<compile_context>
chip_gen: v7x
topology: tpu7x:2x2x1
jax: 0.10.0
libtpu: 0.0.40
codegen_flags: <defaults>
</compile_context>

<pallas_src>
import jax
import jax.numpy as jnp
from jax import lax
from jax.experimental import pallas as pl
from jax.experimental.pallas import tpu as pltpu


def _elu(x):
    # TODO(synk): jnp.expm1 would match jax.nn.elu bit-for-bit near 0; the
    # exp(x)-1 form is kept for guaranteed Mosaic lowering (f32 error < 2e-7,
    # far inside the 1e-4 test tolerance).
    return jnp.where(x > 0.0, x, jnp.exp(x) - 1.0)


def up_block_kernel(x_ref, sa_ref, sb_ref,
                    w0_ref, b0_ref, w1_ref, b1_ref, wu_ref, bu_ref,
                    out_ref, pad_ref, col_ref):
    # x_ref: (NB, H, W, Cm); sa_ref/sb_ref: (NB, H, W, Cs)
    # w0/w1: (3, 3*Ci, Cm); wu: (3, 3*Cm, 4*Co); biases: (1, C)
    # out_ref: (NB, H, W, 4*Co)
    # pad_ref: (NB, H+2, W+2, Ci) zero-bordered activation scratch
    # col_ref: (NB, H+2, W, 3*Ci) staged im2col (dx-shifted interiors)
    NB, H, W, Cm = x_ref.shape
    Cs = sa_ref.shape[-1]
    Ci = Cm + Cs
    M = NB * H * W

    # Zero the padded scratch once per step; borders stay zero for the whole
    # step because only the interior [1:H+1, 1:W+1] is ever written.
    # (Deliberately NOT gated on program_id == 0: the batch axis is marked
    # "parallel", so a gated init would leave the other TensorCore's scratch
    # uninitialised.  With the default single grid step this runs once.)
    pad_ref[...] = jnp.zeros_like(pad_ref)

    def conv3x3_from_pad(cc, w_ref_, b_ref_):
        """3x3 SAME conv of the activation staged in pad_ref[..., :cc]."""
        co = w_ref_.shape[-1]
        # Stage the 3 dx-shifted interiors once: 3 sublane-shifted copies
        # instead of 9 shifted slice+reshape materialisations per conv.
        for dx in range(3):
            col_ref[:, :, :, dx * cc:(dx + 1) * cc] = \
                pad_ref[:, :, dx:dx + W, :cc]
        acc = None
        for dy in range(3):   # dy slices of col_ref are major-axis (aligned)
            patch = col_ref[:, dy:dy + H, :, :3 * cc].reshape(M, 3 * cc)
            d = jnp.dot(patch, w_ref_[dy], preferred_element_type=jnp.float32)
            acc = d if acc is None else acc + d
        return (acc + b_ref_[...]).reshape(NB, H, W, co)

    def residual(h, skip_ref, w_ref_, b_ref_):
        # Residual: h + dropout(conv3x3(ELU(concat([h, skip], channels)))).
        # The channel concat is realised by staging ELU(h) into pad channels
        # [0:Cm] and ELU(skip) into [Cm:Ci]; no in-kernel concatenate needed.
        pad_ref[:, 1:H + 1, 1:W + 1, :Cm] = _elu(h)
        pad_ref[:, 1:H + 1, 1:W + 1, Cm:Ci] = \
            _elu(skip_ref[...].astype(jnp.float32))
        # TODO(synk): nn.Dropout(drop_prob) skipped -- eval-mode identity.
        return h + conv3x3_from_pad(Ci, w_ref_, b_ref_)

    x = x_ref[...].astype(jnp.float32)
    h = residual(x, sa_ref, w0_ref, b0_ref)     # residual_0(x, skip_in=skip_a)
    h = residual(h, sb_ref, w1_ref, b1_ref)     # residual_1(x, skip_in=skip_b)

    # UpSample ('subpixel'): conv3x3 c_middle -> 4*c_out (no pre-activation).
    # depth_to_space is done in the wrapper; this store is a lane-dense
    # (4*c_out = 128 lanes) unmasked slab write.
    pad_ref[:, 1:H + 1, 1:W + 1, :Cm] = h
    y = conv3x3_from_pad(Cm, wu_ref, bu_ref)
    out_ref[...] = y.astype(out_ref.dtype)


def up_block(x, skip_a, skip_b, params, images_per_step=None):
    """x: (N, H, W, c_middle), skips: (N, H, W, c_skip) NHWC.

    Returns the UpBlock output (N, 2H, 2W, c_out), like
    UpBlock.forward(x, skip_a, skip_b) with up_mode='subpixel'.
    """
    w0, b0, w1, b1, wu, bu = params
    N, H, W, Cm = x.shape
    Cs = skip_a.shape[-1]
    Ci = Cm + Cs
    Cup = wu.shape[-1]           # 4 * c_out
    Co = Cup // 4

    # Collapse the batch grid by default: one grid step over all N images
    # (N is folded into the matmul M dimension inside the kernel).  Set
    # images_per_step < N to re-expose a parallel batch axis (v7x megacore).
    NB = N if images_per_step is None else images_per_step
    assert N % NB == 0

    # Pre-reshape conv weights for im2col: (3, 3, cin, cout) -> (3, 3*cin, cout)
    # (flattened (kw, cin) order matches the dx-major channel packing of col).
    w0r = w0.reshape(3, 3 * Ci, Cm)
    w1r = w1.reshape(3, 3 * Ci, Cm)
    wur = wu.reshape(3, 3 * Cm, Cup)

    y = pl.pallas_call(
        up_block_kernel,
        out_shape=jax.ShapeDtypeStruct((N, H, W, Cup), x.dtype),
        grid_spec=pltpu.PrefetchScalarGridSpec(
            num_scalar_prefetch=0,
            grid=(N // NB,),
            in_specs=[
                pl.BlockSpec((NB, H, W, Cm), lambda n: (n, 0, 0, 0)),
                pl.BlockSpec((NB, H, W, Cs), lambda n: (n, 0, 0, 0)),
                pl.BlockSpec((NB, H, W, Cs), lambda n: (n, 0, 0, 0)),
                pl.BlockSpec((3, 3 * Ci, Cm), lambda n: (0, 0, 0)),
                pl.BlockSpec((1, Cm), lambda n: (0, 0)),
                pl.BlockSpec((3, 3 * Ci, Cm), lambda n: (0, 0, 0)),
                pl.BlockSpec((1, Cm), lambda n: (0, 0)),
                pl.BlockSpec((3, 3 * Cm, Cup), lambda n: (0, 0, 0)),
                pl.BlockSpec((1, Cup), lambda n: (0, 0)),
            ],
            out_specs=pl.BlockSpec((NB, H, W, Cup), lambda n: (n, 0, 0, 0)),
            scratch_shapes=[
                pltpu.VMEM((NB, H + 2, W + 2, Ci), jnp.float32),
                pltpu.VMEM((NB, H + 2, W, 3 * Ci), jnp.float32),
            ],
        ),
        compiler_params=pltpu.CompilerParams(
            dimension_semantics=("parallel",)),
    )(x, skip_a, skip_b, w0r, b0, w1r, b1, wur, bu)

    # depth_to_space (block 2): pure layout plumbing, done outside the kernel.
    y = y.reshape(N, H, W, 2, 2, Co)
    y = y.transpose(0, 1, 3, 2, 4, 5).reshape(N, 2 * H, 2 * W, Co)
    return y


def make_params(key, c_in, c_middle, c_out):
    """Deterministic parameters with weight_norm folded (w = g * v / ||v||)."""
    ks = jax.random.split(key, 9)

    def fold_wn(v, g, axes):
        nrm = jnp.sqrt(jnp.sum(v * v, axis=axes, keepdims=True))
        return (g * v / nrm).astype(jnp.float32)

    def conv_params(kv, kg, kb, ci, co):
        v = 0.05 * jax.random.normal(kv, (3, 3, ci, co), jnp.float32)
        g = 1.0 + 0.01 * jax.random.normal(kg, (1, 1, 1, co), jnp.float32)
        w = fold_wn(v, g, axes=(0, 1, 2))
        b = 0.01 * jax.random.normal(kb, (1, co), jnp.float32)
        return w, b

    w0, b0 = conv_params(ks[0], ks[1], ks[2], c_in, c_middle)       # residual_0
    w1, b1 = conv_params(ks[3], ks[4], ks[5], c_in, c_middle)       # residual_1
    wu, bu = conv_params(ks[6], ks[7], ks[8], c_middle, 4 * c_out)  # upsample
    return w0, b0, w1, b1, wu, bu


def ref_forward(x, skip_a, skip_b, params):
    """Plain-JAX reference (NHWC) mirroring UpBlock.forward (eval mode)."""
    w0, b0, w1, b1, wu, bu = params

    def conv3x3(a, w, b):
        y = lax.conv_general_dilated(a, w, (1, 1), 'SAME',
                                     dimension_numbers=('NHWC', 'HWIO', 'NHWC'))
        return y + b.reshape(1, 1, 1, -1)

    def residual(h, skip, w, b):
        a = jax.nn.elu(jnp.concatenate([h, skip], axis=-1))
        return h + conv3x3(a, w, b)          # dropout = identity in eval mode

    h = residual(x, skip_a, w0, b0)
    h = residual(h, skip_b, w1, b1)
    y = conv3x3(h, wu, bu)                   # UpSample 'subpixel' conv
    N, H, W, _ = y.shape
    Co = y.shape[-1] // 4
    y = y.reshape(N, H, W, 2, 2, Co)
    y = y.transpose(0, 1, 3, 2, 4, 5).reshape(N, 2 * H, 2 * W, Co)
    return y


if __name__ == "__main__":
    N, H, W = 2, 16, 16
    c_middle, c_skip, c_out = 32, 32, 32
    c_in = c_middle + c_skip     # conv input channels after concat(x, skip)

    key = jax.random.PRNGKey(0)
    kx, ka, kb, kp = jax.random.split(key, 4)
    x = jax.random.normal(kx, (N, H, W, c_middle), jnp.float32)
    skip_a = jax.random.normal(ka, (N, H, W, c_skip), jnp.float32)
    skip_b = jax.random.normal(kb, (N, H, W, c_skip), jnp.float32)
    params = make_params(kp, c_in, c_middle, c_out)

    out = up_block(x, skip_a, skip_b, params)
    jax.block_until_ready(out)

    ref = ref_forward(x, skip_a, skip_b, params)
    assert out.shape == (N, 2 * H, 2 * W, c_out)
    assert jnp.allclose(out, ref, atol=1e-4, rtol=1e-4)

    print("KERNEL_OK")
</pallas_src>

<mosaic_0001>
module attributes {stable_mosaic.version = 11 : i64} {
  func.func @up_block_kernel(%arg0: i32, %arg1: memref<2x16x16x32xf32, #tpu.memory_space<vmem>>, %arg2: memref<2x16x16x32xf32, #tpu.memory_space<vmem>>, %arg3: memref<2x16x16x32xf32, #tpu.memory_space<vmem>>, %arg4: memref<3x192x32xf32, #tpu.memory_space<vmem>>, %arg5: memref<1x32xf32, #tpu.memory_space<vmem>>, %arg6: memref<3x192x32xf32, #tpu.memory_space<vmem>>, %arg7: memref<1x32xf32, #tpu.memory_space<vmem>>, %arg8: memref<3x96x128xf32, #tpu.memory_space<vmem>>, %arg9: memref<1x128xf32, #tpu.memory_space<vmem>>, %arg10: memref<2x16x16x128xf32, #tpu.memory_space<vmem>>, %arg11: memref<2x18x18x64xf32, #tpu.memory_space<vmem>>, %arg12: memref<2x18x16x192xf32, #tpu.memory_space<vmem>>) attributes {dimension_semantics = [#tpu.dimension_semantics<parallel>], iteration_bounds = array<i64: 1>, scalar_prefetch = 0 : i64, scratch_operands = 2 : i64, tpu.core_type = #tpu.core_type<tc>, window_params = [{transform_indices = @transform_0, window_bounds = array<i64: 2, 16, 16, 32>}, {transform_indices = @transform_1, window_bounds = array<i64: 2, 16, 16, 32>}, {transform_indices = @transform_2, window_bounds = array<i64: 2, 16, 16, 32>}, {pipeline_mode = #tpu.pipeline_mode<synchronous>, transform_indices = @transform_3, window_bounds = array<i64: 3, 192, 32>}, {pipeline_mode = #tpu.pipeline_mode<synchronous>, transform_indices = @transform_4, window_bounds = array<i64: 1, 32>}, {pipeline_mode = #tpu.pipeline_mode<synchronous>, transform_indices = @transform_5, window_bounds = array<i64: 3, 192, 32>}, {pipeline_mode = #tpu.pipeline_mode<synchronous>, transform_indices = @transform_6, window_bounds = array<i64: 1, 32>}, {pipeline_mode = #tpu.pipeline_mode<synchronous>, transform_indices = @transform_7, window_bounds = array<i64: 3, 96, 128>}, {pipeline_mode = #tpu.pipeline_mode<synchronous>, transform_indices = @transform_8, window_bounds = array<i64: 1, 128>}, {transform_indices = @transform_9, window_bounds = array<i64: 2, 16, 16, 128>}]} {
    %cst = arith.constant 0.000000e+00 : f32
    %0 = vector.broadcast %cst : f32 to vector<2x18x18x64xf32>
    %c0 = arith.constant 0 : index
    %c0_0 = arith.constant 0 : index
    %c0_1 = arith.constant 0 : index
    %c0_2 = arith.constant 0 : index
    %1 = vector.load %arg11[%c0, %c0_0, %c0_1, %c0_2] : memref<2x18x18x64xf32, #tpu.memory_space<vmem>>, vector<2x18x18x64xf32>
    tpu.vector_store %arg11[%c0, %c0_0, %c0_1, %c0_2], %0 {strides = array<i32>} : memref<2x18x18x64xf32, #tpu.memory_space<vmem>>, vector<2x18x18x64xf32>,
    %c0_3 = arith.constant 0 : index
    %c0_4 = arith.constant 0 : index
    %c0_5 = arith.constant 0 : index
    %c0_6 = arith.constant 0 : index
    %2 = vector.load %arg1[%c0_3, %c0_4, %c0_5, %c0_6] : memref<2x16x16x32xf32, #tpu.memory_space<vmem>>, vector<2x16x16x32xf32>
    %cst_7 = arith.constant 0.000000e+00 : f32
    %3 = vector.broadcast %cst_7 : f32 to vector<2x16x16x32xf32>
    %4 = arith.cmpf ogt, %2, %3 : vector<2x16x16x32xf32>
    %5 = math.exp %2 : vector<2x16x16x32xf32>
    %cst_8 = arith.constant 1.000000e+00 : f32
    %6 = vector.broadcast %cst_8 : f32 to vector<2x16x16x32xf32>
    %7 = arith.subf %5, %6 : vector<2x16x16x32xf32>
    %8 = arith.select %4, %2, %7 : vector<2x16x16x32xi1>, vector<2x16x16x32xf32>
    %c0_9 = arith.constant 0 : index
    %c1 = arith.constant 1 : index
    %c1_10 = arith.constant 1 : index
    %c0_11 = arith.constant 0 : index
    %9 = vector.load %arg11[%c0_9, %c1, %c1_10, %c0_11] : memref<2x18x18x64xf32, #tpu.memory_space<vmem>>, vector<2x16x16x32xf32>
    tpu.vector_store %arg11[%c0_9, %c1, %c1_10, %c0_11], %8 {strides = array<i32>} : memref<2x18x18x64xf32, #tpu.memory_space<vmem>>, vector<2x16x16x32xf32>,
    %c0_12 = arith.constant 0 : index
    %c0_13 = arith.constant 0 : index
    %c0_14 = arith.constant 0 : index
    %c0_15 = arith.constant 0 : index
    %10 = vector.load %arg2[%c0_12, %c0_13, %c0_14, %c0_15] : memref<2x16x16x32xf32, #tpu.memory_space<vmem>>, vector<2x16x16x32xf32>
    %cst_16 = arith.constant 0.000000e+00 : f32
    %11 = vector.broadcast %cst_16 : f32 to vector<2x16x16x32xf32>
    %12 = arith.cmpf ogt, %10, %11 : vector<2x16x16x32xf32>
    %13 = math.exp %10 : vector<2x16x16x32xf32>
    %cst_17 = arith.constant 1.000000e+00 : f32
    %14 = vector.broadcast %cst_17 : f32 to vector<2x16x16x32xf32>
    %15 = arith.subf %13, %14 : vector<2x16x16x32xf32>
    %16 = arith.select %12, %10, %15 : vector<2x16x16x32xi1>, vector<2x16x16x32xf32>
    %c0_18 = arith.constant 0 : index
    %c1_19 = arith.constant 1 : index
    %c1_20 = arith.constant 1 : index
    %c32 = arith.constant 32 : index
    %17 = vector.load %arg11[%c0_18, %c1_19, %c1_20, %c32] : memref<2x18x18x64xf32, #tpu.memory_space<vmem>>, vector<2x16x16x32xf32>
    tpu.vector_store %arg11[%c0_18, %c1_19, %c1_20, %c32], %16 {strides = array<i32>} : memref<2x18x18x64xf32, #tpu.memory_space<vmem>>, vector<2x16x16x32xf32>,
    %c0_21 = arith.constant 0 : index
    %c0_22 = arith.constant 0 : index
    %c0_23 = arith.constant 0 : index
    %c0_24 = arith.constant 0 : index
    %18 = vector.load %arg11[%c0_21, %c0_22, %c0_23, %c0_24] : memref<2x18x18x64xf32, #tpu.memory_space<vmem>>, vector<2x18x16x64xf32>
    %c0_25 = arith.constant 0 : index
    %c0_26 = arith.constant 0 : index
    %c0_27 = arith.constant 0 : index
    %c0_28 = arith.constant 0 : index
    %19 = vector.load %arg12[%c0_25, %c0_26, %c0_27, %c0_28] : memref<2x18x16x192xf32, #tpu.memory_space<vmem>>, vector<2x18x16x64xf32>
    tpu.vector_store %arg12[%c0_25, %c0_26, %c0_27, %c0_28], %18 {strides = array<i32>} : memref<2x18x16x192xf32, #tpu.memory_space<vmem>>, vector<2x18x16x64xf32>,
    %c0_29 = arith.constant 0 : index
    %c0_30 = arith.constant 0 : index
    %c1_31 = arith.constant 1 : index
    %c0_32 = arith.constant 0 : index
    %20 = vector.load %arg11[%c0_29, %c0_30, %c1_31, %c0_32] : memref<2x18x18x64xf32, #tpu.memory_space<vmem>>, vector<2x18x16x64xf32>
    %c0_33 = arith.constant 0 : index
    %c0_34 = arith.constant 0 : index
    %c0_35 = arith.constant 0 : index
    %c64 = arith.constant 64 : index
    %21 = vector.load %arg12[%c0_33, %c0_34, %c0_35, %c64] : memref<2x18x16x192xf32, #tpu.memory_space<vmem>>, vector<2x18x16x64xf32>
    tpu.vector_store %arg12[%c0_33, %c0_34, %c0_35, %c64], %20 {strides = array<i32>} : memref<2x18x16x192xf32, #tpu.memory_space<vmem>>, vector<2x18x16x64xf32>,
    %c0_36 = arith.constant 0 : index
    %c0_37 = arith.constant 0 : index
    %c2 = arith.constant 2 : index
    %c0_38 = arith.constant 0 : index
    %22 = vector.load %arg11[%c0_36, %c0_37, %c2, %c0_38] : memref<2x18x18x64xf32, #tpu.memory_space<vmem>>, vector<2x18x16x64xf32>
    %c0_39 = arith.constant 0 : index
    %c0_40 = arith.constant 0 : index
    %c0_41 = arith.constant 0 : index
    %c128 = arith.constant 128 : index
    %23 = vector.load %arg12[%c0_39, %c0_40, %c0_41, %c128] : memref<2x18x16x192xf32, #tpu.memory_space<vmem>>, vector<2x18x16x64xf32>
    tpu.vector_store %arg12[%c0_39, %c0_40, %c0_41, %c128], %22 {strides = array<i32>} : memref<2x18x16x192xf32, #tpu.memory_space<vmem>>, vector<2x18x16x64xf32>,
    %c0_42 = arith.constant 0 : index
    %c0_43 = arith.constant 0 : index
    %c0_44 = arith.constant 0 : index
    %c0_45 = arith.constant 0 : index
    %24 = vector.load %arg12[%c0_42, %c0_43, %c0_44, %c0_45] : memref<2x18x16x192xf32, #tpu.memory_space<vmem>>, vector<2x16x16x192xf32>
    %25 = vector.shape_cast %24 : vector<2x16x16x192xf32> to vector<512x192xf32>
    %c0_46 = arith.constant 0 : index
    %c0_47 = arith.constant 0 : index
    %c0_48 = arith.constant 0 : index
    %26 = vector.load %arg4[%c0_46, %c0_47, %c0_48] : memref<3x192x32xf32, #tpu.memory_space<vmem>>, vector<1x192x32xf32>
    %27 = vector.shape_cast %26 : vector<1x192x32xf32> to vector<192x32xf32>
    %cst_49 = arith.constant dense<0.000000e+00> : vector<512x32xf32>
    %28 = tpu.matmul %25, %27, %cst_49 {dimension_numbers = #tpu.dot_dimension_numbers<[1], [0], [0], [1], [0, 0, 1, 1], [], []>} : vector<512x192xf32>, vector<192x32xf32>, vector<512x32xf32> -> vector<512x32xf32>
    %c0_50 = arith.constant 0 : index
    %c1_51 = arith.constant 1 : index
    %c0_52 = arith.constant 0 : index
    %c0_53 = arith.constant 0 : index
    %29 = vector.load %arg12[%c0_50, %c1_51, %c0_52, %c0_53] : memref<2x18x16x192xf32, #tpu.memory_space<vmem>>, vector<2x16x16x192xf32>
    %30 = vector.shape_cast %29 : vector<2x16x16x192xf32> to vector<512x192xf32>
    %c1_54 = arith.constant 1 : index
    %c0_55 = arith.constant 0 : index
    %c0_56 = arith.constant 0 : index
    %31 = vector.load %arg4[%c1_54, %c0_55, %c0_56] : memref<3x192x32xf32, #tpu.memory_space<vmem>>, vector<1x192x32xf32>
    %32 = vector.shape_cast %31 : vector<1x192x32xf32> to vector<192x32xf32>
    %cst_57 = arith.constant dense<0.000000e+00> : vector<512x32xf32>
    %33 = tpu.matmul %30, %32, %cst_57 {dimension_numbers = #tpu.dot_dimension_numbers<[1], [0], [0], [1], [0, 0, 1, 1], [], []>} : vector<512x192xf32>, vector<192x32xf32>, vector<512x32xf32> -> vector<512x32xf32>
    %34 = arith.addf %28, %33 : vector<512x32xf32>
    %c0_58 = arith.constant 0 : index
    %c2_59 = arith.constant 2 : index
    %c0_60 = arith.constant 0 : index
    %c0_61 = arith.constant 0 : index
    %35 = vector.load %arg12[%c0_58, %c2_59, %c0_60, %c0_61] : memref<2x18x16x192xf32, #tpu.memory_space<vmem>>, vector<2x16x16x192xf32>
    %36 = vector.shape_cast %35 : vector<2x16x16x192xf32> to vector<512x192xf32>
    %c2_62 = arith.constant 2 : index
    %c0_63 = arith.constant 0 : index
    %c0_64 = arith.constant 0 : index
    %37 = vector.load %arg4[%c2_62, %c0_63, %c0_64] : memref<3x192x32xf32, #tpu.memory_space<vmem>>, vector<1x192x32xf32>
    %38 = vector.shape_cast %37 : vector<1x192x32xf32> to vector<192x32xf32>
    %cst_65 = arith.constant dense<0.000000e+00> : vector<512x32xf32>
    %39 = tpu.matmul %36, %38, %cst_65 {dimension_numbers = #tpu.dot_dimension_numbers<[1], [0], [0], [1], [0, 0, 1, 1], [], []>} : vector<512x192xf32>, vector<192x32xf32>, vector<512x32xf32> -> vector<512x32xf32>
    %40 = arith.addf %34, %39 : vector<512x32xf32>
    %c0_66 = arith.constant 0 : index
    %c0_67 = arith.constant 0 : index
    %41 = vector.load %arg5[%c0_66, %c0_67] : memref<1x32xf32, #tpu.memory_space<vmem>>, vector<1x32xf32>
    %42 = vector.broadcast %41 : vector<1x32xf32> to vector<512x32xf32>
    %43 = arith.addf %40, %42 : vector<512x32xf32>
    %44 = vector.shape_cast %43 : vector<512x32xf32> to vector<2x16x16x32xf32>
    %45 = arith.addf %2, %44 : vector<2x16x16x32xf32>
    %cst_68 = arith.constant 0.000000e+00 : f32
    %46 = vector.broadcast %cst_68 : f32 to vector<2x16x16x32xf32>
    %47 = arith.cmpf ogt, %45, %46 : vector<2x16x16x32xf32>
    %48 = math.exp %45 : vector<2x16x16x32xf32>
    %cst_69 = arith.constant 1.000000e+00 : f32
    %49 = vector.broadcast %cst_69 : f32 to vector<2x16x16x32xf32>
    %50 = arith.subf %48, %49 : vector<2x16x16x32xf32>
    %51 = arith.select %47, %45, %50 : vector<2x16x16x32xi1>, vector<2x16x16x32xf32>
    %c0_70 = arith.constant 0 : index
    %c1_71 = arith.constant 1 : index
    %c1_72 = arith.constant 1 : index
    %c0_73 = arith.constant 0 : index
    %52 = vector.load %arg11[%c0_70, %c1_71, %c1_72, %c0_73] : memref<2x18x18x64xf32, #tpu.memory_space<vmem>>, vector<2x16x16x32xf32>
    tpu.vector_store %arg11[%c0_70, %c1_71, %c1_72, %c0_73], %51 {strides = array<i32>} : memref<2x18x18x64xf32, #tpu.memory_space<vmem>>, vector<2x16x16x32xf32>,
    %c0_74 = arith.constant 0 : index
    %c0_75 = arith.constant 0 : index
    %c0_76 = arith.constant 0 : index
    %c0_77 = arith.constant 0 : index
    %53 = vector.load %arg3[%c0_74, %c0_75, %c0_76, %c0_77] : memref<2x16x16x32xf32, #tpu.memory_space<vmem>>, vector<2x16x16x32xf32>
    %cst_78 = arith.constant 0.000000e+00 : f32
    %54 = vector.broadcast %cst_78 : f32 to vector<2x16x16x32xf32>
    %55 = arith.cmpf ogt, %53, %54 : vector<2x16x16x32xf32>
    %56 = math.exp %53 : vector<2x16x16x32xf32>
    %cst_79 = arith.constant 1.000000e+00 : f32
    %57 = vector.broadcast %cst_79 : f32 to vector<2x16x16x32xf32>
    %58 = arith.subf %56, %57 : vector<2x16x16x32xf32>
    %59 = arith.select %55, %53, %58 : vector<2x16x16x32xi1>, vector<2x16x16x32xf32>
    %c0_80 = arith.constant 0 : index
    %c1_81 = arith.constant 1 : index
    %c1_82 = arith.constant 1 : index
    %c32_83 = arith.constant 32 : index
    %60 = vector.load %arg11[%c0_80, %c1_81, %c1_82, %c32_83] : memref<2x18x18x64xf32, #tpu.memory_space<vmem>>, vector<2x16x16x32xf32>
    tpu.vector_store %arg11[%c0_80, %c1_81, %c1_82, %c32_83], %59 {strides = array<i32>} : memref<2x18x18x64xf32, #tpu.memory_space<vmem>>, vector<2x16x16x32xf32>,
    %c0_84 = arith.constant 0 : index
    %c0_85 = arith.constant 0 : index
    %c0_86 = arith.constant 0 : index
    %c0_87 = arith.constant 0 : index
    %61 = vector.load %arg11[%c0_84, %c0_85, %c0_86, %c0_87] : memref<2x18x18x64xf32, #tpu.memory_space<vmem>>, vector<2x18x16x64xf32>
    %c0_88 = arith.constant 0 : index
    %c0_89 = arith.constant 0 : index
    %c0_90 = arith.constant 0 : index
    %c0_91 = arith.constant 0 : index
    %62 = vector.load %arg12[%c0_88, %c0_89, %c0_90, %c0_91] : memref<2x18x16x192xf32, #tpu.memory_space<vmem>>, vector<2x18x16x64xf32>
    tpu.vector_store %arg12[%c0_88, %c0_89, %c0_90, %c0_91], %61 {strides = array<i32>} : memref<2x18x16x192xf32, #tpu.memory_space<vmem>>, vector<2x18x16x64xf32>,
    %c0_92 = arith.constant 0 : index
    %c0_93 = arith.constant 0 : index
    %c1_94 = arith.constant 1 : index
    %c0_95 = arith.constant 0 : index
    %63 = vector.load %arg11[%c0_92, %c0_93, %c1_94, %c0_95] : memref<2x18x18x64xf32, #tpu.memory_space<vmem>>, vector<2x18x16x64xf32>
    %c0_96 = arith.constant 0 : index
    %c0_97 = arith.constant 0 : index
    %c0_98 = arith.constant 0 : index
    %c64_99 = arith.constant 64 : index
    %64 = vector.load %arg12[%c0_96, %c0_97, %c0_98, %c64_99] : memref<2x18x16x192xf32, #tpu.memory_space<vmem>>, vector<2x18x16x64xf32>
    tpu.vector_store %arg12[%c0_96, %c0_97, %c0_98, %c64_99], %63 {strides = array<i32>} : memref<2x18x16x192xf32, #tpu.memory_space<vmem>>, vector<2x18x16x64xf32>,
    %c0_100 = arith.constant 0 : index
    %c0_101 = arith.constant 0 : index
    %c2_102 = arith.constant 2 : index
    %c0_103 = arith.constant 0 : index
    %65 = vector.load %arg11[%c0_100, %c0_101, %c2_102, %c0_103] : memref<2x18x18x64xf32, #tpu.memory_space<vmem>>, vector<2x18x16x64xf32>
    %c0_104 = arith.constant 0 : index
    %c0_105 = arith.constant 0 : index
    %c0_106 = arith.constant 0 : index
    %c128_107 = arith.constant 128 : index
    %66 = vector.load %arg12[%c0_104, %c0_105, %c0_106, %c128_107] : memref<2x18x16x192xf32, #tpu.memory_space<vmem>>, vector<2x18x16x64xf32>
    tpu.vector_store %arg12[%c0_104, %c0_105, %c0_106, %c128_107], %65 {strides = array<i32>} : memref<2x18x16x192xf32, #tpu.memory_space<vmem>>, vector<2x18x16x64xf32>,
    %c0_108 = arith.constant 0 : index
    %c0_109 = arith.constant 0 : index
    %c0_110 = arith.constant 0 : index
    %c0_111 = arith.constant 0 : index
    %67 = vector.load %arg12[%c0_108, %c0_109, %c0_110, %c0_111] : memref<2x18x16x192xf32, #tpu.memory_space<vmem>>, vector<2x16x16x192xf32>
    %68 = vector.shape_cast %67 : vector<2x16x16x192xf32> to vector<512x192xf32>
    %c0_112 = arith.constant 0 : index
    %c0_113 = arith.constant 0 : index
    %c0_114 = arith.constant 0 : index
    %69 = vector.load %arg6[%c0_112, %c0_113, %c0_114] : memref<3x192x32xf32, #tpu.memory_space<vmem>>, vector<1x192x32xf32>
    %70 = vector.shape_cast %69 : vector<1x192x32xf32> to vector<192x32xf32>
    %cst_115 = arith.constant dense<0.000000e+00> : vector<512x32xf32>
    %71 = tpu.matmul %68, %70, %cst_115 {dimension_numbers = #tpu.dot_dimension_numbers<[1], [0], [0], [1], [0, 0, 1, 1], [], []>} : vector<512x192xf32>, vector<192x32xf32>, vector<512x32xf32> -> vector<512x32xf32>
    %c0_116 = arith.constant 0 : index
    %c1_117 = arith.constant 1 : index
    %c0_118 = arith.constant 0 : index
    %c0_119 = arith.constant 0 : index
    %72 = vector.load %arg12[%c0_116, %c1_117, %c0_118, %c0_119] : memref<2x18x16x192xf32, #tpu.memory_space<vmem>>, vector<2x16x16x192xf32>
    %73 = vector.shape_cast %72 : vector<2x16x16x192xf32> to vector<512x192xf32>
    %c1_120 = arith.constant 1 : index
    %c0_121 = arith.constant 0 : index
    %c0_122 = arith.constant 0 : index
    %74 = vector.load %arg6[%c1_120, %c0_121, %c0_122] : memref<3x192x32xf32, #tpu.memory_space<vmem>>, vector<1x192x32xf32>
    %75 = vector.shape_cast %74 : vector<1x192x32xf32> to vector<192x32xf32>
    %cst_123 = arith.constant dense<0.000000e+00> : vector<512x32xf32>
    %76 = tpu.matmul %73, %75, %cst_123 {dimension_numbers = #tpu.dot_dimension_numbers<[1], [0], [0], [1], [0, 0, 1, 1], [], []>} : vector<512x192xf32>, vector<192x32xf32>, vector<512x32xf32> -> vector<512x32xf32>
    %77 = arith.addf %71, %76 : vector<512x32xf32>
    %c0_124 = arith.constant 0 : index
    %c2_125 = arith.constant 2 : index
    %c0_126 = arith.constant 0 : index
    %c0_127 = arith.constant 0 : index
    %78 = vector.load %arg12[%c0_124, %c2_125, %c0_126, %c0_127] : memref<2x18x16x192xf32, #tpu.memory_space<vmem>>, vector<2x16x16x192xf32>
    %79 = vector.shape_cast %78 : vector<2x16x16x192xf32> to vector<512x192xf32>
    %c2_128 = arith.constant 2 : index
    %c0_129 = arith.constant 0 : index
    %c0_130 = arith.constant 0 : index
    %80 = vector.load %arg6[%c2_128, %c0_129, %c0_130] : memref<3x192x32xf32, #tpu.memory_space<vmem>>, vector<1x192x32xf32>
    %81 = vector.shape_cast %80 : vector<1x192x32xf32> to vector<192x32xf32>
    %cst_131 = arith.constant dense<0.000000e+00> : vector<512x32xf32>
    %82 = tpu.matmul %79, %81, %cst_131 {dimension_numbers = #tpu.dot_dimension_numbers<[1], [0], [0], [1], [0, 0, 1, 1], [], []>} : vector<512x192xf32>, vector<192x32xf32>, vector<512x32xf32> -> vector<512x32xf32>
    %83 = arith.addf %77, %82 : vector<512x32xf32>
    %c0_132 = arith.constant 0 : index
    %c0_133 = arith.constant 0 : index
    %84 = vector.load %arg7[%c0_132, %c0_133] : memref<1x32xf32, #tpu.memory_space<vmem>>, vector<1x32xf32>
    %85 = vector.broadcast %84 : vector<1x32xf32> to vector<512x32xf32>
    %86 = arith.addf %83, %85 : vector<512x32xf32>
    %87 = vector.shape_cast %86 : vector<512x32xf32> to vector<2x16x16x32xf32>
    %88 = arith.addf %45, %87 : vector<2x16x16x32xf32>
    %c0_134 = arith.constant 0 : index
    %c1_135 = arith.constant 1 : index
    %c1_136 = arith.constant 1 : index
    %c0_137 = arith.constant 0 : index
    %89 = vector.load %arg11[%c0_134, %c1_135, %c1_136, %c0_137] : memref<2x18x18x64xf32, #tpu.memory_space<vmem>>, vector<2x16x16x32xf32>
    tpu.vector_store %arg11[%c0_134, %c1_135, %c1_136, %c0_137], %88 {strides = array<i32>} : memref<2x18x18x64xf32, #tpu.memory_space<vmem>>, vector<2x16x16x32xf32>,
    %c0_138 = arith.constant 0 : index
    %c0_139 = arith.constant 0 : index
    %c0_140 = arith.constant 0 : index
    %c0_141 = arith.constant 0 : index
    %90 = vector.load %arg11[%c0_138, %c0_139, %c0_140, %c0_141] : memref<2x18x18x64xf32, #tpu.memory_space<vmem>>, vector<2x18x16x32xf32>
    %c0_142 = arith.constant 0 : index
    %c0_143 = arith.constant 0 : index
    %c0_144 = arith.constant 0 : index
    %c0_145 = arith.constant 0 : index
    %91 = vector.load %arg12[%c0_142, %c0_143, %c0_144, %c0_145] : memref<2x18x16x192xf32, #tpu.memory_space<vmem>>, vector<2x18x16x32xf32>
    tpu.vector_store %arg12[%c0_142, %c0_143, %c0_144, %c0_145], %90 {strides = array<i32>} : memref<2x18x16x192xf32, #tpu.memory_space<vmem>>, vector<2x18x16x32xf32>,
    %c0_146 = arith.constant 0 : index
    %c0_147 = arith.constant 0 : index
    %c1_148 = arith.constant 1 : index
    %c0_149 = arith.constant 0 : index
    %92 = vector.load %arg11[%c0_146, %c0_147, %c1_148, %c0_149] : memref<2x18x18x64xf32, #tpu.memory_space<vmem>>, vector<2x18x16x32xf32>
    %c0_150 = arith.constant 0 : index
    %c0_151 = arith.constant 0 : index
    %c0_152 = arith.constant 0 : index
    %c32_153 = arith.constant 32 : index
    %93 = vector.load %arg12[%c0_150, %c0_151, %c0_152, %c32_153] : memref<2x18x16x192xf32, #tpu.memory_space<vmem>>, vector<2x18x16x32xf32>
    tpu.vector_store %arg12[%c0_150, %c0_151, %c0_152, %c32_153], %92 {strides = array<i32>} : memref<2x18x16x192xf32, #tpu.memory_space<vmem>>, vector<2x18x16x32xf32>,
    %c0_154 = arith.constant 0 : index
    %c0_155 = arith.constant 0 : index
    %c2_156 = arith.constant 2 : index
    %c0_157 = arith.constant 0 : index
    %94 = vector.load %arg11[%c0_154, %c0_155, %c2_156, %c0_157] : memref<2x18x18x64xf32, #tpu.memory_space<vmem>>, vector<2x18x16x32xf32>
    %c0_158 = arith.constant 0 : index
    %c0_159 = arith.constant 0 : index
    %c0_160 = arith.constant 0 : index
    %c64_161 = arith.constant 64 : index
    %95 = vector.load %arg12[%c0_158, %c0_159, %c0_160, %c64_161] : memref<2x18x16x192xf32, #tpu.memory_space<vmem>>, vector<2x18x16x32xf32>
    tpu.vector_store %arg12[%c0_158, %c0_159, %c0_160, %c64_161], %94 {strides = array<i32>} : memref<2x18x16x192xf32, #tpu.memory_space<vmem>>, vector<2x18x16x32xf32>,
    %c0_162 = arith.constant 0 : index
    %c0_163 = arith.constant 0 : index
    %c0_164 = arith.constant 0 : index
    %c0_165 = arith.constant 0 : index
    %96 = vector.load %arg12[%c0_162, %c0_163, %c0_164, %c0_165] : memref<2x18x16x192xf32, #tpu.memory_space<vmem>>, vector<2x16x16x96xf32>
    %97 = vector.shape_cast %96 : vector<2x16x16x96xf32> to vector<512x96xf32>
    %c0_166 = arith.constant 0 : index
    %c0_167 = arith.constant 0 : index
    %c0_168 = arith.constant 0 : index
    %98 = vector.load %arg8[%c0_166, %c0_167, %c0_168] : memref<3x96x128xf32, #tpu.memory_space<vmem>>, vector<1x96x128xf32>
    %99 = vector.shape_cast %98 : vector<1x96x128xf32> to vector<96x128xf32>
    %cst_169 = arith.constant dense<0.000000e+00> : vector<512x128xf32>
    %100 = tpu.matmul %97, %99, %cst_169 {dimension_numbers = #tpu.dot_dimension_numbers<[1], [0], [0], [1], [0, 0, 1, 1], [], []>} : vector<512x96xf32>, vector<96x128xf32>, vector<512x128xf32> -> vector<512x128xf32>
    %c0_170 = arith.constant 0 : index
    %c1_171 = arith.constant 1 : index
    %c0_172 = arith.constant 0 : index
    %c0_173 = arith.constant 0 : index
    %101 = vector.load %arg12[%c0_170, %c1_171, %c0_172, %c0_173] : memref<2x18x16x192xf32, #tpu.memory_space<vmem>>, vector<2x16x16x96xf32>
    %102 = vector.shape_cast %101 : vector<2x16x16x96xf32> to vector<512x96xf32>
    %c1_174 = arith.constant 1 : index
    %c0_175 = arith.constant 0 : index
    %c0_176 = arith.constant 0 : index
    %103 = vector.load %arg8[%c1_174, %c0_175, %c0_176] : memref<3x96x128xf32, #tpu.memory_space<vmem>>, vector<1x96x128xf32>
    %104 = vector.shape_cast %103 : vector<1x96x128xf32> to vector<96x128xf32>
    %cst_177 = arith.constant dense<0.000000e+00> : vector<512x128xf32>
    %105 = tpu.matmul %102, %104, %cst_177 {dimension_numbers = #tpu.dot_dimension_numbers<[1], [0], [0], [1], [0, 0, 1, 1], [], []>} : vector<512x96xf32>, vector<96x128xf32>, vector<512x128xf32> -> vector<512x128xf32>
    %106 = arith.addf %100, %105 : vector<512x128xf32>
    %c0_178 = arith.constant 0 : index
    %c2_179 = arith.constant 2 : index
    %c0_180 = arith.constant 0 : index
    %c0_181 = arith.constant 0 : index
    %107 = vector.load %arg12[%c0_178, %c2_179, %c0_180, %c0_181] : memref<2x18x16x192xf32, #tpu.memory_space<vmem>>, vector<2x16x16x96xf32>
    %108 = vector.shape_cast %107 : vector<2x16x16x96xf32> to vector<512x96xf32>
    %c2_182 = arith.constant 2 : index
    %c0_183 = arith.constant 0 : index
    %c0_184 = arith.constant 0 : index
    %109 = vector.load %arg8[%c2_182, %c0_183, %c0_184] : memref<3x96x128xf32, #tpu.memory_space<vmem>>, vector<1x96x128xf32>
    %110 = vector.shape_cast %109 : vector<1x96x128xf32> to vector<96x128xf32>
    %cst_185 = arith.constant dense<0.000000e+00> : vector<512x128xf32>
    %111 = tpu.matmul %108, %110, %cst_185 {dimension_numbers = #tpu.dot_dimension_numbers<[1], [0], [0], [1], [0, 0, 1, 1], [], []>} : vector<512x96xf32>, vector<96x128xf32>, vector<512x128xf32> -> vector<512x128xf32>
    %112 = arith.addf %106, %111 : vector<512x128xf32>
    %c0_186 = arith.constant 0 : index
    %c0_187 = arith.constant 0 : index
    %113 = vector.load %arg9[%c0_186, %c0_187] : memref<1x128xf32, #tpu.memory_space<vmem>>, vector<1x128xf32>
    %114 = vector.broadcast %113 : vector<1x128xf32> to vector<512x128xf32>
    %115 = arith.addf %112, %114 : vector<512x128xf32>
    %116 = vector.shape_cast %115 : vector<512x128xf32> to vector<2x16x16x128xf32>
    %c0_188 = arith.constant 0 : index
    %c0_189 = arith.constant 0 : index
    %c0_190 = arith.constant 0 : index
    %c0_191 = arith.constant 0 : index
    %117 = vector.load %arg10[%c0_188, %c0_189, %c0_190, %c0_191] : memref<2x16x16x128xf32, #tpu.memory_space<vmem>>, vector<2x16x16x128xf32>
    tpu.vector_store %arg10[%c0_188, %c0_189, %c0_190, %c0_191], %116 {strides = array<i32>} : memref<2x16x16x128xf32, #tpu.memory_space<vmem>>, vector<2x16x16x128xf32>,
    return
  }
  func.func @transform_0(%arg0: i32) -> (i32, i32, i32, i32) {
    %c0_i32 = arith.constant 0 : i32
    %c0_i32_0 = arith.constant 0 : i32
    %c0_i32_1 = arith.constant 0 : i32
    %c0_i32_2 = arith.constant 0 : i32
    return %arg0, %c0_i32, %c0_i32_0, %c0_i32_1 : i32, i32, i32, i32
  }
  func.func @transform_1(%arg0: i32) -> (i32, i32, i32, i32) {
    %c0_i32 = arith.constant 0 : i32
    %c0_i32_0 = arith.constant 0 : i32
    %c0_i32_1 = arith.constant 0 : i32
    %c0_i32_2 = arith.constant 0 : i32
    return %arg0, %c0_i32, %c0_i32_0, %c0_i32_1 : i32, i32, i32, i32
  }
  func.func @transform_2(%arg0: i32) -> (i32, i32, i32, i32) {
    %c0_i32 = arith.constant 0 : i32
    %c0_i32_0 = arith.constant 0 : i32
    %c0_i32_1 = arith.constant 0 : i32
    %c0_i32_2 = arith.constant 0 : i32
    return %arg0, %c0_i32, %c0_i32_0, %c0_i32_1 : i32, i32, i32, i32
  }
  func.func @transform_3(%arg0: i32) -> (i32, i32, i32) {
    %c0_i32 = arith.constant 0 : i32
    %c0_i32_0 = arith.constant 0 : i32
    %c0_i32_1 = arith.constant 0 : i32
    %c0_i32_2 = arith.constant 0 : i32
    return %c0_i32, %c0_i32_0, %c0_i32_1 : i32, i32, i32
  }
  func.func @transform_4(%arg0: i32) -> (i32, i32) {
    %c0_i32 = arith.constant 0 : i32
    %c0_i32_0 = arith.constant 0 : i32
    %c0_i32_1 = arith.constant 0 : i32
    return %c0_i32, %c0_i32_0 : i32, i32
  }
  func.func @transform_5(%arg0: i32) -> (i32, i32, i32) {
    %c0_i32 = arith.constant 0 : i32
    %c0_i32_0 = arith.constant 0 : i32
    %c0_i32_1 = arith.constant 0 : i32
    %c0_i32_2 = arith.constant 0 : i32
    return %c0_i32, %c0_i32_0, %c0_i32_1 : i32, i32, i32
  }
  func.func @transform_6(%arg0: i32) -> (i32, i32) {
    %c0_i32 = arith.constant 0 : i32
    %c0_i32_0 = arith.constant 0 : i32
    %c0_i32_1 = arith.constant 0 : i32
    return %c0_i32, %c0_i32_0 : i32, i32
  }
  func.func @transform_7(%arg0: i32) -> (i32, i32, i32) {
    %c0_i32 = arith.constant 0 : i32
    %c0_i32_0 = arith.constant 0 : i32
    %c0_i32_1 = arith.constant 0 : i32
    %c0_i32_2 = arith.constant 0 : i32
    return %c0_i32, %c0_i32_0, %c0_i32_1 : i32, i32, i32
  }
  func.func @transform_8(%arg0: i32) -> (i32, i32) {
    %c0_i32 = arith.constant 0 : i32
    %c0_i32_0 = arith.constant 0 : i32
    %c0_i32_1 = arith.constant 0 : i32
    return %c0_i32, %c0_i32_0 : i32, i32
  }
  func.func @transform_9(%arg0: i32) -> (i32, i32, i32, i32) {
    %c0_i32 = arith.constant 0 : i32
    %c0_i32_0 = arith.constant 0 : i32
    %c0_i32_1 = arith.constant 0 : i32
    %c0_i32_2 = arith.constant 0 : i32
    return %arg0, %c0_i32, %c0_i32_0, %c0_i32_1 : i32, i32, i32, i32
  }
}

</mosaic_0001>

<llo_original>
// kernel: tpu_custom_call.1
$region0: #{tpu_custom_call.1}
  #allocation0 [shape = 'u32[]', space=smem, size = 0x4, offset = 0x4, fixed_abs, tag = 'smem constant byte address 0x4 - core index']
  #allocation1 [shape = 'u32[144,128]{1,0:T(1,128)}', space=vmem, size = 0x12000, scoped, tag = 'internal scratch']
  #allocation2 [shape = 'f32[2,18,18,64]{3,2,1,0:T(8,128)}', space=vmem, size = 0x6c000, scoped, tag = 'scratch operand']
  #allocation3 [shape = 'f32[2,18,16,192]{3,2,1,0:T(8,128)}', space=vmem, size = 0x90000, scoped, tag = 'scratch operand']
  %s0 = inlined_call_operand.vmem [shape: f32[2,16,16,32], index: 0, kind: input, shape index: {}]
  %s1 = inlined_call_operand.vmem [shape: f32[2,16,16,32], index: 1, kind: input, shape index: {}]
  %s2 = inlined_call_operand.vmem [shape: f32[2,16,16,32], index: 2, kind: input, shape index: {}]
  %s3 = inlined_call_operand.vmem [shape: f32[3,192,32], index: 3, kind: input, shape index: {}]
  %s4 = inlined_call_operand.hbm [shape: f32[1,32], index: 4, kind: input, shape index: {}]
  %s5 = inlined_call_operand.vmem [shape: f32[3,192,32], index: 5, kind: input, shape index: {}]
  %s6 = inlined_call_operand.vmem [shape: f32[1,32], index: 6, kind: input, shape index: {}]
  %s7 = inlined_call_operand.hbm [shape: f32[3,96,128], index: 7, kind: input, shape index: {}]
  %s8 = inlined_call_operand.vmem [shape: f32[1,128], index: 8, kind: input, shape index: {}]
  %s9 = inlined_call_operand.hbm [shape: f32[2,16,16,128], index: 9, kind: output, shape index: {}]
  %s10 = sld [smem:[#allocation0]]
  $region54: #{tpu_custom_call.1} parent=0
    _
  %s12 = ssub.s32 1, %s10
  %s13 = scalar_select 0, %s12, %s10
  $region1: #{tpu_custom_call.1} parent=0
    #allocation4 [shape = 'u8[512]{0}', space=vmem, size = 0x400, scoped, tag = 'input window, operand 4, single buffered']
    #allocation5 [shape = 's32[1]{0}', space=sflag, size = 0x4, scoped, tag = 'scoped memory for tpu_custom_call.1']
    #allocation6 [shape = 's32[1]{0}', space=sflag, size = 0x4, scoped, tag = 'scoped memory for tpu_custom_call.1']
    #allocation7 [shape = 'u8[147456]{0}', space=vmem, size = 0x24000, scoped, tag = 'input window, operand 7, single buffered']
    #allocation8 [shape = 's32[1]{0}', space=sflag, size = 0x4, scoped, tag = 'scoped memory for tpu_custom_call.1']
    #allocation9 [shape = 'u8[262144]{0}', space=vmem, size = 0x40000, scoped, tag = 'output window, operand 0, single buffered']
    %14 = vsyncpa [#allocation5], 0
    %15 = vsyncpa [#allocation8], 0
    %16 = vsyncpa [#allocation6], 0
    // Predicated region
    $region2: #{tpu_custom_call.1} parent=1 // pred_check
      _
    $region3: #{tpu_custom_call.1} parent=1 // pred_check_branch
      %18 = sbr.rel (0) target = $region5
    $region4: #{tpu_custom_call.1} parent=1 // pred_region
      _
    $region5: #{tpu_custom_call.1} parent=1 // pred_fallthru
      _
    // Predicated region
    $region6: #{tpu_custom_call.1} parent=1 // pred_check
      _
    $region7: #{tpu_custom_call.1} parent=1 // pred_check_branch
      %20 = sbr.rel (0) target = $region9
    $region8: #{tpu_custom_call.1} parent=1 // pred_region
      _
    $region9: #{tpu_custom_call.1} parent=1 // pred_fallthru
      _
    // Predicated region
    $region10: #{tpu_custom_call.1} parent=1 // pred_check
      _
    $region11: #{tpu_custom_call.1} parent=1 // pred_check_branch
      %22 = sbr.rel (0) target = $region13
    $region12: #{tpu_custom_call.1} parent=1 // pred_region
      _
    $region13: #{tpu_custom_call.1} parent=1 // pred_fallthru
      _
    // Predicated region
    $region14: #{tpu_custom_call.1} parent=1 // pred_check
      _
    $region15: #{tpu_custom_call.1} parent=1 // pred_check_branch
      %24 = sbr.rel (0) target = $region17
    $region16: #{tpu_custom_call.1} parent=1 // pred_region
      _
    $region17: #{tpu_custom_call.1} parent=1 // pred_fallthru
      _
    // Predicated region
    $region18: #{tpu_custom_call.1} parent=1 // pred_check
      _
    $region19: #{tpu_custom_call.1} parent=1 // pred_check_branch
      %26 = sbr.rel (0) target = $region21
    $region20: #{tpu_custom_call.1} parent=1 // pred_region
      %s28 = ssub.s32 16, 16
      %29 = vsyncadd [#allocation5], %s28
      %s31 = sshll.u32 [#allocation4], 4
      %s32 = int_to_ptr.vmem [resolvable:$true] %s31
      %34 = dma.hbm_to_vmem [thread:$0]  %s4, 16, %s32, [#allocation5]
    $region21: #{tpu_custom_call.1} parent=1 // pred_fallthru
      _
    // Predicated region
    $region22: #{tpu_custom_call.1} parent=1 // pred_check
      _
    $region23: #{tpu_custom_call.1} parent=1 // pred_check_branch
      %36 = sbr.rel (0) target = $region25
    $region24: #{tpu_custom_call.1} parent=1 // pred_region
      _
    $region25: #{tpu_custom_call.1} parent=1 // pred_fallthru
      _
    // Predicated region
    $region26: #{tpu_custom_call.1} parent=1 // pred_check
      _
    $region27: #{tpu_custom_call.1} parent=1 // pred_check_branch
      %38 = sbr.rel (0) target = $region29
    $region28: #{tpu_custom_call.1} parent=1 // pred_region
      _
    $region29: #{tpu_custom_call.1} parent=1 // pred_fallthru
      _
    // Predicated region
    $region30: #{tpu_custom_call.1} parent=1 // pred_check
      _
    $region31: #{tpu_custom_call.1} parent=1 // pred_check_branch
      %40 = sbr.rel (0) target = $region33
    $region32: #{tpu_custom_call.1} parent=1 // pred_region
      %s42 = ssub.s32 4608, 4608
      %43 = vsyncadd [#allocation8], %s42
      %s44 = sshll.u32 [#allocation7], 4
      %s45 = int_to_ptr.vmem [resolvable:$true] %s44
      %50 = dma.hbm_to_vmem [thread:$0]  %s7, 4608, %s45, [#allocation8], 128, 128, 8
    $region33: #{tpu_custom_call.1} parent=1 // pred_fallthru
      _
    // Predicated region
    $region34: #{tpu_custom_call.1} parent=1 // pred_check
      _
    $region35: #{tpu_custom_call.1} parent=1 // pred_check_branch
      %52 = sbr.rel (0) target = $region37
    $region36: #{tpu_custom_call.1} parent=1 // pred_region
      _
    $region37: #{tpu_custom_call.1} parent=1 // pred_fallthru
      _
    // Predicated region
    $region38: #{tpu_custom_call.1} parent=1 // pred_check
      _
    $region39: #{tpu_custom_call.1} parent=1 // pred_check_branch
      %54 = sbr.rel (0) target = $region41
    $region40: #{tpu_custom_call.1} parent=1 // pred_region
      %55 = dma.done [#allocation5], 16
    $region41: #{tpu_custom_call.1} parent=1 // pred_fallthru
      _
    // Predicated region
    $region42: #{tpu_custom_call.1} parent=1 // pred_check
      _
    $region43: #{tpu_custom_call.1} parent=1 // pred_check_branch
      %57 = sbr.rel (0) target = $region45
    $region44: #{tpu_custom_call.1} parent=1 // pred_region
      %58 = dma.done [#allocation8], 4608
    $region45: #{tpu_custom_call.1} parent=1 // pred_fallthru
      _
    %vm59 = vcmask 523264
    %60 = vst.msk [vmem:[#allocation2] sm:$0xff] %vm59, 0.0
    %61 = vst.msk [vmem:[#allocation2 + $0x8] sm:$0xff] %vm59, 0.0
    %vm62 = vcmask 517120
    %63 = vst.msk [vmem:[#allocation2 + $0x10] sm:$0x3] %vm62, 0.0
    %64 = vst.msk [vmem:[#allocation2 + $0x18] sm:$0xff] %vm59, 0.0
    %65 = vst.msk [vmem:[#allocation2 + $0x20] sm:$0xff] %vm59, 0.0
    %66 = vst.msk [vmem:[#allocation2 + $0x28] sm:$0x3] %vm62, 0.0
    %67 = vst.msk [vmem:[#allocation2 + $0x30] sm:$0xff] %vm59, 0.0
    %68 = vst.msk [vmem:[#allocation2 + $0x38] sm:$0xff] %vm59, 0.0
    %69 = vst.msk [vmem:[#allocation2 + $0x40] sm:$0x3] %vm62, 0.0
    %70 = vst.msk [vmem:[#allocation2 + $0x48] sm:$0xff] %vm59, 0.0
    %71 = vst.msk [vmem:[#allocation2 + $0x50] sm:$0xff] %vm59, 0.0
    %72 = vst.msk [vmem:[#allocation2 + $0x58] sm:$0x3] %vm62, 0.0
    %73 = vst.msk [vmem:[#allocation2 + $0x60] sm:$0xff] %vm59, 0.0
    %74 = vst.msk [vmem:[#allocation2 + $0x68] sm:$0xff] %vm59, 0.0
    %75 = vst.msk [vmem:[#allocation2 + $0x70] sm:$0x3] %vm62, 0.0
    %76 = vst.msk [vmem:[#allocation2 + $0x78] sm:$0xff] %vm59, 0.0
    %77 = vst.msk [vmem:[#allocation2 + $0x80] sm:$0xff] %vm59, 0.0
    %78 = vst.msk [vmem:[#allocation2 + $0x88] sm:$0x3] %vm62, 0.0
    %79 = vst.msk [vmem:[#allocation2 + $0x90] sm:$0xff] %vm59, 0.0
    %80 = vst.msk [vmem:[#allocation2 + $0x98] sm:$0xff] %vm59, 0.0
    %81 = vst.msk [vmem:[#allocation2 + $0xa0] sm:$0x3] %vm62, 0.0
    %82 = vst.msk [vmem:[#allocation2 + $0xa8] sm:$0xff] %vm59, 0.0
    %83 = vst.msk [vmem:[#allocation2 + $0xb0] sm:$0xff] %vm59, 0.0
    %84 = vst.msk [vmem:[#allocation2 + $0xb8] sm:$0x3] %vm62, 0.0
    %85 = vst.msk [vmem:[#allocation2 + $0xc0] sm:$0xff] %vm59, 0.0
    %86 = vst.msk [vmem:[#allocation2 + $0xc8] sm:$0xff] %vm59, 0.0
    %87 = vst.msk [vmem:[#allocation2 + $0xd0] sm:$0x3] %vm62, 0.0
    %88 = vst.msk [vmem:[#allocation2 + $0xd8] sm:$0xff] %vm59, 0.0
    %89 = vst.msk [vmem:[#allocation2 + $0xe0] sm:$0xff] %vm59, 0.0
    %90 = vst.msk [vmem:[#allocation2 + $0xe8] sm:$0x3] %vm62, 0.0
    %91 = vst.msk [vmem:[#allocation2 + $0xf0] sm:$0xff] %vm59, 0.0
    %92 = vst.msk [vmem:[#allocation2 + $0xf8] sm:$0xff] %vm59, 0.0
    %93 = vst.msk [vmem:[#allocation2 + $0x100] sm:$0x3] %vm62, 0.0
    %94 = vst.msk [vmem:[#allocation2 + $0x108] sm:$0xff] %vm59, 0.0
    %95 = vst.msk [vmem:[#allocation2 + $0x110] sm:$0xff] %vm59, 0.0
    %96 = vst.msk [vmem:[#allocation2 + $0x118] sm:$0x3] %vm62, 0.0
    %97 = vst.msk [vmem:[#allocation2 + $0x120] sm:$0xff] %vm59, 0.0
    %98 = vst.msk [vmem:[#allocation2 + $0x128] sm:$0xff] %vm59, 0.0
    %99 = vst.msk [vmem:[#allocation2 + $0x130] sm:$0x3] %vm62, 0.0
    %100 = vst.msk [vmem:[#allocation2 + $0x138] sm:$0xff] %vm59, 0.0
    %101 = vst.msk [vmem:[#allocation2 + $0x140] sm:$0xff] %vm59, 0.0
    %102 = vst.msk [vmem:[#allocation2 + $0x148] sm:$0x3] %vm62, 0.0
    %103 = vst.msk [vmem:[#allocation2 + $0x150] sm:$0xff] %vm59, 0.0
    %104 = vst.msk [vmem:[#allocation2 + $0x158] sm:$0xff] %vm59, 0.0
    %105 = vst.msk [vmem:[#allocation2 + $0x160] sm:$0x3] %vm62, 0.0
    %106 = vst.msk [vmem:[#allocation2 + $0x168] sm:$0xff] %vm59, 0.0
    %107 = vst.msk [vmem:[#allocation2 + $0x170] sm:$0xff] %vm59, 0.0
    %108 = vst.msk [vmem:[#allocation2 + $0x178] sm:$0x3] %vm62, 0.0
    %109 = vst.msk [vmem:[#allocation2 + $0x180] sm:$0xff] %vm59, 0.0
    %110 = vst.msk [vmem:[#allocation2 + $0x188] sm:$0xff] %vm59, 0.0
    %111 = vst.msk [vmem:[#allocation2 + $0x190] sm:$0x3] %vm62, 0.0
    %112 = vst.msk [vmem:[#allocation2 + $0x198] sm:$0xff] %vm59, 0.0
    %113 = vst.msk [vmem:[#allocation2 + $0x1a0] sm:$0xff] %vm59, 0.0
    %114 = vst.msk [vmem:[#allocation2 + $0x1a8] sm:$0x3] %vm62, 0.0
    %115 = vst.msk [vmem:[#allocation2 + $0x1b0] sm:$0xff] %vm59, 0.0
    %116 = vst.msk [vmem:[#allocation2 + $0x1b8] sm:$0xff] %vm59, 0.0
    %117 = vst.msk [vmem:[#allocation2 + $0x1c0] sm:$0x3] %vm62, 0.0
    %118 = vst.msk [vmem:[#allocation2 + $0x1c8] sm:$0xff] %vm59, 0.0
    %119 = vst.msk [vmem:[#allocation2 + $0x1d0] sm:$0xff] %vm59, 0.0
    %120 = vst.msk [vmem:[#allocation2 + $0x1d8] sm:$0x3] %vm62, 0.0
    %121 = vst.msk [vmem:[#allocation2 + $0x1e0] sm:$0xff] %vm59, 0.0
    %122 = vst.msk [vmem:[#allocation2 + $0x1e8] sm:$0xff] %vm59, 0.0
    %123 = vst.msk [vmem:[#allocation2 + $0x1f0] sm:$0x3] %vm62, 0.0
    %124 = vst.msk [vmem:[#allocation2 + $0x1f8] sm:$0xff] %vm59, 0.0
    %125 = vst.msk [vmem:[#allocation2 + $0x200] sm:$0xff] %vm59, 0.0
    %126 = vst.msk [vmem:[#allocation2 + $0x208] sm:$0x3] %vm62, 0.0
    %127 = vst.msk [vmem:[#allocation2 + $0x210] sm:$0xff] %vm59, 0.0
    %128 = vst.msk [vmem:[#allocation2 + $0x218] sm:$0xff] %vm59, 0.0
    %129 = vst.msk [vmem:[#allocation2 + $0x220] sm:$0x3] %vm62, 0.0
    %130 = vst.msk [vmem:[#allocation2 + $0x228] sm:$0xff] %vm59, 0.0
    %131 = vst.msk [vmem:[#allocation2 + $0x230] sm:$0xff] %vm59, 0.0
    %132 = vst.msk [vmem:[#allocation2 + $0x238] sm:$0x3] %vm62, 0.0
    %133 = vst.msk [vmem:[#allocation2 + $0x240] sm:$0xff] %vm59, 0.0
    %134 = vst.msk [vmem:[#allocation2 + $0x248] sm:$0xff] %vm59, 0.0
    %135 = vst.msk [vmem:[#allocation2 + $0x250] sm:$0x3] %vm62, 0.0
    %136 = vst.msk [vmem:[#allocation2 + $0x258] sm:$0xff] %vm59, 0.0
    %137 = vst.msk [vmem:[#allocation2 + $0x260] sm:$0xff] %vm59, 0.0
    %138 = vst.msk [vmem:[#allocation2 + $0x268] sm:$0x3] %vm62, 0.0
    %139 = vst.msk [vmem:[#allocation2 + $0x270] sm:$0xff] %vm59, 0.0
    %140 = vst.msk [vmem:[#allocation2 + $0x278] sm:$0xff] %vm59, 0.0
    %141 = vst.msk [vmem:[#allocation2 + $0x280] sm:$0x3] %vm62, 0.0
    %142 = vst.msk [vmem:[#allocation2 + $0x288] sm:$0xff] %vm59, 0.0
    %143 = vst.msk [vmem:[#allocation2 + $0x290] sm:$0xff] %vm59, 0.0
    %144 = vst.msk [vmem:[#allocation2 + $0x298] sm:$0x3] %vm62, 0.0
    %145 = vst.msk [vmem:[#allocation2 + $0x2a0] sm:$0xff] %vm59, 0.0
    %146 = vst.msk [vmem:[#allocation2 + $0x2a8] sm:$0xff] %vm59, 0.0
    %147 = vst.msk [vmem:[#allocation2 + $0x2b0] sm:$0x3] %vm62, 0.0
    %148 = vst.msk [vmem:[#allocation2 + $0x2b8] sm:$0xff] %vm59, 0.0
    %149 = vst.msk [vmem:[#allocation2 + $0x2c0] sm:$0xff] %vm59, 0.0
    %150 = vst.msk [vmem:[#allocation2 + $0x2c8] sm:$0x3] %vm62, 0.0
    %151 = vst.msk [vmem:[#allocation2 + $0x2d0] sm:$0xff] %vm59, 0.0
    %152 = vst.msk [vmem:[#allocation2 + $0x2d8] sm:$0xff] %vm59, 0.0
    %153 = vst.msk [vmem:[#allocation2 + $0x2e0] sm:$0x3] %vm62, 0.0
    %154 = vst.msk [vmem:[#allocation2 + $0x2e8] sm:$0xff] %vm59, 0.0
    %155 = vst.msk [vmem:[#allocation2 + $0x2f0] sm:$0xff] %vm59, 0.0
    %156 = vst.msk [vmem:[#allocation2 + $0x2f8] sm:$0x3] %vm62, 0.0
    %157 = vst.msk [vmem:[#allocation2 + $0x300] sm:$0xff] %vm59, 0.0
    %158 = vst.msk [vmem:[#allocation2 + $0x308] sm:$0xff] %vm59, 0.0
    %159 = vst.msk [vmem:[#allocation2 + $0x310] sm:$0x3] %vm62, 0.0
    %160 = vst.msk [vmem:[#allocation2 + $0x318] sm:$0xff] %vm59, 0.0
    %161 = vst.msk [vmem:[#allocation2 + $0x320] sm:$0xff] %vm59, 0.0
    %162 = vst.msk [vmem:[#allocation2 + $0x328] sm:$0x3] %vm62, 0.0
    %163 = vst.msk [vmem:[#allocation2 + $0x330] sm:$0xff] %vm59, 0.0
    %164 = vst.msk [vmem:[#allocation2 + $0x338] sm:$0xff] %vm59, 0.0
    %165 = vst.msk [vmem:[#allocation2 + $0x340] sm:$0x3] %vm62, 0.0
    %166 = vst.msk [vmem:[#allocation2 + $0x348] sm:$0xff] %vm59, 0.0
    %167 = vst.msk [vmem:[#allocation2 + $0x350] sm:$0xff] %vm59, 0.0
    %168 = vst.msk [vmem:[#allocation2 + $0x358] sm:$0x3] %vm62, 0.0
    %v169 = vld [vmem:[%s0] sm:$0xff]
    %v170 = vld [vmem:[%s0 + $0x8] sm:$0xff]
    %v171 = vld [vmem:[%s0 + $0x10] sm:$0xff]
    %v172 = vld [vmem:[%s0 + $0x18] sm:$0xff]
    %v173 = vld [vmem:[%s0 + $0x20] sm:$0xff]
    %v174 = vld [vmem:[%s0 + $0x28] sm:$0xff]
    %v175 = vld [vmem:[%s0 + $0x30] sm:$0xff]
    %v176 = vld [vmem:[%s0 + $0x38] sm:$0xff]
    %v177 = vld [vmem:[%s0 + $0x40] sm:$0xff]
    %v178 = vld [vmem:[%s0 + $0x48] sm:$0xff]
    %v179 = vld [vmem:[%s0 + $0x50] sm:$0xff]
    %v180 = vld [vmem:[%s0 + $0x58] sm:$0xff]
    %v181 = vld [vmem:[%s0 + $0x60] sm:$0xff]
    %v182 = vld [vmem:[%s0 + $0x68] sm:$0xff]
    %v183 = vld [vmem:[%s0 + $0x70] sm:$0xff]
    %v184 = vld [vmem:[%s0 + $0x78] sm:$0xff]
    %v185 = vld [vmem:[%s0 + $0x80] sm:$0xff]
    %v186 = vld [vmem:[%s0 + $0x88] sm:$0xff]
    %v187 = vld [vmem:[%s0 + $0x90] sm:$0xff]
    %v188 = vld [vmem:[%s0 + $0x98] sm:$0xff]
    %v189 = vld [vmem:[%s0 + $0xa0] sm:$0xff]
    %v190 = vld [vmem:[%s0 + $0xa8] sm:$0xff]
    %v191 = vld [vmem:[%s0 + $0xb0] sm:$0xff]
    %v192 = vld [vmem:[%s0 + $0xb8] sm:$0xff]
    %v193 = vld [vmem:[%s0 + $0xc0] sm:$0xff]
    %v194 = vld [vmem:[%s0 + $0xc8] sm:$0xff]
    %v195 = vld [vmem:[%s0 + $0xd0] sm:$0xff]
    %v196 = vld [vmem:[%s0 + $0xd8] sm:$0xff]
    %v197 = vld [vmem:[%s0 + $0xe0] sm:$0xff]
    %v198 = vld [vmem:[%s0 + $0xe8] sm:$0xff]
    %v199 = vld [vmem:[%s0 + $0xf0] sm:$0xff]
    %v200 = vld [vmem:[%s0 + $0xf8] sm:$0xff]
    %v201 = vld [vmem:[%s0 + $0x100] sm:$0xff]
    %v202 = vld [vmem:[%s0 + $0x108] sm:$0xff]
    %v203 = vld [vmem:[%s0 + $0x110] sm:$0xff]
    %v204 = vld [vmem:[%s0 + $0x118] sm:$0xff]
    %v205 = vld [vmem:[%s0 + $0x120] sm:$0xff]
    %v206 = vld [vmem:[%s0 + $0x128] sm:$0xff]
    %v207 = vld [vmem:[%s0 + $0x130] sm:$0xff]
    %v208 = vld [vmem:[%s0 + $0x138] sm:$0xff]
    %v209 = vld [vmem:[%s0 + $0x140] sm:$0xff]
    %v210 = vld [vmem:[%s0 + $0x148] sm:$0xff]
    %v211 = vld [vmem:[%s0 + $0x150] sm:$0xff]
    %v212 = vld [vmem:[%s0 + $0x158] sm:$0xff]
    %v213 = vld [vmem:[%s0 + $0x160] sm:$0xff]
    %v214 = vld [vmem:[%s0 + $0x168] sm:$0xff]
    %v215 = vld [vmem:[%s0 + $0x170] sm:$0xff]
    %v216 = vld [vmem:[%s0 + $0x178] sm:$0xff]
    %v217 = vld [vmem:[%s0 + $0x180] sm:$0xff]
    %v218 = vld [vmem:[%s0 + $0x188] sm:$0xff]
    %v219 = vld [vmem:[%s0 + $0x190] sm:$0xff]
    %v220 = vld [vmem:[%s0 + $0x198] sm:$0xff]
    %v221 = vld [vmem:[%s0 + $0x1a0] sm:$0xff]
    %v222 = vld [vmem:[%s0 + $0x1a8] sm:$0xff]
    %v223 = vld [vmem:[%s0 + $0x1b0] sm:$0xff]
    %v224 = vld [vmem:[%s0 + $0x1b8] sm:$0xff]
    %v225 = vld [vmem:[%s0 + $0x1c0] sm:$0xff]
    %v226 = vld [vmem:[%s0 + $0x1c8] sm:$0xff]
    %v227 = vld [vmem:[%s0 + $0x1d0] sm:$0xff]
    %v228 = vld [vmem:[%s0 + $0x1d8] sm:$0xff]
    %v229 = vld [vmem:[%s0 + $0x1e0] sm:$0xff]
    %v230 = vld [vmem:[%s0 + $0x1e8] sm:$0xff]
    %v231 = vld [vmem:[%s0 + $0x1f0] sm:$0xff]
    %v232 = vld [vmem:[%s0 + $0x1f8] sm:$0xff]
    %vm233 = vcmp.gt.f32.partialorder %v169, 0.0
    %vm234 = vcmp.gt.f32.partialorder %v170, 0.0
    %vm235 = vcmp.gt.f32.partialorder %v171, 0.0
    %vm236 = vcmp.gt.f32.partialorder %v172, 0.0
    %vm237 = vcmp.gt.f32.partialorder %v173, 0.0
    %vm238 = vcmp.gt.f32.partialorder %v174, 0.0
    %vm239 = vcmp.gt.f32.partialorder %v175, 0.0
    %vm240 = vcmp.gt.f32.partialorder %v176, 0.0
    %vm241 = vcmp.gt.f32.partialorder %v177, 0.0
    %vm242 = vcmp.gt.f32.partialorder %v178, 0.0
    %vm243 = vcmp.gt.f32.partialorder %v179, 0.0
    %vm244 = vcmp.gt.f32.partialorder %v180, 0.0
    %vm245 = vcmp.gt.f32.partialorder %v181, 0.0
    %vm246 = vcmp.gt.f32.partialorder %v182, 0.0
    %vm247 = vcmp.gt.f32.partialorder %v183, 0.0
    %vm248 = vcmp.gt.f32.partialorder %v184, 0.0
    %vm249 = vcmp.gt.f32.partialorder %v185, 0.0
    %vm250 = vcmp.gt.f32.partialorder %v186, 0.0
    %vm251 = vcmp.gt.f32.partialorder %v187, 0.0
    %vm252 = vcmp.gt.f32.partialorder %v188, 0.0
    %vm253 = vcmp.gt.f32.partialorder %v189, 0.0
    %vm254 = vcmp.gt.f32.partialorder %v190, 0.0
    %vm255 = vcmp.gt.f32.partialorder %v191, 0.0
    %vm256 = vcmp.gt.f32.partialorder %v192, 0.0
    %vm257 = vcmp.gt.f32.partialorder %v193, 0.0
    %vm258 = vcmp.gt.f32.partialorder %v194, 0.0
    %vm259 = vcmp.gt.f32.partialorder %v195, 0.0
    %vm260 = vcmp.gt.f32.partialorder %v196, 0.0
    %vm261 = vcmp.gt.f32.partialorder %v197, 0.0
    %vm262 = vcmp.gt.f32.partialorder %v198, 0.0
    %vm263 = vcmp.gt.f32.partialorder %v199, 0.0
    %vm264 = vcmp.gt.f32.partialorder %v200, 0.0
    %vm265 = vcmp.gt.f32.partialorder %v201, 0.0
    %vm266 = vcmp.gt.f32.partialorder %v202, 0.0
    %vm267 = vcmp.gt.f32.partialorder %v203, 0.0
    %vm268 = vcmp.gt.f32.partialorder %v204, 0.0
    %vm269 = vcmp.gt.f32.partialorder %v205, 0.0
    %vm270 = vcmp.gt.f32.partialorder %v206, 0.0
    %vm271 = vcmp.gt.f32.partialorder %v207, 0.0
    %vm272 = vcmp.gt.f32.partialorder %v208, 0.0
    %vm273 = vcmp.gt.f32.partialorder %v209, 0.0
    %vm274 = vcmp.gt.f32.partialorder %v210, 0.0
    %vm275 = vcmp.gt.f32.partialorder %v211, 0.0
    %vm276 = vcmp.gt.f32.partialorder %v212, 0.0
    %vm277 = vcmp.gt.f32.partialorder %v213, 0.0
    %vm278 = vcmp.gt.f32.partialorder %v214, 0.0
    %vm279 = vcmp.gt.f32.partialorder %v215, 0.0
    %vm280 = vcmp.gt.f32.partialorder %v216, 0.0
    %vm281 = vcmp.gt.f32.partialorder %v217, 0.0
    %vm282 = vcmp.gt.f32.partialorder %v218, 0.0
    %vm283 = vcmp.gt.f32.partialorder %v219, 0.0
    %vm284 = vcmp.gt.f32.partialorder %v220, 0.0
    %vm285 = vcmp.gt.f32.partialorder %v221, 0.0
    %vm286 = vcmp.gt.f32.partialorder %v222, 0.0
    %vm287 = vcmp.gt.f32.partialorder %v223, 0.0
    %vm288 = vcmp.gt.f32.partialorder %v224, 0.0
    %vm289 = vcmp.gt.f32.partialorder %v225, 0.0
    %vm290 = vcmp.gt.f32.partialorder %v226, 0.0
    %vm291 = vcmp.gt.f32.partialorder %v227, 0.0
    %vm292 = vcmp.gt.f32.partialorder %v228, 0.0
    %vm293 = vcmp.gt.f32.partialorder %v229, 0.0
    %vm294 = vcmp.gt.f32.partialorder %v230, 0.0
    %vm295 = vcmp.gt.f32.partialorder %v231, 0.0
    %vm296 = vcmp.gt.f32.partialorder %v232, 0.0
    %v297 = vmul.f32 %v169, 1.442695
    %v298 = vpow.pop %v297
    %v299 = vmul.f32 %v170, 1.442695
    %v300 = vpow.pop %v299
    %v301 = vmul.f32 %v171, 1.442695
    %v302 = vpow.pop %v301
    %v303 = vmul.f32 %v172, 1.442695
    %v304 = vpow.pop %v303
    %v305 = vmul.f32 %v173, 1.442695
    %v306 = vpow.pop %v305
    %v307 = vmul.f32 %v174, 1.442695
    %v308 = vpow.pop %v307
    %v309 = vmul.f32 %v175, 1.442695
    %v310 = vpow.pop %v309
    %v311 = vmul.f32 %v176, 1.442695
    %v312 = vpow.pop %v311
    %v313 = vmul.f32 %v177, 1.442695
    %v314 = vpow.pop %v313
    %v315 = vmul.f32 %v178, 1.442695
    %v316 = vpow.pop %v315
    %v317 = vmul.f32 %v179, 1.442695
    %v318 = vpow.pop %v317
    %v319 = vmul.f32 %v180, 1.442695
    %v320 = vpow.pop %v319
    %v321 = vmul.f32 %v181, 1.442695
    %v322 = vpow.pop %v321
    %v323 = vmul.f32 %v182, 1.442695
    %v324 = vpow.pop %v323
    %v325 = vmul.f32 %v183, 1.442695
    %v326 = vpow.pop %v325
    %v327 = vmul.f32 %v184, 1.442695
    %v328 = vpow.pop %v327
    %v329 = vmul.f32 %v185, 1.442695
    %v330 = vpow.pop %v329
    %v331 = vmul.f32 %v186, 1.442695
    %v332 = vpow.pop %v331
    %v333 = vmul.f32 %v187, 1.442695
    %v334 = vpow.pop %v333
    %v335 = vmul.f32 %v188, 1.442695
    %v336 = vpow.pop %v335
    %v337 = vmul.f32 %v189, 1.442695
    %v338 = vpow.pop %v337
    %v339 = vmul.f32 %v190, 1.442695
    %v340 = vpow.pop %v339
    %v341 = vmul.f32 %v191, 1.442695
    %v342 = vpow.pop %v341
    %v343 = vmul.f32 %v192, 1.442695
    %v344 = vpow.pop %v343
    %v345 = vmul.f32 %v193, 1.442695
    %v346 = vpow.pop %v345
    %v347 = vmul.f32 %v194, 1.442695
    %v348 = vpow.pop %v347
    %v349 = vmul.f32 %v195, 1.442695
    %v350 = vpow.pop %v349
    %v351 = vmul.f32 %v196, 1.442695
    %v352 = vpow.pop %v351
    %v353 = vmul.f32 %v197, 1.442695
    %v354 = vpow.pop %v353
    %v355 = vmul.f32 %v198, 1.442695
    %v356 = vpow.pop %v355
    %v357 = vmul.f32 %v199, 1.442695
    %v358 = vpow.pop %v357
    %v359 = vmul.f32 %v200, 1.442695
    %v360 = vpow.pop %v359
    %v361 = vmul.f32 %v201, 1.442695
    %v362 = vpow.pop %v361
    %v363 = vmul.f32 %v202, 1.442695
    %v364 = vpow.pop %v363
    %v365 = vmul.f32 %v203, 1.442695
    %v366 = vpow.pop %v365
    %v367 = vmul.f32 %v204, 1.442695
    %v368 = vpow.pop %v367
    %v369 = vmul.f32 %v205, 1.442695
    %v370 = vpow.pop %v369
    %v371 = vmul.f32 %v206, 1.442695
    %v372 = vpow.pop %v371
    %v373 = vmul.f32 %v207, 1.442695
    %v374 = vpow.pop %v373
    %v375 = vmul.f32 %v208, 1.442695
    %v376 = vpow.pop %v375
    %v377 = vmul.f32 %v209, 1.442695
    %v378 = vpow.pop %v377
    %v379 = vmul.f32 %v210, 1.442695
    %v380 = vpow.pop %v379
    %v381 = vmul.f32 %v211, 1.442695
    %v382 = vpow.pop %v381
    %v383 = vmul.f32 %v212, 1.442695
    %v384 = vpow.pop %v383
    %v385 = vmul.f32 %v213, 1.442695
    %v386 = vpow.pop %v385
    %v387 = vmul.f32 %v214, 1.442695
    %v388 = vpow.pop %v387
    %v389 = vmul.f32 %v215, 1.442695
    %v390 = vpow.pop %v389
    %v391 = vmul.f32 %v216, 1.442695
    %v392 = vpow.pop %v391
    %v393 = vmul.f32 %v217, 1.442695
    %v394 = vpow.pop %v393
    %v395 = vmul.f32 %v218, 1.442695
    %v396 = vpow.pop %v395
    %v397 = vmul.f32 %v219, 1.442695
    %v398 = vpow.pop %v397
    %v399 = vmul.f32 %v220, 1.442695
    %v400 = vpow.pop %v399
    %v401 = vmul.f32 %v221, 1.442695
    %v402 = vpow.pop %v401
    %v403 = vmul.f32 %v222, 1.442695
    %v404 = vpow.pop %v403
    %v405 = vmul.f32 %v223, 1.442695
    %v406 = vpow.pop %v405
    %v407 = vmul.f32 %v224, 1.442695
    %v408 = vpow.pop %v407
    %v409 = vmul.f32 %v225, 1.442695
    %v410 = vpow.pop %v409
    %v411 = vmul.f32 %v226, 1.442695
    %v412 = vpow.pop %v411
    %v413 = vmul.f32 %v227, 1.442695
    %v414 = vpow.pop %v413
    %v415 = vmul.f32 %v228, 1.442695
    %v416 = vpow.pop %v415
    %v417 = vmul.f32 %v229, 1.442695
    %v418 = vpow.pop %v417
    %v419 = vmul.f32 %v230, 1.442695
    %v420 = vpow.pop %v419
    %v421 = vmul.f32 %v231, 1.442695
    %v422 = vpow.pop %v421
    %v423 = vmul.f32 %v232, 1.442695
    %v424 = vpow.pop %v423
    %v425 = vsub.f32 %v298, 1.0
    %v426 = vsub.f32 %v300, 1.0
    %v427 = vsub.f32 %v302, 1.0
    %v428 = vsub.f32 %v304, 1.0
    %v429 = vsub.f32 %v306, 1.0
    %v430 = vsub.f32 %v308, 1.0
    %v431 = vsub.f32 %v310, 1.0
    %v432 = vsub.f32 %v312, 1.0
    %v433 = vsub.f32 %v314, 1.0
    %v434 = vsub.f32 %v316, 1.0
    %v435 = vsub.f32 %v318, 1.0
    %v436 = vsub.f32 %v320, 1.0
    %v437 = vsub.f32 %v322, 1.0
    %v438 = vsub.f32 %v324, 1.0
    %v439 = vsub.f32 %v326, 1.0
    %v440 = vsub.f32 %v328, 1.0
    %v441 = vsub.f32 %v330, 1.0
    %v442 = vsub.f32 %v332, 1.0
    %v443 = vsub.f32 %v334, 1.0
    %v444 = vsub.f32 %v336, 1.0
    %v445 = vsub.f32 %v338, 1.0
    %v446 = vsub.f32 %v340, 1.0
    %v447 = vsub.f32 %v342, 1.0
    %v448 = vsub.f32 %v344, 1.0
    %v449 = vsub.f32 %v346, 1.0
    %v450 = vsub.f32 %v348, 1.0
    %v451 = vsub.f32 %v350, 1.0
    %v452 = vsub.f32 %v352, 1.0
    %v453 = vsub.f32 %v354, 1.0
    %v454 = vsub.f32 %v356, 1.0
    %v455 = vsub.f32 %v358, 1.0
    %v456 = vsub.f32 %v360, 1.0
    %v457 = vsub.f32 %v362, 1.0
    %v458 = vsub.f32 %v364, 1.0
    %v459 = vsub.f32 %v366, 1.0
    %v460 = vsub.f32 %v368, 1.0
    %v461 = vsub.f32 %v370, 1.0
    %v462 = vsub.f32 %v372, 1.0
    %v463 = vsub.f32 %v374, 1.0
    %v464 = vsub.f32 %v376, 1.0
    %v465 = vsub.f32 %v378, 1.0
    %v466 = vsub.f32 %v380, 1.0
    %v467 = vsub.f32 %v382, 1.0
    %v468 = vsub.f32 %v384, 1.0
    %v469 = vsub.f32 %v386, 1.0
    %v470 = vsub.f32 %v388, 1.0
    %v471 = vsub.f32 %v390, 1.0
    %v472 = vsub.f32 %v392, 1.0
    %v473 = vsub.f32 %v394, 1.0
    %v474 = vsub.f32 %v396, 1.0
    %v475 = vsub.f32 %v398, 1.0
    %v476 = vsub.f32 %v400, 1.0
    %v477 = vsub.f32 %v402, 1.0
    %v478 = vsub.f32 %v404, 1.0
    %v479 = vsub.f32 %v406, 1.0
    %v480 = vsub.f32 %v408, 1.0
    %v481 = vsub.f32 %v410, 1.0
    %v482 = vsub.f32 %v412, 1.0
    %v483 = vsub.f32 %v414, 1.0
    %v484 = vsub.f32 %v416, 1.0
    %v485 = vsub.f32 %v418, 1.0
    %v486 = vsub.f32 %v420, 1.0
    %v487 = vsub.f32 %v422, 1.0
    %v488 = vsub.f32 %v424, 1.0
    %v489 = vsel %vm233, %v169, %v425
    %v490 = vsel %vm234, %v170, %v426
    %v491 = vsel %vm235, %v171, %v427
    %v492 = vsel %vm236, %v172, %v428
    %v493 = vsel %vm237, %v173, %v429
    %v494 = vsel %vm238, %v174, %v430
    %v495 = vsel %vm239, %v175, %v431
    %v496 = vsel %vm240, %v176, %v432
    %v497 = vsel %vm241, %v177, %v433
    %v498 = vsel %vm242, %v178, %v434
    %v499 = vsel %vm243, %v179, %v435
    %v500 = vsel %vm244, %v180, %v436
    %v501 = vsel %vm245, %v181, %v437
    %v502 = vsel %vm246, %v182, %v438
    %v503 = vsel %vm247, %v183, %v439
    %v504 = vsel %vm248, %v184, %v440
    %v505 = vsel %vm249, %v185, %v441
    %v506 = vsel %vm250, %v186, %v442
    %v507 = vsel %vm251, %v187, %v443
    %v508 = vsel %vm252, %v188, %v444
    %v509 = vsel %vm253, %v189, %v445
    %v510 = vsel %vm254, %v190, %v446
    %v511 = vsel %vm255, %v191, %v447
    %v512 = vsel %vm256, %v192, %v448
    %v513 = vsel %vm257, %v193, %v449
    %v514 = vsel %vm258, %v194, %v450
    %v515 = vsel %vm259, %v195, %v451
    %v516 = vsel %vm260, %v196, %v452
    %v517 = vsel %vm261, %v197, %v453
    %v518 = vsel %vm262, %v198, %v454
    %v519 = vsel %vm263, %v199, %v455
    %v520 = vsel %vm264, %v200, %v456
    %v521 = vsel %vm265, %v201, %v457
    %v522 = vsel %vm266, %v202, %v458
    %v523 = vsel %vm267, %v203, %v459
    %v524 = vsel %vm268, %v204, %v460
    %v525 = vsel %vm269, %v205, %v461
    %v526 = vsel %vm270, %v206, %v462
    %v527 = vsel %vm271, %v207, %v463
    %v528 = vsel %vm272, %v208, %v464
    %v529 = vsel %vm273, %v209, %v465
    %v530 = vsel %vm274, %v210, %v466
    %v531 = vsel %vm275, %v211, %v467
    %v532 = vsel %vm276, %v212, %v468
    %v533 = vsel %vm277, %v213, %v469
    %v534 = vsel %vm278, %v214, %v470
    %v535 = vsel %vm279, %v215, %v471
    %v536 = vsel %vm280, %v216, %v472
    %v537 = vsel %vm281, %v217, %v473
    %v538 = vsel %vm282, %v218, %v474
    %v539 = vsel %vm283, %v219, %v475
    %v540 = vsel %vm284, %v220, %v476
    %v541 = vsel %vm285, %v221, %v477
    %v542 = vsel %vm286, %v222, %v478
    %v543 = vsel %vm287, %v223, %v479
    %v544 = vsel %vm288, %v224, %v480
    %v545 = vsel %vm289, %v225, %v481
    %v546 = vsel %vm290, %v226, %v482
    %v547 = vsel %vm291, %v227, %v483
    %v548 = vsel %vm292, %v228, %v484
    %v549 = vsel %vm293, %v229, %v485
    %v550 = vsel %vm294, %v230, %v486
    %v551 = vsel %vm295, %v231, %v487
    %v552 = vsel %vm296, %v232, %v488
    %s553 = scalar_lea.vmem [#allocation2], 24
    %vm554 = vcmask 261120
    %555 = vst.msk [vmem:[%s553 + $0x1] sm:$0xff] %vm554, %v489
    %556 = vst.msk [vmem:[%s553 + $0x9] sm:$0xff] %vm554, %v490
    %557 = vst.msk [vmem:[%s553 + $0x19] sm:$0xff] %vm554, %v491
    %558 = vst.msk [vmem:[%s553 + $0x21] sm:$0xff] %vm554, %v492
    %559 = vst.msk [vmem:[%s553 + $0x31] sm:$0xff] %vm554, %v493
    %560 = vst.msk [vmem:[%s553 + $0x39] sm:$0xff] %vm554, %v494
    %561 = vst.msk [vmem:[%s553 + $0x49] sm:$0xff] %vm554, %v495
    %562 = vst.msk [vmem:[%s553 + $0x51] sm:$0xff] %vm554, %v496
    %563 = vst.msk [vmem:[%s553 + $0x61] sm:$0xff] %vm554, %v497
    %564 = vst.msk [vmem:[%s553 + $0x69] sm:$0xff] %vm554, %v498
    %565 = vst.msk [vmem:[%s553 + $0x79] sm:$0xff] %vm554, %v499
    %566 = vst.msk [vmem:[%s553 + $0x81] sm:$0xff] %vm554, %v500
    %567 = vst.msk [vmem:[%s553 + $0x91] sm:$0xff] %vm554, %v501
    %568 = vst.msk [vmem:[%s553 + $0x99] sm:$0xff] %vm554, %v502
    %569 = vst.msk [vmem:[%s553 + $0xa9] sm:$0xff] %vm554, %v503
    %570 = vst.msk [vmem:[%s553 + $0xb1] sm:$0xff] %vm554, %v504
    %571 = vst.msk [vmem:[%s553 + $0xc1] sm:$0xff] %vm554, %v505
    %572 = vst.msk [vmem:[%s553 + $0xc9] sm:$0xff] %vm554, %v506
    %573 = vst.msk [vmem:[%s553 + $0xd9] sm:$0xff] %vm554, %v507
    %574 = vst.msk [vmem:[%s553 + $0xe1] sm:$0xff] %vm554, %v508
    %575 = vst.msk [vmem:[%s553 + $0xf1] sm:$0xff] %vm554, %v509
    %576 = vst.msk [vmem:[%s553 + $0xf9] sm:$0xff] %vm554, %v510
    %577 = vst.msk [vmem:[%s553 + $0x109] sm:$0xff] %vm554, %v511
    %578 = vst.msk [vmem:[%s553 + $0x111] sm:$0xff] %vm554, %v512
    %579 = vst.msk [vmem:[%s553 + $0x121] sm:$0xff] %vm554, %v513
    %580 = vst.msk [vmem:[%s553 + $0x129] sm:$0xff] %vm554, %v514
    %581 = vst.msk [vmem:[%s553 + $0x139] sm:$0xff] %vm554, %v515
    %582 = vst.msk [vmem:[%s553 + $0x141] sm:$0xff] %vm554, %v516
    %583 = vst.msk [vmem:[%s553 + $0x151] sm:$0xff] %vm554, %v517
    %584 = vst.msk [vmem:[%s553 + $0x159] sm:$0xff] %vm554, %v518
    %585 = vst.msk [vmem:[%s553 + $0x169] sm:$0xff] %vm554, %v519
    %586 = vst.msk [vmem:[%s553 + $0x171] sm:$0xff] %vm554, %v520
    %587 = vst.msk [vmem:[%s553 + $0x1b1] sm:$0xff] %vm554, %v521
    %588 = vst.msk [vmem:[%s553 + $0x1b9] sm:$0xff] %vm554, %v522
    %589 = vst.msk [vmem:[%s553 + $0x1c9] sm:$0xff] %vm554, %v523
    %590 = vst.msk [vmem:[%s553 + $0x1d1] sm:$0xff] %vm554, %v524
    %591 = vst.msk [vmem:[%s553 + $0x1e1] sm:$0xff] %vm554, %v525
    %592 = vst.msk [vmem:[%s553 + $0x1e9] sm:$0xff] %vm554, %v526
    %593 = vst.msk [vmem:[%s553 + $0x1f9] sm:$0xff] %vm554, %v527
    %594 = vst.msk [vmem:[%s553 + $0x201] sm:$0xff] %vm554, %v528
    %595 = vst.msk [vmem:[%s553 + $0x211] sm:$0xff] %vm554, %v529
    %596 = vst.msk [vmem:[%s553 + $0x219] sm:$0xff] %vm554, %v530
    %597 = vst.msk [vmem:[%s553 + $0x229] sm:$0xff] %vm554, %v531
    %598 = vst.msk [vmem:[%s553 + $0x231] sm:$0xff] %vm554, %v532
    %599 = vst.msk [vmem:[%s553 + $0x241] sm:$0xff] %vm554, %v533
    %600 = vst.msk [vmem:[%s553 + $0x249] sm:$0xff] %vm554, %v534
    %601 = vst.msk [vmem:[%s553 + $0x259] sm:$0xff] %vm554, %v535
    %602 = vst.msk [vmem:[%s553 + $0x261] sm:$0xff] %vm554, %v536
    %603 = vst.msk [vmem:[%s553 + $0x271] sm:$0xff] %vm554, %v537
    %604 = vst.msk [vmem:[%s553 + $0x279] sm:$0xff] %vm554, %v538
    %605 = vst.msk [vmem:[%s553 + $0x289] sm:$0xff] %vm554, %v539
    %606 = vst.msk [vmem:[%s553 + $0x291] sm:$0xff] %vm554, %v540
    %607 = vst.msk [vmem:[%s553 + $0x2a1] sm:$0xff] %vm554, %v541
    %608 = vst.msk [vmem:[%s553 + $0x2a9] sm:$0xff] %vm554, %v542
    %609 = vst.msk [vmem:[%s553 + $0x2b9] sm:$0xff] %vm554, %v543
    %610 = vst.msk [vmem:[%s553 + $0x2c1] sm:$0xff] %vm554, %v544
    %611 = vst.msk [vmem:[%s553 + $0x2d1] sm:$0xff] %vm554, %v545
    %612 = vst.msk [vmem:[%s553 + $0x2d9] sm:$0xff] %vm554, %v546
    %613 = vst.msk [vmem:[%s553 + $0x2e9] sm:$0xff] %vm554, %v547
    %614 = vst.msk [vmem:[%s553 + $0x2f1] sm:$0xff] %vm554, %v548
    %615 = vst.msk [vmem:[%s553 + $0x301] sm:$0xff] %vm554, %v549
    %616 = vst.msk [vmem:[%s553 + $0x309] sm:$0xff] %vm554, %v550
    %617 = vst.msk [vmem:[%s553 + $0x319] sm:$0xff] %vm554, %v551
    %618 = vst.msk [vmem:[%s553 + $0x321] sm:$0xff] %vm554, %v552
    %v619 = vld [vmem:[%s1] sm:$0xff]
    %v620 = vld [vmem:[%s1 + $0x8] sm:$0xff]
    %v621 = vld [vmem:[%s1 + $0x10] sm:$0xff]
    %v622 = vld [vmem:[%s1 + $0x18] sm:$0xff]
    %v623 = vld [vmem:[%s1 + $0x20] sm:$0xff]
    %v624 = vld [vmem:[%s1 + $0x28] sm:$0xff]
    %v625 = vld [vmem:[%s1 + $0x30] sm:$0xff]
    %v626 = vld [vmem:[%s1 + $0x38] sm:$0xff]
    %v627 = vld [vmem:[%s1 + $0x40] sm:$0xff]
    %v628 = vld [vmem:[%s1 + $0x48] sm:$0xff]
    %v629 = vld [vmem:[%s1 + $0x50] sm:$0xff]
    %v630 = vld [vmem:[%s1 + $0x58] sm:$0xff]
    %v631 = vld [vmem:[%s1 + $0x60] sm:$0xff]
    %v632 = vld [vmem:[%s1 + $0x68] sm:$0xff]
    %v633 = vld [vmem:[%s1 + $0x70] sm:$0xff]
    %v634 = vld [vmem:[%s1 + $0x78] sm:$0xff]
    %v635 = vld [vmem:[%s1 + $0x80] sm:$0xff]
    %v636 = vld [vmem:[%s1 + $0x88] sm:$0xff]
    %v637 = vld [vmem:[%s1 + $0x90] sm:$0xff]
    %v638 = vld [vmem:[%s1 + $0x98] sm:$0xff]
    %v639 = vld [vmem:[%s1 + $0xa0] sm:$0xff]
    %v640 = vld [vmem:[%s1 + $0xa8] sm:$0xff]
    %v641 = vld [vmem:[%s1 + $0xb0] sm:$0xff]
    %v642 = vld [vmem:[%s1 + $0xb8] sm:$0xff]
    %v643 = vld [vmem:[%s1 + $0xc0] sm:$0xff]
    %v644 = vld [vmem:[%s1 + $0xc8] sm:$0xff]
    %v645 = vld [vmem:[%s1 + $0xd0] sm:$0xff]
    %v646 = vld [vmem:[%s1 + $0xd8] sm:$0xff]
    %v647 = vld [vmem:[%s1 + $0xe0] sm:$0xff]
    %v648 = vld [vmem:[%s1 + $0xe8] sm:$0xff]
    %v649 = vld [vmem:[%s1 + $0xf0] sm:$0xff]
    %v650 = vld [vmem:[%s1 + $0xf8] sm:$0xff]
    %v651 = vld [vmem:[%s1 + $0x100] sm:$0xff]
    %v652 = vld [vmem:[%s1 + $0x108] sm:$0xff]
    %v653 = vld [vmem:[%s1 + $0x110] sm:$0xff]
    %v654 = vld [vmem:[%s1 + $0x118] sm:$0xff]
    %v655 = vld [vmem:[%s1 + $0x120] sm:$0xff]
    %v656 = vld [vmem:[%s1 + $0x128] sm:$0xff]
    %v657 = vld [vmem:[%s1 + $0x130] sm:$0xff]
    %v658 = vld [vmem:[%s1 + $0x138] sm:$0xff]
    %v659 = vld [vmem:[%s1 + $0x140] sm:$0xff]
    %v660 = vld [vmem:[%s1 + $0x148] sm:$0xff]
    %v661 = vld [vmem:[%s1 + $0x150] sm:$0xff]
    %v662 = vld [vmem:[%s1 + $0x158] sm:$0xff]
    %v663 = vld [vmem:[%s1 + $0x160] sm:$0xff]
    %v664 = vld [vmem:[%s1 + $0x168] sm:$0xff]
    %v665 = vld [vmem:[%s1 + $0x170] sm:$0xff]
    %v666 = vld [vmem:[%s1 + $0x178] sm:$0xff]
    %v667 = vld [vmem:[%s1 + $0x180] sm:$0xff]
    %v668 = vld [vmem:[%s1 + $0x188] sm:$0xff]
    %v669 = vld [vmem:[%s1 + $0x190] sm:$0xff]
    %v670 = vld [vmem:[%s1 + $0x198] sm:$0xff]
    %v671 = vld [vmem:[%s1 + $0x1a0] sm:$0xff]
    %v672 = vld [vmem:[%s1 + $0x1a8] sm:$0xff]
    %v673 = vld [vmem:[%s1 + $0x1b0] sm:$0xff]
    %v674 = vld [vmem:[%s1 + $0x1b8] sm:$0xff]
    %v675 = vld [vmem:[%s1 + $0x1c0] sm:$0xff]
    %v676 = vld [vmem:[%s1 + $0x1c8] sm:$0xff]
    %v677 = vld [vmem:[%s1 + $0x1d0] sm:$0xff]
    %v678 = vld [vmem:[%s1 + $0x1d8] sm:$0xff]
    %v679 = vld [vmem:[%s1 + $0x1e0] sm:$0xff]
    %v680 = vld [vmem:[%s1 + $0x1e8] sm:$0xff]
    %v681 = vld [vmem:[%s1 + $0x1f0] sm:$0xff]
    %v682 = vld [vmem:[%s1 + $0x1f8] sm:$0xff]
    %vm683 = vcmp.gt.f32.partialorder %v619, 0.0
    %vm684 = vcmp.gt.f32.partialorder %v620, 0.0
    %vm685 = vcmp.gt.f32.partialorder %v621, 0.0
    %vm686 = vcmp.gt.f32.partialorder %v622, 0.0
    %vm687 = vcmp.gt.f32.partialorder %v623, 0.0
    %vm688 = vcmp.gt.f32.partialorder %v624, 0.0
    %vm689 = vcmp.gt.f32.partialorder %v625, 0.0
    %vm690 = vcmp.gt.f32.partialorder %v626, 0.0
    %vm691 = vcmp.gt.f32.partialorder %v627, 0.0
    %vm692 = vcmp.gt.f32.partialorder %v628, 0.0
    %vm693 = vcmp.gt.f32.partialorder %v629, 0.0
    %vm694 = vcmp.gt.f32.partialorder %v630, 0.0
    %vm695 = vcmp.gt.f32.partialorder %v631, 0.0
    %vm696 = vcmp.gt.f32.partialorder %v632, 0.0
    %vm697 = vcmp.gt.f32.partialorder %v633, 0.0
    %vm698 = vcmp.gt.f32.partialorder %v634, 0.0
    %vm699 = vcmp.gt.f32.partialorder %v635, 0.0
    %vm700 = vcmp.gt.f32.partialorder %v636, 0.0
    %vm701 = vcmp.gt.f32.partialorder %v637, 0.0
    %vm702 = vcmp.gt.f32.partialorder %v638, 0.0
    %vm703 = vcmp.gt.f32.partialorder %v639, 0.0
    %vm704 = vcmp.gt.f32.partialorder %v640, 0.0
    %vm705 = vcmp.gt.f32.partialorder %v641, 0.0
    %vm706 = vcmp.gt.f32.partialorder %v642, 0.0
    %vm707 = vcmp.gt.f32.partialorder %v643, 0.0
    %vm708 = vcmp.gt.f32.partialorder %v644, 0.0
    %vm709 = vcmp.gt.f32.partialorder %v645, 0.0
    %vm710 = vcmp.gt.f32.partialorder %v646, 0.0
    %vm711 = vcmp.gt.f32.partialorder %v647, 0.0
    %vm712 = vcmp.gt.f32.partialorder %v648, 0.0
    %vm713 = vcmp.gt.f32.partialorder %v649, 0.0
    %vm714 = vcmp.gt.f32.partialorder %v650, 0.0
    %vm715 = vcmp.gt.f32.partialorder %v651, 0.0
    %vm716 = vcmp.gt.f32.partialorder %v652, 0.0
    %vm717 = vcmp.gt.f32.partialorder %v653, 0.0
    %vm718 = vcmp.gt.f32.partialorder %v654, 0.0
    %vm719 = vcmp.gt.f32.partialorder %v655, 0.0
    %vm720 = vcmp.gt.f32.partialorder %v656, 0.0
    %vm721 = vcmp.gt.f32.partialorder %v657, 0.0
    %vm722 = vcmp.gt.f32.partialorder %v658, 0.0
    %vm723 = vcmp.gt.f32.partialorder %v659, 0.0
    %vm724 = vcmp.gt.f32.partialorder %v660, 0.0
    %vm725 = vcmp.gt.f32.partialorder %v661, 0.0
    %vm726 = vcmp.gt.f32.partialorder %v662, 0.0
    %vm727 = vcmp.gt.f32.partialorder %v663, 0.0
    %vm728 = vcmp.gt.f32.partialorder %v664, 0.0
    %vm729 = vcmp.gt.f32.partialorder %v665, 0.0
    %vm730 = vcmp.gt.f32.partialorder %v666, 0.0
    %vm731 = vcmp.gt.f32.partialorder %v667, 0.0
    %vm732 = vcmp.gt.f32.partialorder %v668, 0.0
    %vm733 = vcmp.gt.f32.partialorder %v669, 0.0
    %vm734 = vcmp.gt.f32.partialorder %v670, 0.0
    %vm735 = vcmp.gt.f32.partialorder %v671, 0.0
    %vm736 = vcmp.gt.f32.partialorder %v672, 0.0
    %vm737 = vcmp.gt.f32.partialorder %v673, 0.0
    %vm738 = vcmp.gt.f32.partialorder %v674, 0.0
    %vm739 = vcmp.gt.f32.partialorder %v675, 0.0
    %vm740 = vcmp.gt.f32.partialorder %v676, 0.0
    %vm741 = vcmp.gt.f32.partialorder %v677, 0.0
    %vm742 = vcmp.gt.f32.partialorder %v678, 0.0
    %vm743 = vcmp.gt.f32.partialorder %v679, 0.0
    %vm744 = vcmp.gt.f32.partialorder %v680, 0.0
    %vm745 = vcmp.gt.f32.partialorder %v681, 0.0
    %vm746 = vcmp.gt.f32.partialorder %v682, 0.0
    %v747 = vmul.f32 %v619, 1.442695
    %v748 = vpow.pop %v747
    %v749 = vmul.f32 %v620, 1.442695
    %v750 = vpow.pop %v749
    %v751 = vmul.f32 %v621, 1.442695
    %v752 = vpow.pop %v751
    %v753 = vmul.f32 %v622, 1.442695
    %v754 = vpow.pop %v753
    %v755 = vmul.f32 %v623, 1.442695
    %v756 = vpow.pop %v755
    %v757 = vmul.f32 %v624, 1.442695
    %v758 = vpow.pop %v757
    %v759 = vmul.f32 %v625, 1.442695
    %v760 = vpow.pop %v759
    %v761 = vmul.f32 %v626, 1.442695
    %v762 = vpow.pop %v761
    %v763 = vmul.f32 %v627, 1.442695
    %v764 = vpow.pop %v763
    %v765 = vmul.f32 %v628, 1.442695
    %v766 = vpow.pop %v765
    %v767 = vmul.f32 %v629, 1.442695
    %v768 = vpow.pop %v767
    %v769 = vmul.f32 %v630, 1.442695
    %v770 = vpow.pop %v769
    %v771 = vmul.f32 %v631, 1.442695
    %v772 = vpow.pop %v771
    %v773 = vmul.f32 %v632, 1.442695
    %v774 = vpow.pop %v773
    %v775 = vmul.f32 %v633, 1.442695
    %v776 = vpow.pop %v775
    %v777 = vmul.f32 %v634, 1.442695
    %v778 = vpow.pop %v777
    %v779 = vmul.f32 %v635, 1.442695
    %v780 = vpow.pop %v779
    %v781 = vmul.f32 %v636, 1.442695
    %v782 = vpow.pop %v781
    %v783 = vmul.f32 %v637, 1.442695
    %v784 = vpow.pop %v783
    %v785 = vmul.f32 %v638, 1.442695
    %v786 = vpow.pop %v785
    %v787 = vmul.f32 %v639, 1.442695
    %v788 = vpow.pop %v787
    %v789 = vmul.f32 %v640, 1.442695
    %v790 = vpow.pop %v789
    %v791 = vmul.f32 %v641, 1.442695
    %v792 = vpow.pop %v791
    %v793 = vmul.f32 %v642, 1.442695
    %v794 = vpow.pop %v793
    %v795 = vmul.f32 %v643, 1.442695
    %v796 = vpow.pop %v795
    %v797 = vmul.f32 %v644, 1.442695
    %v798 = vpow.pop %v797
    %v799 = vmul.f32 %v645, 1.442695
    %v800 = vpow.pop %v799
    %v801 = vmul.f32 %v646, 1.442695
    %v802 = vpow.pop %v801
    %v803 = vmul.f32 %v647, 1.442695
    %v804 = vpow.pop %v803
    %v805 = vmul.f32 %v648, 1.442695
    %v806 = vpow.pop %v805
    %v807 = vmul.f32 %v649, 1.442695
    %v808 = vpow.pop %v807
    %v809 = vmul.f32 %v650, 1.442695
    %v810 = vpow.pop %v809
    %v811 = vmul.f32 %v651, 1.442695
    %v812 = vpow.pop %v811
    %v813 = vmul.f32 %v652, 1.442695
    %v814 = vpow.pop %v813
    %v815 = vmul.f32 %v653, 1.442695
    %v816 = vpow.pop %v815
    %v817 = vmul.f32 %v654, 1.442695
    %v818 = vpow.pop %v817
    %v819 = vmul.f32 %v655, 1.442695
    %v820 = vpow.pop %v819
    %v821 = vmul.f32 %v656, 1.442695
    %v822 = vpow.pop %v821
    %v823 = vmul.f32 %v657, 1.442695
    %v824 = vpow.pop %v823
    %v825 = vmul.f32 %v658, 1.442695
    %v826 = vpow.pop %v825
    %v827 = vmul.f32 %v659, 1.442695
    %v828 = vpow.pop %v827
    %v829 = vmul.f32 %v660, 1.442695
    %v830 = vpow.pop %v829
    %v831 = vmul.f32 %v661, 1.442695
    %v832 = vpow.pop %v831
    %v833 = vmul.f32 %v662, 1.442695
    %v834 = vpow.pop %v833
    %v835 = vmul.f32 %v663, 1.442695
    %v836 = vpow.pop %v835
    %v837 = vmul.f32 %v664, 1.442695
    %v838 = vpow.pop %v837
    %v839 = vmul.f32 %v665, 1.442695
    %v840 = vpow.pop %v839
    %v841 = vmul.f32 %v666, 1.442695
    %v842 = vpow.pop %v841
    %v843 = vmul.f32 %v667, 1.442695
    %v844 = vpow.pop %v843
    %v845 = vmul.f32 %v668, 1.442695
    %v846 = vpow.pop %v845
    %v847 = vmul.f32 %v669, 1.442695
    %v848 = vpow.pop %v847
    %v849 = vmul.f32 %v670, 1.442695
    %v850 = vpow.pop %v849
    %v851 = vmul.f32 %v671, 1.442695
    %v852 = vpow.pop %v851
    %v853 = vmul.f32 %v672, 1.442695
    %v854 = vpow.pop %v853
    %v855 = vmul.f32 %v673, 1.442695
    %v856 = vpow.pop %v855
    %v857 = vmul.f32 %v674, 1.442695
    %v858 = vpow.pop %v857
    %v859 = vmul.f32 %v675, 1.442695
    %v860 = vpow.pop %v859
    %v861 = vmul.f32 %v676, 1.442695
    %v862 = vpow.pop %v861
    %v863 = vmul.f32 %v677, 1.442695
    %v864 = vpow.pop %v863
    %v865 = vmul.f32 %v678, 1.442695
    %v866 = vpow.pop %v865
    %v867 = vmul.f32 %v679, 1.442695
    %v868 = vpow.pop %v867
    %v869 = vmul.f32 %v680, 1.442695
    %v870 = vpow.pop %v869
    %v871 = vmul.f32 %v681, 1.442695
    %v872 = vpow.pop %v871
    %v873 = vmul.f32 %v682, 1.442695
    %v874 = vpow.pop %v873
    %v875 = vsub.f32 %v748, 1.0
    %v876 = vsub.f32 %v750, 1.0
    %v877 = vsub.f32 %v752, 1.0
    %v878 = vsub.f32 %v754, 1.0
    %v879 = vsub.f32 %v756, 1.0
    %v880 = vsub.f32 %v758, 1.0
    %v881 = vsub.f32 %v760, 1.0
    %v882 = vsub.f32 %v762, 1.0
    %v883 = vsub.f32 %v764, 1.0
    %v884 = vsub.f32 %v766, 1.0
    %v885 = vsub.f32 %v768, 1.0
    %v886 = vsub.f32 %v770, 1.0
    %v887 = vsub.f32 %v772, 1.0
    %v888 = vsub.f32 %v774, 1.0
    %v889 = vsub.f32 %v776, 1.0
    %v890 = vsub.f32 %v778, 1.0
    %v891 = vsub.f32 %v780, 1.0
    %v892 = vsub.f32 %v782, 1.0
    %v893 = vsub.f32 %v784, 1.0
    %v894 = vsub.f32 %v786, 1.0
    %v895 = vsub.f32 %v788, 1.0
    %v896 = vsub.f32 %v790, 1.0
    %v897 = vsub.f32 %v792, 1.0
    %v898 = vsub.f32 %v794, 1.0
    %v899 = vsub.f32 %v796, 1.0
    %v900 = vsub.f32 %v798, 1.0
    %v901 = vsub.f32 %v800, 1.0
    %v902 = vsub.f32 %v802, 1.0
    %v903 = vsub.f32 %v804, 1.0
    %v904 = vsub.f32 %v806, 1.0
    %v905 = vsub.f32 %v808, 1.0
    %v906 = vsub.f32 %v810, 1.0
    %v907 = vsub.f32 %v812, 1.0
    %v908 = vsub.f32 %v814, 1.0
    %v909 = vsub.f32 %v816, 1.0
    %v910 = vsub.f32 %v818, 1.0
    %v911 = vsub.f32 %v820, 1.0
    %v912 = vsub.f32 %v822, 1.0
    %v913 = vsub.f32 %v824, 1.0
    %v914 = vsub.f32 %v826, 1.0
    %v915 = vsub.f32 %v828, 1.0
    %v916 = vsub.f32 %v830, 1.0
    %v917 = vsub.f32 %v832, 1.0
    %v918 = vsub.f32 %v834, 1.0
    %v919 = vsub.f32 %v836, 1.0
    %v920 = vsub.f32 %v838, 1.0
    %v921 = vsub.f32 %v840, 1.0
    %v922 = vsub.f32 %v842, 1.0
    %v923 = vsub.f32 %v844, 1.0
    %v924 = vsub.f32 %v846, 1.0
    %v925 = vsub.f32 %v848, 1.0
    %v926 = vsub.f32 %v850, 1.0
    %v927 = vsub.f32 %v852, 1.0
    %v928 = vsub.f32 %v854, 1.0
    %v929 = vsub.f32 %v856, 1.0
    %v930 = vsub.f32 %v858, 1.0
    %v931 = vsub.f32 %v860, 1.0
    %v932 = vsub.f32 %v862, 1.0
    %v933 = vsub.f32 %v864, 1.0
    %v934 = vsub.f32 %v866, 1.0
    %v935 = vsub.f32 %v868, 1.0
    %v936 = vsub.f32 %v870, 1.0
    %v937 = vsub.f32 %v872, 1.0
    %v938 = vsub.f32 %v874, 1.0
    %v939 = vsel %vm683, %v619, %v875
    %v940 = vsel %vm684, %v620, %v876
    %v941 = vsel %vm685, %v621, %v877
    %v942 = vsel %vm686, %v622, %v878
    %v943 = vsel %vm687, %v623, %v879
    %v944 = vsel %vm688, %v624, %v880
    %v945 = vsel %vm689, %v625, %v881
    %v946 = vsel %vm690, %v626, %v882
    %v947 = vsel %vm691, %v627, %v883
    %v948 = vsel %vm692, %v628, %v884
    %v949 = vsel %vm693, %v629, %v885
    %v950 = vsel %vm694, %v630, %v886
    %v951 = vsel %vm695, %v631, %v887
    %v952 = vsel %vm696, %v632, %v888
    %v953 = vsel %vm697, %v633, %v889
    %v954 = vsel %vm698, %v634, %v890
    %v955 = vsel %vm699, %v635, %v891
    %v956 = vsel %vm700, %v636, %v892
    %v957 = vsel %vm701, %v637, %v893
    %v958 = vsel %vm702, %v638, %v894
    %v959 = vsel %vm703, %v639, %v895
    %v960 = vsel %vm704, %v640, %v896
    %v961 = vsel %vm705, %v641, %v897
    %v962 = vsel %vm706, %v642, %v898
    %v963 = vsel %vm707, %v643, %v899
    %v964 = vsel %vm708, %v644, %v900
    %v965 = vsel %vm709, %v645, %v901
    %v966 = vsel %vm710, %v646, %v902
    %v967 = vsel %vm711, %v647, %v903
    %v968 = vsel %vm712, %v648, %v904
    %v969 = vsel %vm713, %v649, %v905
    %v970 = vsel %vm714, %v650, %v906
    %v971 = vsel %vm715, %v651, %v907
    %v972 = vsel %vm716, %v652, %v908
    %v973 = vsel %vm717, %v653, %v909
    %v974 = vsel %vm718, %v654, %v910
    %v975 = vsel %vm719, %v655, %v911
    %v976 = vsel %vm720, %v656, %v912
    %v977 = vsel %vm721, %v657, %v913
    %v978 = vsel %vm722, %v658, %v914
    %v979 = vsel %vm723, %v659, %v915
    %v980 = vsel %vm724, %v660, %v916
    %v981 = vsel %vm725, %v661, %v917
    %v982 = vsel %vm726, %v662, %v918
    %v983 = vsel %vm727, %v663, %v919
    %v984 = vsel %vm728, %v664, %v920
    %v985 = vsel %vm729, %v665, %v921
    %v986 = vsel %vm730, %v666, %v922
    %v987 = vsel %vm731, %v667, %v923
    %v988 = vsel %vm732, %v668, %v924
    %v989 = vsel %vm733, %v669, %v925
    %v990 = vsel %vm734, %v670, %v926
    %v991 = vsel %vm735, %v671, %v927
    %v992 = vsel %vm736, %v672, %v928
    %v993 = vsel %vm737, %v673, %v929
    %v994 = vsel %vm738, %v674, %v930
    %v995 = vsel %vm739, %v675, %v931
    %v996 = vsel %vm740, %v676, %v932
    %v997 = vsel %vm741, %v677, %v933
    %v998 = vsel %vm742, %v678, %v934
    %v999 = vsel %vm743, %v679, %v935
    %v1000 = vsel %vm744, %v680, %v936
    %v1001 = vsel %vm745, %v681, %v937
    %v1002 = vsel %vm746, %v682, %v938
    %1067 = vrot.lane.b32.xlu0 %v939, 32
    %v1068 = vpop.permute.xlu0 %1067
    %1069 = vrot.lane.b32.xlu0 %v940, 32
    %v1070 = vpop.permute.xlu0 %1069
    %1071 = vrot.lane.b32.xlu0 %v941, 32
    %v1072 = vpop.permute.xlu0 %1071
    %1073 = vrot.lane.b32.xlu0 %v942, 32
    %v1074 = vpop.permute.xlu0 %1073
    %1075 = vrot.lane.b32.xlu0 %v943, 32
    %v1076 = vpop.permute.xlu0 %1075
    %1077 = vrot.lane.b32.xlu0 %v944, 32
    %v1078 = vpop.permute.xlu0 %1077
    %1079 = vrot.lane.b32.xlu0 %v945, 32
    %v1080 = vpop.permute.xlu0 %1079
    %1081 = vrot.lane.b32.xlu0 %v946, 32
    %v1082 = vpop.permute.xlu0 %1081
    %1083 = vrot.lane.b32.xlu0 %v947, 32
    %v1084 = vpop.permute.xlu0 %1083
    %1085 = vrot.lane.b32.xlu0 %v948, 32
    %v1086 = vpop.permute.xlu0 %1085
    %1087 = vrot.lane.b32.xlu0 %v949, 32
    %v1088 = vpop.permute.xlu0 %1087
    %1089 = vrot.lane.b32.xlu0 %v950, 32
    %v1090 = vpop.permute.xlu0 %1089
    %1091 = vrot.lane.b32.xlu0 %v951, 32
    %v1092 = vpop.permute.xlu0 %1091
    %1093 = vrot.lane.b32.xlu0 %v952, 32
    %v1094 = vpop.permute.xlu0 %1093
    %1095 = vrot.lane.b32.xlu0 %v953, 32
    %v1096 = vpop.permute.xlu0 %1095
    %1097 = vrot.lane.b32.xlu0 %v954, 32
    %v1098 = vpop.permute.xlu0 %1097
    %1099 = vrot.lane.b32.xlu0 %v955, 32
    %v1100 = vpop.permute.xlu0 %1099
    %1101 = vrot.lane.b32.xlu0 %v956, 32
    %v1102 = vpop.permute.xlu0 %1101
    %1103 = vrot.lane.b32.xlu0 %v957, 32
    %v1104 = vpop.permute.xlu0 %1103
    %1105 = vrot.lane.b32.xlu0 %v958, 32
    %v1106 = vpop.permute.xlu0 %1105
    %1107 = vrot.lane.b32.xlu0 %v959, 32
    %v1108 = vpop.permute.xlu0 %1107
    %1109 = vrot.lane.b32.xlu0 %v960, 32
    %v1110 = vpop.permute.xlu0 %1109
    %1111 = vrot.lane.b32.xlu0 %v961, 32
    %v1112 = vpop.permute.xlu0 %1111
    %1113 = vrot.lane.b32.xlu0 %v962, 32
    %v1114 = vpop.permute.xlu0 %1113
    %1115 = vrot.lane.b32.xlu0 %v963, 32
    %v1116 = vpop.permute.xlu0 %1115
    %1117 = vrot.lane.b32.xlu0 %v964, 32
    %v1118 = vpop.permute.xlu0 %1117
    %1119 = vrot.lane.b32.xlu0 %v965, 32
    %v1120 = vpop.permute.xlu0 %1119
    %1121 = vrot.lane.b32.xlu0 %v966, 32
    %v1122 = vpop.permute.xlu0 %1121
    %1123 = vrot.lane.b32.xlu0 %v967, 32
    %v1124 = vpop.permute.xlu0 %1123
    %1125 = vrot.lane.b32.xlu0 %v968, 32
    %v1126 = vpop.permute.xlu0 %1125
    %1127 = vrot.lane.b32.xlu0 %v969, 32
    %v1128 = vpop.permute.xlu0 %1127
    %1129 = vrot.lane.b32.xlu0 %v970, 32
    %v1130 = vpop.permute.xlu0 %1129
    %1131 = vrot.lane.b32.xlu0 %v971, 32
    %v1132 = vpop.permute.xlu0 %1131
    %1133 = vrot.lane.b32.xlu0 %v972, 32
    %v1134 = vpop.permute.xlu0 %1133
    %1135 = vrot.lane.b32.xlu0 %v973, 32
    %v1136 = vpop.permute.xlu0 %1135
    %1137 = vrot.lane.b32.xlu0 %v974, 32
    %v1138 = vpop.permute.xlu0 %1137
    %1139 = vrot.lane.b32.xlu0 %v975, 32
    %v1140 = vpop.permute.xlu0 %1139
    %1141 = vrot.lane.b32.xlu0 %v976, 32
    %v1142 = vpop.permute.xlu0 %1141
    %1143 = vrot.lane.b32.xlu0 %v977, 32
    %v1144 = vpop.permute.xlu0 %1143
    %1145 = vrot.lane.b32.xlu0 %v978, 32
    %v1146 = vpop.permute.xlu0 %1145
    %1147 = vrot.lane.b32.xlu0 %v979, 32
    %v1148 = vpop.permute.xlu0 %1147
    %1149 = vrot.lane.b32.xlu0 %v980, 32
    %v1150 = vpop.permute.xlu0 %1149
    %1151 = vrot.lane.b32.xlu0 %v981, 32
    %v1152 = vpop.permute.xlu0 %1151
    %1153 = vrot.lane.b32.xlu0 %v982, 32
    %v1154 = vpop.permute.xlu0 %1153
    %1155 = vrot.lane.b32.xlu0 %v983, 32
    %v1156 = vpop.permute.xlu0 %1155
    %1157 = vrot.lane.b32.xlu0 %v984, 32
    %v1158 = vpop.permute.xlu0 %1157
    %1159 = vrot.lane.b32.xlu0 %v985, 32
    %v1160 = vpop.permute.xlu0 %1159
    %1161 = vrot.lane.b32.xlu0 %v986, 32
    %v1162 = vpop.permute.xlu0 %1161
    %1163 = vrot.lane.b32.xlu0 %v987, 32
    %v1164 = vpop.permute.xlu0 %1163
    %1165 = vrot.lane.b32.xlu0 %v988, 32
    %v1166 = vpop.permute.xlu0 %1165
    %1167 = vrot.lane.b32.xlu0 %v989, 32
    %v1168 = vpop.permute.xlu0 %1167
    %1169 = vrot.lane.b32.xlu0 %v990, 32
    %v1170 = vpop.permute.xlu0 %1169
    %1171 = vrot.lane.b32.xlu0 %v991, 32
    %v1172 = vpop.permute.xlu0 %1171
    %1173 = vrot.lane.b32.xlu0 %v992, 32
    %v1174 = vpop.permute.xlu0 %1173
    %1175 = vrot.lane.b32.xlu0 %v993, 32
    %v1176 = vpop.permute.xlu0 %1175
    %1177 = vrot.lane.b32.xlu0 %v994, 32
    %v1178 = vpop.permute.xlu0 %1177
    %1179 = vrot.lane.b32.xlu0 %v995, 32
    %v1180 = vpop.permute.xlu0 %1179
    %1181 = vrot.lane.b32.xlu0 %v996, 32
    %v1182 = vpop.permute.xlu0 %1181
    %1183 = vrot.lane.b32.xlu0 %v997, 32
    %v1184 = vpop.permute.xlu0 %1183
    %1185 = vrot.lane.b32.xlu0 %v998, 32
    %v1186 = vpop.permute.xlu0 %1185
    %1187 = vrot.lane.b32.xlu0 %v999, 32
    %v1188 = vpop.permute.xlu0 %1187
    %1189 = vrot.lane.b32.xlu0 %v1000, 32
    %v1190 = vpop.permute.xlu0 %1189
    %1191 = vrot.lane.b32.xlu0 %v1001, 32
    %v1192 = vpop.permute.xlu0 %1191
    %1193 = vrot.lane.b32.xlu0 %v1002, 32
    %v1194 = vpop.permute.xlu0 %1193
    %vm1259 = vcmask 523520
    %1260 = vst.msk [vmem:[%s553 + $0x1] sm:$0xff] %vm1259, %v1068
    %1261 = vst.msk [vmem:[%s553 + $0x9] sm:$0xff] %vm1259, %v1070
    %1262 = vst.msk [vmem:[%s553 + $0x19] sm:$0xff] %vm1259, %v1072
    %1263 = vst.msk [vmem:[%s553 + $0x21] sm:$0xff] %vm1259, %v1074
    %1264 = vst.msk [vmem:[%s553 + $0x31] sm:$0xff] %vm1259, %v1076
    %1265 = vst.msk [vmem:[%s553 + $0x39] sm:$0xff] %vm1259, %v1078
    %1266 = vst.msk [vmem:[%s553 + $0x49] sm:$0xff] %vm1259, %v1080
    %1267 = vst.msk [vmem:[%s553 + $0x51] sm:$0xff] %vm1259, %v1082
    %1268 = vst.msk [vmem:[%s553 + $0x61] sm:$0xff] %vm1259, %v1084
    %1269 = vst.msk [vmem:[%s553 + $0x69] sm:$0xff] %vm1259, %v1086
    %1270 = vst.msk [vmem:[%s553 + $0x79] sm:$0xff] %vm1259, %v1088
    %1271 = vst.msk [vmem:[%s553 + $0x81] sm:$0xff] %vm1259, %v1090
    %1272 = vst.msk [vmem:[%s553 + $0x91] sm:$0xff] %vm1259, %v1092
    %1273 = vst.msk [vmem:[%s553 + $0x99] sm:$0xff] %vm1259, %v1094
    %1274 = vst.msk [vmem:[%s553 + $0xa9] sm:$0xff] %vm1259, %v1096
    %1275 = vst.msk [vmem:[%s553 + $0xb1] sm:$0xff] %vm1259, %v1098
    %1276 = vst.msk [vmem:[%s553 + $0xc1] sm:$0xff] %vm1259, %v1100
    %1277 = vst.msk [vmem:[%s553 + $0xc9] sm:$0xff] %vm1259, %v1102
    %1278 = vst.msk [vmem:[%s553 + $0xd9] sm:$0xff] %vm1259, %v1104
    %1279 = vst.msk [vmem:[%s553 + $0xe1] sm:$0xff] %vm1259, %v1106
    %1280 = vst.msk [vmem:[%s553 + $0xf1] sm:$0xff] %vm1259, %v1108
    %1281 = vst.msk [vmem:[%s553 + $0xf9] sm:$0xff] %vm1259, %v1110
    %1282 = vst.msk [vmem:[%s553 + $0x109] sm:$0xff] %vm1259, %v1112
    %1283 = vst.msk [vmem:[%s553 + $0x111] sm:$0xff] %vm1259, %v1114
    %1284 = vst.msk [vmem:[%s553 + $0x121] sm:$0xff] %vm1259, %v1116
    %1285 = vst.msk [vmem:[%s553 + $0x129] sm:$0xff] %vm1259, %v1118
    %1286 = vst.msk [vmem:[%s553 + $0x139] sm:$0xff] %vm1259, %v1120
    %1287 = vst.msk [vmem:[%s553 + $0x141] sm:$0xff] %vm1259, %v1122
    %1288 = vst.msk [vmem:[%s553 + $0x151] sm:$0xff] %vm1259, %v1124
    %1289 = vst.msk [vmem:[%s553 + $0x159] sm:$0xff] %vm1259, %v1126
    %1290 = vst.msk [vmem:[%s553 + $0x169] sm:$0xff] %vm1259, %v1128
    %1291 = vst.msk [vmem:[%s553 + $0x171] sm:$0xff] %vm1259, %v1130
    %1292 = vst.msk [vmem:[%s553 + $0x1b1] sm:$0xff] %vm1259, %v1132
    %1293 = vst.msk [vmem:[%s553 + $0x1b9] sm:$0xff] %vm1259, %v1134
    %1294 = vst.msk [vmem:[%s553 + $0x1c9] sm:$0xff] %vm1259, %v1136
    %1295 = vst.msk [vmem:[%s553 + $0x1d1] sm:$0xff] %vm1259, %v1138
    %1296 = vst.msk [vmem:[%s553 + $0x1e1] sm:$0xff] %vm1259, %v1140
    %1297 = vst.msk [vmem:[%s553 + $0x1e9] sm:$0xff] %vm1259, %v1142
    %1298 = vst.msk [vmem:[%s553 + $0x1f9] sm:$0xff] %vm1259, %v1144
    %1299 = vst.msk [vmem:[%s553 + $0x201] sm:$0xff] %vm1259, %v1146
    %1300 = vst.msk [vmem:[%s553 + $0x211] sm:$0xff] %vm1259, %v1148
    %1301 = vst.msk [vmem:[%s553 + $0x219] sm:$0xff] %vm1259, %v1150
    %1302 = vst.msk [vmem:[%s553 + $0x229] sm:$0xff] %vm1259, %v1152
    %1303 = vst.msk [vmem:[%s553 + $0x231] sm:$0xff] %vm1259, %v1154
    %1304 = vst.msk [vmem:[%s553 + $0x241] sm:$0xff] %vm1259, %v1156
    %1305 = vst.msk [vmem:[%s553 + $0x249] sm:$0xff] %vm1259, %v1158
    %1306 = vst.msk [vmem:[%s553 + $0x259] sm:$0xff] %vm1259, %v1160
    %1307 = vst.msk [vmem:[%s553 + $0x261] sm:$0xff] %vm1259, %v1162
    %1308 = vst.msk [vmem:[%s553 + $0x271] sm:$0xff] %vm1259, %v1164
    %1309 = vst.msk [vmem:[%s553 + $0x279] sm:$0xff] %vm1259, %v1166
    %1310 = vst.msk [vmem:[%s553 + $0x289] sm:$0xff] %vm1259, %v1168
    %1311 = vst.msk [vmem:[%s553 + $0x291] sm:$0xff] %vm1259, %v1170
    %1312 = vst.msk [vmem:[%s553 + $0x2a1] sm:$0xff] %vm1259, %v1172
    %1313 = vst.msk [vmem:[%s553 + $0x2a9] sm:$0xff] %vm1259, %v1174
    %1314 = vst.msk [vmem:[%s553 + $0x2b9] sm:$0xff] %vm1259, %v1176
    %1315 = vst.msk [vmem:[%s553 + $0x2c1] sm:$0xff] %vm1259, %v1178
    %1316 = vst.msk [vmem:[%s553 + $0x2d1] sm:$0xff] %vm1259, %v1180
    %1317 = vst.msk [vmem:[%s553 + $0x2d9] sm:$0xff] %vm1259, %v1182
    %1318 = vst.msk [vmem:[%s553 + $0x2e9] sm:$0xff] %vm1259, %v1184
    %1319 = vst.msk [vmem:[%s553 + $0x2f1] sm:$0xff] %vm1259, %v1186
    %1320 = vst.msk [vmem:[%s553 + $0x301] sm:$0xff] %vm1259, %v1188
    %1321 = vst.msk [vmem:[%s553 + $0x309] sm:$0xff] %vm1259, %v1190
    %1322 = vst.msk [vmem:[%s553 + $0x319] sm:$0xff] %vm1259, %v1192
    %1323 = vst.msk [vmem:[%s553 + $0x321] sm:$0xff] %vm1259, %v1194
    %v1324 = vld [vmem:[#allocation2] sm:$0xff]
    %v1325 = vld [vmem:[#allocation2 + $0x8] sm:$0xff]
    %v1326 = vld [vmem:[#allocation2 + $0x18] sm:$0xff]
    %v1327 = vld [vmem:[#allocation2 + $0x20] sm:$0xff]
    %v1328 = vld [vmem:[#allocation2 + $0x30] sm:$0xff]
    %v1329 = vld [vmem:[#allocation2 + $0x38] sm:$0xff]
    %v1330 = vld [vmem:[#allocation2 + $0x48] sm:$0xff]
    %v1331 = vld [vmem:[#allocation2 + $0x50] sm:$0xff]
    %v1332 = vld [vmem:[#allocation2 + $0x60] sm:$0xff]
    %v1333 = vld [vmem:[#allocation2 + $0x68] sm:$0xff]
    %v1334 = vld [vmem:[#allocation2 + $0x78] sm:$0xff]
    %v1335 = vld [vmem:[#allocation2 + $0x80] sm:$0xff]
    %v1336 = vld [vmem:[#allocation2 + $0x90] sm:$0xff]
    %v1337 = vld [vmem:[#allocation2 + $0x98] sm:$0xff]
    %v1338 = vld [vmem:[#allocation2 + $0xa8] sm:$0xff]
    %v1339 = vld [vmem:[#allocation2 + $0xb0] sm:$0xff]
    %v1340 = vld [vmem:[#allocation2 + $0xc0] sm:$0xff]
    %v1341 = vld [vmem:[#allocation2 + $0xc8] sm:$0xff]
    %v1342 = vld [vmem:[#allocation2 + $0xd8] sm:$0xff]
    %v1343 = vld [vmem:[#allocation2 + $0xe0] sm:$0xff]
    %v1344 = vld [vmem:[#allocation2 + $0xf0] sm:$0xff]
    %v1345 = vld [vmem:[#allocation2 + $0xf8] sm:$0xff]
    %v1346 = vld [vmem:[#allocation2 + $0x108] sm:$0xff]
    %v1347 = vld [vmem:[#allocation2 + $0x110] sm:$0xff]
    %v1348 = vld [vmem:[#allocation2 + $0x120] sm:$0xff]
    %v1349 = vld [vmem:[#allocation2 + $0x128] sm:$0xff]
    %v1350 = vld [vmem:[#allocation2 + $0x138] sm:$0xff]
    %v1351 = vld [vmem:[#allocation2 + $0x140] sm:$0xff]
    %v1352 = vld [vmem:[#allocation2 + $0x150] sm:$0xff]
    %v1353 = vld [vmem:[#allocation2 + $0x158] sm:$0xff]
    %v1354 = vld [vmem:[#allocation2 + $0x168] sm:$0xff]
    %v1355 = vld [vmem:[#allocation2 + $0x170] sm:$0xff]
    %v1356 = vld [vmem:[#allocation2 + $0x180] sm:$0xff]
    %v1357 = vld [vmem:[#allocation2 + $0x188] sm:$0xff]
    %v1358 = vld [vmem:[#allocation2 + $0x198] sm:$0xff]
    %v1359 = vld [vmem:[#allocation2 + $0x1a0] sm:$0xff]
    %v1360 = vld [vmem:[#allocation2 + $0x1b0] sm:$0xff]
    %v1361 = vld [vmem:[#allocation2 + $0x1b8] sm:$0xff]
    %v1362 = vld [vmem:[#allocation2 + $0x1c8] sm:$0xff]
    %v1363 = vld [vmem:[#allocation2 + $0x1d0] sm:$0xff]
    %v1364 = vld [vmem:[#allocation2 + $0x1e0] sm:$0xff]
    %v1365 = vld [vmem:[#allocation2 + $0x1e8] sm:$0xff]
    %v1366 = vld [vmem:[#allocation2 + $0x1f8] sm:$0xff]
    %v1367 = vld [vmem:[#allocation2 + $0x200] sm:$0xff]
    %v1368 = vld [vmem:[#allocation2 + $0x210] sm:$0xff]
    %v1369 = vld [vmem:[#allocation2 + $0x218] sm:$0xff]
    %v1370 = vld [vmem:[#allocation2 + $0x228] sm:$0xff]
    %v1371 = vld [vmem:[#allocation2 + $0x230] sm:$0xff]
    %v1372 = vld [vmem:[#allocation2 + $0x240] sm:$0xff]
    %v1373 = vld [vmem:[#allocation2 + $0x248] sm:$0xff]
    %v1374 = vld [vmem:[#allocation2 + $0x258] sm:$0xff]
    %v1375 = vld [vmem:[#allocation2 + $0x260] sm:$0xff]
    %v1376 = vld [vmem:[#allocation2 + $0x270] sm:$0xff]
    %v1377 = vld [vmem:[#allocation2 + $0x278] sm:$0xff]
    %v1378 = vld [vmem:[#allocation2 + $0x288] sm:$0xff]
    %v1379 = vld [vmem:[#allocation2 + $0x290] sm:$0xff]
    %v1380 = vld [vmem:[#allocation2 + $0x2a0] sm:$0xff]
    %v1381 = vld [vmem:[#allocation2 + $0x2a8] sm:$0xff]
    %v1382 = vld [vmem:[#allocation2 + $0x2b8] sm:$0xff]
    %v1383 = vld [vmem:[#allocation2 + $0x2c0] sm:$0xff]
    %v1384 = vld [vmem:[#allocation2 + $0x2d0] sm:$0xff]
    %v1385 = vld [vmem:[#allocation2 + $0x2d8] sm:$0xff]
    %v1386 = vld [vmem:[#allocation2 + $0x2e8] sm:$0xff]
    %v1387 = vld [vmem:[#allocation2 + $0x2f0] sm:$0xff]
    %v1388 = vld [vmem:[#allocation2 + $0x300] sm:$0xff]
    %v1389 = vld [vmem:[#allocation2 + $0x308] sm:$0xff]
    %v1390 = vld [vmem:[#allocation2 + $0x318] sm:$0xff]
    %v1391 = vld [vmem:[#allocation2 + $0x320] sm:$0xff]
    %v1392 = vld [vmem:[#allocation2 + $0x330] sm:$0xff]
    %v1393 = vld [vmem:[#allocation2 + $0x338] sm:$0xff]
    %v1394 = vld [vmem:[#allocation2 + $0x348] sm:$0xff]
    %v1395 = vld [vmem:[#allocation2 + $0x350] sm:$0xff]
    %1396 = vst.msk [vmem:[#allocation3] sm:$0xff] %vm59, %v1324
    %1397 = vst.msk [vmem:[#allocation3 + $0x10] sm:$0xff] %vm59, %v1325
    %1398 = vst.msk [vmem:[#allocation3 + $0x20] sm:$0xff] %vm59, %v1326
    %1399 = vst.msk [vmem:[#allocation3 + $0x30] sm:$0xff] %vm59, %v1327
    %1400 = vst.msk [vmem:[#allocation3 + $0x40] sm:$0xff] %vm59, %v1328
    %1401 = vst.msk [vmem:[#allocation3 + $0x50] sm:$0xff] %vm59, %v1329
    %1402 = vst.msk [vmem:[#allocation3 + $0x60] sm:$0xff] %vm59, %v1330
    %1403 = vst.msk [vmem:[#allocation3 + $0x70] sm:$0xff] %vm59, %v1331
    %1404 = vst.msk [vmem:[#allocation3 + $0x80] sm:$0xff] %vm59, %v1332
    %1405 = vst.msk [vmem:[#allocation3 + $0x90] sm:$0xff] %vm59, %v1333
    %1406 = vst.msk [vmem:[#allocation3 + $0xa0] sm:$0xff] %vm59, %v1334
    %1407 = vst.msk [vmem:[#allocation3 + $0xb0] sm:$0xff] %vm59, %v1335
    %1408 = vst.msk [vmem:[#allocation3 + $0xc0] sm:$0xff] %vm59, %v1336
    %1409 = vst.msk [vmem:[#allocation3 + $0xd0] sm:$0xff] %vm59, %v1337
    %1410 = vst.msk [vmem:[#allocation3 + $0xe0] sm:$0xff] %vm59, %v1338
    %1411 = vst.msk [vmem:[#allocation3 + $0xf0] sm:$0xff] %vm59, %v1339
    %1412 = vst.msk [vmem:[#allocation3 + $0x100] sm:$0xff] %vm59, %v1340
    %1413 = vst.msk [vmem:[#allocation3 + $0x110] sm:$0xff] %vm59, %v1341
    %1414 = vst.msk [vmem:[#allocation3 + $0x120] sm:$0xff] %vm59, %v1342
    %1415 = vst.msk [vmem:[#allocation3 + $0x130] sm:$0xff] %vm59, %v1343
    %1416 = vst.msk [vmem:[#allocation3 + $0x140] sm:$0xff] %vm59, %v1344
    %1417 = vst.msk [vmem:[#allocation3 + $0x150] sm:$0xff] %vm59, %v1345
    %1418 = vst.msk [vmem:[#allocation3 + $0x160] sm:$0xff] %vm59, %v1346
    %1419 = vst.msk [vmem:[#allocation3 + $0x170] sm:$0xff] %vm59, %v1347
    %1420 = vst.msk [vmem:[#allocation3 + $0x180] sm:$0xff] %vm59, %v1348
    %1421 = vst.msk [vmem:[#allocation3 + $0x190] sm:$0xff] %vm59, %v1349
    %1422 = vst.msk [vmem:[#allocation3 + $0x1a0] sm:$0xff] %vm59, %v1350
    %1423 = vst.msk [vmem:[#allocation3 + $0x1b0] sm:$0xff] %vm59, %v1351
    %1424 = vst.msk [vmem:[#allocation3 + $0x1c0] sm:$0xff] %vm59, %v1352
    %1425 = vst.msk [vmem:[#allocation3 + $0x1d0] sm:$0xff] %vm59, %v1353
    %1426 = vst.msk [vmem:[#allocation3 + $0x1e0] sm:$0xff] %vm59, %v1354
    %1427 = vst.msk [vmem:[#allocation3 + $0x1f0] sm:$0xff] %vm59, %v1355
    %1428 = vst.msk [vmem:[#allocation3 + $0x200] sm:$0xff] %vm59, %v1356
    %1429 = vst.msk [vmem:[#allocation3 + $0x210] sm:$0xff] %vm59, %v1357
    %1430 = vst.msk [vmem:[#allocation3 + $0x220] sm:$0xff] %vm59, %v1358
    %1431 = vst.msk [vmem:[#allocation3 + $0x230] sm:$0xff] %vm59, %v1359
    %1432 = vst.msk [vmem:[#allocation3 + $0x240] sm:$0xff] %vm59, %v1360
    %1433 = vst.msk [vmem:[#allocation3 + $0x250] sm:$0xff] %vm59, %v1361
    %1434 = vst.msk [vmem:[#allocation3 + $0x260] sm:$0xff] %vm59, %v1362
    %1435 = vst.msk [vmem:[#allocation3 + $0x270] sm:$0xff] %vm59, %v1363
    %1436 = vst.msk [vmem:[#allocation3 + $0x280] sm:$0xff] %vm59, %v1364
    %1437 = vst.msk [vmem:[#allocation3 + $0x290] sm:$0xff] %vm59, %v1365
    %1438 = vst.msk [vmem:[#allocation3 + $0x2a0] sm:$0xff] %vm59, %v1366
    %1439 = vst.msk [vmem:[#allocation3 + $0x2b0] sm:$0xff] %vm59, %v1367
    %1440 = vst.msk [vmem:[#allocation3 + $0x2c0] sm:$0xff] %vm59, %v1368
    %1441 = vst.msk [vmem:[#allocation3 + $0x2d0] sm:$0xff] %vm59, %v1369
    %1442 = vst.msk [vmem:[#allocation3 + $0x2e0] sm:$0xff] %vm59, %v1370
    %1443 = vst.msk [vmem:[#allocation3 + $0x2f0] sm:$0xff] %vm59, %v1371
    %1444 = vst.msk [vmem:[#allocation3 + $0x300] sm:$0xff] %vm59, %v1372
    %1445 = vst.msk [vmem:[#allocation3 + $0x310] sm:$0xff] %vm59, %v1373
    %1446 = vst.msk [vmem:[#allocation3 + $0x320] sm:$0xff] %vm59, %v1374
    %1447 = vst.msk [vmem:[#allocation3 + $0x330] sm:$0xff] %vm59, %v1375
    %1448 = vst.msk [vmem:[#allocation3 + $0x340] sm:$0xff] %vm59, %v1376
    %1449 = vst.msk [vmem:[#allocation3 + $0x350] sm:$0xff] %vm59, %v1377
    %1450 = vst.msk [vmem:[#allocation3 + $0x360] sm:$0xff] %vm59, %v1378
    %1451 = vst.msk [vmem:[#allocation3 + $0x370] sm:$0xff] %vm59, %v1379
    %1452 = vst.msk [vmem:[#allocation3 + $0x380] sm:$0xff] %vm59, %v1380
    %1453 = vst.msk [vmem:[#allocation3 + $0x390] sm:$0xff] %vm59, %v1381
    %1454 = vst.msk [vmem:[#allocation3 + $0x3a0] sm:$0xff] %vm59, %v1382
    %1455 = vst.msk [vmem:[#allocation3 + $0x3b0] sm:$0xff] %vm59, %v1383
    %1456 = vst.msk [vmem:[#allocation3 + $0x3c0] sm:$0xff] %vm59, %v1384
    %1457 = vst.msk [vmem:[#allocation3 + $0x3d0] sm:$0xff] %vm59, %v1385
    %1458 = vst.msk [vmem:[#allocation3 + $0x3e0] sm:$0xff] %vm59, %v1386
    %1459 = vst.msk [vmem:[#allocation3 + $0x3f0] sm:$0xff] %vm59, %v1387
    %1460 = vst.msk [vmem:[#allocation3 + $0x400] sm:$0xff] %vm59, %v1388
    %1461 = vst.msk [vmem:[#allocation3 + $0x410] sm:$0xff] %vm59, %v1389
    %1462 = vst.msk [vmem:[#allocation3 + $0x420] sm:$0xff] %vm59, %v1390
    %1463 = vst.msk [vmem:[#allocation3 + $0x430] sm:$0xff] %vm59, %v1391
    %1464 = vst.msk [vmem:[#allocation3 + $0x440] sm:$0xff] %vm59, %v1392
    %1465 = vst.msk [vmem:[#allocation3 + $0x450] sm:$0xff] %vm59, %v1393
    %1466 = vst.msk [vmem:[#allocation3 + $0x460] sm:$0xff] %vm59, %v1394
    %1467 = vst.msk [vmem:[#allocation3 + $0x470] sm:$0xff] %vm59, %v1395
    %v1468 = vld [vmem:[#allocation2 + $0x1] sm:$0xff]
    %v1469 = vld [vmem:[#allocation2 + $0x9] sm:$0xff]
    %v1470 = vld [vmem:[#allocation2 + $0x19] sm:$0xff]
    %v1471 = vld [vmem:[#allocation2 + $0x21] sm:$0xff]
    %v1472 = vld [vmem:[#allocation2 + $0x31] sm:$0xff]
    %v1473 = vld [vmem:[#allocation2 + $0x39] sm:$0xff]
    %v1474 = vld [vmem:[#allocation2 + $0x49] sm:$0xff]
    %v1475 = vld [vmem:[#allocation2 + $0x51] sm:$0xff]
    %v1476 = vld [vmem:[#allocation2 + $0x61] sm:$0xff]
    %v1477 = vld [vmem:[#allocation2 + $0x69] sm:$0xff]
    %v1478 = vld [vmem:[#allocation2 + $0x79] sm:$0xff]
    %v1479 = vld [vmem:[#allocation2 + $0x81] sm:$0xff]
    %v1480 = vld [vmem:[#allocation2 + $0x91] sm:$0xff]
    %v1481 = vld [vmem:[#allocation2 + $0x99] sm:$0xff]
    %v1482 = vld [vmem:[#allocation2 + $0xa9] sm:$0xff]
    %v1483 = vld [vmem:[#allocation2 + $0xb1] sm:$0xff]
    %v1484 = vld [vmem:[#allocation2 + $0xc1] sm:$0xff]
    %v1485 = vld [vmem:[#allocation2 + $0xc9] sm:$0xff]
    %v1486 = vld [vmem:[#allocation2 + $0xd9] sm:$0xff]
    %v1487 = vld [vmem:[#allocation2 + $0xe1] sm:$0xff]
    %v1488 = vld [vmem:[#allocation2 + $0xf1] sm:$0xff]
    %v1489 = vld [vmem:[#allocation2 + $0xf9] sm:$0xff]
    %v1490 = vld [vmem:[#allocation2 + $0x109] sm:$0xff]
    %v1491 = vld [vmem:[#allocation2 + $0x111] sm:$0xff]
    %v1492 = vld [vmem:[#allocation2 + $0x121] sm:$0xff]
    %v1493 = vld [vmem:[#allocation2 + $0x129] sm:$0xff]
    %v1494 = vld [vmem:[#allocation2 + $0x139] sm:$0xff]
    %v1495 = vld [vmem:[#allocation2 + $0x141] sm:$0xff]
    %v1496 = vld [vmem:[#allocation2 + $0x151] sm:$0xff]
    %v1497 = vld [vmem:[#allocation2 + $0x159] sm:$0xff]
    %v1498 = vld [vmem:[#allocation2 + $0x169] sm:$0xff]
    %v1499 = vld [vmem:[#allocation2 + $0x171] sm:$0xff]
    %v1500 = vld [vmem:[#allocation2 + $0x181] sm:$0xff]
    %v1501 = vld [vmem:[#allocation2 + $0x189] sm:$0xff]
    %v1502 = vld [vmem:[#allocation2 + $0x199] sm:$0xff]
    %v1503 = vld [vmem:[#allocation2 + $0x1a1] sm:$0xff]
    %v1504 = vld [vmem:[#allocation2 + $0x1b1] sm:$0xff]
    %v1505 = vld [vmem:[#allocation2 + $0x1b9] sm:$0xff]
    %v1506 = vld [vmem:[#allocation2 + $0x1c9] sm:$0xff]
    %v1507 = vld [vmem:[#allocation2 + $0x1d1] sm:$0xff]
    %v1508 = vld [vmem:[#allocation2 + $0x1e1] sm:$0xff]
    %v1509 = vld [vmem:[#allocation2 + $0x1e9] sm:$0xff]
    %v1510 = vld [vmem:[#allocation2 + $0x1f9] sm:$0xff]
    %v1511 = vld [vmem:[#allocation2 + $0x201] sm:$0xff]
    %v1512 = vld [vmem:[#allocation2 + $0x211] sm:$0xff]
    %v1513 = vld [vmem:[#allocation2 + $0x219] sm:$0xff]
    %v1514 = vld [vmem:[#allocation2 + $0x229] sm:$0xff]
    %v1515 = vld [vmem:[#allocation2 + $0x231] sm:$0xff]
    %v1516 = vld [vmem:[#allocation2 + $0x241] sm:$0xff]
    %v1517 = vld [vmem:[#allocation2 + $0x249] sm:$0xff]
    %v1518 = vld [vmem:[#allocation2 + $0x259] sm:$0xff]
    %v1519 = vld [vmem:[#allocation2 + $0x261] sm:$0xff]
    %v1520 = vld [vmem:[#allocation2 + $0x271] sm:$0xff]
    %v1521 = vld [vmem:[#allocation2 + $0x279] sm:$0xff]
    %v1522 = vld [vmem:[#allocation2 + $0x289] sm:$0xff]
    %v1523 = vld [vmem:[#allocation2 + $0x291] sm:$0xff]
    %v1524 = vld [vmem:[#allocation2 + $0x2a1] sm:$0xff]
    %v1525 = vld [vmem:[#allocation2 + $0x2a9] sm:$0xff]
    %v1526 = vld [vmem:[#allocation2 + $0x2b9] sm:$0xff]
    %v1527 = vld [vmem:[#allocation2 + $0x2c1] sm:$0xff]
    %v1528 = vld [vmem:[#allocation2 + $0x2d1] sm:$0xff]
    %v1529 = vld [vmem:[#allocation2 + $0x2d9] sm:$0xff]
    %v1530 = vld [vmem:[#allocation2 + $0x2e9] sm:$0xff]
    %v1531 = vld [vmem:[#allocation2 + $0x2f1] sm:$0xff]
    %v1532 = vld [vmem:[#allocation2 + $0x301] sm:$0xff]
    %v1533 = vld [vmem:[#allocation2 + $0x309] sm:$0xff]
    %v1534 = vld [vmem:[#allocation2 + $0x319] sm:$0xff]
    %v1535 = vld [vmem:[#allocation2 + $0x321] sm:$0xff]
    %v1536 = vld [vmem:[#allocation2 + $0x331] sm:$0xff]
    %v1537 = vld [vmem:[#allocation2 + $0x339] sm:$0xff]
    %v1538 = vld [vmem:[#allocation2 + $0x349] sm:$0xff]
    %v1539 = vld [vmem:[#allocation2 + $0x351] sm:$0xff]
    %1612 = vrot.lane.b32.xlu0 %v1468, 64
    %v1613 = vpop.permute.xlu0 %1612
    %1614 = vrot.lane.b32.xlu0 %v1469, 64
    %v1615 = vpop.permute.xlu0 %1614
    %1616 = vrot.lane.b32.xlu0 %v1470, 64
    %v1617 = vpop.permute.xlu0 %1616
    %1618 = vrot.lane.b32.xlu0 %v1471, 64
    %v1619 = vpop.permute.xlu0 %1618
    %1620 = vrot.lane.b32.xlu0 %v1472, 64
    %v1621 = vpop.permute.xlu0 %1620
    %1622 = vrot.lane.b32.xlu0 %v1473, 64
    %v1623 = vpop.permute.xlu0 %1622
    %1624 = vrot.lane.b32.xlu0 %v1474, 64
    %v1625 = vpop.permute.xlu0 %1624
    %1626 = vrot.lane.b32.xlu0 %v1475, 64
    %v1627 = vpop.permute.xlu0 %1626
    %1628 = vrot.lane.b32.xlu0 %v1476, 64
    %v1629 = vpop.permute.xlu0 %1628
    %1630 = vrot.lane.b32.xlu0 %v1477, 64
    %v1631 = vpop.permute.xlu0 %1630
    %1632 = vrot.lane.b32.xlu0 %v1478, 64
    %v1633 = vpop.permute.xlu0 %1632
    %1634 = vrot.lane.b32.xlu0 %v1479, 64
    %v1635 = vpop.permute.xlu0 %1634
    %1636 = vrot.lane.b32.xlu0 %v1480, 64
    %v1637 = vpop.permute.xlu0 %1636
    %1638 = vrot.lane.b32.xlu0 %v1481, 64
    %v1639 = vpop.permute.xlu0 %1638
    %1640 = vrot.lane.b32.xlu0 %v1482, 64
    %v1641 = vpop.permute.xlu0 %1640
    %1642 = vrot.lane.b32.xlu0 %v1483, 64
    %v1643 = vpop.permute.xlu0 %1642
    %1644 = vrot.lane.b32.xlu0 %v1484, 64
    %v1645 = vpop.permute.xlu0 %1644
    %1646 = vrot.lane.b32.xlu0 %v1485, 64
    %v1647 = vpop.permute.xlu0 %1646
    %1648 = vrot.lane.b32.xlu0 %v1486, 64
    %v1649 = vpop.permute.xlu0 %1648
    %1650 = vrot.lane.b32.xlu0 %v1487, 64
    %v1651 = vpop.permute.xlu0 %1650
    %1652 = vrot.lane.b32.xlu0 %v1488, 64
    %v1653 = vpop.permute.xlu0 %1652
    %1654 = vrot.lane.b32.xlu0 %v1489, 64
    %v1655 = vpop.permute.xlu0 %1654
    %1656 = vrot.lane.b32.xlu0 %v1490, 64
    %v1657 = vpop.permute.xlu0 %1656
    %1658 = vrot.lane.b32.xlu0 %v1491, 64
    %v1659 = vpop.permute.xlu0 %1658
    %1660 = vrot.lane.b32.xlu0 %v1492, 64
    %v1661 = vpop.permute.xlu0 %1660
    %1662 = vrot.lane.b32.xlu0 %v1493, 64
    %v1663 = vpop.permute.xlu0 %1662
    %1664 = vrot.lane.b32.xlu0 %v1494, 64
    %v1665 = vpop.permute.xlu0 %1664
    %1666 = vrot.lane.b32.xlu0 %v1495, 64
    %v1667 = vpop.permute.xlu0 %1666
    %1668 = vrot.lane.b32.xlu0 %v1496, 64
    %v1669 = vpop.permute.xlu0 %1668
    %1670 = vrot.lane.b32.xlu0 %v1497, 64
    %v1671 = vpop.permute.xlu0 %1670
    %1672 = vrot.lane.b32.xlu0 %v1498, 64
    %v1673 = vpop.permute.xlu0 %1672
    %1674 = vrot.lane.b32.xlu0 %v1499, 64
    %v1675 = vpop.permute.xlu0 %1674
    %1676 = vrot.lane.b32.xlu0 %v1500, 64
    %v1677 = vpop.permute.xlu0 %1676
    %1678 = vrot.lane.b32.xlu0 %v1501, 64
    %v1679 = vpop.permute.xlu0 %1678
    %1680 = vrot.lane.b32.xlu0 %v1502, 64
    %v1681 = vpop.permute.xlu0 %1680
    %1682 = vrot.lane.b32.xlu0 %v1503, 64
    %v1683 = vpop.permute.xlu0 %1682
    %1684 = vrot.lane.b32.xlu0 %v1504, 64
    %v1685 = vpop.permute.xlu0 %1684
    %1686 = vrot.lane.b32.xlu0 %v1505, 64
    %v1687 = vpop.permute.xlu0 %1686
    %1688 = vrot.lane.b32.xlu0 %v1506, 64
    %v1689 = vpop.permute.xlu0 %1688
    %1690 = vrot.lane.b32.xlu0 %v1507, 64
    %v1691 = vpop.permute.xlu0 %1690
    %1692 = vrot.lane.b32.xlu0 %v1508, 64
    %v1693 = vpop.permute.xlu0 %1692
    %1694 = vrot.lane.b32.xlu0 %v1509, 64
    %v1695 = vpop.permute.xlu0 %1694
    %1696 = vrot.lane.b32.xlu0 %v1510, 64
    %v1697 = vpop.permute.xlu0 %1696
    %1698 = vrot.lane.b32.xlu0 %v1511, 64
    %v1699 = vpop.permute.xlu0 %1698
    %1700 = vrot.lane.b32.xlu0 %v1512, 64
    %v1701 = vpop.permute.xlu0 %1700
    %1702 = vrot.lane.b32.xlu0 %v1513, 64
    %v1703 = vpop.permute.xlu0 %1702
    %1704 = vrot.lane.b32.xlu0 %v1514, 64
    %v1705 = vpop.permute.xlu0 %1704
    %1706 = vrot.lane.b32.xlu0 %v1515, 64
    %v1707 = vpop.permute.xlu0 %1706
    %1708 = vrot.lane.b32.xlu0 %v1516, 64
    %v1709 = vpop.permute.xlu0 %1708
    %1710 = vrot.lane.b32.xlu0 %v1517, 64
    %v1711 = vpop.permute.xlu0 %1710
    %1712 = vrot.lane.b32.xlu0 %v1518, 64
    %v1713 = vpop.permute.xlu0 %1712
    %1714 = vrot.lane.b32.xlu0 %v1519, 64
    %v1715 = vpop.permute.xlu0 %1714
    %1716 = vrot.lane.b32.xlu0 %v1520, 64
    %v1717 = vpop.permute.xlu0 %1716
    %1718 = vrot.lane.b32.xlu0 %v1521, 64
    %v1719 = vpop.permute.xlu0 %1718
    %1720 = vrot.lane.b32.xlu0 %v1522, 64
    %v1721 = vpop.permute.xlu0 %1720
    %1722 = vrot.lane.b32.xlu0 %v1523, 64
    %v1723 = vpop.permute.xlu0 %1722
    %1724 = vrot.lane.b32.xlu0 %v1524, 64
    %v1725 = vpop.permute.xlu0 %1724
    %1726 = vrot.lane.b32.xlu0 %v1525, 64
    %v1727 = vpop.permute.xlu0 %1726
    %1728 = vrot.lane.b32.xlu0 %v1526, 64
    %v1729 = vpop.permute.xlu0 %1728
    %1730 = vrot.lane.b32.xlu0 %v1527, 64
    %v1731 = vpop.permute.xlu0 %1730
    %1732 = vrot.lane.b32.xlu0 %v1528, 64
    %v1733 = vpop.permute.xlu0 %1732
    %1734 = vrot.lane.b32.xlu0 %v1529, 64
    %v1735 = vpop.permute.xlu0 %1734
    %1736 = vrot.lane.b32.xlu0 %v1530, 64
    %v1737 = vpop.permute.xlu0 %1736
    %1738 = vrot.lane.b32.xlu0 %v1531, 64
    %v1739 = vpop.permute.xlu0 %1738
    %1740 = vrot.lane.b32.xlu0 %v1532, 64
    %v1741 = vpop.permute.xlu0 %1740
    %1742 = vrot.lane.b32.xlu0 %v1533, 64
    %v1743 = vpop.permute.xlu0 %1742
    %1744 = vrot.lane.b32.xlu0 %v1534, 64
    %v1745 = vpop.permute.xlu0 %1744
    %1746 = vrot.lane.b32.xlu0 %v1535, 64
    %v1747 = vpop.permute.xlu0 %1746
    %1748 = vrot.lane.b32.xlu0 %v1536, 64
    %v1749 = vpop.permute.xlu0 %1748
    %1750 = vrot.lane.b32.xlu0 %v1537, 64
    %v1751 = vpop.permute.xlu0 %1750
    %1752 = vrot.lane.b32.xlu0 %v1538, 64
    %v1753 = vpop.permute.xlu0 %1752
    %1754 = vrot.lane.b32.xlu0 %v1539, 64
    %v1755 = vpop.permute.xlu0 %1754
    %vm1828 = vcmask 1048064
    %1829 = vst.msk [vmem:[#allocation3] sm:$0xff] %vm1828, %v1613
    %1830 = vst.msk [vmem:[#allocation3 + $0x10] sm:$0xff] %vm1828, %v1615
    %1831 = vst.msk [vmem:[#allocation3 + $0x20] sm:$0xff] %vm1828, %v1617
    %1832 = vst.msk [vmem:[#allocation3 + $0x30] sm:$0xff] %vm1828, %v1619
    %1833 = vst.msk [vmem:[#allocation3 + $0x40] sm:$0xff] %vm1828, %v1621
    %1834 = vst.msk [vmem:[#allocation3 + $0x50] sm:$0xff] %vm1828, %v1623
    %1835 = vst.msk [vmem:[#allocation3 + $0x60] sm:$0xff] %vm1828, %v1625
    %1836 = vst.msk [vmem:[#allocation3 + $0x70] sm:$0xff] %vm1828, %v1627
    %1837 = vst.msk [vmem:[#allocation3 + $0x80] sm:$0xff] %vm1828, %v1629
    %1838 = vst.msk [vmem:[#allocation3 + $0x90] sm:$0xff] %vm1828, %v1631
    %1839 = vst.msk [vmem:[#allocation3 + $0xa0] sm:$0xff] %vm1828, %v1633
    %1840 = vst.msk [vmem:[#allocation3 + $0xb0] sm:$0xff] %vm1828, %v1635
    %1841 = vst.msk [vmem:[#allocation3 + $0xc0] sm:$0xff] %vm1828, %v1637
    %1842 = vst.msk [vmem:[#allocation3 + $0xd0] sm:$0xff] %vm1828, %v1639
    %1843 = vst.msk [vmem:[#allocation3 + $0xe0] sm:$0xff] %vm1828, %v1641
    %1844 = vst.msk [vmem:[#allocation3 + $0xf0] sm:$0xff] %vm1828, %v1643
    %1845 = vst.msk [vmem:[#allocation3 + $0x100] sm:$0xff] %vm1828, %v1645
    %1846 = vst.msk [vmem:[#allocation3 + $0x110] sm:$0xff] %vm1828, %v1647
    %1847 = vst.msk [vmem:[#allocation3 + $0x120] sm:$0xff] %vm1828, %v1649
    %1848 = vst.msk [vmem:[#allocation3 + $0x130] sm:$0xff] %vm1828, %v1651
    %1849 = vst.msk [vmem:[#allocation3 + $0x140] sm:$0xff] %vm1828, %v1653
    %1850 = vst.msk [vmem:[#allocation3 + $0x150] sm:$0xff] %vm1828, %v1655
    %1851 = vst.msk [vmem:[#allocation3 + $0x160] sm:$0xff] %vm1828, %v1657
    %1852 = vst.msk [vmem:[#allocation3 + $0x170] sm:$0xff] %vm1828, %v1659
    %1853 = vst.msk [vmem:[#allocation3 + $0x180] sm:$0xff] %vm1828, %v1661
    %1854 = vst.msk [vmem:[#allocation3 + $0x190] sm:$0xff] %vm1828, %v1663
    %1855 = vst.msk [vmem:[#allocation3 + $0x1a0] sm:$0xff] %vm1828, %v1665
    %1856 = vst.msk [vmem:[#allocation3 + $0x1b0] sm:$0xff] %vm1828, %v1667
    %1857 = vst.msk [vmem:[#allocation3 + $0x1c0] sm:$0xff] %vm1828, %v1669
    %1858 = vst.msk [vmem:[#allocation3 + $0x1d0] sm:$0xff] %vm1828, %v1671
    %1859 = vst.msk [vmem:[#allocation3 + $0x1e0] sm:$0xff] %vm1828, %v1673
    %1860 = vst.msk [vmem:[#allocation3 + $0x1f0] sm:$0xff] %vm1828, %v1675
    %1861 = vst.msk [vmem:[#allocation3 + $0x200] sm:$0xff] %vm1828, %v1677
    %1862 = vst.msk [vmem:[#allocation3 + $0x210] sm:$0xff] %vm1828, %v1679
    %1863 = vst.msk [vmem:[#allocation3 + $0x220] sm:$0xff] %vm1828, %v1681
    %1864 = vst.msk [vmem:[#allocation3 + $0x230] sm:$0xff] %vm1828, %v1683
    %1865 = vst.msk [vmem:[#allocation3 + $0x240] sm:$0xff] %vm1828, %v1685
    %1866 = vst.msk [vmem:[#allocation3 + $0x250] sm:$0xff] %vm1828, %v1687
    %1867 = vst.msk [vmem:[#allocation3 + $0x260] sm:$0xff] %vm1828, %v1689
    %1868 = vst.msk [vmem:[#allocation3 + $0x270] sm:$0xff] %vm1828, %v1691
    %1869 = vst.msk [vmem:[#allocation3 + $0x280] sm:$0xff] %vm1828, %v1693
    %1870 = vst.msk [vmem:[#allocation3 + $0x290] sm:$0xff] %vm1828, %v1695
    %1871 = vst.msk [vmem:[#allocation3 + $0x2a0] sm:$0xff] %vm1828, %v1697
    %1872 = vst.msk [vmem:[#allocation3 + $0x2b0] sm:$0xff] %vm1828, %v1699
    %1873 = vst.msk [vmem:[#allocation3 + $0x2c0] sm:$0xff] %vm1828, %v1701
    %1874 = vst.msk [vmem:[#allocation3 + $0x2d0] sm:$0xff] %vm1828, %v1703
    %1875 = vst.msk [vmem:[#allocation3 + $0x2e0] sm:$0xff] %vm1828, %v1705
    %1876 = vst.msk [vmem:[#allocation3 + $0x2f0] sm:$0xff] %vm1828, %v1707
    %1877 = vst.msk [vmem:[#allocation3 + $0x300] sm:$0xff] %vm1828, %v1709
    %1878 = vst.msk [vmem:[#allocation3 + $0x310] sm:$0xff] %vm1828, %v1711
    %1879 = vst.msk [vmem:[#allocation3 + $0x320] sm:$0xff] %vm1828, %v1713
    %1880 = vst.msk [vmem:[#allocation3 + $0x330] sm:$0xff] %vm1828, %v1715
    %1881 = vst.msk [vmem:[#allocation3 + $0x340] sm:$0xff] %vm1828, %v1717
    %1882 = vst.msk [vmem:[#allocation3 + $0x350] sm:$0xff] %vm1828, %v1719
    %1883 = vst.msk [vmem:[#allocation3 + $0x360] sm:$0xff] %vm1828, %v1721
    %1884 = vst.msk [vmem:[#allocation3 + $0x370] sm:$0xff] %vm1828, %v1723
    %1885 = vst.msk [vmem:[#allocation3 + $0x380] sm:$0xff] %vm1828, %v1725
    %1886 = vst.msk [vmem:[#allocation3 + $0x390] sm:$0xff] %vm1828, %v1727
    %1887 = vst.msk [vmem:[#allocation3 + $0x3a0] sm:$0xff] %vm1828, %v1729
    %1888 = vst.msk [vmem:[#allocation3 + $0x3b0] sm:$0xff] %vm1828, %v1731
    %1889 = vst.msk [vmem:[#allocation3 + $0x3c0] sm:$0xff] %vm1828, %v1733
    %1890 = vst.msk [vmem:[#allocation3 + $0x3d0] sm:$0xff] %vm1828, %v1735
    %1891 = vst.msk [vmem:[#allocation3 + $0x3e0] sm:$0xff] %vm1828, %v1737
    %1892 = vst.msk [vmem:[#allocation3 + $0x3f0] sm:$0xff] %vm1828, %v1739
    %1893 = vst.msk [vmem:[#allocation3 + $0x400] sm:$0xff] %vm1828, %v1741
    %1894 = vst.msk [vmem:[#allocation3 + $0x410] sm:$0xff] %vm1828, %v1743
    %1895 = vst.msk [vmem:[#allocation3 + $0x420] sm:$0xff] %vm1828, %v1745
    %1896 = vst.msk [vmem:[#allocation3 + $0x430] sm:$0xff] %vm1828, %v1747
    %1897 = vst.msk [vmem:[#allocation3 + $0x440] sm:$0xff] %vm1828, %v1749
    %1898 = vst.msk [vmem:[#allocation3 + $0x450] sm:$0xff] %vm1828, %v1751
    %1899 = vst.msk [vmem:[#allocation3 + $0x460] sm:$0xff] %vm1828, %v1753
    %1900 = vst.msk [vmem:[#allocation3 + $0x470] sm:$0xff] %vm1828, %v1755
    %v1901 = vld [vmem:[#allocation2 + $0x2] sm:$0xff]
    %v1902 = vld [vmem:[#allocation2 + $0xa] sm:$0xff]
    %v1903 = vld [vmem:[#allocation2 + $0x1a] sm:$0xff]
    %v1904 = vld [vmem:[#allocation2 + $0x22] sm:$0xff]
    %v1905 = vld [vmem:[#allocation2 + $0x32] sm:$0xff]
    %v1906 = vld [vmem:[#allocation2 + $0x3a] sm:$0xff]
    %v1907 = vld [vmem:[#allocation2 + $0x4a] sm:$0xff]
    %v1908 = vld [vmem:[#allocation2 + $0x52] sm:$0xff]
    %v1909 = vld [vmem:[#allocation2 + $0x62] sm:$0xff]
    %v1910 = vld [vmem:[#allocation2 + $0x6a] sm:$0xff]
    %v1911 = vld [vmem:[#allocation2 + $0x7a] sm:$0xff]
    %v1912 = vld [vmem:[#allocation2 + $0x82] sm:$0xff]
    %v1913 = vld [vmem:[#allocation2 + $0x92] sm:$0xff]
    %v1914 = vld [vmem:[#allocation2 + $0x9a] sm:$0xff]
    %v1915 = vld [vmem:[#allocation2 + $0xaa] sm:$0xff]
    %v1916 = vld [vmem:[#allocation2 + $0xb2] sm:$0xff]
    %v1917 = vld [vmem:[#allocation2 + $0xc2] sm:$0xff]
    %v1918 = vld [vmem:[#allocation2 + $0xca] sm:$0xff]
    %v1919 = vld [vmem:[#allocation2 + $0xda] sm:$0xff]
    %v1920 = vld [vmem:[#allocation2 + $0xe2] sm:$0xff]
    %v1921 = vld [vmem:[#allocation2 + $0xf2] sm:$0xff]
    %v1922 = vld [vmem:[#allocation2 + $0xfa] sm:$0xff]
    %v1923 = vld [vmem:[#allocation2 + $0x10a] sm:$0xff]
    %v1924 = vld [vmem:[#allocation2 + $0x112] sm:$0xff]
    %v1925 = vld [vmem:[#allocation2 + $0x122] sm:$0xff]
    %v1926 = vld [vmem:[#allocation2 + $0x12a] sm:$0xff]
    %v1927 = vld [vmem:[#allocation2 + $0x13a] sm:$0xff]
    %v1928 = vld [vmem:[#allocation2 + $0x142] sm:$0xff]
    %v1929 = vld [vmem:[#allocation2 + $0x152] sm:$0xff]
    %v1930 = vld [vmem:[#allocation2 + $0x15a] sm:$0xff]
    %v1931 = vld [vmem:[#allocation2 + $0x16a] sm:$0xff]
    %v1932 = vld [vmem:[#allocation2 + $0x172] sm:$0xff]
    %v1933 = vld [vmem:[#allocation2 + $0x182] sm:$0xff]
    %v1934 = vld [vmem:[#allocation2 + $0x18a] sm:$0xff]
    %v1935 = vld [vmem:[#allocation2 + $0x19a] sm:$0xff]
    %v1936 = vld [vmem:[#allocation2 + $0x1a2] sm:$0xff]
    %v1937 = vld [vmem:[#allocation2 + $0x1b2] sm:$0xff]
    %v1938 = vld [vmem:[#allocation2 + $0x1ba] sm:$0xff]
    %v1939 = vld [vmem:[#allocation2 + $0x1ca] sm:$0xff]
    %v1940 = vld [vmem:[#allocation2 + $0x1d2] sm:$0xff]
    %v1941 = vld [vmem:[#allocation2 + $0x1e2] sm:$0xff]
    %v1942 = vld [vmem:[#allocation2 + $0x1ea] sm:$0xff]
    %v1943 = vld [vmem:[#allocation2 + $0x1fa] sm:$0xff]
    %v1944 = vld [vmem:[#allocation2 + $0x202] sm:$0xff]
    %v1945 = vld [vmem:[#allocation2 + $0x212] sm:$0xff]
    %v1946 = vld [vmem:[#allocation2 + $0x21a] sm:$0xff]
    %v1947 = vld [vmem:[#allocation2 + $0x22a] sm:$0xff]
    %v1948 = vld [vmem:[#allocation2 + $0x232] sm:$0xff]
    %v1949 = vld [vmem:[#allocation2 + $0x242] sm:$0xff]
    %v1950 = vld [vmem:[#allocation2 + $0x24a] sm:$0xff]
    %v1951 = vld [vmem:[#allocation2 + $0x25a] sm:$0xff]
    %v1952 = vld [vmem:[#allocation2 + $0x262] sm:$0xff]
    %v1953 = vld [vmem:[#allocation2 + $0x272] sm:$0xff]
    %v1954 = vld [vmem:[#allocation2 + $0x27a] sm:$0xff]
    %v1955 = vld [vmem:[#allocation2 + $0x28a] sm:$0xff]
    %v1956 = vld [vmem:[#allocation2 + $0x292] sm:$0xff]
    %v1957 = vld [vmem:[#allocation2 + $0x2a2] sm:$0xff]
    %v1958 = vld [vmem:[#allocation2 + $0x2aa] sm:$0xff]
    %v1959 = vld [vmem:[#allocation2 + $0x2ba] sm:$0xff]
    %v1960 = vld [vmem:[#allocation2 + $0x2c2] sm:$0xff]
    %v1961 = vld [vmem:[#allocation2 + $0x2d2] sm:$0xff]
    %v1962 = vld [vmem:[#allocation2 + $0x2da] sm:$0xff]
    %v1963 = vld [vmem:[#allocation2 + $0x2ea] sm:$0xff]
    %v1964 = vld [vmem:[#allocation2 + $0x2f2] sm:$0xff]
    %v1965 = vld [vmem:[#allocation2 + $0x302] sm:$0xff]
    %v1966 = vld [vmem:[#allocation2 + $0x30a] sm:$0xff]
    %v1967 = vld [vmem:[#allocation2 + $0x31a] sm:$0xff]
    %v1968 = vld [vmem:[#allocation2 + $0x322] sm:$0xff]
    %v1969 = vld [vmem:[#allocation2 + $0x332] sm:$0xff]
    %v1970 = vld [vmem:[#allocation2 + $0x33a] sm:$0xff]
    %v1971 = vld [vmem:[#allocation2 + $0x34a] sm:$0xff]
    %v1972 = vld [vmem:[#allocation2 + $0x352] sm:$0xff]
    %1973 = vst.msk [vmem:[#allocation3 + $0x8] sm:$0xff] %vm59, %v1901
    %1974 = vst.msk [vmem:[#allocation3 + $0x18] sm:$0xff] %vm59, %v1902
    %1975 = vst.msk [vmem:[#allocation3 + $0x28] sm:$0xff] %vm59, %v1903
    %1976 = vst.msk [vmem:[#allocation3 + $0x38] sm:$0xff] %vm59, %v1904
    %1977 = vst.msk [vmem:[#allocation3 + $0x48] sm:$0xff] %vm59, %v1905
    %1978 = vst.msk [vmem:[#allocation3 + $0x58] sm:$0xff] %vm59, %v1906
    %1979 = vst.msk [vmem:[#allocation3 + $0x68] sm:$0xff] %vm59, %v1907
    %1980 = vst.msk [vmem:[#allocation3 + $0x78] sm:$0xff] %vm59, %v1908
    %1981 = vst.msk [vmem:[#allocation3 + $0x88] sm:$0xff] %vm59, %v1909
    %1982 = vst.msk [vmem:[#allocation3 + $0x98] sm:$0xff] %vm59, %v1910
    %1983 = vst.msk [vmem:[#allocation3 + $0xa8] sm:$0xff] %vm59, %v1911
    %1984 = vst.msk [vmem:[#allocation3 + $0xb8] sm:$0xff] %vm59, %v1912
    %1985 = vst.msk [vmem:[#allocation3 + $0xc8] sm:$0xff] %vm59, %v1913
    %1986 = vst.msk [vmem:[#allocation3 + $0xd8] sm:$0xff] %vm59, %v1914
    %1987 = vst.msk [vmem:[#allocation3 + $0xe8] sm:$0xff] %vm59, %v1915
    %1988 = vst.msk [vmem:[#allocation3 + $0xf8] sm:$0xff] %vm59, %v1916
    %1989 = vst.msk [vmem:[#allocation3 + $0x108] sm:$0xff] %vm59, %v1917
    %1990 = vst.msk [vmem:[#allocation3 + $0x118] sm:$0xff] %vm59, %v1918
    %1991 = vst.msk [vmem:[#allocation3 + $0x128] sm:$0xff] %vm59, %v1919
    %1992 = vst.msk [vmem:[#allocation3 + $0x138] sm:$0xff] %vm59, %v1920
    %1993 = vst.msk [vmem:[#allocation3 + $0x148] sm:$0xff] %vm59, %v1921
    %1994 = vst.msk [vmem:[#allocation3 + $0x158] sm:$0xff] %vm59, %v1922
    %1995 = vst.msk [vmem:[#allocation3 + $0x168] sm:$0xff] %vm59, %v1923
    %1996 = vst.msk [vmem:[#allocation3 + $0x178] sm:$0xff] %vm59, %v1924
    %1997 = vst.msk [vmem:[#allocation3 + $0x188] sm:$0xff] %vm59, %v1925
    %1998 = vst.msk [vmem:[#allocation3 + $0x198] sm:$0xff] %vm59, %v1926
    %1999 = vst.msk [vmem:[#allocation3 + $0x1a8] sm:$0xff] %vm59, %v1927
    %2000 = vst.msk [vmem:[#allocation3 + $0x1b8] sm:$0xff] %vm59, %v1928
    %2001 = vst.msk [vmem:[#allocation3 + $0x1c8] sm:$0xff] %vm59, %v1929
    %2002 = vst.msk [vmem:[#allocation3 + $0x1d8] sm:$0xff] %vm59, %v1930
    %2003 = vst.msk [vmem:[#allocation3 + $0x1e8] sm:$0xff] %vm59, %v1931
    %2004 = vst.msk [vmem:[#allocation3 + $0x1f8] sm:$0xff] %vm59, %v1932
    %2005 = vst.msk [vmem:[#allocation3 + $0x208] sm:$0xff] %vm59, %v1933
    %2006 = vst.msk [vmem:[#allocation3 + $0x218] sm:$0xff] %vm59, %v1934
    %2007 = vst.msk [vmem:[#allocation3 + $0x228] sm:$0xff] %vm59, %v1935
    %2008 = vst.msk [vmem:[#allocation3 + $0x238] sm:$0xff] %vm59, %v1936
    %2009 = vst.msk [vmem:[#allocation3 + $0x248] sm:$0xff] %vm59, %v1937
    %2010 = vst.msk [vmem:[#allocation3 + $0x258] sm:$0xff] %vm59, %v1938
    %2011 = vst.msk [vmem:[#allocation3 + $0x268] sm:$0xff] %vm59, %v1939
    %2012 = vst.msk [vmem:[#allocation3 + $0x278] sm:$0xff] %vm59, %v1940
    %2013 = vst.msk [vmem:[#allocation3 + $0x288] sm:$0xff] %vm59, %v1941
    %2014 = vst.msk [vmem:[#allocation3 + $0x298] sm:$0xff] %vm59, %v1942
    %2015 = vst.msk [vmem:[#allocation3 + $0x2a8] sm:$0xff] %vm59, %v1943
    %2016 = vst.msk [vmem:[#allocation3 + $0x2b8] sm:$0xff] %vm59, %v1944
    %2017 = vst.msk [vmem:[#allocation3 + $0x2c8] sm:$0xff] %vm59, %v1945
    %2018 = vst.msk [vmem:[#allocation3 + $0x2d8] sm:$0xff] %vm59, %v1946
    %2019 = vst.msk [vmem:[#allocation3 + $0x2e8] sm:$0xff] %vm59, %v1947
    %2020 = vst.msk [vmem:[#allocation3 + $0x2f8] sm:$0xff] %vm59, %v1948
    %2021 = vst.msk [vmem:[#allocation3 + $0x308] sm:$0xff] %vm59, %v1949
    %2022 = vst.msk [vmem:[#allocation3 + $0x318] sm:$0xff] %vm59, %v1950
    %2023 = vst.msk [vmem:[#allocation3 + $0x328] sm:$0xff] %vm59, %v1951
    %2024 = vst.msk [vmem:[#allocation3 + $0x338] sm:$0xff] %vm59, %v1952
    %2025 = vst.msk [vmem:[#allocation3 + $0x348] sm:$0xff] %vm59, %v1953
    %2026 = vst.msk [vmem:[#allocation3 + $0x358] sm:$0xff] %vm59, %v1954
    %2027 = vst.msk [vmem:[#allocation3 + $0x368] sm:$0xff] %vm59, %v1955
    %2028 = vst.msk [vmem:[#allocation3 + $0x378] sm:$0xff] %vm59, %v1956
    %2029 = vst.msk [vmem:[#allocation3 + $0x388] sm:$0xff] %vm59, %v1957
    %2030 = vst.msk [vmem:[#allocation3 + $0x398] sm:$0xff] %vm59, %v1958
    %2031 = vst.msk [vmem:[#allocation3 + $0x3a8] sm:$0xff] %vm59, %v1959
    %2032 = vst.msk [vmem:[#allocation3 + $0x3b8] sm:$0xff] %vm59, %v1960
    %2033 = vst.msk [vmem:[#allocation3 + $0x3c8] sm:$0xff] %vm59, %v1961
    %2034 = vst.msk [vmem:[#allocation3 + $0x3d8] sm:$0xff] %vm59, %v1962
    %2035 = vst.msk [vmem:[#allocation3 + $0x3e8] sm:$0xff] %vm59, %v1963
    %2036 = vst.msk [vmem:[#allocation3 + $0x3f8] sm:$0xff] %vm59, %v1964
    %2037 = vst.msk [vmem:[#allocation3 + $0x408] sm:$0xff] %vm59, %v1965
    %2038 = vst.msk [vmem:[#allocation3 + $0x418] sm:$0xff] %vm59, %v1966
    %2039 = vst.msk [vmem:[#allocation3 + $0x428] sm:$0xff] %vm59, %v1967
    %2040 = vst.msk [vmem:[#allocation3 + $0x438] sm:$0xff] %vm59, %v1968
    %2041 = vst.msk [vmem:[#allocation3 + $0x448] sm:$0xff] %vm59, %v1969
    %2042 = vst.msk [vmem:[#allocation3 + $0x458] sm:$0xff] %vm59, %v1970
    %2043 = vst.msk [vmem:[#allocation3 + $0x468] sm:$0xff] %vm59, %v1971
    %2044 = vst.msk [vmem:[#allocation3 + $0x478] sm:$0xff] %vm59, %v1972
    %v2045 = vld [vmem:[#allocation3] sm:$0xff]
    %v2046 = vld [vmem:[#allocation3 + $0x8] sm:$0xff]
    %v2047 = vld [vmem:[#allocation3 + $0x10] sm:$0xff]
    %v2048 = vld [vmem:[#allocation3 + $0x18] sm:$0xff]
    %v2049 = vld [vmem:[#allocation3 + $0x20] sm:$0xff]
    %v2050 = vld [vmem:[#allocation3 + $0x28] sm:$0xff]
    %v2051 = vld [vmem:[#allocation3 + $0x30] sm:$0xff]
    %v2052 = vld [vmem:[#allocation3 + $0x38] sm:$0xff]
    %v2053 = vld [vmem:[#allocation3 + $0x40] sm:$0xff]
    %v2054 = vld [vmem:[#allocation3 + $0x48] sm:$0xff]
    %v2055 = vld [vmem:[#allocation3 + $0x50] sm:$0xff]
    %v2056 = vld [vmem:[#allocation3 + $0x58] sm:$0xff]
    %v2057 = vld [vmem:[#allocation3 + $0x60] sm:$0xff]
    %v2058 = vld [vmem:[#allocation3 + $0x68] sm:$0xff]
    %v2059 = vld [vmem:[#allocation3 + $0x70] sm:$0xff]
    %v2060 = vld [vmem:[#allocation3 + $0x78] sm:$0xff]
    %v2061 = vld [vmem:[#allocation3 + $0x80] sm:$0xff]
    %v2062 = vld [vmem:[#allocation3 + $0x88] sm:$0xff]
    %v2063 = vld [vmem:[#allocation3 + $0x90] sm:$0xff]
    %v2064 = vld [vmem:[#allocation3 + $0x98] sm:$0xff]
    %v2065 = vld [vmem:[#allocation3 + $0xa0] sm:$0xff]
    %v2066 = vld [vmem:[#allocation3 + $0xa8] sm:$0xff]
    %v2067 = vld [vmem:[#allocation3 + $0xb0] sm:$0xff]
    %v2068 = vld [vmem:[#allocation3 + $0xb8] sm:$0xff]
    %v2069 = vld [vmem:[#allocation3 + $0xc0] sm:$0xff]
    %v2070 = vld [vmem:[#allocation3 + $0xc8] sm:$0xff]
    %v2071 = vld [vmem:[#allocation3 + $0xd0] sm:$0xff]
    %v2072 = vld [vmem:[#allocation3 + $0xd8] sm:$0xff]
    %v2073 = vld [vmem:[#allocation3 + $0xe0] sm:$0xff]
    %v2074 = vld [vmem:[#allocation3 + $0xe8] sm:$0xff]
    %v2075 = vld [vmem:[#allocation3 + $0xf0] sm:$0xff]
    %v2076 = vld [vmem:[#allocation3 + $0xf8] sm:$0xff]
    %v2077 = vld [vmem:[#allocation3 + $0x100] sm:$0xff]
    %v2078 = vld [vmem:[#allocation3 + $0x108] sm:$0xff]
    %v2079 = vld [vmem:[#allocation3 + $0x110] sm:$0xff]
    %v2080 = vld [vmem:[#allocation3 + $0x118] sm:$0xff]
    %v2081 = vld [vmem:[#allocation3 + $0x120] sm:$0xff]
    %v2082 = vld [vmem:[#allocation3 + $0x128] sm:$0xff]
    %v2083 = vld [vmem:[#allocation3 + $0x130] sm:$0xff]
    %v2084 = vld [vmem:[#allocation3 + $0x138] sm:$0xff]
    %v2085 = vld [vmem:[#allocation3 + $0x140] sm:$0xff]
    %v2086 = vld [vmem:[#allocation3 + $0x148] sm:$0xff]
    %v2087 = vld [vmem:[#allocation3 + $0x150] sm:$0xff]
    %v2088 = vld [vmem:[#allocation3 + $0x158] sm:$0xff]
    %v2089 = vld [vmem:[#allocation3 + $0x160] sm:$0xff]
    %v2090 = vld [vmem:[#allocation3 + $0x168] sm:$0xff]
    %v2091 = vld [vmem:[#allocation3 + $0x170] sm:$0xff]
    %v2092 = vld [vmem:[#allocation3 + $0x178] sm:$0xff]
    %v2093 = vld [vmem:[#allocation3 + $0x180] sm:$0xff]
    %v2094 = vld [vmem:[#allocation3 + $0x188] sm:$0xff]
    %v2095 = vld [vmem:[#allocation3 + $0x190] sm:$0xff]
    %v2096 = vld [vmem:[#allocation3 + $0x198] sm:$0xff]
    %v2097 = vld [vmem:[#allocation3 + $0x1a0] sm:$0xff]
    %v2098 = vld [vmem:[#allocation3 + $0x1a8] sm:$0xff]
    %v2099 = vld [vmem:[#allocation3 + $0x1b0] sm:$0xff]
    %v2100 = vld [vmem:[#allocation3 + $0x1b8] sm:$0xff]
    %v2101 = vld [vmem:[#allocation3 + $0x1c0] sm:$0xff]
    %v2102 = vld [vmem:[#allocation3 + $0x1c8] sm:$0xff]
    %v2103 = vld [vmem:[#allocation3 + $0x1d0] sm:$0xff]
    %v2104 = vld [vmem:[#allocation3 + $0x1d8] sm:$0xff]
    %v2105 = vld [vmem:[#allocation3 + $0x1e0] sm:$0xff]
    %v2106 = vld [vmem:[#allocation3 + $0x1e8] sm:$0xff]
    %v2107 = vld [vmem:[#allocation3 + $0x1f0] sm:$0xff]
    %v2108 = vld [vmem:[#allocation3 + $0x1f8] sm:$0xff]
    %v2109 = vld [vmem:[#allocation3 + $0x240] sm:$0xff]
    %v2110 = vld [vmem:[#allocation3 + $0x248] sm:$0xff]
    %v2111 = vld [vmem:[#allocation3 + $0x250] sm:$0xff]
    %v2112 = vld [vmem:[#allocation3 + $0x258] sm:$0xff]
    %v2113 = vld [vmem:[#allocation3 + $0x260] sm:$0xff]
    %v2114 = vld [vmem:[#allocation3 + $0x268] sm:$0xff]
    %v2115 = vld [vmem:[#allocation3 + $0x270] sm:$0xff]
    %v2116 = vld [vmem:[#allocation3 + $0x278] sm:$0xff]
    %v2117 = vld [vmem:[#allocation3 + $0x280] sm:$0xff]
    %v2118 = vld [vmem:[#allocation3 + $0x288] sm:$0xff]
    %v2119 = vld [vmem:[#allocation3 + $0x290] sm:$0xff]
    %v2120 = vld [vmem:[#allocation3 + $0x298] sm:$0xff]
    %v2121 = vld [vmem:[#allocation3 + $0x2a0] sm:$0xff]
    %v2122 = vld [vmem:[#allocation3 + $0x2a8] sm:$0xff]
    %v2123 = vld [vmem:[#allocation3 + $0x2b0] sm:$0xff]
    %v2124 = vld [vmem:[#allocation3 + $0x2b8] sm:$0xff]
    %v2125 = vld [vmem:[#allocation3 + $0x2c0] sm:$0xff]
    %v2126 = vld [vmem:[#allocation3 + $0x2c8] sm:$0xff]
    %v2127 = vld [vmem:[#allocation3 + $0x2d0] sm:$0xff]
    %v2128 = vld [vmem:[#allocation3 + $0x2d8] sm:$0xff]
    %v2129 = vld [vmem:[#allocation3 + $0x2e0] sm:$0xff]
    %v2130 = vld [vmem:[#allocation3 + $0x2e8] sm:$0xff]
    %v2131 = vld [vmem:[#allocation3 + $0x2f0] sm:$0xff]
    %v2132 = vld [vmem:[#allocation3 + $0x2f8] sm:$0xff]
    %v2133 = vld [vmem:[#allocation3 + $0x300] sm:$0xff]
    %v2134 = vld [vmem:[#allocation3 + $0x308] sm:$0xff]
    %v2135 = vld [vmem:[#allocation3 + $0x310] sm:$0xff]
    %v2136 = vld [vmem:[#allocation3 + $0x318] sm:$0xff]
    %v2137 = vld [vmem:[#allocation3 + $0x320] sm:$0xff]
    %v2138 = vld [vmem:[#allocation3 + $0x328] sm:$0xff]
    %v2139 = vld [vmem:[#allocation3 + $0x330] sm:$0xff]
    %v2140 = vld [vmem:[#allocation3 + $0x338] sm:$0xff]
    %v2141 = vld [vmem:[#allocation3 + $0x340] sm:$0xff]
    %v2142 = vld [vmem:[#allocation3 + $0x348] sm:$0xff]
    %v2143 = vld [vmem:[#allocation3 + $0x350] sm:$0xff]
    %v2144 = vld [vmem:[#allocation3 + $0x358] sm:$0xff]
    %v2145 = vld [vmem:[#allocation3 + $0x360] sm:$0xff]
    %v2146 = vld [vmem:[#allocation3 + $0x368] sm:$0xff]
    %v2147 = vld [vmem:[#allocation3 + $0x370] sm:$0xff]
    %v2148 = vld [vmem:[#allocation3 + $0x378] sm:$0xff]
    %v2149 = vld [vmem:[#allocation3 + $0x380] sm:$0xff]
    %v2150 = vld [vmem:[#allocation3 + $0x388] sm:$0xff]
    %v2151 = vld [vmem:[#allocation3 + $0x390] sm:$0xff]
    %v2152 = vld [vmem:[#allocation3 + $0x398] sm:$0xff]
    %v2153 = vld [vmem:[#allocation3 + $0x3a0] sm:$0xff]
    %v2154 = vld [vmem:[#allocation3 + $0x3a8] sm:$0xff]
    %v2155 = vld [vmem:[#allocation3 + $0x3b0] sm:$0xff]
    %v2156 = vld [vmem:[#allocation3 + $0x3b8] sm:$0xff]
    %v2157 = vld [vmem:[#allocation3 + $0x3c0] sm:$0xff]
    %v2158 = vld [vmem:[#allocation3 + $0x3c8] sm:$0xff]
    %v2159 = vld [vmem:[#allocation3 + $0x3d0] sm:$0xff]
    %v2160 = vld [vmem:[#allocation3 + $0x3d8] sm:$0xff]
    %v2161 = vld [vmem:[#allocation3 + $0x3e0] sm:$0xff]
    %v2162 = vld [vmem:[#allocation3 + $0x3e8] sm:$0xff]
    %v2163 = vld [vmem:[#allocation3 + $0x3f0] sm:$0xff]
    %v2164 = vld [vmem:[#allocation3 + $0x3f8] sm:$0xff]
    %v2165 = vld [vmem:[#allocation3 + $0x400] sm:$0xff]
    %v2166 = vld [vmem:[#allocation3 + $0x408] sm:$0xff]
    %v2167 = vld [vmem:[#allocation3 + $0x410] sm:$0xff]
    %v2168 = vld [vmem:[#allocation3 + $0x418] sm:$0xff]
    %v2169 = vld [vmem:[#allocation3 + $0x420] sm:$0xff]
    %v2170 = vld [vmem:[#allocation3 + $0x428] sm:$0xff]
    %v2171 = vld [vmem:[#allocation3 + $0x430] sm:$0xff]
    %v2172 = vld [vmem:[#allocation3 + $0x438] sm:$0xff]
    %v2173 = vld [vmem:[%s3] sm:$0xff]
    %v2174 = vld [vmem:[%s3 + $0x8] sm:$0xff]
    %v2175 = vld [vmem:[%s3 + $0x10] sm:$0xff]
    %v2176 = vld [vmem:[%s3 + $0x18] sm:$0xff]
    %v2177 = vld [vmem:[%s3 + $0x20] sm:$0xff]
    %v2178 = vld [vmem:[%s3 + $0x28] sm:$0xff]
    %v2179 = vld [vmem:[%s3 + $0x30] sm:$0xff]
    %v2180 = vld [vmem:[%s3 + $0x38] sm:$0xff]
    %v2181 = vld [vmem:[%s3 + $0x40] sm:$0xff]
    %v2182 = vld [vmem:[%s3 + $0x48] sm:$0xff]
    %v2183 = vld [vmem:[%s3 + $0x50] sm:$0xff]
    %v2184 = vld [vmem:[%s3 + $0x58] sm:$0xff]
    %v2185 = vld [vmem:[%s3 + $0x60] sm:$0xff]
    %v2186 = vld [vmem:[%s3 + $0x68] sm:$0xff]
    %v2187 = vld [vmem:[%s3 + $0x70] sm:$0xff]
    %v2188 = vld [vmem:[%s3 + $0x78] sm:$0xff]
    %v2189 = vld [vmem:[%s3 + $0x80] sm:$0xff]
    %v2190 = vld [vmem:[%s3 + $0x88] sm:$0xff]
    %v2191 = vld [vmem:[%s3 + $0x90] sm:$0xff]
    %v2192 = vld [vmem:[%s3 + $0x98] sm:$0xff]
    %v2193 = vld [vmem:[%s3 + $0xa0] sm:$0xff]
    %v2194 = vld [vmem:[%s3 + $0xa8] sm:$0xff]
    %v2195 = vld [vmem:[%s3 + $0xb0] sm:$0xff]
    %v2196 = vld [vmem:[%s3 + $0xb8] sm:$0xff]
    %s2197 = scalar_lea.vmem [#allocation3], 32
    %v2198 = vld [vmem:[%s2197] sm:$0xff]
    %v2199 = vld [vmem:[%s2197 + $0x8] sm:$0xff]
    %v2200 = vld [vmem:[%s2197 + $0x10] sm:$0xff]
    %v2201 = vld [vmem:[%s2197 + $0x18] sm:$0xff]
    %v2202 = vld [vmem:[%s2197 + $0x20] sm:$0xff]
    %v2203 = vld [vmem:[%s2197 + $0x28] sm:$0xff]
    %v2204 = vld [vmem:[%s2197 + $0x30] sm:$0xff]
    %v2205 = vld [vmem:[%s2197 + $0x38] sm:$0xff]
    %v2206 = vld [vmem:[%s2197 + $0x40] sm:$0xff]
    %v2207 = vld [vmem:[%s2197 + $0x48] sm:$0xff]
    %v2208 = vld [vmem:[%s2197 + $0x50] sm:$0xff]
    %v2209 = vld [vmem:[%s2197 + $0x58] sm:$0xff]
    %v2210 = vld [vmem:[%s2197 + $0x60] sm:$0xff]
    %v2211 = vld [vmem:[%s2197 + $0x68] sm:$0xff]
    %v2212 = vld [vmem:[%s2197 + $0x70] sm:$0xff]
    %v2213 = vld [vmem:[%s2197 + $0x78] sm:$0xff]
    %v2214 = vld [vmem:[%s2197 + $0x80] sm:$0xff]
    %v2215 = vld [vmem:[%s2197 + $0x88] sm:$0xff]
    %v2216 = vld [vmem:[%s2197 + $0x90] sm:$0xff]
    %v2217 = vld [vmem:[%s2197 + $0x98] sm:$0xff]
    %v2218 = vld [vmem:[%s2197 + $0xa0] sm:$0xff]
    %v2219 = vld [vmem:[%s2197 + $0xa8] sm:$0xff]
    %v2220 = vld [vmem:[%s2197 + $0xb0] sm:$0xff]
    %v2221 = vld [vmem:[%s2197 + $0xb8] sm:$0xff]
    %v2222 = vld [vmem:[%s2197 + $0xc0] sm:$0xff]
    %v2223 = vld [vmem:[%s2197 + $0xc8] sm:$0xff]
    %v2224 = vld [vmem:[%s2197 + $0xd0] sm:$0xff]
    %v2225 = vld [vmem:[%s2197 + $0xd8] sm:$0xff]
    %v2226 = vld [vmem:[%s2197 + $0xe0] sm:$0xff]
    %v2227 = vld [vmem:[%s2197 + $0xe8] sm:$0xff]
    %v2228 = vld [vmem:[%s2197 + $0xf0] sm:$0xff]
    %v2229 = vld [vmem:[%s2197 + $0xf8] sm:$0xff]
    %v2230 = vld [vmem:[%s2197 + $0x100] sm:$0xff]
    %v2231 = vld [vmem:[%s2197 + $0x108] sm:$0xff]
    %v2232 = vld [vmem:[%s2197 + $0x110] sm:$0xff]
    %v2233 = vld [vmem:[%s2197 + $0x118] sm:$0xff]
    %v2234 = vld [vmem:[%s2197 + $0x120] sm:$0xff]
    %v2235 = vld [vmem:[%s2197 + $0x128] sm:$0xff]
    %v2236 = vld [vmem:[%s2197 + $0x130] sm:$0xff]
    %v2237 = vld [vmem:[%s2197 + $0x138] sm:$0xff]
    %v2238 = vld [vmem:[%s2197 + $0x140] sm:$0xff]
    %v2239 = vld [vmem:[%s2197 + $0x148] sm:$0xff]
    %v2240 = vld [vmem:[%s2197 + $0x150] sm:$0xff]
    %v2241 = vld [vmem:[%s2197 + $0x158] sm:$0xff]
    %v2242 = vld [vmem:[%s2197 + $0x160] sm:$0xff]
    %v2243 = vld [vmem:[%s2197 + $0x168] sm:$0xff]
    %v2244 = vld [vmem:[%s2197 + $0x170] sm:$0xff]
    %v2245 = vld [vmem:[%s2197 + $0x178] sm:$0xff]
    %v2246 = vld [vmem:[%s2197 + $0x180] sm:$0xff]
    %v2247 = vld [vmem:[%s2197 + $0x188] sm:$0xff]
    %v2248 = vld [vmem:[%s2197 + $0x190] sm:$0xff]
    %v2249 = vld [vmem:[%s2197 + $0x198] sm:$0xff]
    %v2250 = vld [vmem:[%s2197 + $0x1a0] sm:$0xff]
    %v2251 = vld [vmem:[%s2197 + $0x1a8] sm:$0xff]
    %v2252 = vld [vmem:[%s2197 + $0x1b0] sm:$0xff]
    %v2253 = vld [vmem:[%s2197 + $0x1b8] sm:$0xff]
    %v2254 = vld [vmem:[%s2197 + $0x1c0] sm:$0xff]
    %v2255 = vld [vmem:[%s2197 + $0x1c8] sm:$0xff]
    %v2256 = vld [vmem:[%s2197 + $0x1d0] sm:$0xff]
    %v2257 = vld [vmem:[%s2197 + $0x1d8] sm:$0xff]
    %v2258 = vld [vmem:[%s2197 + $0x1e0] sm:$0xff]
    %v2259 = vld [vmem:[%s2197 + $0x1e8] sm:$0xff]
    %v2260 = vld [vmem:[%s2197 + $0x1f0] sm:$0xff]
    %v2261 = vld [vmem:[%s2197 + $0x1f8] sm:$0xff]
    %v2262 = vld [vmem:[%s2197 + $0x240] sm:$0xff]
    %v2263 = vld [vmem:[%s2197 + $0x248] sm:$0xff]
    %v2264 = vld [vmem:[%s2197 + $0x250] sm:$0xff]
    %v2265 = vld [vmem:[%s2197 + $0x258] sm:$0xff]
    %v2266 = vld [vmem:[%s2197 + $0x260] sm:$0xff]
    %v2267 = vld [vmem:[%s2197 + $0x268] sm:$0xff]
    %v2268 = vld [vmem:[%s2197 + $0x270] sm:$0xff]
    %v2269 = vld [vmem:[%s2197 + $0x278] sm:$0xff]
    %v2270 = vld [vmem:[%s2197 + $0x280] sm:$0xff]
    %v2271 = vld [vmem:[%s2197 + $0x288] sm:$0xff]
    %v2272 = vld [vmem:[%s2197 + $0x290] sm:$0xff]
    %v2273 = vld [vmem:[%s2197 + $0x298] sm:$0xff]
    %v2274 = vld [vmem:[%s2197 + $0x2a0] sm:$0xff]
    %v2275 = vld [vmem:[%s2197 + $0x2a8] sm:$0xff]
    %v2276 = vld [vmem:[%s2197 + $0x2b0] sm:$0xff]
    %v2277 = vld [vmem:[%s2197 + $0x2b8] sm:$0xff]
    %v2278 = vld [vmem:[%s2197 + $0x2c0] sm:$0xff]
    %v2279 = vld [vmem:[%s2197 + $0x2c8] sm:$0xff]
    %v2280 = vld [vmem:[%s2197 + $0x2d0] sm:$0xff]
    %v2281 = vld [vmem:[%s2197 + $0x2d8] sm:$0xff]
    %v2282 = vld [vmem:[%s2197 + $0x2e0] sm:$0xff]
    %v2283 = vld [vmem:[%s2197 + $0x2e8] sm:$0xff]
    %v2284 = vld [vmem:[%s2197 + $0x2f0] sm:$0xff]
    %v2285 = vld [vmem:[%s2197 + $0x2f8] sm:$0xff]
    %v2286 = vld [vmem:[%s2197 + $0x300] sm:$0xff]
    %v2287 = vld [vmem:[%s2197 + $0x308] sm:$0xff]
    %v2288 = vld [vmem:[%s2197 + $0x310] sm:$0xff]
    %v2289 = vld [vmem:[%s2197 + $0x318] sm:$0xff]
    %v2290 = vld [vmem:[%s2197 + $0x320] sm:$0xff]
    %v2291 = vld [vmem:[%s2197 + $0x328] sm:$0xff]
    %v2292 = vld [vmem:[%s2197 + $0x330] sm:$0xff]
    %v2293 = vld [vmem:[%s2197 + $0x338] sm:$0xff]
    %v2294 = vld [vmem:[%s2197 + $0x340] sm:$0xff]
    %v2295 = vld [vmem:[%s2197 + $0x348] sm:$0xff]
    %v2296 = vld [vmem:[%s2197 + $0x350] sm:$0xff]
    %v2297 = vld [vmem:[%s2197 + $0x358] sm:$0xff]
    %v2298 = vld [vmem:[%s2197 + $0x360] sm:$0xff]
    %v2299 = vld [vmem:[%s2197 + $0x368] sm:$0xff]
    %v2300 = vld [vmem:[%s2197 + $0x370] sm:$0xff]
    %v2301 = vld [vmem:[%s2197 + $0x378] sm:$0xff]
    %v2302 = vld [vmem:[%s2197 + $0x380] sm:$0xff]
    %v2303 = vld [vmem:[%s2197 + $0x388] sm:$0xff]
    %v2304 = vld [vmem:[%s2197 + $0x390] sm:$0xff]
    %v2305 = vld [vmem:[%s2197 + $0x398] sm:$0xff]
    %v2306 = vld [vmem:[%s2197 + $0x3a0] sm:$0xff]
    %v2307 = vld [vmem:[%s2197 + $0x3a8] sm:$0xff]
    %v2308 = vld [vmem:[%s2197 + $0x3b0] sm:$0xff]
    %v2309 = vld [vmem:[%s2197 + $0x3b8] sm:$0xff]
    %v2310 = vld [vmem:[%s2197 + $0x3c0] sm:$0xff]
    %v2311 = vld [vmem:[%s2197 + $0x3c8] sm:$0xff]
    %v2312 = vld [vmem:[%s2197 + $0x3d0] sm:$0xff]
    %v2313 = vld [vmem:[%s2197 + $0x3d8] sm:$0xff]
    %v2314 = vld [vmem:[%s2197 + $0x3e0] sm:$0xff]
    %v2315 = vld [vmem:[%s2197 + $0x3e8] sm:$0xff]
    %v2316 = vld [vmem:[%s2197 + $0x3f0] sm:$0xff]
    %v2317 = vld [vmem:[%s2197 + $0x3f8] sm:$0xff]
    %v2318 = vld [vmem:[%s2197 + $0x400] sm:$0xff]
    %v2319 = vld [vmem:[%s2197 + $0x408] sm:$0xff]
    %v2320 = vld [vmem:[%s2197 + $0x410] sm:$0xff]
    %v2321 = vld [vmem:[%s2197 + $0x418] sm:$0xff]
    %v2322 = vld [vmem:[%s2197 + $0x420] sm:$0xff]
    %v2323 = vld [vmem:[%s2197 + $0x428] sm:$0xff]
    %v2324 = vld [vmem:[%s2197 + $0x430] sm:$0xff]
    %v2325 = vld [vmem:[%s2197 + $0x438] sm:$0xff]
    %s2326 = scalar_lea.vmem %s3, 192
    %v2327 = vld [vmem:[%s2326] sm:$0xff]
    %v2328 = vld [vmem:[%s2326 + $0x8] sm:$0xff]
    %v2329 = vld [vmem:[%s2326 + $0x10] sm:$0xff]
    %v2330 = vld [vmem:[%s2326 + $0x18] sm:$0xff]
    %v2331 = vld [vmem:[%s2326 + $0x20] sm:$0xff]
    %v2332 = vld [vmem:[%s2326 + $0x28] sm:$0xff]
    %v2333 = vld [vmem:[%s2326 + $0x30] sm:$0xff]
    %v2334 = vld [vmem:[%s2326 + $0x38] sm:$0xff]
    %v2335 = vld [vmem:[%s2326 + $0x40] sm:$0xff]
    %v2336 = vld [vmem:[%s2326 + $0x48] sm:$0xff]
    %v2337 = vld [vmem:[%s2326 + $0x50] sm:$0xff]
    %v2338 = vld [vmem:[%s2326 + $0x58] sm:$0xff]
    %v2339 = vld [vmem:[%s2326 + $0x60] sm:$0xff]
    %v2340 = vld [vmem:[%s2326 + $0x68] sm:$0xff]
    %v2341 = vld [vmem:[%s2326 + $0x70] sm:$0xff]
    %v2342 = vld [vmem:[%s2326 + $0x78] sm:$0xff]
    %v2343 = vld [vmem:[%s2326 + $0x80] sm:$0xff]
    %v2344 = vld [vmem:[%s2326 + $0x88] sm:$0xff]
    %v2345 = vld [vmem:[%s2326 + $0x90] sm:$0xff]
    %v2346 = vld [vmem:[%s2326 + $0x98] sm:$0xff]
    %v2347 = vld [vmem:[%s2326 + $0xa0] sm:$0xff]
    %v2348 = vld [vmem:[%s2326 + $0xa8] sm:$0xff]
    %v2349 = vld [vmem:[%s2326 + $0xb0] sm:$0xff]
    %v2350 = vld [vmem:[%s2326 + $0xb8] sm:$0xff]
    %v2352 = vsel %vm59, %v2199, 0
    %v2355 = vsel %vm59, %v2201, 0
    %v2358 = vsel %vm59, %v2203, 0
    %v2361 = vsel %vm59, %v2205, 0
    %v2364 = vsel %vm59, %v2207, 0
    %v2367 = vsel %vm59, %v2209, 0
    %v2370 = vsel %vm59, %v2211, 0
    %v2373 = vsel %vm59, %v2213, 0
    %v2376 = vsel %vm59, %v2215, 0
    %v2379 = vsel %vm59, %v2217, 0
    %v2382 = vsel %vm59, %v2219, 0
    %v2385 = vsel %vm59, %v2221, 0
    %v2388 = vsel %vm59, %v2223, 0
    %v2391 = vsel %vm59, %v2225, 0
    %v2394 = vsel %vm59, %v2227, 0
    %v2397 = vsel %vm59, %v2229, 0
    %v2400 = vsel %vm59, %v2231, 0
    %v2403 = vsel %vm59, %v2233, 0
    %v2406 = vsel %vm59, %v2235, 0
    %v2409 = vsel %vm59, %v2237, 0
    %v2412 = vsel %vm59, %v2239, 0
    %v2415 = vsel %vm59, %v2241, 0
    %v2418 = vsel %vm59, %v2243, 0
    %v2421 = vsel %vm59, %v2245, 0
    %v2424 = vsel %vm59, %v2247, 0
    %v2427 = vsel %vm59, %v2249, 0
    %v2430 = vsel %vm59, %v2251, 0
    %v2433 = vsel %vm59, %v2253, 0
    %v2436 = vsel %vm59, %v2255, 0
    %v2439 = vsel %vm59, %v2257, 0
    %v2442 = vsel %vm59, %v2259, 0
    %v2445 = vsel %vm59, %v2261, 0
    %v2448 = vsel %vm59, %v2263, 0
    %v2451 = vsel %vm59, %v2265, 0
    %v2454 = vsel %vm59, %v2267, 0
    %v2457 = vsel %vm59, %v2269, 0
    %v2460 = vsel %vm59, %v2271, 0
    %v2463 = vsel %vm59, %v2273, 0
    %v2466 = vsel %vm59, %v2275, 0
    %v2469 = vsel %vm59, %v2277, 0
    %v2472 = vsel %vm59, %v2279, 0
    %v2475 = vsel %vm59, %v2281, 0
    %v2478 = vsel %vm59, %v2283, 0
    %v2481 = vsel %vm59, %v2285, 0
    %v2484 = vsel %vm59, %v2287, 0
    %v2487 = vsel %vm59, %v2289, 0
    %v2490 = vsel %vm59, %v2291, 0
    %v2493 = vsel %vm59, %v2293, 0
    %v2496 = vsel %vm59, %v2295, 0
    %v2499 = vsel %vm59, %v2297, 0
    %v2502 = vsel %vm59, %v2299, 0
    %v2505 = vsel %vm59, %v2301, 0
    %v2508 = vsel %vm59, %v2303, 0
    %v2511 = vsel %vm59, %v2305, 0
    %v2514 = vsel %vm59, %v2307, 0
    %v2517 = vsel %vm59, %v2309, 0
    %v2520 = vsel %vm59, %v2311, 0
    %v2523 = vsel %vm59, %v2313, 0
    %v2526 = vsel %vm59, %v2315, 0
    %v2529 = vsel %vm59, %v2317, 0
    %v2532 = vsel %vm59, %v2319, 0
    %v2535 = vsel %vm59, %v2321, 0
    %v2538 = vsel %vm59, %v2323, 0
    %v2541 = vsel %vm59, %v2325, 0
    %2543 = vmatprep.subr.mxu0 0.0
    %2544 = vmatpush1.msra.mxu0 %v2327
    %2545 = vmatprep.subr.mxu0 0.0
    %2546 = vmatpush1.msra.mxu0 %v2328
    %2547 = vmatprep.subr.mxu0 0.0
    %2548 = vmatpush1.msra.mxu0 %v2329
    %2549 = vmatprep.subr.mxu0 0.0
    %2550 = vmatpush1.msra.mxu0 %v2330
    %2551 = vmatprep.subr.mxu0 0.0
    %2552 = vmatpush1.msra.mxu0 %v2331
    %2553 = vmatprep.subr.mxu0 0.0
    %2554 = vmatpush1.msra.mxu0 %v2332
    %2555 = vmatprep.subr.mxu0 0.0
    %2556 = vmatpush1.msra.mxu0 %v2333
    %2557 = vmatprep.subr.mxu0 0.0
    %2558 = vmatpush1.msra.mxu0 %v2334
    %2559 = vmatprep.subr.mxu0 0.0
    %2560 = vmatpush1.msra.mxu0 %v2335
    %2561 = vmatprep.subr.mxu0 0.0
    %2562 = vmatpush1.msra.mxu0 %v2336
    %2563 = vmatprep.subr.mxu0 0.0
    %2564 = vmatpush1.msra.mxu0 %v2337
    %2565 = vmatprep.subr.mxu0 0.0
    %2566 = vmatpush1.msra.mxu0 %v2338
    %2567 = vmatprep.subr.mxu0 0.0
    %2568 = vmatpush1.msra.mxu0 %v2339
    %2569 = vmatprep.subr.mxu0 0.0
    %2570 = vmatpush1.msra.mxu0 %v2340
    %2571 = vmatprep.subr.mxu0 0.0
    %2572 = vmatpush1.msra.mxu0 %v2341
    %2573 = vmatprep.subr.mxu0 0.0
    %2574 = vmatpush1.msra.mxu0 %v2342
    %2575 = vmatprep.subr.mxu0 0.0
    %2576 = vmatpush1.msra.mxu0 %v2343
    %2577 = vmatprep.subr.mxu0 0.0
    %2578 = vmatpush1.msra.mxu0 %v2344
    %2579 = vmatprep.subr.mxu0 0.0
    %2580 = vmatpush1.msra.mxu0 %v2345
    %2581 = vmatprep.subr.mxu0 0.0
    %2582 = vmatpush1.msra.mxu0 %v2346
    %2583 = vmatprep.subr.mxu0 0.0
    %2584 = vmatpush1.msra.mxu0 %v2347
    %2585 = vmatprep.subr.mxu0 0.0
    %2586 = vmatpush1.msra.mxu0 %v2348
    %2587 = vmatprep.subr.mxu0 0.0
    %2588 = vmatpush1.msra.mxu0 %v2349
    %2589 = vmatprep.subr.mxu0 0.0
    %2590 = vmatpush1.msra.mxu0 %v2350
    %2591 = vmatprep.subr.mxu0 0.0
    %2592 = vmatpush1.msra.mxu0 0.0
    %2593 = vmatprep.subr.mxu0 0.0
    %2594 = vmatpush1.msra.mxu0 0.0
    %2595 = vmatprep.subr.mxu0 0.0
    %2596 = vmatpush1.msra.mxu0 0.0
    %2597 = vmatprep.subr.mxu0 0.0
    %2598 = vmatpush1.msra.mxu0 0.0
    %2599 = vmatprep.subr.mxu0 0.0
    %2600 = vmatpush1.msra.mxu0 0.0
    %2601 = vmatprep.subr.mxu0 0.0
    %2602 = vmatpush1.msra.mxu0 0.0
    %2603 = vmatprep.subr.mxu0 0.0
    %2604 = vmatpush1.msra.mxu0 0.0
    %2605 = vmatprep.subr.mxu0 0.0
    %2606 = vmatpush1.msra.mxu0 0.0
    %2607 = vmatprep.mubr.f32.mxu0 %v2352
    %2608 = vmatmul.mubr.f32.gmra.mrb[0].mxu0 %v2198
    %v2609 = vpop.f32.mrb[0].mxu0
    %v2610 = vadd.f32 0.0, %v2609
    %v2611 = vpop.f32.mrb[0].mxu0
    %2612 = vmatprep.mubr.f32.mxu0 %v2355
    %2613 = vmatmul.mubr.f32.gmra.mrb[0].mxu0 %v2200
    %v2614 = vpop.f32.mrb[0].mxu0
    %v2615 = vadd.f32 0.0, %v2614
    %v2616 = vpop.f32.mrb[0].mxu0
    %2617 = vmatprep.mubr.f32.mxu0 %v2358
    %2618 = vmatmul.mubr.f32.gmra.mrb[0].mxu0 %v2202
    %v2619 = vpop.f32.mrb[0].mxu0
    %v2620 = vadd.f32 0.0, %v2619
    %v2621 = vpop.f32.mrb[0].mxu0
    %2622 = vmatprep.mubr.f32.mxu0 %v2361
    %2623 = vmatmul.mubr.f32.gmra.mrb[0].mxu0 %v2204
    %v2624 = vpop.f32.mrb[0].mxu0
    %v2625 = vadd.f32 0.0, %v2624
    %v2626 = vpop.f32.mrb[0].mxu0
    %2627 = vmatprep.mubr.f32.mxu0 %v2364
    %2628 = vmatmul.mubr.f32.gmra.mrb[0].mxu0 %v2206
    %v2629 = vpop.f32.mrb[0].mxu0
    %v2630 = vadd.f32 0.0, %v2629
    %v2631 = vpop.f32.mrb[0].mxu0
    %2632 = vmatprep.mubr.f32.mxu0 %v2367
    %2633 = vmatmul.mubr.f32.gmra.mrb[0].mxu0 %v2208
    %v2634 = vpop.f32.mrb[0].mxu0
    %v2635 = vadd.f32 0.0, %v2634
    %v2636 = vpop.f32.mrb[0].mxu0
    %2637 = vmatprep.mubr.f32.mxu0 %v2370
    %2638 = vmatmul.mubr.f32.gmra.mrb[0].mxu0 %v2210
    %v2639 = vpop.f32.mrb[0].mxu0
    %v2640 = vadd.f32 0.0, %v2639
    %v2641 = vpop.f32.mrb[0].mxu0
    %2642 = vmatprep.mubr.f32.mxu0 %v2373
    %2643 = vmatmul.mubr.f32.gmra.mrb[0].mxu0 %v2212
    %v2644 = vpop.f32.mrb[0].mxu0
    %v2645 = vadd.f32 0.0, %v2644
    %v2646 = vpop.f32.mrb[0].mxu0
    %2647 = vmatprep.mubr.f32.mxu0 %v2376
    %2648 = vmatmul.mubr.f32.gmra.mrb[0].mxu0 %v2214
    %v2649 = vpop.f32.mrb[0].mxu0
    %v2650 = vadd.f32 0.0, %v2649
    %v2651 = vpop.f32.mrb[0].mxu0
    %2652 = vmatprep.mubr.f32.mxu0 %v2379
    %2653 = vmatmul.mubr.f32.gmra.mrb[0].mxu0 %v2216
    %v2654 = vpop.f32.mrb[0].mxu0
    %v2655 = vadd.f32 0.0, %v2654
    %v2656 = vpop.f32.mrb[0].mxu0
    %2657 = vmatprep.mubr.f32.mxu0 %v2382
    %2658 = vmatmul.mubr.f32.gmra.mrb[0].mxu0 %v2218
    %v2659 = vpop.f32.mrb[0].mxu0
    %v2660 = vadd.f32 0.0, %v2659
    %v2661 = vpop.f32.mrb[0].mxu0
    %2662 = vmatprep.mubr.f32.mxu0 %v2385
    %2663 = vmatmul.mubr.f32.gmra.mrb[0].mxu0 %v2220
    %v2664 = vpop.f32.mrb[0].mxu0
    %v2665 = vadd.f32 0.0, %v2664
    %v2666 = vpop.f32.mrb[0].mxu0
    %2667 = vmatprep.mubr.f32.mxu0 %v2388
    %2668 = vmatmul.mubr.f32.gmra.mrb[0].mxu0 %v2222
    %v2669 = vpop.f32.mrb[0].mxu0
    %v2670 = vadd.f32 0.0, %v2669
    %v2671 = vpop.f32.mrb[0].mxu0
    %2672 = vmatprep.mubr.f32.mxu0 %v2391
    %2673 = vmatmul.mubr.f32.gmra.mrb[0].mxu0 %v2224
    %v2674 = vpop.f32.mrb[0].mxu0
    %v2675 = vadd.f32 0.0, %v2674
    %v2676 = vpop.f32.mrb[0].mxu0
    %2677 = vmatprep.mubr.f32.mxu0 %v2394
    %2678 = vmatmul.mubr.f32.gmra.mrb[0].mxu0 %v2226
    %v2679 = vpop.f32.mrb[0].mxu0
    %v2680 = vadd.f32 0.0, %v2679
    %v2681 = vpop.f32.mrb[0].mxu0
    %2682 = vmatprep.mubr.f32.mxu0 %v2397
    %2683 = vmatmul.mubr.f32.gmra.mrb[0].mxu0 %v2228
    %v2684 = vpop.f32.mrb[0].mxu0
    %v2685 = vadd.f32 0.0, %v2684
    %v2686 = vpop.f32.mrb[0].mxu0
    %2687 = vmatprep.mubr.f32.mxu0 %v2400
    %2688 = vmatmul.mubr.f32.gmra.mrb[0].mxu0 %v2230
    %v2689 = vpop.f32.mrb[0].mxu0
    %v2690 = vadd.f32 0.0, %v2689
    %v2691 = vpop.f32.mrb[0].mxu0
    %2692 = vmatprep.mubr.f32.mxu0 %v2403
    %2693 = vmatmul.mubr.f32.gmra.mrb[0].mxu0 %v2232
    %v2694 = vpop.f32.mrb[0].mxu0
    %v2695 = vadd.f32 0.0, %v2694
    %v2696 = vpop.f32.mrb[0].mxu0
    %2697 = vmatprep.mubr.f32.mxu0 %v2406
    %2698 = vmatmul.mubr.f32.gmra.mrb[0].mxu0 %v2234
    %v2699 = vpop.f32.mrb[0].mxu0
    %v2700 = vadd.f32 0.0, %v2699
    %v2701 = vpop.f32.mrb[0].mxu0
    %2702 = vmatprep.mubr.f32.mxu0 %v2409
    %2703 = vmatmul.mubr.f32.gmra.mrb[0].mxu0 %v2236
    %v2704 = vpop.f32.mrb[0].mxu0
    %v2705 = vadd.f32 0.0, %v2704
    %v2706 = vpop.f32.mrb[0].mxu0
    %2707 = vmatprep.mubr.f32.mxu0 %v2412
    %2708 = vmatmul.mubr.f32.gmra.mrb[0].mxu0 %v2238
    %v2709 = vpop.f32.mrb[0].mxu0
    %v2710 = vadd.f32 0.0, %v2709
    %v2711 = vpop.f32.mrb[0].mxu0
    %2712 = vmatprep.mubr.f32.mxu0 %v2415
    %2713 = vmatmul.mubr.f32.gmra.mrb[0].mxu0 %v2240
    %v2714 = vpop.f32.mrb[0].mxu0
    %v2715 = vadd.f32 0.0, %v2714
    %v2716 = vpop.f32.mrb[0].mxu0
    %2717 = vmatprep.mubr.f32.mxu0 %v2418
    %2718 = vmatmul.mubr.f32.gmra.mrb[0].mxu0 %v2242
    %v2719 = vpop.f32.mrb[0].mxu0
    %v2720 = vadd.f32 0.0, %v2719
    %v2721 = vpop.f32.mrb[0].mxu0
    %2722 = vmatprep.mubr.f32.mxu0 %v2421
    %2723 = vmatmul.mubr.f32.gmra.mrb[0].mxu0 %v2244
    %v2724 = vpop.f32.mrb[0].mxu0
    %v2725 = vadd.f32 0.0, %v2724
    %v2726 = vpop.f32.mrb[0].mxu0
    %2727 = vmatprep.mubr.f32.mxu0 %v2424
    %2728 = vmatmul.mubr.f32.gmra.mrb[0].mxu0 %v2246
    %v2729 = vpop.f32.mrb[0].mxu0
    %v2730 = vadd.f32 0.0, %v2729
    %v2731 = vpop.f32.mrb[0].mxu0
    %2732 = vmatprep.mubr.f32.mxu0 %v2427
    %2733 = vmatmul.mubr.f32.gmra.mrb[0].mxu0 %v2248
    %v2734 = vpop.f32.mrb[0].mxu0
    %v2735 = vadd.f32 0.0, %v2734
    %v2736 = vpop.f32.mrb[0].mxu0
    %2737 = vmatprep.mubr.f32.mxu0 %v2430
    %2738 = vmatmul.mubr.f32.gmra.mrb[0].mxu0 %v2250
    %v2739 = vpop.f32.mrb[0].mxu0
    %v2740 = vadd.f32 0.0, %v2739
    %v2741 = vpop.f32.mrb[0].mxu0
    %2742 = vmatprep.mubr.f32.mxu0 %v2433
    %2743 = vmatmul.mubr.f32.gmra.mrb[0].mxu0 %v2252
    %v2744 = vpop.f32.mrb[0].mxu0
    %v2745 = vadd.f32 0.0, %v2744
    %v2746 = vpop.f32.mrb[0].mxu0
    %2747 = vmatprep.mubr.f32.mxu0 %v2436
    %2748 = vmatmul.mubr.f32.gmra.mrb[0].mxu0 %v2254
    %v2749 = vpop.f32.mrb[0].mxu0
    %v2750 = vadd.f32 0.0, %v2749
    %v2751 = vpop.f32.mrb[0].mxu0
    %2752 = vmatprep.mubr.f32.mxu0 %v2439
    %2753 = vmatmul.mubr.f32.gmra.mrb[0].mxu0 %v2256
    %v2754 = vpop.f32.mrb[0].mxu0
    %v2755 = vadd.f32 0.0, %v2754
    %v2756 = vpop.f32.mrb[0].mxu0
    %2757 = vmatprep.mubr.f32.mxu0 %v2442
    %2758 = vmatmul.mubr.f32.gmra.mrb[0].mxu0 %v2258
    %v2759 = vpop.f32.mrb[0].mxu0
    %v2760 = vadd.f32 0.0, %v2759
    %v2761 = vpop.f32.mrb[0].mxu0
    %2762 = vmatprep.mubr.f32.mxu0 %v2445
    %2763 = vmatmul.mubr.f32.gmra.mrb[0].mxu0 %v2260
    %v2764 = vpop.f32.mrb[0].mxu0
    %v2765 = vadd.f32 0.0, %v2764
    %v2766 = vpop.f32.mrb[0].mxu0
    %2767 = vmatprep.mubr.f32.mxu0 %v2448
    %2768 = vmatmul.mubr.f32.gmra.mrb[0].mxu0 %v2262
    %v2769 = vpop.f32.mrb[0].mxu0
    %v2770 = vadd.f32 0.0, %v2769
    %v2771 = vpop.f32.mrb[0].mxu0
    %2772 = vmatprep.mubr.f32.mxu0 %v2451
    %2773 = vmatmul.mubr.f32.gmra.mrb[0].mxu0 %v2264
    %v2774 = vpop.f32.mrb[0].mxu0
    %v2775 = vadd.f32 0.0, %v2774
    %v2776 = vpop.f32.mrb[0].mxu0
    %2777 = vmatprep.mubr.f32.mxu0 %v2454
    %2778 = vmatmul.mubr.f32.gmra.mrb[0].mxu0 %v2266
    %v2779 = vpop.f32.mrb[0].mxu0
    %v2780 = vadd.f32 0.0, %v2779
    %v2781 = vpop.f32.mrb[0].mxu0
    %2782 = vmatprep.mubr.f32.mxu0 %v2457
    %2783 = vmatmul.mubr.f32.gmra.mrb[0].mxu0 %v2268
    %v2784 = vpop.f32.mrb[0].mxu0
    %v2785 = vadd.f32 0.0, %v2784
    %v2786 = vpop.f32.mrb[0].mxu0
    %2787 = vmatprep.mubr.f32.mxu0 %v2460
    %2788 = vmatmul.mubr.f32.gmra.mrb[0].mxu0 %v2270
    %v2789 = vpop.f32.mrb[0].mxu0
    %v2790 = vadd.f32 0.0, %v2789
    %v2791 = vpop.f32.mrb[0].mxu0
    %2792 = vmatprep.mubr.f32.mxu0 %v2463
    %2793 = vmatmul.mubr.f32.gmra.mrb[0].mxu0 %v2272
    %v2794 = vpop.f32.mrb[0].mxu0
    %v2795 = vadd.f32 0.0, %v2794
    %v2796 = vpop.f32.mrb[0].mxu0
    %2797 = vmatprep.mubr.f32.mxu0 %v2466
    %2798 = vmatmul.mubr.f32.gmra.mrb[0].mxu0 %v2274
    %v2799 = vpop.f32.mrb[0].mxu0
    %v2800 = vadd.f32 0.0, %v2799
    %v2801 = vpop.f32.mrb[0].mxu0
    %2802 = vmatprep.mubr.f32.mxu0 %v2469
    %2803 = vmatmul.mubr.f32.gmra.mrb[0].mxu0 %v2276
    %v2804 = vpop.f32.mrb[0].mxu0
    %v2805 = vadd.f32 0.0, %v2804
    %v2806 = vpop.f32.mrb[0].mxu0
    %2807 = vmatprep.mubr.f32.mxu0 %v2472
    %2808 = vmatmul.mubr.f32.gmra.mrb[0].mxu0 %v2278
    %v2809 = vpop.f32.mrb[0].mxu0
    %v2810 = vadd.f32 0.0, %v2809
    %v2811 = vpop.f32.mrb[0].mxu0
    %2812 = vmatprep.mubr.f32.mxu0 %v2475
    %2813 = vmatmul.mubr.f32.gmra.mrb[0].mxu0 %v2280
    %v2814 = vpop.f32.mrb[0].mxu0
    %v2815 = vadd.f32 0.0, %v2814
    %v2816 = vpop.f32.mrb[0].mxu0
    %2817 = vmatprep.mubr.f32.mxu0 %v2478
    %2818 = vmatmul.mubr.f32.gmra.mrb[0].mxu0 %v2282
    %v2819 = vpop.f32.mrb[0].mxu0
    %v2820 = vadd.f32 0.0, %v2819
    %v2821 = vpop.f32.mrb[0].mxu0
    %2822 = vmatprep.mubr.f32.mxu0 %v2481
    %2823 = vmatmul.mubr.f32.gmra.mrb[0].mxu0 %v2284
    %v2824 = vpop.f32.mrb[0].mxu0
    %v2825 = vadd.f32 0.0, %v2824
    %v2826 = vpop.f32.mrb[0].mxu0
    %2827 = vmatprep.mubr.f32.mxu0 %v2484
    %2828 = vmatmul.mubr.f32.gmra.mrb[0].mxu0 %v2286
    %v2829 = vpop.f32.mrb[0].mxu0
    %v2830 = vadd.f32 0.0, %v2829
    %v2831 = vpop.f32.mrb[0].mxu0
    %2832 = vmatprep.mubr.f32.mxu0 %v2487
    %2833 = vmatmul.mubr.f32.gmra.mrb[0].mxu0 %v2288
    %v2834 = vpop.f32.mrb[0].mxu0
    %v2835 = vadd.f32 0.0, %v2834
    %v2836 = vpop.f32.mrb[0].mxu0
    %2837 = vmatprep.mubr.f32.mxu0 %v2490
    %2838 = vmatmul.mubr.f32.gmra.mrb[0].mxu0 %v2290
    %v2839 = vpop.f32.mrb[0].mxu0
    %v2840 = vadd.f32 0.0, %v2839
    %v2841 = vpop.f32.mrb[0].mxu0
    %2842 = vmatprep.mubr.f32.mxu0 %v2493
    %2843 = vmatmul.mubr.f32.gmra.mrb[0].mxu0 %v2292
    %v2844 = vpop.f32.mrb[0].mxu0
    %v2845 = vadd.f32 0.0, %v2844
    %v2846 = vpop.f32.mrb[0].mxu0
    %2847 = vmatprep.mubr.f32.mxu0 %v2496
    %2848 = vmatmul.mubr.f32.gmra.mrb[0].mxu0 %v2294
    %v2849 = vpop.f32.mrb[0].mxu0
    %v2850 = vadd.f32 0.0, %v2849
    %v2851 = vpop.f32.mrb[0].mxu0
    %2852 = vmatprep.mubr.f32.mxu0 %v2499
    %2853 = vmatmul.mubr.f32.gmra.mrb[0].mxu0 %v2296
    %v2854 = vpop.f32.mrb[0].mxu0
    %v2855 = vadd.f32 0.0, %v2854
    %v2856 = vpop.f32.mrb[0].mxu0
    %2857 = vmatprep.mubr.f32.mxu0 %v2502
    %2858 = vmatmul.mubr.f32.gmra.mrb[0].mxu0 %v2298
    %v2859 = vpop.f32.mrb[0].mxu0
    %v2860 = vadd.f32 0.0, %v2859
    %v2861 = vpop.f32.mrb[0].mxu0
    %2862 = vmatprep.mubr.f32.mxu0 %v2505
    %2863 = vmatmul.mubr.f32.gmra.mrb[0].mxu0 %v2300
    %v2864 = vpop.f32.mrb[0].mxu0
    %v2865 = vadd.f32 0.0, %v2864
    %v2866 = vpop.f32.mrb[0].mxu0
    %2867 = vmatprep.mubr.f32.mxu0 %v2508
    %2868 = vmatmul.mubr.f32.gmra.mrb[0].mxu0 %v2302
    %v2869 = vpop.f32.mrb[0].mxu0
    %v2870 = vadd.f32 0.0, %v2869
    %v2871 = vpop.f32.mrb[0].mxu0
    %2872 = vmatprep.mubr.f32.mxu0 %v2511
    %2873 = vmatmul.mubr.f32.gmra.mrb[0].mxu0 %v2304
    %v2874 = vpop.f32.mrb[0].mxu0
    %v2875 = vadd.f32 0.0, %v2874
    %v2876 = vpop.f32.mrb[0].mxu0
    %2877 = vmatprep.mubr.f32.mxu0 %v2514
    %2878 = vmatmul.mubr.f32.gmra.mrb[0].mxu0 %v2306
    %v2879 = vpop.f32.mrb[0].mxu0
    %v2880 = vadd.f32 0.0, %v2879
    %v2881 = vpop.f32.mrb[0].mxu0
    %2882 = vmatprep.mubr.f32.mxu0 %v2517
    %2883 = vmatmul.mubr.f32.gmra.mrb[0].mxu0 %v2308
    %v2884 = vpop.f32.mrb[0].mxu0
    %v2885 = vadd.f32 0.0, %v2884
    %v2886 = vpop.f32.mrb[0].mxu0
    %2887 = vmatprep.mubr.f32.mxu0 %v2520
    %2888 = vmatmul.mubr.f32.gmra.mrb[0].mxu0 %v2310
    %v2889 = vpop.f32.mrb[0].mxu0
    %v2890 = vadd.f32 0.0, %v2889
    %v2891 = vpop.f32.mrb[0].mxu0
    %2892 = vmatprep.mubr.f32.mxu0 %v2523
    %2893 = vmatmul.mubr.f32.gmra.mrb[0].mxu0 %v2312
    %v2894 = vpop.f32.mrb[0].mxu0
    %v2895 = vadd.f32 0.0, %v2894
    %v2896 = vpop.f32.mrb[0].mxu0
    %2897 = vmatprep.mubr.f32.mxu0 %v2526
    %2898 = vmatmul.mubr.f32.gmra.mrb[0].mxu0 %v2314
    %v2899 = vpop.f32.mrb[0].mxu0
    %v2900 = vadd.f32 0.0, %v2899
    %v2901 = vpop.f32.mrb[0].mxu0
    %2902 = vmatprep.mubr.f32.mxu0 %v2529
    %2903 = vmatmul.mubr.f32.gmra.mrb[0].mxu0 %v2316
    %v2904 = vpop.f32.mrb[0].mxu0
    %v2905 = vadd.f32 0.0, %v2904
    %v2906 = vpop.f32.mrb[0].mxu0
    %2907 = vmatprep.mubr.f32.mxu0 %v2532
    %2908 = vmatmul.mubr.f32.gmra.mrb[0].mxu0 %v2318
    %v2909 = vpop.f32.mrb[0].mxu0
    %v2910 = vadd.f32 0.0, %v2909
    %v2911 = vpop.f32.mrb[0].mxu0
    %2912 = vmatprep.mubr.f32.mxu0 %v2535
    %2913 = vmatmul.mubr.f32.gmra.mrb[0].mxu0 %v2320
    %v2914 = vpop.f32.mrb[0].mxu0
    %v2915 = vadd.f32 0.0, %v2914
    %v2916 = vpop.f32.mrb[0].mxu0
    %2917 = vmatprep.mubr.f32.mxu0 %v2538
    %2918 = vmatmul.mubr.f32.gmra.mrb[0].mxu0 %v2322
    %v2919 = vpop.f32.mrb[0].mxu0
    %v2920 = vadd.f32 0.0, %v2919
    %v2921 = vpop.f32.mrb[0].mxu0
    %2922 = vmatprep.mubr.f32.mxu0 %v2541
    %2923 = vmatmul.mubr.f32.gmra.mrb[0].mxu0 %v2324
    %v2924 = vpop.f32.mrb[0].mxu0
    %v2925 = vadd.f32 0.0, %v2924
    %v2926 = vpop.f32.mrb[0].mxu0
    %2927 = vdwg.mxu0
    %v2929 = vsel %vm59, %v2046, 0
    %v2932 = vsel %vm59, %v2048, 0
    %v2935 = vsel %vm59, %v2050, 0
    %v2938 = vsel %vm59, %v2052, 0
    %v2941 = vsel %vm59, %v2054, 0
    %v2944 = vsel %vm59, %v2056, 0
    %v2947 = vsel %vm59, %v2058, 0
    %v2950 = vsel %vm59, %v2060, 0
    %v2953 = vsel %vm59, %v2062, 0
    %v2956 = vsel %vm59, %v2064, 0
    %v2959 = vsel %vm59, %v2066, 0
    %v2962 = vsel %vm59, %v2068, 0
    %v2965 = vsel %vm59, %v2070, 0
    %v2968 = vsel %vm59, %v2072, 0
    %v2971 = vsel %vm59, %v2074, 0
    %v2974 = vsel %vm59, %v2076, 0
    %v2977 = vsel %vm59, %v2078, 0
    %v2980 = vsel %vm59, %v2080, 0
    %v2983 = vsel %vm59, %v2082, 0
    %v2986 = vsel %vm59, %v2084, 0
    %v2989 = vsel %vm59, %v2086, 0
    %v2992 = vsel %vm59, %v2088, 0
    %v2995 = vsel %vm59, %v2090, 0
    %v2998 = vsel %vm59, %v2092, 0
    %v3001 = vsel %vm59, %v2094, 0
    %v3004 = vsel %vm59, %v2096, 0
    %v3007 = vsel %vm59, %v2098, 0
    %v3010 = vsel %vm59, %v2100, 0
    %v3013 = vsel %vm59, %v2102, 0
    %v3016 = vsel %vm59, %v2104, 0
    %v3019 = vsel %vm59, %v2106, 0
    %v3022 = vsel %vm59, %v2108, 0
    %v3025 = vsel %vm59, %v2110, 0
    %v3028 = vsel %vm59, %v2112, 0
    %v3031 = vsel %vm59, %v2114, 0
    %v3034 = vsel %vm59, %v2116, 0
    %v3037 = vsel %vm59, %v2118, 0
    %v3040 = vsel %vm59, %v2120, 0
    %v3043 = vsel %vm59, %v2122, 0
    %v3046 = vsel %vm59, %v2124, 0
    %v3049 = vsel %vm59, %v2126, 0
    %v3052 = vsel %vm59, %v2128, 0
    %v3055 = vsel %vm59, %v2130, 0
    %v3058 = vsel %vm59, %v2132, 0
    %v3061 = vsel %vm59, %v2134, 0
    %v3064 = vsel %vm59, %v2136, 0
    %v3067 = vsel %vm59, %v2138, 0
    %v3070 = vsel %vm59, %v2140, 0
    %v3073 = vsel %vm59, %v2142, 0
    %v3076 = vsel %vm59, %v2144, 0
    %v3079 = vsel %vm59, %v2146, 0
    %v3082 = vsel %vm59, %v2148, 0
    %v3085 = vsel %vm59, %v2150, 0
    %v3088 = vsel %vm59, %v2152, 0
    %v3091 = vsel %vm59, %v2154, 0
    %v3094 = vsel %vm59, %v2156, 0
    %v3097 = vsel %vm59, %v2158, 0
    %v3100 = vsel %vm59, %v2160, 0
    %v3103 = vsel %vm59, %v2162, 0
    %v3106 = vsel %vm59, %v2164, 0
    %v3109 = vsel %vm59, %v2166, 0
    %v3112 = vsel %vm59, %v2168, 0
    %v3115 = vsel %vm59, %v2170, 0
    %v3118 = vsel %vm59, %v2172, 0
    %3120 = vmatprep.subr.mxu0 0.0
    %3121 = vmatpush1.msra.mxu0 %v2173
    %3122 = vmatprep.subr.mxu0 0.0
    %3123 = vmatpush1.msra.mxu0 %v2174
    %3124 = vmatprep.subr.mxu0 0.0
    %3125 = vmatpush1.msra.mxu0 %v2175
    %3126 = vmatprep.subr.mxu0 0.0
    %3127 = vmatpush1.msra.mxu0 %v2176
    %3128 = vmatprep.subr.mxu0 0.0
    %3129 = vmatpush1.msra.mxu0 %v2177
    %3130 = vmatprep.subr.mxu0 0.0
    %3131 = vmatpush1.msra.mxu0 %v2178
    %3132 = vmatprep.subr.mxu0 0.0
    %3133 = vmatpush1.msra.mxu0 %v2179
    %3134 = vmatprep.subr.mxu0 0.0
    %3135 = vmatpush1.msra.mxu0 %v2180
    %3136 = vmatprep.subr.mxu0 0.0
    %3137 = vmatpush1.msra.mxu0 %v2181
    %3138 = vmatprep.subr.mxu0 0.0
    %3139 = vmatpush1.msra.mxu0 %v2182
    %3140 = vmatprep.subr.mxu0 0.0
    %3141 = vmatpush1.msra.mxu0 %v2183
    %3142 = vmatprep.subr.mxu0 0.0
    %3143 = vmatpush1.msra.mxu0 %v2184
    %3144 = vmatprep.subr.mxu0 0.0
    %3145 = vmatpush1.msra.mxu0 %v2185
    %3146 = vmatprep.subr.mxu0 0.0
    %3147 = vmatpush1.msra.mxu0 %v2186
    %3148 = vmatprep.subr.mxu0 0.0
    %3149 = vmatpush1.msra.mxu0 %v2187
    %3150 = vmatprep.subr.mxu0 0.0
    %3151 = vmatpush1.msra.mxu0 %v2188
    %3152 = vmatprep.subr.mxu0 0.0
    %3153 = vmatpush1.msra.mxu0 %v2189
    %3154 = vmatprep.subr.mxu0 0.0
    %3155 = vmatpush1.msra.mxu0 %v2190
    %3156 = vmatprep.subr.mxu0 0.0
    %3157 = vmatpush1.msra.mxu0 %v2191
    %3158 = vmatprep.subr.mxu0 0.0
    %3159 = vmatpush1.msra.mxu0 %v2192
    %3160 = vmatprep.subr.mxu0 0.0
    %3161 = vmatpush1.msra.mxu0 %v2193
    %3162 = vmatprep.subr.mxu0 0.0
    %3163 = vmatpush1.msra.mxu0 %v2194
    %3164 = vmatprep.subr.mxu0 0.0
    %3165 = vmatpush1.msra.mxu0 %v2195
    %3166 = vmatprep.subr.mxu0 0.0
    %3167 = vmatpush1.msra.mxu0 %v2196
    %3168 = vmatprep.subr.mxu0 0.0
    %3169 = vmatpush1.msra.mxu0 0.0
    %3170 = vmatprep.subr.mxu0 0.0
    %3171 = vmatpush1.msra.mxu0 0.0
    %3172 = vmatprep.subr.mxu0 0.0
    %3173 = vmatpush1.msra.mxu0 0.0
    %3174 = vmatprep.subr.mxu0 0.0
    %3175 = vmatpush1.msra.mxu0 0.0
    %3176 = vmatprep.subr.mxu0 0.0
    %3177 = vmatpush1.msra.mxu0 0.0
    %3178 = vmatprep.subr.mxu0 0.0
    %3179 = vmatpush1.msra.mxu0 0.0
    %3180 = vmatprep.subr.mxu0 0.0
    %3181 = vmatpush1.msra.mxu0 0.0
    %3182 = vmatprep.subr.mxu0 0.0
    %3183 = vmatpush1.msra.mxu0 0.0
    %3184 = vmatprep.mubr.f32.mxu0 %v2929
    %3185 = vmatmul.mubr.f32.gmra.mrb[0].mxu0 %v2045
    %v3186 = vpop.f32.mrb[0].mxu0
    %v3187 = vadd.f32 %v2610, %v3186
    %v3188 = vpop.f32.mrb[0].mxu0
    %3189 = vmatprep.mubr.f32.mxu0 %v2932
    %3190 = vmatmul.mubr.f32.gmra.mrb[0].mxu0 %v2047
    %v3191 = vpop.f32.mrb[0].mxu0
    %v3192 = vadd.f32 %v2615, %v3191
    %v3193 = vpop.f32.mrb[0].mxu0
    %3194 = vmatprep.mubr.f32.mxu0 %v2935
    %3195 = vmatmul.mubr.f32.gmra.mrb[0].mxu0 %v2049
    %v3196 = vpop.f32.mrb[0].mxu0
    %v3197 = vadd.f32 %v2620, %v3196
    %v3198 = vpop.f32.mrb[0].mxu0
    %3199 = vmatprep.mubr.f32.mxu0 %v2938
    %3200 = vmatmul.mubr.f32.gmra.mrb[0].mxu0 %v2051
    %v3201 = vpop.f32.mrb[0].mxu0
    %v3202 = vadd.f32 %v2625, %v3201
    %v3203 = vpop.f32.mrb[0].mxu0
    %3204 = vmatprep.mubr.f32.mxu0 %v2941
    %3205 = vmatmul.mubr.f32.gmra.mrb[0].mxu0 %v2053
    %v3206 = vpop.f32.mrb[0].mxu0
    %v3207 = vadd.f32 %v2630, %v3206
    %v3208 = vpop.f32.mrb[0].mxu0
    %3209 = vmatprep.mubr.f32.mxu0 %v2944
    %3210 = vmatmul.mubr.f32.gmra.mrb[0].mxu0 %v2055
    %v3211 = vpop.f32.mrb[0].mxu0
    %v3212 = vadd.f32 %v2635, %v3211
    %v3213 = vpop.f32.mrb[0].mxu0
    %3214 = vmatprep.mubr.f32.mxu0 %v2947
    %3215 = vmatmul.mubr.f32.gmra.mrb[0].mxu0 %v2057
    %v3216 = vpop.f32.mrb[0].mxu0
    %v3217 = vadd.f32 %v2640, %v3216
    %v3218 = vpop.f32.mrb[0].mxu0
    %3219 = vmatprep.mubr.f32.mxu0 %v2950
    %3220 = vmatmul.mubr.f32.gmra.mrb[0].mxu0 %v2059
    %v3221 = vpop.f32.mrb[0].mxu0
    %v3222 = vadd.f32 %v2645, %v3221
    %v3223 = vpop.f32.mrb[0].mxu0
    %3224 = vmatprep.mubr.f32.mxu0 %v2953
    %3225 = vmatmul.mubr.f32.gmra.mrb[0].mxu0 %v2061
    %v3226 = vpop.f32.mrb[0].mxu0
    %v3227 = vadd.f32 %v2650, %v3226
    %v3228 = vpop.f32.mrb[0].mxu0
    %3229 = vmatprep.mubr.f32.mxu0 %v2956
    %3230 = vmatmul.mubr.f32.gmra.mrb[0].mxu0 %v2063
    %v3231 = vpop.f32.mrb[0].mxu0
    %v3232 = vadd.f32 %v2655, %v3231
    %v3233 = vpop.f32.mrb[0].mxu0
    %3234 = vmatprep.mubr.f32.mxu0 %v2959
    %3235 = vmatmul.mubr.f32.gmra.mrb[0].mxu0 %v2065
    %v3236 = vpop.f32.mrb[0].mxu0
    %v3237 = vadd.f32 %v2660, %v3236
    %v3238 = vpop.f32.mrb[0].mxu0
    %3239 = vmatprep.mubr.f32.mxu0 %v2962
    %3240 = vmatmul.mubr.f32.gmra.mrb[0].mxu0 %v2067
    %v3241 = vpop.f32.mrb[0].mxu0
    %v3242 = vadd.f32 %v2665, %v3241
    %v3243 = vpop.f32.mrb[0].mxu0
    %3244 = vmatprep.mubr.f32.mxu0 %v2965
    %3245 = vmatmul.mubr.f32.gmra.mrb[0].mxu0 %v2069
    %v3246 = vpop.f32.mrb[0].mxu0
    %v3247 = vadd.f32 %v2670, %v3246
    %v3248 = vpop.f32.mrb[0].mxu0
    %3249 = vmatprep.mubr.f32.mxu0 %v2968
    %3250 = vmatmul.mubr.f32.gmra.mrb[0].mxu0 %v2071
    %v3251 = vpop.f32.mrb[0].mxu0
    %v3252 = vadd.f32 %v2675, %v3251
    %v3253 = vpop.f32.mrb[0].mxu0
    %3254 = vmatprep.mubr.f32.mxu0 %v2971
    %3255 = vmatmul.mubr.f32.gmra.mrb[0].mxu0 %v2073
    %v3256 = vpop.f32.mrb[0].mxu0
    %v3257 = vadd.f32 %v2680, %v3256
    %v3258 = vpop.f32.mrb[0].mxu0
    %3259 = vmatprep.mubr.f32.mxu0 %v2974
    %3260 = vmatmul.mubr.f32.gmra.mrb[0].mxu0 %v2075
    %v3261 = vpop.f32.mrb[0].mxu0
    %v3262 = vadd.f32 %v2685, %v3261
    %v3263 = vpop.f32.mrb[0].mxu0
    %3264 = vmatprep.mubr.f32.mxu0 %v2977
    %3265 = vmatmul.mubr.f32.gmra.mrb[0].mxu0 %v2077
    %v3266 = vpop.f32.mrb[0].mxu0
    %v3267 = vadd.f32 %v2690, %v3266
    %v3268 = vpop.f32.mrb[0].mxu0
    %3269 = vmatprep.mubr.f32.mxu0 %v2980
    %3270 = vmatmul.mubr.f32.gmra.mrb[0].mxu0 %v2079
    %v3271 = vpop.f32.mrb[0].mxu0
    %v3272 = vadd.f32 %v2695, %v3271
    %v3273 = vpop.f32.mrb[0].mxu0
    %3274 = vmatprep.mubr.f32.mxu0 %v2983
    %3275 = vmatmul.mubr.f32.gmra.mrb[0].mxu0 %v2081
    %v3276 = vpop.f32.mrb[0].mxu0
    %v3277 = vadd.f32 %v2700, %v3276
    %v3278 = vpop.f32.mrb[0].mxu0
    %3279 = vmatprep.mubr.f32.mxu0 %v2986
    %3280 = vmatmul.mubr.f32.gmra.mrb[0].mxu0 %v2083
    %v3281 = vpop.f32.mrb[0].mxu0
    %v3282 = vadd.f32 %v2705, %v3281
    %v3283 = vpop.f32.mrb[0].mxu0
    %3284 = vmatprep.mubr.f32.mxu0 %v2989
    %3285 = vmatmul.mubr.f32.gmra.mrb[0].mxu0 %v2085
    %v3286 = vpop.f32.mrb[0].mxu0
    %v3287 = vadd.f32 %v2710, %v3286
    %v3288 = vpop.f32.mrb[0].mxu0
    %3289 = vmatprep.mubr.f32.mxu0 %v2992
    %3290 = vmatmul.mubr.f32.gmra.mrb[0].mxu0 %v2087
    %v3291 = vpop.f32.mrb[0].mxu0
    %v3292 = vadd.f32 %v2715, %v3291
    %v3293 = vpop.f32.mrb[0].mxu0
    %3294 = vmatprep.mubr.f32.mxu0 %v2995
    %3295 = vmatmul.mubr.f32.gmra.mrb[0].mxu0 %v2089
    %v3296 = vpop.f32.mrb[0].mxu0
    %v3297 = vadd.f32 %v2720, %v3296
    %v3298 = vpop.f32.mrb[0].mxu0
    %3299 = vmatprep.mubr.f32.mxu0 %v2998
    %3300 = vmatmul.mubr.f32.gmra.mrb[0].mxu0 %v2091
    %v3301 = vpop.f32.mrb[0].mxu0
    %v3302 = vadd.f32 %v2725, %v3301
    %v3303 = vpop.f32.mrb[0].mxu0
    %3304 = vmatprep.mubr.f32.mxu0 %v3001
    %3305 = vmatmul.mubr.f32.gmra.mrb[0].mxu0 %v2093
    %v3306 = vpop.f32.mrb[0].mxu0
    %v3307 = vadd.f32 %v2730, %v3306
    %v3308 = vpop.f32.mrb[0].mxu0
    %3309 = vmatprep.mubr.f32.mxu0 %v3004
    %3310 = vmatmul.mubr.f32.gmra.mrb[0].mxu0 %v2095
    %v3311 = vpop.f32.mrb[0].mxu0
    %v3312 = vadd.f32 %v2735, %v3311
    %v3313 = vpop.f32.mrb[0].mxu0
    %3314 = vmatprep.mubr.f32.mxu0 %v3007
    %3315 = vmatmul.mubr.f32.gmra.mrb[0].mxu0 %v2097
    %v3316 = vpop.f32.mrb[0].mxu0
    %v3317 = vadd.f32 %v2740, %v3316
    %v3318 = vpop.f32.mrb[0].mxu0
    %3319 = vmatprep.mubr.f32.mxu0 %v3010
    %3320 = vmatmul.mubr.f32.gmra.mrb[0].mxu0 %v2099
    %v3321 = vpop.f32.mrb[0].mxu0
    %v3322 = vadd.f32 %v2745, %v3321
    %v3323 = vpop.f32.mrb[0].mxu0
    %3324 = vmatprep.mubr.f32.mxu0 %v3013
    %3325 = vmatmul.mubr.f32.gmra.mrb[0].mxu0 %v2101
    %v3326 = vpop.f32.mrb[0].mxu0
    %v3327 = vadd.f32 %v2750, %v3326
    %v3328 = vpop.f32.mrb[0].mxu0
    %3329 = vmatprep.mubr.f32.mxu0 %v3016
    %3330 = vmatmul.mubr.f32.gmra.mrb[0].mxu0 %v2103
    %v3331 = vpop.f32.mrb[0].mxu0
    %v3332 = vadd.f32 %v2755, %v3331
    %v3333 = vpop.f32.mrb[0].mxu0
    %3334 = vmatprep.mubr.f32.mxu0 %v3019
    %3335 = vmatmul.mubr.f32.gmra.mrb[0].mxu0 %v2105
    %v3336 = vpop.f32.mrb[0].mxu0
    %v3337 = vadd.f32 %v2760, %v3336
    %v3338 = vpop.f32.mrb[0].mxu0
    %3339 = vmatprep.mubr.f32.mxu0 %v3022
    %3340 = vmatmul.mubr.f32.gmra.mrb[0].mxu0 %v2107
    %v3341 = vpop.f32.mrb[0].mxu0
    %v3342 = vadd.f32 %v2765, %v3341
    %v3343 = vpop.f32.mrb[0].mxu0
    %3344 = vmatprep.mubr.f32.mxu0 %v3025
    %3345 = vmatmul.mubr.f32.gmra.mrb[0].mxu0 %v2109
    %v3346 = vpop.f32.mrb[0].mxu0
    %v3347 = vadd.f32 %v2770, %v3346
    %v3348 = vpop.f32.mrb[0].mxu0
    %3349 = vmatprep.mubr.f32.mxu0 %v3028
    %3350 = vmatmul.mubr.f32.gmra.mrb[0].mxu0 %v2111
    %v3351 = vpop.f32.mrb[0].mxu0
    %v3352 = vadd.f32 %v2775, %v3351
    %v3353 = vpop.f32.mrb[0].mxu0
    %3354 = vmatprep.mubr.f32.mxu0 %v3031
    %3355 = vmatmul.mubr.f32.gmra.mrb[0].mxu0 %v2113
    %v3356 = vpop.f32.mrb[0].mxu0
    %v3357 = vadd.f32 %v2780, %v3356
    %v3358 = vpop.f32.mrb[0].mxu0
    %3359 = vmatprep.mubr.f32.mxu0 %v3034
    %3360 = vmatmul.mubr.f32.gmra.mrb[0].mxu0 %v2115
    %v3361 = vpop.f32.mrb[0].mxu0
    %v3362 = vadd.f32 %v2785, %v3361
    %v3363 = vpop.f32.mrb[0].mxu0
    %3364 = vmatprep.mubr.f32.mxu0 %v3037
    %3365 = vmatmul.mubr.f32.gmra.mrb[0].mxu0 %v2117
    %v3366 = vpop.f32.mrb[0].mxu0
    %v3367 = vadd.f32 %v2790, %v3366
    %v3368 = vpop.f32.mrb[0].mxu0
    %3369 = vmatprep.mubr.f32.mxu0 %v3040
    %3370 = vmatmul.mubr.f32.gmra.mrb[0].mxu0 %v2119
    %v3371 = vpop.f32.mrb[0].mxu0
    %v3372 = vadd.f32 %v2795, %v3371
    %v3373 = vpop.f32.mrb[0].mxu0
    %3374 = vmatprep.mubr.f32.mxu0 %v3043
    %3375 = vmatmul.mubr.f32.gmra.mrb[0].mxu0 %v2121
    %v3376 = vpop.f32.mrb[0].mxu0
    %v3377 = vadd.f32 %v2800, %v3376
    %v3378 = vpop.f32.mrb[0].mxu0
    %3379 = vmatprep.mubr.f32.mxu0 %v3046
    %3380 = vmatmul.mubr.f32.gmra.mrb[0].mxu0 %v2123
    %v3381 = vpop.f32.mrb[0].mxu0
    %v3382 = vadd.f32 %v2805, %v3381
    %v3383 = vpop.f32.mrb[0].mxu0
    %3384 = vmatprep.mubr.f32.mxu0 %v3049
    %3385 = vmatmul.mubr.f32.gmra.mrb[0].mxu0 %v2125
    %v3386 = vpop.f32.mrb[0].mxu0
    %v3387 = vadd.f32 %v2810, %v3386
    %v3388 = vpop.f32.mrb[0].mxu0
    %3389 = vmatprep.mubr.f32.mxu0 %v3052
    %3390 = vmatmul.mubr.f32.gmra.mrb[0].mxu0 %v2127
    %v3391 = vpop.f32.mrb[0].mxu0
    %v3392 = vadd.f32 %v2815, %v3391
    %v3393 = vpop.f32.mrb[0].mxu0
    %3394 = vmatprep.mubr.f32.mxu0 %v3055
    %3395 = vmatmul.mubr.f32.gmra.mrb[0].mxu0 %v2129
    %v3396 = vpop.f32.mrb[0].mxu0
    %v3397 = vadd.f32 %v2820, %v3396
    %v3398 = vpop.f32.mrb[0].mxu0
    %3399 = vmatprep.mubr.f32.mxu0 %v3058
    %3400 = vmatmul.mubr.f32.gmra.mrb[0].mxu0 %v2131
    %v3401 = vpop.f32.mrb[0].mxu0
    %v3402 = vadd.f32 %v2825, %v3401
    %v3403 = vpop.f32.mrb[0].mxu0
    %3404 = vmatprep.mubr.f32.mxu0 %v3061
    %3405 = vmatmul.mubr.f32.gmra.mrb[0].mxu0 %v2133
    %v3406 = vpop.f32.mrb[0].mxu0
    %v3407 = vadd.f32 %v2830, %v3406
    %v3408 = vpop.f32.mrb[0].mxu0
    %3409 = vmatprep.mubr.f32.mxu0 %v3064
    %3410 = vmatmul.mubr.f32.gmra.mrb[0].mxu0 %v2135
    %v3411 = vpop.f32.mrb[0].mxu0
    %v3412 = vadd.f32 %v2835, %v3411
    %v3413 = vpop.f32.mrb[0].mxu0
    %3414 = vmatprep.mubr.f32.mxu0 %v3067
    %3415 = vmatmul.mubr.f32.gmra.mrb[0].mxu0 %v2137
    %v3416 = vpop.f32.mrb[0].mxu0
    %v3417 = vadd.f32 %v2840, %v3416
    %v3418 = vpop.f32.mrb[0].mxu0
    %3419 = vmatprep.mubr.f32.mxu0 %v3070
    %3420 = vmatmul.mubr.f32.gmra.mrb[0].mxu0 %v2139
    %v3421 = vpop.f32.mrb[0].mxu0
    %v3422 = vadd.f32 %v2845, %v3421
    %v3423 = vpop.f32.mrb[0].mxu0
    %3424 = vmatprep.mubr.f32.mxu0 %v3073
    %3425 = vmatmul.mubr.f32.gmra.mrb[0].mxu0 %v2141
    %v3426 = vpop.f32.mrb[0].mxu0
    %v3427 = vadd.f32 %v2850, %v3426
    %v3428 = vpop.f32.mrb[0].mxu0
    %3429 = vmatprep.mubr.f32.mxu0 %v3076
    %3430 = vmatmul.mubr.f32.gmra.mrb[0].mxu0 %v2143
    %v3431 = vpop.f32.mrb[0].mxu0
    %v3432 = vadd.f32 %v2855, %v3431
    %v3433 = vpop.f32.mrb[0].mxu0
    %3434 = vmatprep.mubr.f32.mxu0 %v3079
    %3435 = vmatmul.mubr.f32.gmra.mrb[0].mxu0 %v2145
    %v3436 = vpop.f32.mrb[0].mxu0
    %v3437 = vadd.f32 %v2860, %v3436
    %v3438 = vpop.f32.mrb[0].mxu0
    %3439 = vmatprep.mubr.f32.mxu0 %v3082
    %3440 = vmatmul.mubr.f32.gmra.mrb[0].mxu0 %v2147
    %v3441 = vpop.f32.mrb[0].mxu0
    %v3442 = vadd.f32 %v2865, %v3441
    %v3443 = vpop.f32.mrb[0].mxu0
    %3444 = vmatprep.mubr.f32.mxu0 %v3085
    %3445 = vmatmul.mubr.f32.gmra.mrb[0].mxu0 %v2149
    %v3446 = vpop.f32.mrb[0].mxu0
    %v3447 = vadd.f32 %v2870, %v3446
    %v3448 = vpop.f32.mrb[0].mxu0
    %3449 = vmatprep.mubr.f32.mxu0 %v3088
    %3450 = vmatmul.mubr.f32.gmra.mrb[0].mxu0 %v2151
    %v3451 = vpop.f32.mrb[0].mxu0
    %v3452 = vadd.f32 %v2875, %v3451
    %v3453 = vpop.f32.mrb[0].mxu0
    %3454 = vmatprep.mubr.f32.mxu0 %v3091
    %3455 = vmatmul.mubr.f32.gmra.mrb[0].mxu0 %v2153
    %v3456 = vpop.f32.mrb[0].mxu0
    %v3457 = vadd.f32 %v2880, %v3456
    %v3458 = vpop.f32.mrb[0].mxu0
    %3459 = vmatprep.mubr.f32.mxu0 %v3094
    %3460 = vmatmul.mubr.f32.gmra.mrb[0].mxu0 %v2155
    %v3461 = vpop.f32.mrb[0].mxu0
    %v3462 = vadd.f32 %v2885, %v3461
    %v3463 = vpop.f32.mrb[0].mxu0
    %3464 = vmatprep.mubr.f32.mxu0 %v3097
    %3465 = vmatmul.mubr.f32.gmra.mrb[0].mxu0 %v2157
    %v3466 = vpop.f32.mrb[0].mxu0
    %v3467 = vadd.f32 %v2890, %v3466
    %v3468 = vpop.f32.mrb[0].mxu0
    %3469 = vmatprep.mubr.f32.mxu0 %v3100
    %3470 = vmatmul.mubr.f32.gmra.mrb[0].mxu0 %v2159
    %v3471 = vpop.f32.mrb[0].mxu0
    %v3472 = vadd.f32 %v2895, %v3471
    %v3473 = vpop.f32.mrb[0].mxu0
    %3474 = vmatprep.mubr.f32.mxu0 %v3103
    %3475 = vmatmul.mubr.f32.gmra.mrb[0].mxu0 %v2161
    %v3476 = vpop.f32.mrb[0].mxu0
    %v3477 = vadd.f32 %v2900, %v3476
    %v3478 = vpop.f32.mrb[0].mxu0
    %3479 = vmatprep.mubr.f32.mxu0 %v3106
    %3480 = vmatmul.mubr.f32.gmra.mrb[0].mxu0 %v2163
    %v3481 = vpop.f32.mrb[0].mxu0
    %v3482 = vadd.f32 %v2905, %v3481
    %v3483 = vpop.f32.mrb[0].mxu0
    %3484 = vmatprep.mubr.f32.mxu0 %v3109
    %3485 = vmatmul.mubr.f32.gmra.mrb[0].mxu0 %v2165
    %v3486 = vpop.f32.mrb[0].mxu0
    %v3487 = vadd.f32 %v2910, %v3486
    %v3488 = vpop.f32.mrb[0].mxu0
    %3489 = vmatprep.mubr.f32.mxu0 %v3112
    %3490 = vmatmul.mubr.f32.gmra.mrb[0].mxu0 %v2167
    %v3491 = vpop.f32.mrb[0].mxu0
    %v3492 = vadd.f32 %v2915, %v3491
    %v3493 = vpop.f32.mrb[0].mxu0
    %3494 = vmatprep.mubr.f32.mxu0 %v3115
    %3495 = vmatmul.mubr.f32.gmra.mrb[0].mxu0 %v2169
    %v3496 = vpop.f32.mrb[0].mxu0
    %v3497 = vadd.f32 %v2920, %v3496
    %v3498 = vpop.f32.mrb[0].mxu0
    %3499 = vmatprep.mubr.f32.mxu0 %v3118
    %3500 = vmatmul.mubr.f32.gmra.mrb[0].mxu0 %v2171
    %v3501 = vpop.f32.mrb[0].mxu0
    %v3502 = vadd.f32 %v2925, %v3501
    %v3503 = vpop.f32.mrb[0].mxu0
    %3504 = vdwg.mxu0
    %s3505 = scalar_lea.vmem [#allocation3], 64
    %v3506 = vld [vmem:[%s3505] sm:$0xff]
    %v3507 = vld [vmem:[%s3505 + $0x8] sm:$0xff]
    %v3508 = vld [vmem:[%s3505 + $0x10] sm:$0xff]
    %v3509 = vld [vmem:[%s3505 + $0x18] sm:$0xff]
    %v3510 = vld [vmem:[%s3505 + $0x20] sm:$0xff]
    %v3511 = vld [vmem:[%s3505 + $0x28] sm:$0xff]
    %v3512 = vld [vmem:[%s3505 + $0x30] sm:$0xff]
    %v3513 = vld [vmem:[%s3505 + $0x38] sm:$0xff]
    %v3514 = vld [vmem:[%s3505 + $0x40] sm:$0xff]
    %v3515 = vld [vmem:[%s3505 + $0x48] sm:$0xff]
    %v3516 = vld [vmem:[%s3505 + $0x50] sm:$0xff]
    %v3517 = vld [vmem:[%s3505 + $0x58] sm:$0xff]
    %v3518 = vld [vmem:[%s3505 + $0x60] sm:$0xff]
    %v3519 = vld [vmem:[%s3505 + $0x68] sm:$0xff]
    %v3520 = vld [vmem:[%s3505 + $0x70] sm:$0xff]
    %v3521 = vld [vmem:[%s3505 + $0x78] sm:$0xff]
    %v3522 = vld [vmem:[%s3505 + $0x80] sm:$0xff]
    %v3523 = vld [vmem:[%s3505 + $0x88] sm:$0xff]
    %v3524 = vld [vmem:[%s3505 + $0x90] sm:$0xff]
    %v3525 = vld [vmem:[%s3505 + $0x98] sm:$0xff]
    %v3526 = vld [vmem:[%s3505 + $0xa0] sm:$0xff]
    %v3527 = vld [vmem:[%s3505 + $0xa8] sm:$0xff]
    %v3528 = vld [vmem:[%s3505 + $0xb0] sm:$0xff]
    %v3529 = vld [vmem:[%s3505 + $0xb8] sm:$0xff]
    %v3530 = vld [vmem:[%s3505 + $0xc0] sm:$0xff]
    %v3531 = vld [vmem:[%s3505 + $0xc8] sm:$0xff]
    %v3532 = vld [vmem:[%s3505 + $0xd0] sm:$0xff]
    %v3533 = vld [vmem:[%s3505 + $0xd8] sm:$0xff]
    %v3534 = vld [vmem:[%s3505 + $0xe0] sm:$0xff]
    %v3535 = vld [vmem:[%s3505 + $0xe8] sm:$0xff]
    %v3536 = vld [vmem:[%s3505 + $0xf0] sm:$0xff]
    %v3537 = vld [vmem:[%s3505 + $0xf8] sm:$0xff]
    %v3538 = vld [vmem:[%s3505 + $0x100] sm:$0xff]
    %v3539 = vld [vmem:[%s3505 + $0x108] sm:$0xff]
    %v3540 = vld [vmem:[%s3505 + $0x110] sm:$0xff]
    %v3541 = vld [vmem:[%s3505 + $0x118] sm:$0xff]
    %v3542 = vld [vmem:[%s3505 + $0x120] sm:$0xff]
    %v3543 = vld [vmem:[%s3505 + $0x128] sm:$0xff]
    %v3544 = vld [vmem:[%s3505 + $0x130] sm:$0xff]
    %v3545 = vld [vmem:[%s3505 + $0x138] sm:$0xff]
    %v3546 = vld [vmem:[%s3505 + $0x140] sm:$0xff]
    %v3547 = vld [vmem:[%s3505 + $0x148] sm:$0xff]
    %v3548 = vld [vmem:[%s3505 + $0x150] sm:$0xff]
    %v3549 = vld [vmem:[%s3505 + $0x158] sm:$0xff]
    %v3550 = vld [vmem:[%s3505 + $0x160] sm:$0xff]
    %v3551 = vld [vmem:[%s3505 + $0x168] sm:$0xff]
    %v3552 = vld [vmem:[%s3505 + $0x170] sm:$0xff]
    %v3553 = vld [vmem:[%s3505 + $0x178] sm:$0xff]
    %v3554 = vld [vmem:[%s3505 + $0x180] sm:$0xff]
    %v3555 = vld [vmem:[%s3505 + $0x188] sm:$0xff]
    %v3556 = vld [vmem:[%s3505 + $0x190] sm:$0xff]
    %v3557 = vld [vmem:[%s3505 + $0x198] sm:$0xff]
    %v3558 = vld [vmem:[%s3505 + $0x1a0] sm:$0xff]
    %v3559 = vld [vmem:[%s3505 + $0x1a8] sm:$0xff]
    %v3560 = vld [vmem:[%s3505 + $0x1b0] sm:$0xff]
    %v3561 = vld [vmem:[%s3505 + $0x1b8] sm:$0xff]
    %v3562 = vld [vmem:[%s3505 + $0x1c0] sm:$0xff]
    %v3563 = vld [vmem:[%s3505 + $0x1c8] sm:$0xff]
    %v3564 = vld [vmem:[%s3505 + $0x1d0] sm:$0xff]
    %v3565 = vld [vmem:[%s3505 + $0x1d8] sm:$0xff]
    %v3566 = vld [vmem:[%s3505 + $0x1e0] sm:$0xff]
    %v3567 = vld [vmem:[%s3505 + $0x1e8] sm:$0xff]
    %v3568 = vld [vmem:[%s3505 + $0x1f0] sm:$0xff]
    %v3569 = vld [vmem:[%s3505 + $0x1f8] sm:$0xff]
    %v3570 = vld [vmem:[%s3505 + $0x240] sm:$0xff]
    %v3571 = vld [vmem:[%s3505 + $0x248] sm:$0xff]
    %v3572 = vld [vmem:[%s3505 + $0x250] sm:$0xff]
    %v3573 = vld [vmem:[%s3505 + $0x258] sm:$0xff]
    %v3574 = vld [vmem:[%s3505 + $0x260] sm:$0xff]
    %v3575 = vld [vmem:[%s3505 + $0x268] sm:$0xff]
    %v3576 = vld [vmem:[%s3505 + $0x270] sm:$0xff]
    %v3577 = vld [vmem:[%s3505 + $0x278] sm:$0xff]
    %v3578 = vld [vmem:[%s3505 + $0x280] sm:$0xff]
    %v3579 = vld [vmem:[%s3505 + $0x288] sm:$0xff]
    %v3580 = vld [vmem:[%s3505 + $0x290] sm:$0xff]
    %v3581 = vld [vmem:[%s3505 + $0x298] sm:$0xff]
    %v3582 = vld [vmem:[%s3505 + $0x2a0] sm:$0xff]
    %v3583 = vld [vmem:[%s3505 + $0x2a8] sm:$0xff]
    %v3584 = vld [vmem:[%s3505 + $0x2b0] sm:$0xff]
    %v3585 = vld [vmem:[%s3505 + $0x2b8] sm:$0xff]
    %v3586 = vld [vmem:[%s3505 + $0x2c0] sm:$0xff]
    %v3587 = vld [vmem:[%s3505 + $0x2c8] sm:$0xff]
    %v3588 = vld [vmem:[%s3505 + $0x2d0] sm:$0xff]
    %v3589 = vld [vmem:[%s3505 + $0x2d8] sm:$0xff]
    %v3590 = vld [vmem:[%s3505 + $0x2e0] sm:$0xff]
    %v3591 = vld [vmem:[%s3505 + $0x2e8] sm:$0xff]
    %v3592 = vld [vmem:[%s3505 + $0x2f0] sm:$0xff]
    %v3593 = vld [vmem:[%s3505 + $0x2f8] sm:$0xff]
    %v3594 = vld [vmem:[%s3505 + $0x300] sm:$0xff]
    %v3595 = vld [vmem:[%s3505 + $0x308] sm:$0xff]
    %v3596 = vld [vmem:[%s3505 + $0x310] sm:$0xff]
    %v3597 = vld [vmem:[%s3505 + $0x318] sm:$0xff]
    %v3598 = vld [vmem:[%s3505 + $0x320] sm:$0xff]
    %v3599 = vld [vmem:[%s3505 + $0x328] sm:$0xff]
    %v3600 = vld [vmem:[%s3505 + $0x330] sm:$0xff]
    %v3601 = vld [vmem:[%s3505 + $0x338] sm:$0xff]
    %v3602 = vld [vmem:[%s3505 + $0x340] sm:$0xff]
    %v3603 = vld [vmem:[%s3505 + $0x348] sm:$0xff]
    %v3604 = vld [vmem:[%s3505 + $0x350] sm:$0xff]
    %v3605 = vld [vmem:[%s3505 + $0x358] sm:$0xff]
    %v3606 = vld [vmem:[%s3505 + $0x360] sm:$0xff]
    %v3607 = vld [vmem:[%s3505 + $0x368] sm:$0xff]
    %v3608 = vld [vmem:[%s3505 + $0x370] sm:$0xff]
    %v3609 = vld [vmem:[%s3505 + $0x378] sm:$0xff]
    %v3610 = vld [vmem:[%s3505 + $0x380] sm:$0xff]
    %v3611 = vld [vmem:[%s3505 + $0x388] sm:$0xff]
    %v3612 = vld [vmem:[%s3505 + $0x390] sm:$0xff]
    %v3613 = vld [vmem:[%s3505 + $0x398] sm:$0xff]
    %v3614 = vld [vmem:[%s3505 + $0x3a0] sm:$0xff]
    %v3615 = vld [vmem:[%s3505 + $0x3a8] sm:$0xff]
    %v3616 = vld [vmem:[%s3505 + $0x3b0] sm:$0xff]
    %v3617 = vld [vmem:[%s3505 + $0x3b8] sm:$0xff]
    %v3618 = vld [vmem:[%s3505 + $0x3c0] sm:$0xff]
    %v3619 = vld [vmem:[%s3505 + $0x3c8] sm:$0xff]
    %v3620 = vld [vmem:[%s3505 + $0x3d0] sm:$0xff]
    %v3621 = vld [vmem:[%s3505 + $0x3d8] sm:$0xff]
    %v3622 = vld [vmem:[%s3505 + $0x3e0] sm:$0xff]
    %v3623 = vld [vmem:[%s3505 + $0x3e8] sm:$0xff]
    %v3624 = vld [vmem:[%s3505 + $0x3f0] sm:$0xff]
    %v3625 = vld [vmem:[%s3505 + $0x3f8] sm:$0xff]
    %v3626 = vld [vmem:[%s3505 + $0x400] sm:$0xff]
    %v3627 = vld [vmem:[%s3505 + $0x408] sm:$0xff]
    %v3628 = vld [vmem:[%s3505 + $0x410] sm:$0xff]
    %v3629 = vld [vmem:[%s3505 + $0x418] sm:$0xff]
    %v3630 = vld [vmem:[%s3505 + $0x420] sm:$0xff]
    %v3631 = vld [vmem:[%s3505 + $0x428] sm:$0xff]
    %v3632 = vld [vmem:[%s3505 + $0x430] sm:$0xff]
    %v3633 = vld [vmem:[%s3505 + $0x438] sm:$0xff]
    %s3634 = scalar_lea.vmem %s3, 384
    %v3635 = vld [vmem:[%s3634] sm:$0xff]
    %v3636 = vld [vmem:[%s3634 + $0x8] sm:$0xff]
    %v3637 = vld [vmem:[%s3634 + $0x10] sm:$0xff]
    %v3638 = vld [vmem:[%s3634 + $0x18] sm:$0xff]
    %v3639 = vld [vmem:[%s3634 + $0x20] sm:$0xff]
    %v3640 = vld [vmem:[%s3634 + $0x28] sm:$0xff]
    %v3641 = vld [vmem:[%s3634 + $0x30] sm:$0xff]
    %v3642 = vld [vmem:[%s3634 + $0x38] sm:$0xff]
    %v3643 = vld [vmem:[%s3634 + $0x40] sm:$0xff]
    %v3644 = vld [vmem:[%s3634 + $0x48] sm:$0xff]
    %v3645 = vld [vmem:[%s3634 + $0x50] sm:$0xff]
    %v3646 = vld [vmem:[%s3634 + $0x58] sm:$0xff]
    %v3647 = vld [vmem:[%s3634 + $0x60] sm:$0xff]
    %v3648 = vld [vmem:[%s3634 + $0x68] sm:$0xff]
    %v3649 = vld [vmem:[%s3634 + $0x70] sm:$0xff]
    %v3650 = vld [vmem:[%s3634 + $0x78] sm:$0xff]
    %v3651 = vld [vmem:[%s3634 + $0x80] sm:$0xff]
    %v3652 = vld [vmem:[%s3634 + $0x88] sm:$0xff]
    %v3653 = vld [vmem:[%s3634 + $0x90] sm:$0xff]
    %v3654 = vld [vmem:[%s3634 + $0x98] sm:$0xff]
    %v3655 = vld [vmem:[%s3634 + $0xa0] sm:$0xff]
    %v3656 = vld [vmem:[%s3634 + $0xa8] sm:$0xff]
    %v3657 = vld [vmem:[%s3634 + $0xb0] sm:$0xff]
    %v3658 = vld [vmem:[%s3634 + $0xb8] sm:$0xff]
    %v3660 = vsel %vm59, %v3507, 0
    %v3663 = vsel %vm59, %v3509, 0
    %v3666 = vsel %vm59, %v3511, 0
    %v3669 = vsel %vm59, %v3513, 0
    %v3672 = vsel %vm59, %v3515, 0
    %v3675 = vsel %vm59, %v3517, 0
    %v3678 = vsel %vm59, %v3519, 0
    %v3681 = vsel %vm59, %v3521, 0
    %v3684 = vsel %vm59, %v3523, 0
    %v3687 = vsel %vm59, %v3525, 0
    %v3690 = vsel %vm59, %v3527, 0
    %v3693 = vsel %vm59, %v3529, 0
    %v3696 = vsel %vm59, %v3531, 0
    %v3699 = vsel %vm59, %v3533, 0
    %v3702 = vsel %vm59, %v3535, 0
    %v3705 = vsel %vm59, %v3537, 0
    %v3708 = vsel %vm59, %v3539, 0
    %v3711 = vsel %vm59, %v3541, 0
    %v3714 = vsel %vm59, %v3543, 0
    %v3717 = vsel %vm59, %v3545, 0
    %v3720 = vsel %vm59, %v3547, 0
    %v3723 = vsel %vm59, %v3549, 0
    %v3726 = vsel %vm59, %v3551, 0
    %v3729 = vsel %vm59, %v3553, 0
    %v3732 = vsel %vm59, %v3555, 0
    %v3735 = vsel %vm59, %v3557, 0
    %v3738 = vsel %vm59, %v3559, 0
    %v3741 = vsel %vm59, %v3561, 0
    %v3744 = vsel %vm59, %v3563, 0
    %v3747 = vsel %vm59, %v3565, 0
    %v3750 = vsel %vm59, %v3567, 0
    %v3753 = vsel %vm59, %v3569, 0
    %v3756 = vsel %vm59, %v3571, 0
    %v3759 = vsel %vm59, %v3573, 0
    %v3762 = vsel %vm59, %v3575, 0
    %v3765 = vsel %vm59, %v3577, 0
    %v3768 = vsel %vm59, %v3579, 0
    %v3771 = vsel %vm59, %v3581, 0
    %v3774 = vsel %vm59, %v3583, 0
    %v3777 = vsel %vm59, %v3585, 0
    %v3780 = vsel %vm59, %v3587, 0
    %v3783 = vsel %vm59, %v3589, 0
    %v3786 = vsel %vm59, %v3591, 0
    %v3789 = vsel %vm59, %v3593, 0
    %v3792 = vsel %vm59, %v3595, 0
    %v3795 = vsel %vm59, %v3597, 0
    %v3798 = vsel %vm59, %v3599, 0
    %v3801 = vsel %vm59, %v3601, 0
    %v3804 = vsel %vm59, %v3603, 0
    %v3807 = vsel %vm59, %v3605, 0
    %v3810 = vsel %vm59, %v3607, 0
    %v3813 = vsel %vm59, %v3609, 0
    %v3816 = vsel %vm59, %v3611, 0
    %v3819 = vsel %vm59, %v3613, 0
    %v3822 = vsel %vm59, %v3615, 0
    %v3825 = vsel %vm59, %v3617, 0
    %v3828 = vsel %vm59, %v3619, 0
    %v3831 = vsel %vm59, %v3621, 0
    %v3834 = vsel %vm59, %v3623, 0
    %v3837 = vsel %vm59, %v3625, 0
    %v3840 = vsel %vm59, %v3627, 0
    %v3843 = vsel %vm59, %v3629, 0
    %v3846 = vsel %vm59, %v3631, 0
    %v3849 = vsel %vm59, %v3633, 0
    %3851 = vmatprep.subr.mxu0 0.0
    %3852 = vmatpush1.msra.mxu0 %v3635
    %3853 = vmatprep.subr.mxu0 0.0
    %3854 = vmatpush1.msra.mxu0 %v3636
    %3855 = vmatprep.subr.mxu0 0.0
    %3856 = vmatpush1.msra.mxu0 %v3637
    %3857 = vmatprep.subr.mxu0 0.0
    %3858 = vmatpush1.msra.mxu0 %v3638
    %3859 = vmatprep.subr.mxu0 0.0
    %3860 = vmatpush1.msra.mxu0 %v3639
    %3861 = vmatprep.subr.mxu0 0.0
    %3862 = vmatpush1.msra.mxu0 %v3640
    %3863 = vmatprep.subr.mxu0 0.0
    %3864 = vmatpush1.msra.mxu0 %v3641
    %3865 = vmatprep.subr.mxu0 0.0
    %3866 = vmatpush1.msra.mxu0 %v3642
    %3867 = vmatprep.subr.mxu0 0.0
    %3868 = vmatpush1.msra.mxu0 %v3643
    %3869 = vmatprep.subr.mxu0 0.0
    %3870 = vmatpush1.msra.mxu0 %v3644
    %3871 = vmatprep.subr.mxu0 0.0
    %3872 = vmatpush1.msra.mxu0 %v3645
    %3873 = vmatprep.subr.mxu0 0.0
    %3874 = vmatpush1.msra.mxu0 %v3646
    %3875 = vmatprep.subr.mxu0 0.0
    %3876 = vmatpush1.msra.mxu0 %v3647
    %3877 = vmatprep.subr.mxu0 0.0
    %3878 = vmatpush1.msra.mxu0 %v3648
    %3879 = vmatprep.subr.mxu0 0.0
    %3880 = vmatpush1.msra.mxu0 %v3649
    %3881 = vmatprep.subr.mxu0 0.0
    %3882 = vmatpush1.msra.mxu0 %v3650
    %3883 = vmatprep.subr.mxu0 0.0
    %3884 = vmatpush1.msra.mxu0 %v3651
    %3885 = vmatprep.subr.mxu0 0.0
    %3886 = vmatpush1.msra.mxu0 %v3652
    %3887 = vmatprep.subr.mxu0 0.0
    %3888 = vmatpush1.msra.mxu0 %v3653
    %3889 = vmatprep.subr.mxu0 0.0
    %3890 = vmatpush1.msra.mxu0 %v3654
    %3891 = vmatprep.subr.mxu0 0.0
    %3892 = vmatpush1.msra.mxu0 %v3655
    %3893 = vmatprep.subr.mxu0 0.0
    %3894 = vmatpush1.msra.mxu0 %v3656
    %3895 = vmatprep.subr.mxu0 0.0
    %3896 = vmatpush1.msra.mxu0 %v3657
    %3897 = vmatprep.subr.mxu0 0.0
    %3898 = vmatpush1.msra.mxu0 %v3658
    %3899 = vmatprep.subr.mxu0 0.0
    %3900 = vmatpush1.msra.mxu0 0.0
    %3901 = vmatprep.subr.mxu0 0.0
    %3902 = vmatpush1.msra.mxu0 0.0
    %3903 = vmatprep.subr.mxu0 0.0
    %3904 = vmatpush1.msra.mxu0 0.0
    %3905 = vmatprep.subr.mxu0 0.0
    %3906 = vmatpush1.msra.mxu0 0.0
    %3907 = vmatprep.subr.mxu0 0.0
    %3908 = vmatpush1.msra.mxu0 0.0
    %3909 = vmatprep.subr.mxu0 0.0
    %3910 = vmatpush1.msra.mxu0 0.0
    %3911 = vmatprep.subr.mxu0 0.0
    %3912 = vmatpush1.msra.mxu0 0.0
    %3913 = vmatprep.subr.mxu0 0.0
    %3914 = vmatpush1.msra.mxu0 0.0
    %3915 = vmatprep.mubr.f32.mxu0 %v3660
    %3916 = vmatmul.mubr.f32.gmra.mrb[0].mxu0 %v3506
    %v3917 = vpop.f32.mrb[0].mxu0
    %v3918 = vadd.f32 0.0, %v3917
    %v3919 = vpop.f32.mrb[0].mxu0
    %3920 = vmatprep.mubr.f32.mxu0 %v3663
    %3921 = vmatmul.mubr.f32.gmra.mrb[0].mxu0 %v3508
    %v3922 = vpop.f32.mrb[0].mxu0
    %v3923 = vadd.f32 0.0, %v3922
    %v3924 = vpop.f32.mrb[0].mxu0
    %3925 = vmatprep.mubr.f32.mxu0 %v3666
    %3926 = vmatmul.mubr.f32.gmra.mrb[0].mxu0 %v3510
    %v3927 = vpop.f32.mrb[0].mxu0
    %v3928 = vadd.f32 0.0, %v3927
    %v3929 = vpop.f32.mrb[0].mxu0
    %3930 = vmatprep.mubr.f32.mxu0 %v3669
    %3931 = vmatmul.mubr.f32.gmra.mrb[0].mxu0 %v3512
    %v3932 = vpop.f32.mrb[0].mxu0
    %v3933 = vadd.f32 0.0, %v3932
    %v3934 = vpop.f32.mrb[0].mxu0
    %3935 = vmatprep.mubr.f32.mxu0 %v3672
    %3936 = vmatmul.mubr.f32.gmra.mrb[0].mxu0 %v3514
    %v3937 = vpop.f32.mrb[0].mxu0
    %v3938 = vadd.f32 0.0, %v3937
    %v3939 = vpop.f32.mrb[0].mxu0
    %3940 = vmatprep.mubr.f32.mxu0 %v3675
    %3941 = vmatmul.mubr.f32.gmra.mrb[0].mxu0 %v3516
    %v3942 = vpop.f32.mrb[0].mxu0
    %v3943 = vadd.f32 0.0, %v3942
    %v3944 = vpop.f32.mrb[0].mxu0
    %3945 = vmatprep.mubr.f32.mxu0 %v3678
    %3946 = vmatmul.mubr.f32.gmra.mrb[0].mxu0 %v3518
    %v3947 = vpop.f32.mrb[0].mxu0
    %v3948 = vadd.f32 0.0, %v3947
    %v3949 = vpop.f32.mrb[0].mxu0
    %3950 = vmatprep.mubr.f32.mxu0 %v3681
    %3951 = vmatmul.mubr.f32.gmra.mrb[0].mxu0 %v3520
    %v3952 = vpop.f32.mrb[0].mxu0
    %v3953 = vadd.f32 0.0, %v3952
    %v3954 = vpop.f32.mrb[0].mxu0
    %3955 = vmatprep.mubr.f32.mxu0 %v3684
    %3956 = vmatmul.mubr.f32.gmra.mrb[0].mxu0 %v3522
    %v3957 = vpop.f32.mrb[0].mxu0
    %v3958 = vadd.f32 0.0, %v3957
    %v3959 = vpop.f32.mrb[0].mxu0
    %3960 = vmatprep.mubr.f32.mxu0 %v3687
    %3961 = vmatmul.mubr.f32.gmra.mrb[0].mxu0 %v3524
    %v3962 = vpop.f32.mrb[0].mxu0
    %v3963 = vadd.f32 0.0, %v3962
    %v3964 = vpop.f32.mrb[0].mxu0
    %3965 = vmatprep.mubr.f32.mxu0 %v3690
    %3966 = vmatmul.mubr.f32.gmra.mrb[0].mxu0 %v3526
    %v3967 = vpop.f32.mrb[0].mxu0
    %v3968 = vadd.f32 0.0, %v3967
    %v3969 = vpop.f32.mrb[0].mxu0
    %3970 = vmatprep.mubr.f32.mxu0 %v3693
    %3971 = vmatmul.mubr.f32.gmra.mrb[0].mxu0 %v3528
    %v3972 = vpop.f32.mrb[0].mxu0
    %v3973 = vadd.f32 0.0, %v3972
    %v3974 = vpop.f32.mrb[0].mxu0
    %3975 = vmatprep.mubr.f32.mxu0 %v3696
    %3976 = vmatmul.mubr.f32.gmra.mrb[0].mxu0 %v3530
    %v3977 = vpop.f32.mrb[0].mxu0
    %v3978 = vadd.f32 0.0, %v3977
    %v3979 = vpop.f32.mrb[0].mxu0
    %3980 = vmatprep.mubr.f32.mxu0 %v3699
    %3981 = vmatmul.mubr.f32.gmra.mrb[0].mxu0 %v3532
    %v3982 = vpop.f32.mrb[0].mxu0
    %v3983 = vadd.f32 0.0, %v3982
    %v3984 = vpop.f32.mrb[0].mxu0
    %3985 = vmatprep.mubr.f32.mxu0 %v3702
    %3986 = vmatmul.mubr.f32.gmra.mrb[0].mxu0 %v3534
    %v3987 = vpop.f32.mrb[0].mxu0
    %v3988 = vadd.f32 0.0, %v3987
    %v3989 = vpop.f32.mrb[0].mxu0
    %3990 = vmatprep.mubr.f32.mxu0 %v3705
    %3991 = vmatmul.mubr.f32.gmra.mrb[0].mxu0 %v3536
    %v3992 = vpop.f32.mrb[0].mxu0
    %v3993 = vadd.f32 0.0, %v3992
    %v3994 = vpop.f32.mrb[0].mxu0
    %3995 = vmatprep.mubr.f32.mxu0 %v3708
    %3996 = vmatmul.mubr.f32.gmra.mrb[0].mxu0 %v3538
    %v3997 = vpop.f32.mrb[0].mxu0
    %v3998 = vadd.f32 0.0, %v3997
    %v3999 = vpop.f32.mrb[0].mxu0
    %4000 = vmatprep.mubr.f32.mxu0 %v3711
    %4001 = vmatmul.mubr.f32.gmra.mrb[0].mxu0 %v3540
    %v4002 = vpop.f32.mrb[0].mxu0
    %v4003 = vadd.f32 0.0, %v4002
    %v4004 = vpop.f32.mrb[0].mxu0
    %4005 = vmatprep.mubr.f32.mxu0 %v3714
    %4006 = vmatmul.mubr.f32.gmra.mrb[0].mxu0 %v3542
    %v4007 = vpop.f32.mrb[0].mxu0
    %v4008 = vadd.f32 0.0, %v4007
    %v4009 = vpop.f32.mrb[0].mxu0
    %4010 = vmatprep.mubr.f32.mxu0 %v3717
    %4011 = vmatmul.mubr.f32.gmra.mrb[0].mxu0 %v3544
    %v4012 = vpop.f32.mrb[0].mxu0
    %v4013 = vadd.f32 0.0, %v4012
    %v4014 = vpop.f32.mrb[0].mxu0
    %4015 = vmatprep.mubr.f32.mxu0 %v3720
    %4016 = vmatmul.mubr.f32.gmra.mrb[0].mxu0 %v3546
    %v4017 = vpop.f32.mrb[0].mxu0
    %v4018 = vadd.f32 0.0, %v4017
    %v4019 = vpop.f32.mrb[0].mxu0
    %4020 = vmatprep.mubr.f32.mxu0 %v3723
    %4021 = vmatmul.mubr.f32.gmra.mrb[0].mxu0 %v3548
    %v4022 = vpop.f32.mrb[0].mxu0
    %v4023 = vadd.f32 0.0, %v4022
    %v4024 = vpop.f32.mrb[0].mxu0
    %4025 = vmatprep.mubr.f32.mxu0 %v3726
    %4026 = vmatmul.mubr.f32.gmra.mrb[0].mxu0 %v3550
    %v4027 = vpop.f32.mrb[0].mxu0
    %v4028 = vadd.f32 0.0, %v4027
    %v4029 = vpop.f32.mrb[0].mxu0
    %4030 = vmatprep.mubr.f32.mxu0 %v3729
    %4031 = vmatmul.mubr.f32.gmra.mrb[0].mxu0 %v3552
    %v4032 = vpop.f32.mrb[0].mxu0
    %v4033 = vadd.f32 0.0, %v4032
    %v4034 = vpop.f32.mrb[0].mxu0
    %4035 = vmatprep.mubr.f32.mxu0 %v3732
    %4036 = vmatmul.mubr.f32.gmra.mrb[0].mxu0 %v3554
    %v4037 = vpop.f32.mrb[0].mxu0
    %v4038 = vadd.f32 0.0, %v4037
    %v4039 = vpop.f32.mrb[0].mxu0
    %4040 = vmatprep.mubr.f32.mxu0 %v3735
    %4041 = vmatmul.mubr.f32.gmra.mrb[0].mxu0 %v3556
    %v4042 = vpop.f32.mrb[0].mxu0
    %v4043 = vadd.f32 0.0, %v4042
    %v4044 = vpop.f32.mrb[0].mxu0
    %4045 = vmatprep.mubr.f32.mxu0 %v3738
    %4046 = vmatmul.mubr.f32.gmra.mrb[0].mxu0 %v3558
    %v4047 = vpop.f32.mrb[0].mxu0
    %v4048 = vadd.f32 0.0, %v4047
    %v4049 = vpop.f32.mrb[0].mxu0
    %4050 = vmatprep.mubr.f32.mxu0 %v3741
    %4051 = vmatmul.mubr.f32.gmra.mrb[0].mxu0 %v3560
    %v4052 = vpop.f32.mrb[0].mxu0
    %v4053 = vadd.f32 0.0, %v4052
    %v4054 = vpop.f32.mrb[0].mxu0
    %4055 = vmatprep.mubr.f32.mxu0 %v3744
    %4056 = vmatmul.mubr.f32.gmra.mrb[0].mxu0 %v3562
    %v4057 = vpop.f32.mrb[0].mxu0
    %v4058 = vadd.f32 0.0, %v4057
    %v4059 = vpop.f32.mrb[0].mxu0
    %4060 = vmatprep.mubr.f32.mxu0 %v3747
    %4061 = vmatmul.mubr.f32.gmra.mrb[0].mxu0 %v3564
    %v4062 = vpop.f32.mrb[0].mxu0
    %v4063 = vadd.f32 0.0, %v4062
    %v4064 = vpop.f32.mrb[0].mxu0
    %4065 = vmatprep.mubr.f32.mxu0 %v3750
    %4066 = vmatmul.mubr.f32.gmra.mrb[0].mxu0 %v3566
    %v4067 = vpop.f32.mrb[0].mxu0
    %v4068 = vadd.f32 0.0, %v4067
    %v4069 = vpop.f32.mrb[0].mxu0
    %4070 = vmatprep.mubr.f32.mxu0 %v3753
    %4071 = vmatmul.mubr.f32.gmra.mrb[0].mxu0 %v3568
    %v4072 = vpop.f32.mrb[0].mxu0
    %v4073 = vadd.f32 0.0, %v4072
    %v4074 = vpop.f32.mrb[0].mxu0
    %4075 = vmatprep.mubr.f32.mxu0 %v3756
    %4076 = vmatmul.mubr.f32.gmra.mrb[0].mxu0 %v3570
    %v4077 = vpop.f32.mrb[0].mxu0
    %v4078 = vadd.f32 0.0, %v4077
    %v4079 = vpop.f32.mrb[0].mxu0
    %4080 = vmatprep.mubr.f32.mxu0 %v3759
    %4081 = vmatmul.mubr.f32.gmra.mrb[0].mxu0 %v3572
    %v4082 = vpop.f32.mrb[0].mxu0
    %v4083 = vadd.f32 0.0, %v4082
    %v4084 = vpop.f32.mrb[0].mxu0
    %4085 = vmatprep.mubr.f32.mxu0 %v3762
    %4086 = vmatmul.mubr.f32.gmra.mrb[0].mxu0 %v3574
    %v4087 = vpop.f32.mrb[0].mxu0
    %v4088 = vadd.f32 0.0, %v4087
    %v4089 = vpop.f32.mrb[0].mxu0
    %4090 = vmatprep.mubr.f32.mxu0 %v3765
    %4091 = vmatmul.mubr.f32.gmra.mrb[0].mxu0 %v3576
    %v4092 = vpop.f32.mrb[0].mxu0
    %v4093 = vadd.f32 0.0, %v4092
    %v4094 = vpop.f32.mrb[0].mxu0
    %4095 = vmatprep.mubr.f32.mxu0 %v3768
    %4096 = vmatmul.mubr.f32.gmra.mrb[0].mxu0 %v3578
    %v4097 = vpop.f32.mrb[0].mxu0
    %v4098 = vadd.f32 0.0, %v4097
    %v4099 = vpop.f32.mrb[0].mxu0
    %4100 = vmatprep.mubr.f32.mxu0 %v3771
    %4101 = vmatmul.mubr.f32.gmra.mrb[0].mxu0 %v3580
    %v4102 = vpop.f32.mrb[0].mxu0
    %v4103 = vadd.f32 0.0, %v4102
    %v4104 = vpop.f32.mrb[0].mxu0
    %4105 = vmatprep.mubr.f32.mxu0 %v3774
    %4106 = vmatmul.mubr.f32.gmra.mrb[0].mxu0 %v3582
    %v4107 = vpop.f32.mrb[0].mxu0
    %v4108 = vadd.f32 0.0, %v4107
    %v4109 = vpop.f32.mrb[0].mxu0
    %4110 = vmatprep.mubr.f32.mxu0 %v3777
    %4111 = vmatmul.mubr.f32.gmra.mrb[0].mxu0 %v3584
    %v4112 = vpop.f32.mrb[0].mxu0
    %v4113 = vadd.f32 0.0, %v4112
    %v4114 = vpop.f32.mrb[0].mxu0
    %4115 = vmatprep.mubr.f32.mxu0 %v3780
    %4116 = vmatmul.mubr.f32.gmra.mrb[0].mxu0 %v3586
    %v4117 = vpop.f32.mrb[0].mxu0
    %v4118 = vadd.f32 0.0, %v4117
    %v4119 = vpop.f32.mrb[0].mxu0
    %4120 = vmatprep.mubr.f32.mxu0 %v3783
    %4121 = vmatmul.mubr.f32.gmra.mrb[0].mxu0 %v3588
    %v4122 = vpop.f32.mrb[0].mxu0
    %v4123 = vadd.f32 0.0, %v4122
    %v4124 = vpop.f32.mrb[0].mxu0
    %4125 = vmatprep.mubr.f32.mxu0 %v3786
    %4126 = vmatmul.mubr.f32.gmra.mrb[0].mxu0 %v3590
    %v4127 = vpop.f32.mrb[0].mxu0
    %v4128 = vadd.f32 0.0, %v4127
    %v4129 = vpop.f32.mrb[0].mxu0
    %4130 = vmatprep.mubr.f32.mxu0 %v3789
    %4131 = vmatmul.mubr.f32.gmra.mrb[0].mxu0 %v3592
    %v4132 = vpop.f32.mrb[0].mxu0
    %v4133 = vadd.f32 0.0, %v4132
    %v4134 = vpop.f32.mrb[0].mxu0
    %4135 = vmatprep.mubr.f32.mxu0 %v3792
    %4136 = vmatmul.mubr.f32.gmra.mrb[0].mxu0 %v3594
    %v4137 = vpop.f32.mrb[0].mxu0
    %v4138 = vadd.f32 0.0, %v4137
    %v4139 = vpop.f32.mrb[0].mxu0
    %4140 = vmatprep.mubr.f32.mxu0 %v3795
    %4141 = vmatmul.mubr.f32.gmra.mrb[0].mxu0 %v3596
    %v4142 = vpop.f32.mrb[0].mxu0
    %v4143 = vadd.f32 0.0, %v4142
    %v4144 = vpop.f32.mrb[0].mxu0
    %4145 = vmatprep.mubr.f32.mxu0 %v3798
    %4146 = vmatmul.mubr.f32.gmra.mrb[0].mxu0 %v3598
    %v4147 = vpop.f32.mrb[0].mxu0
    %v4148 = vadd.f32 0.0, %v4147
    %v4149 = vpop.f32.mrb[0].mxu0
    %4150 = vmatprep.mubr.f32.mxu0 %v3801
    %4151 = vmatmul.mubr.f32.gmra.mrb[0].mxu0 %v3600
    %v4152 = vpop.f32.mrb[0].mxu0
    %v4153 = vadd.f32 0.0, %v4152
    %v4154 = vpop.f32.mrb[0].mxu0
    %4155 = vmatprep.mubr.f32.mxu0 %v3804
    %4156 = vmatmul.mubr.f32.gmra.mrb[0].mxu0 %v3602
    %v4157 = vpop.f32.mrb[0].mxu0
    %v4158 = vadd.f32 0.0, %v4157
    %v4159 = vpop.f32.mrb[0].mxu0
    %4160 = vmatprep.mubr.f32.mxu0 %v3807
    %4161 = vmatmul.mubr.f32.gmra.mrb[0].mxu0 %v3604
    %v4162 = vpop.f32.mrb[0].mxu0
    %v4163 = vadd.f32 0.0, %v4162
    %v4164 = vpop.f32.mrb[0].mxu0
    %4165 = vmatprep.mubr.f32.mxu0 %v3810
    %4166 = vmatmul.mubr.f32.gmra.mrb[0].mxu0 %v3606
    %v4167 = vpop.f32.mrb[0].mxu0
    %v4168 = vadd.f32 0.0, %v4167
    %v4169 = vpop.f32.mrb[0].mxu0
    %4170 = vmatprep.mubr.f32.mxu0 %v3813
    %4171 = vmatmul.mubr.f32.gmra.mrb[0].mxu0 %v3608
    %v4172 = vpop.f32.mrb[0].mxu0
    %v4173 = vadd.f32 0.0, %v4172
    %v4174 = vpop.f32.mrb[0].mxu0
    %4175 = vmatprep.mubr.f32.mxu0 %v3816
    %4176 = vmatmul.mubr.f32.gmra.mrb[0].mxu0 %v3610
    %v4177 = vpop.f32.mrb[0].mxu0
    %v4178 = vadd.f32 0.0, %v4177
    %v4179 = vpop.f32.mrb[0].mxu0
    %4180 = vmatprep.mubr.f32.mxu0 %v3819
    %4181 = vmatmul.mubr.f32.gmra.mrb[0].mxu0 %v3612
    %v4182 = vpop.f32.mrb[0].mxu0
    %v4183 = vadd.f32 0.0, %v4182
    %v4184 = vpop.f32.mrb[0].mxu0
    %4185 = vmatprep.mubr.f32.mxu0 %v3822
    %4186 = vmatmul.mubr.f32.gmra.mrb[0].mxu0 %v3614
    %v4187 = vpop.f32.mrb[0].mxu0
    %v4188 = vadd.f32 0.0, %v4187
    %v4189 = vpop.f32.mrb[0].mxu0
    %4190 = vmatprep.mubr.f32.mxu0 %v3825
    %4191 = vmatmul.mubr.f32.gmra.mrb[0].mxu0 %v3616
    %v4192 = vpop.f32.mrb[0].mxu0
    %v4193 = vadd.f32 0.0, %v4192
    %v4194 = vpop.f32.mrb[0].mxu0
    %4195 = vmatprep.mubr.f32.mxu0 %v3828
    %4196 = vmatmul.mubr.f32.gmra.mrb[0].mxu0 %v3618
    %v4197 = vpop.f32.mrb[0].mxu0
    %v4198 = vadd.f32 0.0, %v4197
    %v4199 = vpop.f32.mrb[0].mxu0
    %4200 = vmatprep.mubr.f32.mxu0 %v3831
    %4201 = vmatmul.mubr.f32.gmra.mrb[0].mxu0 %v3620
    %v4202 = vpop.f32.mrb[0].mxu0
    %v4203 = vadd.f32 0.0, %v4202
    %v4204 = vpop.f32.mrb[0].mxu0
    %4205 = vmatprep.mubr.f32.mxu0 %v3834
    %4206 = vmatmul.mubr.f32.gmra.mrb[0].mxu0 %v3622
    %v4207 = vpop.f32.mrb[0].mxu0
    %v4208 = vadd.f32 0.0, %v4207
    %v4209 = vpop.f32.mrb[0].mxu0
    %4210 = vmatprep.mubr.f32.mxu0 %v3837
    %4211 = vmatmul.mubr.f32.gmra.mrb[0].mxu0 %v3624
    %v4212 = vpop.f32.mrb[0].mxu0
    %v4213 = vadd.f32 0.0, %v4212
    %v4214 = vpop.f32.mrb[0].mxu0
    %4215 = vmatprep.mubr.f32.mxu0 %v3840
    %4216 = vmatmul.mubr.f32.gmra.mrb[0].mxu0 %v3626
    %v4217 = vpop.f32.mrb[0].mxu0
    %v4218 = vadd.f32 0.0, %v4217
    %v4219 = vpop.f32.mrb[0].mxu0
    %4220 = vmatprep.mubr.f32.mxu0 %v3843
    %4221 = vmatmul.mubr.f32.gmra.mrb[0].mxu0 %v3628
    %v4222 = vpop.f32.mrb[0].mxu0
    %v4223 = vadd.f32 0.0, %v4222
    %v4224 = vpop.f32.mrb[0].mxu0
    %4225 = vmatprep.mubr.f32.mxu0 %v3846
    %4226 = vmatmul.mubr.f32.gmra.mrb[0].mxu0 %v3630
    %v4227 = vpop.f32.mrb[0].mxu0
    %v4228 = vadd.f32 0.0, %v4227
    %v4229 = vpop.f32.mrb[0].mxu0
    %4230 = vmatprep.mubr.f32.mxu0 %v3849
    %4231 = vmatmul.mubr.f32.gmra.mrb[0].mxu0 %v3632
    %v4232 = vpop.f32.mrb[0].mxu0
    %v4233 = vadd.f32 0.0, %v4232
    %v4234 = vpop.f32.mrb[0].mxu0
    %4235 = vdwg.mxu0
    %v4236 = vadd.f32 %v3187, %v3918
    %v4237 = vadd.f32 %v3192, %v3923
    %v4238 = vadd.f32 %v3197, %v3928
    %v4239 = vadd.f32 %v3202, %v3933
    %v4240 = vadd.f32 %v3207, %v3938
    %v4241 = vadd.f32 %v3212, %v3943
    %v4242 = vadd.f32 %v3217, %v3948
    %v4243 = vadd.f32 %v3222, %v3953
    %v4244 = vadd.f32 %v3227, %v3958
    %v4245 = vadd.f32 %v3232, %v3963
    %v4246 = vadd.f32 %v3237, %v3968
    %v4247 = vadd.f32 %v3242, %v3973
    %v4248 = vadd.f32 %v3247, %v3978
    %v4249 = vadd.f32 %v3252, %v3983
    %v4250 = vadd.f32 %v3257, %v3988
    %v4251 = vadd.f32 %v3262, %v3993
    %v4252 = vadd.f32 %v3267, %v3998
    %v4253 = vadd.f32 %v3272, %v4003
    %v4254 = vadd.f32 %v3277, %v4008
    %v4255 = vadd.f32 %v3282, %v4013
    %v4256 = vadd.f32 %v3287, %v4018
    %v4257 = vadd.f32 %v3292, %v4023
    %v4258 = vadd.f32 %v3297, %v4028
    %v4259 = vadd.f32 %v3302, %v4033
    %v4260 = vadd.f32 %v3307, %v4038
    %v4261 = vadd.f32 %v3312, %v4043
    %v4262 = vadd.f32 %v3317, %v4048
    %v4263 = vadd.f32 %v3322, %v4053
    %v4264 = vadd.f32 %v3327, %v4058
    %v4265 = vadd.f32 %v3332, %v4063
    %v4266 = vadd.f32 %v3337, %v4068
    %v4267 = vadd.f32 %v3342, %v4073
    %v4268 = vadd.f32 %v3347, %v4078
    %v4269 = vadd.f32 %v3352, %v4083
    %v4270 = vadd.f32 %v3357, %v4088
    %v4271 = vadd.f32 %v3362, %v4093
    %v4272 = vadd.f32 %v3367, %v4098
    %v4273 = vadd.f32 %v3372, %v4103
    %v4274 = vadd.f32 %v3377, %v4108
    %v4275 = vadd.f32 %v3382, %v4113
    %v4276 = vadd.f32 %v3387, %v4118
    %v4277 = vadd.f32 %v3392, %v4123
    %v4278 = vadd.f32 %v3397, %v4128
    %v4279 = vadd.f32 %v3402, %v4133
    %v4280 = vadd.f32 %v3407, %v4138
    %v4281 = vadd.f32 %v3412, %v4143
    %v4282 = vadd.f32 %v3417, %v4148
    %v4283 = vadd.f32 %v3422, %v4153
    %v4284 = vadd.f32 %v3427, %v4158
    %v4285 = vadd.f32 %v3432, %v4163
    %v4286 = vadd.f32 %v3437, %v4168
    %v4287 = vadd.f32 %v3442, %v4173
    %v4288 = vadd.f32 %v3447, %v4178
    %v4289 = vadd.f32 %v3452, %v4183
    %v4290 = vadd.f32 %v3457, %v4188
    %v4291 = vadd.f32 %v3462, %v4193
    %v4292 = vadd.f32 %v3467, %v4198
    %v4293 = vadd.f32 %v3472, %v4203
    %v4294 = vadd.f32 %v3477, %v4208
    %v4295 = vadd.f32 %v3482, %v4213
    %v4296 = vadd.f32 %v3487, %v4218
    %v4297 = vadd.f32 %v3492, %v4223
    %v4298 = vadd.f32 %v3497, %v4228
    %v4299 = vadd.f32 %v3502, %v4233
    %v4300 = vld [vmem:[#allocation4] sm:$0x1]
    %v4302 = vlaneseq
    %v4303 = vshrl.u32 %v4302, 7
    %v4304 = vsub.s32 0, %v4303
    %v4305 = vrot.slane %v4300, %v4304
    %v4307 = vadd.f32 %v4236, %v4305
    %v4308 = vadd.f32 %v4237, %v4305
    %v4309 = vadd.f32 %v4238, %v4305
    %v4310 = vadd.f32 %v4239, %v4305
    %v4311 = vadd.f32 %v4240, %v4305
    %v4312 = vadd.f32 %v4241, %v4305
    %v4313 = vadd.f32 %v4242, %v4305
    %v4314 = vadd.f32 %v4243, %v4305
    %v4315 = vadd.f32 %v4244, %v4305
    %v4316 = vadd.f32 %v4245, %v4305
    %v4317 = vadd.f32 %v4246, %v4305
    %v4318 = vadd.f32 %v4247, %v4305
    %v4319 = vadd.f32 %v4248, %v4305
    %v4320 = vadd.f32 %v4249, %v4305
    %v4321 = vadd.f32 %v4250, %v4305
    %v4322 = vadd.f32 %v4251, %v4305
    %v4323 = vadd.f32 %v4252, %v4305
    %v4324 = vadd.f32 %v4253, %v4305
    %v4325 = vadd.f32 %v4254, %v4305
    %v4326 = vadd.f32 %v4255, %v4305
    %v4327 = vadd.f32 %v4256, %v4305
    %v4328 = vadd.f32 %v4257, %v4305
    %v4329 = vadd.f32 %v4258, %v4305
    %v4330 = vadd.f32 %v4259, %v4305
    %v4331 = vadd.f32 %v4260, %v4305
    %v4332 = vadd.f32 %v4261, %v4305
    %v4333 = vadd.f32 %v4262, %v4305
    %v4334 = vadd.f32 %v4263, %v4305
    %v4335 = vadd.f32 %v4264, %v4305
    %v4336 = vadd.f32 %v4265, %v4305
    %v4337 = vadd.f32 %v4266, %v4305
    %v4338 = vadd.f32 %v4267, %v4305
    %v4339 = vadd.f32 %v4268, %v4305
    %v4340 = vadd.f32 %v4269, %v4305
    %v4341 = vadd.f32 %v4270, %v4305
    %v4342 = vadd.f32 %v4271, %v4305
    %v4343 = vadd.f32 %v4272, %v4305
    %v4344 = vadd.f32 %v4273, %v4305
    %v4345 = vadd.f32 %v4274, %v4305
    %v4346 = vadd.f32 %v4275, %v4305
    %v4347 = vadd.f32 %v4276, %v4305
    %v4348 = vadd.f32 %v4277, %v4305
    %v4349 = vadd.f32 %v4278, %v4305
    %v4350 = vadd.f32 %v4279, %v4305
    %v4351 = vadd.f32 %v4280, %v4305
    %v4352 = vadd.f32 %v4281, %v4305
    %v4353 = vadd.f32 %v4282, %v4305
    %v4354 = vadd.f32 %v4283, %v4305
    %v4355 = vadd.f32 %v4284, %v4305
    %v4356 = vadd.f32 %v4285, %v4305
    %v4357 = vadd.f32 %v4286, %v4305
    %v4358 = vadd.f32 %v4287, %v4305
    %v4359 = vadd.f32 %v4288, %v4305
    %v4360 = vadd.f32 %v4289, %v4305
    %v4361 = vadd.f32 %v4290, %v4305
    %v4362 = vadd.f32 %v4291, %v4305
    %v4363 = vadd.f32 %v4292, %v4305
    %v4364 = vadd.f32 %v4293, %v4305
    %v4365 = vadd.f32 %v4294, %v4305
    %v4366 = vadd.f32 %v4295, %v4305
    %v4367 = vadd.f32 %v4296, %v4305
    %v4368 = vadd.f32 %v4297, %v4305
    %v4369 = vadd.f32 %v4298, %v4305
    %v4370 = vadd.f32 %v4299, %v4305
    %v4371 = vadd.f32 %v169, %v4307
    %v4372 = vadd.f32 %v170, %v4308
    %v4373 = vadd.f32 %v171, %v4309
    %v4374 = vadd.f32 %v172, %v4310
    %v4375 = vadd.f32 %v173, %v4311
    %v4376 = vadd.f32 %v174, %v4312
    %v4377 = vadd.f32 %v175, %v4313
    %v4378 = vadd.f32 %v176, %v4314
    %v4379 = vadd.f32 %v177, %v4315
    %v4380 = vadd.f32 %v178, %v4316
    %v4381 = vadd.f32 %v179, %v4317
    %v4382 = vadd.f32 %v180, %v4318
    %v4383 = vadd.f32 %v181, %v4319
    %v4384 = vadd.f32 %v182, %v4320
    %v4385 = vadd.f32 %v183, %v4321
    %v4386 = vadd.f32 %v184, %v4322
    %v4387 = vadd.f32 %v185, %v4323
    %v4388 = vadd.f32 %v186, %v4324
    %v4389 = vadd.f32 %v187, %v4325
    %v4390 = vadd.f32 %v188, %v4326
    %v4391 = vadd.f32 %v189, %v4327
    %v4392 = vadd.f32 %v190, %v4328
    %v4393 = vadd.f32 %v191, %v4329
    %v4394 = vadd.f32 %v192, %v4330
    %v4395 = vadd.f32 %v193, %v4331
    %v4396 = vadd.f32 %v194, %v4332
    %v4397 = vadd.f32 %v195, %v4333
    %v4398 = vadd.f32 %v196, %v4334
    %v4399 = vadd.f32 %v197, %v4335
    %v4400 = vadd.f32 %v198, %v4336
    %v4401 = vadd.f32 %v199, %v4337
    %v4402 = vadd.f32 %v200, %v4338
    %v4403 = vadd.f32 %v201, %v4339
    %v4404 = vadd.f32 %v202, %v4340
    %v4405 = vadd.f32 %v203, %v4341
    %v4406 = vadd.f32 %v204, %v4342
    %v4407 = vadd.f32 %v205, %v4343
    %v4408 = vadd.f32 %v206, %v4344
    %v4409 = vadd.f32 %v207, %v4345
    %v4410 = vadd.f32 %v208, %v4346
    %v4411 = vadd.f32 %v209, %v4347
    %v4412 = vadd.f32 %v210, %v4348
    %v4413 = vadd.f32 %v211, %v4349
    %v4414 = vadd.f32 %v212, %v4350
    %v4415 = vadd.f32 %v213, %v4351
    %v4416 = vadd.f32 %v214, %v4352
    %v4417 = vadd.f32 %v215, %v4353
    %v4418 = vadd.f32 %v216, %v4354
    %v4419 = vadd.f32 %v217, %v4355
    %v4420 = vadd.f32 %v218, %v4356
    %v4421 = vadd.f32 %v219, %v4357
    %v4422 = vadd.f32 %v220, %v4358
    %v4423 = vadd.f32 %v221, %v4359
    %v4424 = vadd.f32 %v222, %v4360
    %v4425 = vadd.f32 %v223, %v4361
    %v4426 = vadd.f32 %v224, %v4362
    %v4427 = vadd.f32 %v225, %v4363
    %v4428 = vadd.f32 %v226, %v4364
    %v4429 = vadd.f32 %v227, %v4365
    %v4430 = vadd.f32 %v228, %v4366
    %v4431 = vadd.f32 %v229, %v4367
    %v4432 = vadd.f32 %v230, %v4368
    %v4433 = vadd.f32 %v231, %v4369
    %v4434 = vadd.f32 %v232, %v4370
    %vm4435 = vcmp.gt.f32.partialorder %v4371, 0.0
    %vm4436 = vcmp.gt.f32.partialorder %v4372, 0.0
    %vm4437 = vcmp.gt.f32.partialorder %v4373, 0.0
    %vm4438 = vcmp.gt.f32.partialorder %v4374, 0.0
    %vm4439 = vcmp.gt.f32.partialorder %v4375, 0.0
    %vm4440 = vcmp.gt.f32.partialorder %v4376, 0.0
    %vm4441 = vcmp.gt.f32.partialorder %v4377, 0.0
    %vm4442 = vcmp.gt.f32.partialorder %v4378, 0.0
    %vm4443 = vcmp.gt.f32.partialorder %v4379, 0.0
    %vm4444 = vcmp.gt.f32.partialorder %v4380, 0.0
    %vm4445 = vcmp.gt.f32.partialorder %v4381, 0.0
    %vm4446 = vcmp.gt.f32.partialorder %v4382, 0.0
    %vm4447 = vcmp.gt.f32.partialorder %v4383, 0.0
    %vm4448 = vcmp.gt.f32.partialorder %v4384, 0.0
    %vm4449 = vcmp.gt.f32.partialorder %v4385, 0.0
    %vm4450 = vcmp.gt.f32.partialorder %v4386, 0.0
    %vm4451 = vcmp.gt.f32.partialorder %v4387, 0.0
    %vm4452 = vcmp.gt.f32.partialorder %v4388, 0.0
    %vm4453 = vcmp.gt.f32.partialorder %v4389, 0.0
    %vm4454 = vcmp.gt.f32.partialorder %v4390, 0.0
    %vm4455 = vcmp.gt.f32.partialorder %v4391, 0.0
    %vm4456 = vcmp.gt.f32.partialorder %v4392, 0.0
    %vm4457 = vcmp.gt.f32.partialorder %v4393, 0.0
    %vm4458 = vcmp.gt.f32.partialorder %v4394, 0.0
    %vm4459 = vcmp.gt.f32.partialorder %v4395, 0.0
    %vm4460 = vcmp.gt.f32.partialorder %v4396, 0.0
    %vm4461 = vcmp.gt.f32.partialorder %v4397, 0.0
    %vm4462 = vcmp.gt.f32.partialorder %v4398, 0.0
    %vm4463 = vcmp.gt.f32.partialorder %v4399, 0.0
    %vm4464 = vcmp.gt.f32.partialorder %v4400, 0.0
    %vm4465 = vcmp.gt.f32.partialorder %v4401, 0.0
    %vm4466 = vcmp.gt.f32.partialorder %v4402, 0.0
    %vm4467 = vcmp.gt.f32.partialorder %v4403, 0.0
    %vm4468 = vcmp.gt.f32.partialorder %v4404, 0.0
    %vm4469 = vcmp.gt.f32.partialorder %v4405, 0.0
    %vm4470 = vcmp.gt.f32.partialorder %v4406, 0.0
    %vm4471 = vcmp.gt.f32.partialorder %v4407, 0.0
    %vm4472 = vcmp.gt.f32.partialorder %v4408, 0.0
    %vm4473 = vcmp.gt.f32.partialorder %v4409, 0.0
    %vm4474 = vcmp.gt.f32.partialorder %v4410, 0.0
    %vm4475 = vcmp.gt.f32.partialorder %v4411, 0.0
    %vm4476 = vcmp.gt.f32.partialorder %v4412, 0.0
    %vm4477 = vcmp.gt.f32.partialorder %v4413, 0.0
    %vm4478 = vcmp.gt.f32.partialorder %v4414, 0.0
    %vm4479 = vcmp.gt.f32.partialorder %v4415, 0.0
    %vm4480 = vcmp.gt.f32.partialorder %v4416, 0.0
    %vm4481 = vcmp.gt.f32.partialorder %v4417, 0.0
    %vm4482 = vcmp.gt.f32.partialorder %v4418, 0.0
    %vm4483 = vcmp.gt.f32.partialorder %v4419, 0.0
    %vm4484 = vcmp.gt.f32.partialorder %v4420, 0.0
    %vm4485 = vcmp.gt.f32.partialorder %v4421, 0.0
    %vm4486 = vcmp.gt.f32.partialorder %v4422, 0.0
    %vm4487 = vcmp.gt.f32.partialorder %v4423, 0.0
    %vm4488 = vcmp.gt.f32.partialorder %v4424, 0.0
    %vm4489 = vcmp.gt.f32.partialorder %v4425, 0.0
    %vm4490 = vcmp.gt.f32.partialorder %v4426, 0.0
    %vm4491 = vcmp.gt.f32.partialorder %v4427, 0.0
    %vm4492 = vcmp.gt.f32.partialorder %v4428, 0.0
    %vm4493 = vcmp.gt.f32.partialorder %v4429, 0.0
    %vm4494 = vcmp.gt.f32.partialorder %v4430, 0.0
    %vm4495 = vcmp.gt.f32.partialorder %v4431, 0.0
    %vm4496 = vcmp.gt.f32.partialorder %v4432, 0.0
    %vm4497 = vcmp.gt.f32.partialorder %v4433, 0.0
    %vm4498 = vcmp.gt.f32.partialorder %v4434, 0.0
    %v4499 = vmul.f32 %v4371, 1.442695
    %v4500 = vpow.pop %v4499
    %v4501 = vmul.f32 %v4372, 1.442695
    %v4502 = vpow.pop %v4501
    %v4503 = vmul.f32 %v4373, 1.442695
    %v4504 = vpow.pop %v4503
    %v4505 = vmul.f32 %v4374, 1.442695
    %v4506 = vpow.pop %v4505
    %v4507 = vmul.f32 %v4375, 1.442695
    %v4508 = vpow.pop %v4507
    %v4509 = vmul.f32 %v4376, 1.442695
    %v4510 = vpow.pop %v4509
    %v4511 = vmul.f32 %v4377, 1.442695
    %v4512 = vpow.pop %v4511
    %v4513 = vmul.f32 %v4378, 1.442695
    %v4514 = vpow.pop %v4513
    %v4515 = vmul.f32 %v4379, 1.442695
    %v4516 = vpow.pop %v4515
    %v4517 = vmul.f32 %v4380, 1.442695
    %v4518 = vpow.pop %v4517
    %v4519 = vmul.f32 %v4381, 1.442695
    %v4520 = vpow.pop %v4519
    %v4521 = vmul.f32 %v4382, 1.442695
    %v4522 = vpow.pop %v4521
    %v4523 = vmul.f32 %v4383, 1.442695
    %v4524 = vpow.pop %v4523
    %v4525 = vmul.f32 %v4384, 1.442695
    %v4526 = vpow.pop %v4525
    %v4527 = vmul.f32 %v4385, 1.442695
    %v4528 = vpow.pop %v4527
    %v4529 = vmul.f32 %v4386, 1.442695
    %v4530 = vpow.pop %v4529
    %v4531 = vmul.f32 %v4387, 1.442695
    %v4532 = vpow.pop %v4531
    %v4533 = vmul.f32 %v4388, 1.442695
    %v4534 = vpow.pop %v4533
    %v4535 = vmul.f32 %v4389, 1.442695
    %v4536 = vpow.pop %v4535
    %v4537 = vmul.f32 %v4390, 1.442695
    %v4538 = vpow.pop %v4537
    %v4539 = vmul.f32 %v4391, 1.442695
    %v4540 = vpow.pop %v4539
    %v4541 = vmul.f32 %v4392, 1.442695
    %v4542 = vpow.pop %v4541
    %v4543 = vmul.f32 %v4393, 1.442695
    %v4544 = vpow.pop %v4543
    %v4545 = vmul.f32 %v4394, 1.442695
    %v4546 = vpow.pop %v4545
    %v4547 = vmul.f32 %v4395, 1.442695
    %v4548 = vpow.pop %v4547
    %v4549 = vmul.f32 %v4396, 1.442695
    %v4550 = vpow.pop %v4549
    %v4551 = vmul.f32 %v4397, 1.442695
    %v4552 = vpow.pop %v4551
    %v4553 = vmul.f32 %v4398, 1.442695
    %v4554 = vpow.pop %v4553
    %v4555 = vmul.f32 %v4399, 1.442695
    %v4556 = vpow.pop %v4555
    %v4557 = vmul.f32 %v4400, 1.442695
    %v4558 = vpow.pop %v4557
    %v4559 = vmul.f32 %v4401, 1.442695
    %v4560 = vpow.pop %v4559
    %v4561 = vmul.f32 %v4402, 1.442695
    %v4562 = vpow.pop %v4561
    %v4563 = vmul.f32 %v4403, 1.442695
    %v4564 = vpow.pop %v4563
    %v4565 = vmul.f32 %v4404, 1.442695
    %v4566 = vpow.pop %v4565
    %v4567 = vmul.f32 %v4405, 1.442695
    %v4568 = vpow.pop %v4567
    %v4569 = vmul.f32 %v4406, 1.442695
    %v4570 = vpow.pop %v4569
    %v4571 = vmul.f32 %v4407, 1.442695
    %v4572 = vpow.pop %v4571
    %v4573 = vmul.f32 %v4408, 1.442695
    %v4574 = vpow.pop %v4573
    %v4575 = vmul.f32 %v4409, 1.442695
    %v4576 = vpow.pop %v4575
    %v4577 = vmul.f32 %v4410, 1.442695
    %v4578 = vpow.pop %v4577
    %v4579 = vmul.f32 %v4411, 1.442695
    %v4580 = vpow.pop %v4579
    %v4581 = vmul.f32 %v4412, 1.442695
    %v4582 = vpow.pop %v4581
    %v4583 = vmul.f32 %v4413, 1.442695
    %v4584 = vpow.pop %v4583
    %v4585 = vmul.f32 %v4414, 1.442695
    %v4586 = vpow.pop %v4585
    %v4587 = vmul.f32 %v4415, 1.442695
    %v4588 = vpow.pop %v4587
    %v4589 = vmul.f32 %v4416, 1.442695
    %v4590 = vpow.pop %v4589
    %v4591 = vmul.f32 %v4417, 1.442695
    %v4592 = vpow.pop %v4591
    %v4593 = vmul.f32 %v4418, 1.442695
    %v4594 = vpow.pop %v4593
    %v4595 = vmul.f32 %v4419, 1.442695
    %v4596 = vpow.pop %v4595
    %v4597 = vmul.f32 %v4420, 1.442695
    %v4598 = vpow.pop %v4597
    %v4599 = vmul.f32 %v4421, 1.442695
    %v4600 = vpow.pop %v4599
    %v4601 = vmul.f32 %v4422, 1.442695
    %v4602 = vpow.pop %v4601
    %v4603 = vmul.f32 %v4423, 1.442695
    %v4604 = vpow.pop %v4603
    %v4605 = vmul.f32 %v4424, 1.442695
    %v4606 = vpow.pop %v4605
    %v4607 = vmul.f32 %v4425, 1.442695
    %v4608 = vpow.pop %v4607
    %v4609 = vmul.f32 %v4426, 1.442695
    %v4610 = vpow.pop %v4609
    %v4611 = vmul.f32 %v4427, 1.442695
    %v4612 = vpow.pop %v4611
    %v4613 = vmul.f32 %v4428, 1.442695
    %v4614 = vpow.pop %v4613
    %v4615 = vmul.f32 %v4429, 1.442695
    %v4616 = vpow.pop %v4615
    %v4617 = vmul.f32 %v4430, 1.442695
    %v4618 = vpow.pop %v4617
    %v4619 = vmul.f32 %v4431, 1.442695
    %v4620 = vpow.pop %v4619
    %v4621 = vmul.f32 %v4432, 1.442695
    %v4622 = vpow.pop %v4621
    %v4623 = vmul.f32 %v4433, 1.442695
    %v4624 = vpow.pop %v4623
    %v4625 = vmul.f32 %v4434, 1.442695
    %v4626 = vpow.pop %v4625
    %v4627 = vsub.f32 %v4500, 1.0
    %v4628 = vsub.f32 %v4502, 1.0
    %v4629 = vsub.f32 %v4504, 1.0
    %v4630 = vsub.f32 %v4506, 1.0
    %v4631 = vsub.f32 %v4508, 1.0
    %v4632 = vsub.f32 %v4510, 1.0
    %v4633 = vsub.f32 %v4512, 1.0
    %v4634 = vsub.f32 %v4514, 1.0
    %v4635 = vsub.f32 %v4516, 1.0
    %v4636 = vsub.f32 %v4518, 1.0
    %v4637 = vsub.f32 %v4520, 1.0
    %v4638 = vsub.f32 %v4522, 1.0
    %v4639 = vsub.f32 %v4524, 1.0
    %v4640 = vsub.f32 %v4526, 1.0
    %v4641 = vsub.f32 %v4528, 1.0
    %v4642 = vsub.f32 %v4530, 1.0
    %v4643 = vsub.f32 %v4532, 1.0
    %v4644 = vsub.f32 %v4534, 1.0
    %v4645 = vsub.f32 %v4536, 1.0
    %v4646 = vsub.f32 %v4538, 1.0
    %v4647 = vsub.f32 %v4540, 1.0
    %v4648 = vsub.f32 %v4542, 1.0
    %v4649 = vsub.f32 %v4544, 1.0
    %v4650 = vsub.f32 %v4546, 1.0
    %v4651 = vsub.f32 %v4548, 1.0
    %v4652 = vsub.f32 %v4550, 1.0
    %v4653 = vsub.f32 %v4552, 1.0
    %v4654 = vsub.f32 %v4554, 1.0
    %v4655 = vsub.f32 %v4556, 1.0
    %v4656 = vsub.f32 %v4558, 1.0
    %v4657 = vsub.f32 %v4560, 1.0
    %v4658 = vsub.f32 %v4562, 1.0
    %v4659 = vsub.f32 %v4564, 1.0
    %v4660 = vsub.f32 %v4566, 1.0
    %v4661 = vsub.f32 %v4568, 1.0
    %v4662 = vsub.f32 %v4570, 1.0
    %v4663 = vsub.f32 %v4572, 1.0
    %v4664 = vsub.f32 %v4574, 1.0
    %v4665 = vsub.f32 %v4576, 1.0
    %v4666 = vsub.f32 %v4578, 1.0
    %v4667 = vsub.f32 %v4580, 1.0
    %v4668 = vsub.f32 %v4582, 1.0
    %v4669 = vsub.f32 %v4584, 1.0
    %v4670 = vsub.f32 %v4586, 1.0
    %v4671 = vsub.f32 %v4588, 1.0
    %v4672 = vsub.f32 %v4590, 1.0
    %v4673 = vsub.f32 %v4592, 1.0
    %v4674 = vsub.f32 %v4594, 1.0
    %v4675 = vsub.f32 %v4596, 1.0
    %v4676 = vsub.f32 %v4598, 1.0
    %v4677 = vsub.f32 %v4600, 1.0
    %v4678 = vsub.f32 %v4602, 1.0
    %v4679 = vsub.f32 %v4604, 1.0
    %v4680 = vsub.f32 %v4606, 1.0
    %v4681 = vsub.f32 %v4608, 1.0
    %v4682 = vsub.f32 %v4610, 1.0
    %v4683 = vsub.f32 %v4612, 1.0
    %v4684 = vsub.f32 %v4614, 1.0
    %v4685 = vsub.f32 %v4616, 1.0
    %v4686 = vsub.f32 %v4618, 1.0
    %v4687 = vsub.f32 %v4620, 1.0
    %v4688 = vsub.f32 %v4622, 1.0
    %v4689 = vsub.f32 %v4624, 1.0
    %v4690 = vsub.f32 %v4626, 1.0
    %v4691 = vsel %vm4435, %v4371, %v4627
    %v4692 = vsel %vm4436, %v4372, %v4628
    %v4693 = vsel %vm4437, %v4373, %v4629
    %v4694 = vsel %vm4438, %v4374, %v4630
    %v4695 = vsel %vm4439, %v4375, %v4631
    %v4696 = vsel %vm4440, %v4376, %v4632
    %v4697 = vsel %vm4441, %v4377, %v4633
    %v4698 = vsel %vm4442, %v4378, %v4634
    %v4699 = vsel %vm4443, %v4379, %v4635
    %v4700 = vsel %vm4444, %v4380, %v4636
    %v4701 = vsel %vm4445, %v4381, %v4637
    %v4702 = vsel %vm4446, %v4382, %v4638
    %v4703 = vsel %vm4447, %v4383, %v4639
    %v4704 = vsel %vm4448, %v4384, %v4640
    %v4705 = vsel %vm4449, %v4385, %v4641
    %v4706 = vsel %vm4450, %v4386, %v4642
    %v4707 = vsel %vm4451, %v4387, %v4643
    %v4708 = vsel %vm4452, %v4388, %v4644
    %v4709 = vsel %vm4453, %v4389, %v4645
    %v4710 = vsel %vm4454, %v4390, %v4646
    %v4711 = vsel %vm4455, %v4391, %v4647
    %v4712 = vsel %vm4456, %v4392, %v4648
    %v4713 = vsel %vm4457, %v4393, %v4649
    %v4714 = vsel %vm4458, %v4394, %v4650
    %v4715 = vsel %vm4459, %v4395, %v4651
    %v4716 = vsel %vm4460, %v4396, %v4652
    %v4717 = vsel %vm4461, %v4397, %v4653
    %v4718 = vsel %vm4462, %v4398, %v4654
    %v4719 = vsel %vm4463, %v4399, %v4655
    %v4720 = vsel %vm4464, %v4400, %v4656
    %v4721 = vsel %vm4465, %v4401, %v4657
    %v4722 = vsel %vm4466, %v4402, %v4658
    %v4723 = vsel %vm4467, %v4403, %v4659
    %v4724 = vsel %vm4468, %v4404, %v4660
    %v4725 = vsel %vm4469, %v4405, %v4661
    %v4726 = vsel %vm4470, %v4406, %v4662
    %v4727 = vsel %vm4471, %v4407, %v4663
    %v4728 = vsel %vm4472, %v4408, %v4664
    %v4729 = vsel %vm4473, %v4409, %v4665
    %v4730 = vsel %vm4474, %v4410, %v4666
    %v4731 = vsel %vm4475, %v4411, %v4667
    %v4732 = vsel %vm4476, %v4412, %v4668
    %v4733 = vsel %vm4477, %v4413, %v4669
    %v4734 = vsel %vm4478, %v4414, %v4670
    %v4735 = vsel %vm4479, %v4415, %v4671
    %v4736 = vsel %vm4480, %v4416, %v4672
    %v4737 = vsel %vm4481, %v4417, %v4673
    %v4738 = vsel %vm4482, %v4418, %v4674
    %v4739 = vsel %vm4483, %v4419, %v4675
    %v4740 = vsel %vm4484, %v4420, %v4676
    %v4741 = vsel %vm4485, %v4421, %v4677
    %v4742 = vsel %vm4486, %v4422, %v4678
    %v4743 = vsel %vm4487, %v4423, %v4679
    %v4744 = vsel %vm4488, %v4424, %v4680
    %v4745 = vsel %vm4489, %v4425, %v4681
    %v4746 = vsel %vm4490, %v4426, %v4682
    %v4747 = vsel %vm4491, %v4427, %v4683
    %v4748 = vsel %vm4492, %v4428, %v4684
    %v4749 = vsel %vm4493, %v4429, %v4685
    %v4750 = vsel %vm4494, %v4430, %v4686
    %v4751 = vsel %vm4495, %v4431, %v4687
    %v4752 = vsel %vm4496, %v4432, %v4688
    %v4753 = vsel %vm4497, %v4433, %v4689
    %v4754 = vsel %vm4498, %v4434, %v4690
    %4755 = vst.msk [vmem:[%s553 + $0x1] sm:$0xff] %vm554, %v4691
    %4756 = vst.msk [vmem:[%s553 + $0x9] sm:$0xff] %vm554, %v4692
    %4757 = vst.msk [vmem:[%s553 + $0x19] sm:$0xff] %vm554, %v4693
    %4758 = vst.msk [vmem:[%s553 + $0x21] sm:$0xff] %vm554, %v4694
    %4759 = vst.msk [vmem:[%s553 + $0x31] sm:$0xff] %vm554, %v4695
    %4760 = vst.msk [vmem:[%s553 + $0x39] sm:$0xff] %vm554, %v4696
    %4761 = vst.msk [vmem:[%s553 + $0x49] sm:$0xff] %vm554, %v4697
    %4762 = vst.msk [vmem:[%s553 + $0x51] sm:$0xff] %vm554, %v4698
    %4763 = vst.msk [vmem:[%s553 + $0x61] sm:$0xff] %vm554, %v4699
    %4764 = vst.msk [vmem:[%s553 + $0x69] sm:$0xff] %vm554, %v4700
    %4765 = vst.msk [vmem:[%s553 + $0x79] sm:$0xff] %vm554, %v4701
    %4766 = vst.msk [vmem:[%s553 + $0x81] sm:$0xff] %vm554, %v4702
    %4767 = vst.msk [vmem:[%s553 + $0x91] sm:$0xff] %vm554, %v4703
    %4768 = vst.msk [vmem:[%s553 + $0x99] sm:$0xff] %vm554, %v4704
    %4769 = vst.msk [vmem:[%s553 + $0xa9] sm:$0xff] %vm554, %v4705
    %4770 = vst.msk [vmem:[%s553 + $0xb1] sm:$0xff] %vm554, %v4706
    %4771 = vst.msk [vmem:[%s553 + $0xc1] sm:$0xff] %vm554, %v4707
    %4772 = vst.msk [vmem:[%s553 + $0xc9] sm:$0xff] %vm554, %v4708
    %4773 = vst.msk [vmem:[%s553 + $0xd9] sm:$0xff] %vm554, %v4709
    %4774 = vst.msk [vmem:[%s553 + $0xe1] sm:$0xff] %vm554, %v4710
    %4775 = vst.msk [vmem:[%s553 + $0xf1] sm:$0xff] %vm554, %v4711
    %4776 = vst.msk [vmem:[%s553 + $0xf9] sm:$0xff] %vm554, %v4712
    %4777 = vst.msk [vmem:[%s553 + $0x109] sm:$0xff] %vm554, %v4713
    %4778 = vst.msk [vmem:[%s553 + $0x111] sm:$0xff] %vm554, %v4714
    %4779 = vst.msk [vmem:[%s553 + $0x121] sm:$0xff] %vm554, %v4715
    %4780 = vst.msk [vmem:[%s553 + $0x129] sm:$0xff] %vm554, %v4716
    %4781 = vst.msk [vmem:[%s553 + $0x139] sm:$0xff] %vm554, %v4717
    %4782 = vst.msk [vmem:[%s553 + $0x141] sm:$0xff] %vm554, %v4718
    %4783 = vst.msk [vmem:[%s553 + $0x151] sm:$0xff] %vm554, %v4719
    %4784 = vst.msk [vmem:[%s553 + $0x159] sm:$0xff] %vm554, %v4720
    %4785 = vst.msk [vmem:[%s553 + $0x169] sm:$0xff] %vm554, %v4721
    %4786 = vst.msk [vmem:[%s553 + $0x171] sm:$0xff] %vm554, %v4722
    %4787 = vst.msk [vmem:[%s553 + $0x1b1] sm:$0xff] %vm554, %v4723
    %4788 = vst.msk [vmem:[%s553 + $0x1b9] sm:$0xff] %vm554, %v4724
    %4789 = vst.msk [vmem:[%s553 + $0x1c9] sm:$0xff] %vm554, %v4725
    %4790 = vst.msk [vmem:[%s553 + $0x1d1] sm:$0xff] %vm554, %v4726
    %4791 = vst.msk [vmem:[%s553 + $0x1e1] sm:$0xff] %vm554, %v4727
    %4792 = vst.msk [vmem:[%s553 + $0x1e9] sm:$0xff] %vm554, %v4728
    %4793 = vst.msk [vmem:[%s553 + $0x1f9] sm:$0xff] %vm554, %v4729
    %4794 = vst.msk [vmem:[%s553 + $0x201] sm:$0xff] %vm554, %v4730
    %4795 = vst.msk [vmem:[%s553 + $0x211] sm:$0xff] %vm554, %v4731
    %4796 = vst.msk [vmem:[%s553 + $0x219] sm:$0xff] %vm554, %v4732
    %4797 = vst.msk [vmem:[%s553 + $0x229] sm:$0xff] %vm554, %v4733
    %4798 = vst.msk [vmem:[%s553 + $0x231] sm:$0xff] %vm554, %v4734
    %4799 = vst.msk [vmem:[%s553 + $0x241] sm:$0xff] %vm554, %v4735
    %4800 = vst.msk [vmem:[%s553 + $0x249] sm:$0xff] %vm554, %v4736
    %4801 = vst.msk [vmem:[%s553 + $0x259] sm:$0xff] %vm554, %v4737
    %4802 = vst.msk [vmem:[%s553 + $0x261] sm:$0xff] %vm554, %v4738
    %4803 = vst.msk [vmem:[%s553 + $0x271] sm:$0xff] %vm554, %v4739
    %4804 = vst.msk [vmem:[%s553 + $0x279] sm:$0xff] %vm554, %v4740
    %4805 = vst.msk [vmem:[%s553 + $0x289] sm:$0xff] %vm554, %v4741
    %4806 = vst.msk [vmem:[%s553 + $0x291] sm:$0xff] %vm554, %v4742
    %4807 = vst.msk [vmem:[%s553 + $0x2a1] sm:$0xff] %vm554, %v4743
    %4808 = vst.msk [vmem:[%s553 + $0x2a9] sm:$0xff] %vm554, %v4744
    %4809 = vst.msk [vmem:[%s553 + $0x2b9] sm:$0xff] %vm554, %v4745
    %4810 = vst.msk [vmem:[%s553 + $0x2c1] sm:$0xff] %vm554, %v4746
    %4811 = vst.msk [vmem:[%s553 + $0x2d1] sm:$0xff] %vm554, %v4747
    %4812 = vst.msk [vmem:[%s553 + $0x2d9] sm:$0xff] %vm554, %v4748
    %4813 = vst.msk [vmem:[%s553 + $0x2e9] sm:$0xff] %vm554, %v4749
    %4814 = vst.msk [vmem:[%s553 + $0x2f1] sm:$0xff] %vm554, %v4750
    %4815 = vst.msk [vmem:[%s553 + $0x301] sm:$0xff] %vm554, %v4751
    %4816 = vst.msk [vmem:[%s553 + $0x309] sm:$0xff] %vm554, %v4752
    %4817 = vst.msk [vmem:[%s553 + $0x319] sm:$0xff] %vm554, %v4753
    %4818 = vst.msk [vmem:[%s553 + $0x321] sm:$0xff] %vm554, %v4754
    %v4819 = vld [vmem:[%s2] sm:$0xff]
    %v4820 = vld [vmem:[%s2 + $0x8] sm:$0xff]
    %v4821 = vld [vmem:[%s2 + $0x10] sm:$0xff]
    %v4822 = vld [vmem:[%s2 + $0x18] sm:$0xff]
    %v4823 = vld [vmem:[%s2 + $0x20] sm:$0xff]
    %v4824 = vld [vmem:[%s2 + $0x28] sm:$0xff]
    %v4825 = vld [vmem:[%s2 + $0x30] sm:$0xff]
    %v4826 = vld [vmem:[%s2 + $0x38] sm:$0xff]
    %v4827 = vld [vmem:[%s2 + $0x40] sm:$0xff]
    %v4828 = vld [vmem:[%s2 + $0x48] sm:$0xff]
    %v4829 = vld [vmem:[%s2 + $0x50] sm:$0xff]
    %v4830 = vld [vmem:[%s2 + $0x58] sm:$0xff]
    %v4831 = vld [vmem:[%s2 + $0x60] sm:$0xff]
    %v4832 = vld [vmem:[%s2 + $0x68] sm:$0xff]
    %v4833 = vld [vmem:[%s2 + $0x70] sm:$0xff]
    %v4834 = vld [vmem:[%s2 + $0x78] sm:$0xff]
    %v4835 = vld [vmem:[%s2 + $0x80] sm:$0xff]
    %v4836 = vld [vmem:[%s2 + $0x88] sm:$0xff]
    %v4837 = vld [vmem:[%s2 + $0x90] sm:$0xff]
    %v4838 = vld [vmem:[%s2 + $0x98] sm:$0xff]
    %v4839 = vld [vmem:[%s2 + $0xa0] sm:$0xff]
    %v4840 = vld [vmem:[%s2 + $0xa8] sm:$0xff]
    %v4841 = vld [vmem:[%s2 + $0xb0] sm:$0xff]
    %v4842 = vld [vmem:[%s2 + $0xb8] sm:$0xff]
    %v4843 = vld [vmem:[%s2 + $0xc0] sm:$0xff]
    %v4844 = vld [vmem:[%s2 + $0xc8] sm:$0xff]
    %v4845 = vld [vmem:[%s2 + $0xd0] sm:$0xff]
    %v4846 = vld [vmem:[%s2 + $0xd8] sm:$0xff]
    %v4847 = vld [vmem:[%s2 + $0xe0] sm:$0xff]
    %v4848 = vld [vmem:[%s2 + $0xe8] sm:$0xff]
    %v4849 = vld [vmem:[%s2 + $0xf0] sm:$0xff]
    %v4850 = vld [vmem:[%s2 + $0xf8] sm:$0xff]
    %v4851 = vld [vmem:[%s2 + $0x100] sm:$0xff]
    %v4852 = vld [vmem:[%s2 + $0x108] sm:$0xff]
    %v4853 = vld [vmem:[%s2 + $0x110] sm:$0xff]
    %v4854 = vld [vmem:[%s2 + $0x118] sm:$0xff]
    %v4855 = vld [vmem:[%s2 + $0x120] sm:$0xff]
    %v4856 = vld [vmem:[%s2 + $0x128] sm:$0xff]
    %v4857 = vld [vmem:[%s2 + $0x130] sm:$0xff]
    %v4858 = vld [vmem:[%s2 + $0x138] sm:$0xff]
    %v4859 = vld [vmem:[%s2 + $0x140] sm:$0xff]
    %v4860 = vld [vmem:[%s2 + $0x148] sm:$0xff]
    %v4861 = vld [vmem:[%s2 + $0x150] sm:$0xff]
    %v4862 = vld [vmem:[%s2 + $0x158] sm:$0xff]
    %v4863 = vld [vmem:[%s2 + $0x160] sm:$0xff]
    %v4864 = vld [vmem:[%s2 + $0x168] sm:$0xff]
    %v4865 = vld [vmem:[%s2 + $0x170] sm:$0xff]
    %v4866 = vld [vmem:[%s2 + $0x178] sm:$0xff]
    %v4867 = vld [vmem:[%s2 + $0x180] sm:$0xff]
    %v4868 = vld [vmem:[%s2 + $0x188] sm:$0xff]
    %v4869 = vld [vmem:[%s2 + $0x190] sm:$0xff]
    %v4870 = vld [vmem:[%s2 + $0x198] sm:$0xff]
    %v4871 = vld [vmem:[%s2 + $0x1a0] sm:$0xff]
    %v4872 = vld [vmem:[%s2 + $0x1a8] sm:$0xff]
    %v4873 = vld [vmem:[%s2 + $0x1b0] sm:$0xff]
    %v4874 = vld [vmem:[%s2 + $0x1b8] sm:$0xff]
    %v4875 = vld [vmem:[%s2 + $0x1c0] sm:$0xff]
    %v4876 = vld [vmem:[%s2 + $0x1c8] sm:$0xff]
    %v4877 = vld [vmem:[%s2 + $0x1d0] sm:$0xff]
    %v4878 = vld [vmem:[%s2 + $0x1d8] sm:$0xff]
    %v4879 = vld [vmem:[%s2 + $0x1e0] sm:$0xff]
    %v4880 = vld [vmem:[%s2 + $0x1e8] sm:$0xff]
    %v4881 = vld [vmem:[%s2 + $0x1f0] sm:$0xff]
    %v4882 = vld [vmem:[%s2 + $0x1f8] sm:$0xff]
    %vm4883 = vcmp.gt.f32.partialorder %v4819, 0.0
    %vm4884 = vcmp.gt.f32.partialorder %v4820, 0.0
    %vm4885 = vcmp.gt.f32.partialorder %v4821, 0.0
    %vm4886 = vcmp.gt.f32.partialorder %v4822, 0.0
    %vm4887 = vcmp.gt.f32.partialorder %v4823, 0.0
    %vm4888 = vcmp.gt.f32.partialorder %v4824, 0.0
    %vm4889 = vcmp.gt.f32.partialorder %v4825, 0.0
    %vm4890 = vcmp.gt.f32.partialorder %v4826, 0.0
    %vm4891 = vcmp.gt.f32.partialorder %v4827, 0.0
    %vm4892 = vcmp.gt.f32.partialorder %v4828, 0.0
    %vm4893 = vcmp.gt.f32.partialorder %v4829, 0.0
    %vm4894 = vcmp.gt.f32.partialorder %v4830, 0.0
    %vm4895 = vcmp.gt.f32.partialorder %v4831, 0.0
    %vm4896 = vcmp.gt.f32.partialorder %v4832, 0.0
    %vm4897 = vcmp.gt.f32.partialorder %v4833, 0.0
    %vm4898 = vcmp.gt.f32.partialorder %v4834, 0.0
    %vm4899 = vcmp.gt.f32.partialorder %v4835, 0.0
    %vm4900 = vcmp.gt.f32.partialorder %v4836, 0.0
    %vm4901 = vcmp.gt.f32.partialorder %v4837, 0.0
    %vm4902 = vcmp.gt.f32.partialorder %v4838, 0.0
    %vm4903 = vcmp.gt.f32.partialorder %v4839, 0.0
    %vm4904 = vcmp.gt.f32.partialorder %v4840, 0.0
    %vm4905 = vcmp.gt.f32.partialorder %v4841, 0.0
    %vm4906 = vcmp.gt.f32.partialorder %v4842, 0.0
    %vm4907 = vcmp.gt.f32.partialorder %v4843, 0.0
    %vm4908 = vcmp.gt.f32.partialorder %v4844, 0.0
    %vm4909 = vcmp.gt.f32.partialorder %v4845, 0.0
    %vm4910 = vcmp.gt.f32.partialorder %v4846, 0.0
    %vm4911 = vcmp.gt.f32.partialorder %v4847, 0.0
    %vm4912 = vcmp.gt.f32.partialorder %v4848, 0.0
    %vm4913 = vcmp.gt.f32.partialorder %v4849, 0.0
    %vm4914 = vcmp.gt.f32.partialorder %v4850, 0.0
    %vm4915 = vcmp.gt.f32.partialorder %v4851, 0.0
    %vm4916 = vcmp.gt.f32.partialorder %v4852, 0.0
    %vm4917 = vcmp.gt.f32.partialorder %v4853, 0.0
    %vm4918 = vcmp.gt.f32.partialorder %v4854, 0.0
    %vm4919 = vcmp.gt.f32.partialorder %v4855, 0.0
    %vm4920 = vcmp.gt.f32.partialorder %v4856, 0.0
    %vm4921 = vcmp.gt.f32.partialorder %v4857, 0.0
    %vm4922 = vcmp.gt.f32.partialorder %v4858, 0.0
    %vm4923 = vcmp.gt.f32.partialorder %v4859, 0.0
    %vm4924 = vcmp.gt.f32.partialorder %v4860, 0.0
    %vm4925 = vcmp.gt.f32.partialorder %v4861, 0.0
    %vm4926 = vcmp.gt.f32.partialorder %v4862, 0.0
    %vm4927 = vcmp.gt.f32.partialorder %v4863, 0.0
    %vm4928 = vcmp.gt.f32.partialorder %v4864, 0.0
    %vm4929 = vcmp.gt.f32.partialorder %v4865, 0.0
    %vm4930 = vcmp.gt.f32.partialorder %v4866, 0.0
    %vm4931 = vcmp.gt.f32.partialorder %v4867, 0.0
    %vm4932 = vcmp.gt.f32.partialorder %v4868, 0.0
    %vm4933 = vcmp.gt.f32.partialorder %v4869, 0.0
    %vm4934 = vcmp.gt.f32.partialorder %v4870, 0.0
    %vm4935 = vcmp.gt.f32.partialorder %v4871, 0.0
    %vm4936 = vcmp.gt.f32.partialorder %v4872, 0.0
    %vm4937 = vcmp.gt.f32.partialorder %v4873, 0.0
    %vm4938 = vcmp.gt.f32.partialorder %v4874, 0.0
    %vm4939 = vcmp.gt.f32.partialorder %v4875, 0.0
    %vm4940 = vcmp.gt.f32.partialorder %v4876, 0.0
    %vm4941 = vcmp.gt.f32.partialorder %v4877, 0.0
    %vm4942 = vcmp.gt.f32.partialorder %v4878, 0.0
    %vm4943 = vcmp.gt.f32.partialorder %v4879, 0.0
    %vm4944 = vcmp.gt.f32.partialorder %v4880, 0.0
    %vm4945 = vcmp.gt.f32.partialorder %v4881, 0.0
    %vm4946 = vcmp.gt.f32.partialorder %v4882, 0.0
    %v4947 = vmul.f32 %v4819, 1.442695
    %v4948 = vpow.pop %v4947
    %v4949 = vmul.f32 %v4820, 1.442695
    %v4950 = vpow.pop %v4949
    %v4951 = vmul.f32 %v4821, 1.442695
    %v4952 = vpow.pop %v4951
    %v4953 = vmul.f32 %v4822, 1.442695
    %v4954 = vpow.pop %v4953
    %v4955 = vmul.f32 %v4823, 1.442695
    %v4956 = vpow.pop %v4955
    %v4957 = vmul.f32 %v4824, 1.442695
    %v4958 = vpow.pop %v4957
    %v4959 = vmul.f32 %v4825, 1.442695
    %v4960 = vpow.pop %v4959
    %v4961 = vmul.f32 %v4826, 1.442695
    %v4962 = vpow.pop %v4961
    %v4963 = vmul.f32 %v4827, 1.442695
    %v4964 = vpow.pop %v4963
    %v4965 = vmul.f32 %v4828, 1.442695
    %v4966 = vpow.pop %v4965
    %v4967 = vmul.f32 %v4829, 1.442695
    %v4968 = vpow.pop %v4967
    %v4969 = vmul.f32 %v4830, 1.442695
    %v4970 = vpow.pop %v4969
    %v4971 = vmul.f32 %v4831, 1.442695
    %v4972 = vpow.pop %v4971
    %v4973 = vmul.f32 %v4832, 1.442695
    %v4974 = vpow.pop %v4973
    %v4975 = vmul.f32 %v4833, 1.442695
    %v4976 = vpow.pop %v4975
    %v4977 = vmul.f32 %v4834, 1.442695
    %v4978 = vpow.pop %v4977
    %v4979 = vmul.f32 %v4835, 1.442695
    %v4980 = vpow.pop %v4979
    %v4981 = vmul.f32 %v4836, 1.442695
    %v4982 = vpow.pop %v4981
    %v4983 = vmul.f32 %v4837, 1.442695
    %v4984 = vpow.pop %v4983
    %v4985 = vmul.f32 %v4838, 1.442695
    %v4986 = vpow.pop %v4985
    %v4987 = vmul.f32 %v4839, 1.442695
    %v4988 = vpow.pop %v4987
    %v4989 = vmul.f32 %v4840, 1.442695
    %v4990 = vpow.pop %v4989
    %v4991 = vmul.f32 %v4841, 1.442695
    %v4992 = vpow.pop %v4991
    %v4993 = vmul.f32 %v4842, 1.442695
    %v4994 = vpow.pop %v4993
    %v4995 = vmul.f32 %v4843, 1.442695
    %v4996 = vpow.pop %v4995
    %v4997 = vmul.f32 %v4844, 1.442695
    %v4998 = vpow.pop %v4997
    %v4999 = vmul.f32 %v4845, 1.442695
    %v5000 = vpow.pop %v4999
    %v5001 = vmul.f32 %v4846, 1.442695
    %v5002 = vpow.pop %v5001
    %v5003 = vmul.f32 %v4847, 1.442695
    %v5004 = vpow.pop %v5003
    %v5005 = vmul.f32 %v4848, 1.442695
    %v5006 = vpow.pop %v5005
    %v5007 = vmul.f32 %v4849, 1.442695
    %v5008 = vpow.pop %v5007
    %v5009 = vmul.f32 %v4850, 1.442695
    %v5010 = vpow.pop %v5009
    %v5011 = vmul.f32 %v4851, 1.442695
    %v5012 = vpow.pop %v5011
    %v5013 = vmul.f32 %v4852, 1.442695
    %v5014 = vpow.pop %v5013
    %v5015 = vmul.f32 %v4853, 1.442695
    %v5016 = vpow.pop %v5015
    %v5017 = vmul.f32 %v4854, 1.442695
    %v5018 = vpow.pop %v5017
    %v5019 = vmul.f32 %v4855, 1.442695
    %v5020 = vpow.pop %v5019
    %v5021 = vmul.f32 %v4856, 1.442695
    %v5022 = vpow.pop %v5021
    %v5023 = vmul.f32 %v4857, 1.442695
    %v5024 = vpow.pop %v5023
    %v5025 = vmul.f32 %v4858, 1.442695
    %v5026 = vpow.pop %v5025
    %v5027 = vmul.f32 %v4859, 1.442695
    %v5028 = vpow.pop %v5027
    %v5029 = vmul.f32 %v4860, 1.442695
    %v5030 = vpow.pop %v5029
    %v5031 = vmul.f32 %v4861, 1.442695
    %v5032 = vpow.pop %v5031
    %v5033 = vmul.f32 %v4862, 1.442695
    %v5034 = vpow.pop %v5033
    %v5035 = vmul.f32 %v4863, 1.442695
    %v5036 = vpow.pop %v5035
    %v5037 = vmul.f32 %v4864, 1.442695
    %v5038 = vpow.pop %v5037
    %v5039 = vmul.f32 %v4865, 1.442695
    %v5040 = vpow.pop %v5039
    %v5041 = vmul.f32 %v4866, 1.442695
    %v5042 = vpow.pop %v5041
    %v5043 = vmul.f32 %v4867, 1.442695
    %v5044 = vpow.pop %v5043
    %v5045 = vmul.f32 %v4868, 1.442695
    %v5046 = vpow.pop %v5045
    %v5047 = vmul.f32 %v4869, 1.442695
    %v5048 = vpow.pop %v5047
    %v5049 = vmul.f32 %v4870, 1.442695
    %v5050 = vpow.pop %v5049
    %v5051 = vmul.f32 %v4871, 1.442695
    %v5052 = vpow.pop %v5051
    %v5053 = vmul.f32 %v4872, 1.442695
    %v5054 = vpow.pop %v5053
    %v5055 = vmul.f32 %v4873, 1.442695
    %v5056 = vpow.pop %v5055
    %v5057 = vmul.f32 %v4874, 1.442695
    %v5058 = vpow.pop %v5057
    %v5059 = vmul.f32 %v4875, 1.442695
    %v5060 = vpow.pop %v5059
    %v5061 = vmul.f32 %v4876, 1.442695
    %v5062 = vpow.pop %v5061
    %v5063 = vmul.f32 %v4877, 1.442695
    %v5064 = vpow.pop %v5063
    %v5065 = vmul.f32 %v4878, 1.442695
    %v5066 = vpow.pop %v5065
    %v5067 = vmul.f32 %v4879, 1.442695
    %v5068 = vpow.pop %v5067
    %v5069 = vmul.f32 %v4880, 1.442695
    %v5070 = vpow.pop %v5069
    %v5071 = vmul.f32 %v4881, 1.442695
    %v5072 = vpow.pop %v5071
    %v5073 = vmul.f32 %v4882, 1.442695
    %v5074 = vpow.pop %v5073
    %v5075 = vsub.f32 %v4948, 1.0
    %v5076 = vsub.f32 %v4950, 1.0
    %v5077 = vsub.f32 %v4952, 1.0
    %v5078 = vsub.f32 %v4954, 1.0
    %v5079 = vsub.f32 %v4956, 1.0
    %v5080 = vsub.f32 %v4958, 1.0
    %v5081 = vsub.f32 %v4960, 1.0
    %v5082 = vsub.f32 %v4962, 1.0
    %v5083 = vsub.f32 %v4964, 1.0
    %v5084 = vsub.f32 %v4966, 1.0
    %v5085 = vsub.f32 %v4968, 1.0
    %v5086 = vsub.f32 %v4970, 1.0
    %v5087 = vsub.f32 %v4972, 1.0
    %v5088 = vsub.f32 %v4974, 1.0
    %v5089 = vsub.f32 %v4976, 1.0
    %v5090 = vsub.f32 %v4978, 1.0
    %v5091 = vsub.f32 %v4980, 1.0
    %v5092 = vsub.f32 %v4982, 1.0
    %v5093 = vsub.f32 %v4984, 1.0
    %v5094 = vsub.f32 %v4986, 1.0
    %v5095 = vsub.f32 %v4988, 1.0
    %v5096 = vsub.f32 %v4990, 1.0
    %v5097 = vsub.f32 %v4992, 1.0
    %v5098 = vsub.f32 %v4994, 1.0
    %v5099 = vsub.f32 %v4996, 1.0
    %v5100 = vsub.f32 %v4998, 1.0
    %v5101 = vsub.f32 %v5000, 1.0
    %v5102 = vsub.f32 %v5002, 1.0
    %v5103 = vsub.f32 %v5004, 1.0
    %v5104 = vsub.f32 %v5006, 1.0
    %v5105 = vsub.f32 %v5008, 1.0
    %v5106 = vsub.f32 %v5010, 1.0
    %v5107 = vsub.f32 %v5012, 1.0
    %v5108 = vsub.f32 %v5014, 1.0
    %v5109 = vsub.f32 %v5016, 1.0
    %v5110 = vsub.f32 %v5018, 1.0
    %v5111 = vsub.f32 %v5020, 1.0
    %v5112 = vsub.f32 %v5022, 1.0
    %v5113 = vsub.f32 %v5024, 1.0
    %v5114 = vsub.f32 %v5026, 1.0
    %v5115 = vsub.f32 %v5028, 1.0
    %v5116 = vsub.f32 %v5030, 1.0
    %v5117 = vsub.f32 %v5032, 1.0
    %v5118 = vsub.f32 %v5034, 1.0
    %v5119 = vsub.f32 %v5036, 1.0
    %v5120 = vsub.f32 %v5038, 1.0
    %v5121 = vsub.f32 %v5040, 1.0
    %v5122 = vsub.f32 %v5042, 1.0
    %v5123 = vsub.f32 %v5044, 1.0
    %v5124 = vsub.f32 %v5046, 1.0
    %v5125 = vsub.f32 %v5048, 1.0
    %v5126 = vsub.f32 %v5050, 1.0
    %v5127 = vsub.f32 %v5052, 1.0
    %v5128 = vsub.f32 %v5054, 1.0
    %v5129 = vsub.f32 %v5056, 1.0
    %v5130 = vsub.f32 %v5058, 1.0
    %v5131 = vsub.f32 %v5060, 1.0
    %v5132 = vsub.f32 %v5062, 1.0
    %v5133 = vsub.f32 %v5064, 1.0
    %v5134 = vsub.f32 %v5066, 1.0
    %v5135 = vsub.f32 %v5068, 1.0
    %v5136 = vsub.f32 %v5070, 1.0
    %v5137 = vsub.f32 %v5072, 1.0
    %v5138 = vsub.f32 %v5074, 1.0
    %v5139 = vsel %vm4883, %v4819, %v5075
    %v5140 = vsel %vm4884, %v4820, %v5076
    %v5141 = vsel %vm4885, %v4821, %v5077
    %v5142 = vsel %vm4886, %v4822, %v5078
    %v5143 = vsel %vm4887, %v4823, %v5079
    %v5144 = vsel %vm4888, %v4824, %v5080
    %v5145 = vsel %vm4889, %v4825, %v5081
    %v5146 = vsel %vm4890, %v4826, %v5082
    %v5147 = vsel %vm4891, %v4827, %v5083
    %v5148 = vsel %vm4892, %v4828, %v5084
    %v5149 = vsel %vm4893, %v4829, %v5085
    %v5150 = vsel %vm4894, %v4830, %v5086
    %v5151 = vsel %vm4895, %v4831, %v5087
    %v5152 = vsel %vm4896, %v4832, %v5088
    %v5153 = vsel %vm4897, %v4833, %v5089
    %v5154 = vsel %vm4898, %v4834, %v5090
    %v5155 = vsel %vm4899, %v4835, %v5091
    %v5156 = vsel %vm4900, %v4836, %v5092
    %v5157 = vsel %vm4901, %v4837, %v5093
    %v5158 = vsel %vm4902, %v4838, %v5094
    %v5159 = vsel %vm4903, %v4839, %v5095
    %v5160 = vsel %vm4904, %v4840, %v5096
    %v5161 = vsel %vm4905, %v4841, %v5097
    %v5162 = vsel %vm4906, %v4842, %v5098
    %v5163 = vsel %vm4907, %v4843, %v5099
    %v5164 = vsel %vm4908, %v4844, %v5100
    %v5165 = vsel %vm4909, %v4845, %v5101
    %v5166 = vsel %vm4910, %v4846, %v5102
    %v5167 = vsel %vm4911, %v4847, %v5103
    %v5168 = vsel %vm4912, %v4848, %v5104
    %v5169 = vsel %vm4913, %v4849, %v5105
    %v5170 = vsel %vm4914, %v4850, %v5106
    %v5171 = vsel %vm4915, %v4851, %v5107
    %v5172 = vsel %vm4916, %v4852, %v5108
    %v5173 = vsel %vm4917, %v4853, %v5109
    %v5174 = vsel %vm4918, %v4854, %v5110
    %v5175 = vsel %vm4919, %v4855, %v5111
    %v5176 = vsel %vm4920, %v4856, %v5112
    %v5177 = vsel %vm4921, %v4857, %v5113
    %v5178 = vsel %vm4922, %v4858, %v5114
    %v5179 = vsel %vm4923, %v4859, %v5115
    %v5180 = vsel %vm4924, %v4860, %v5116
    %v5181 = vsel %vm4925, %v4861, %v5117
    %v5182 = vsel %vm4926, %v4862, %v5118
    %v5183 = vsel %vm4927, %v4863, %v5119
    %v5184 = vsel %vm4928, %v4864, %v5120
    %v5185 = vsel %vm4929, %v4865, %v5121
    %v5186 = vsel %vm4930, %v4866, %v5122
    %v5187 = vsel %vm4931, %v4867, %v5123
    %v5188 = vsel %vm4932, %v4868, %v5124
    %v5189 = vsel %vm4933, %v4869, %v5125
    %v5190 = vsel %vm4934, %v4870, %v5126
    %v5191 = vsel %vm4935, %v4871, %v5127
    %v5192 = vsel %vm4936, %v4872, %v5128
    %v5193 = vsel %vm4937, %v4873, %v5129
    %v5194 = vsel %vm4938, %v4874, %v5130
    %v5195 = vsel %vm4939, %v4875, %v5131
    %v5196 = vsel %vm4940, %v4876, %v5132
    %v5197 = vsel %vm4941, %v4877, %v5133
    %v5198 = vsel %vm4942, %v4878, %v5134
    %v5199 = vsel %vm4943, %v4879, %v5135
    %v5200 = vsel %vm4944, %v4880, %v5136
    %v5201 = vsel %vm4945, %v4881, %v5137
    %v5202 = vsel %vm4946, %v4882, %v5138
    %5267 = vrot.lane.b32.xlu0 %v5139, 32
    %v5268 = vpop.permute.xlu0 %5267
    %5269 = vrot.lane.b32.xlu0 %v5140, 32
    %v5270 = vpop.permute.xlu0 %5269
    %5271 = vrot.lane.b32.xlu0 %v5141, 32
    %v5272 = vpop.permute.xlu0 %5271
    %5273 = vrot.lane.b32.xlu0 %v5142, 32
    %v5274 = vpop.permute.xlu0 %5273
    %5275 = vrot.lane.b32.xlu0 %v5143, 32
    %v5276 = vpop.permute.xlu0 %5275
    %5277 = vrot.lane.b32.xlu0 %v5144, 32
    %v5278 = vpop.permute.xlu0 %5277
    %5279 = vrot.lane.b32.xlu0 %v5145, 32
    %v5280 = vpop.permute.xlu0 %5279
    %5281 = vrot.lane.b32.xlu0 %v5146, 32
    %v5282 = vpop.permute.xlu0 %5281
    %5283 = vrot.lane.b32.xlu0 %v5147, 32
    %v5284 = vpop.permute.xlu0 %5283
    %5285 = vrot.lane.b32.xlu0 %v5148, 32
    %v5286 = vpop.permute.xlu0 %5285
    %5287 = vrot.lane.b32.xlu0 %v5149, 32
    %v5288 = vpop.permute.xlu0 %5287
    %5289 = vrot.lane.b32.xlu0 %v5150, 32
    %v5290 = vpop.permute.xlu0 %5289
    %5291 = vrot.lane.b32.xlu0 %v5151, 32
    %v5292 = vpop.permute.xlu0 %5291
    %5293 = vrot.lane.b32.xlu0 %v5152, 32
    %v5294 = vpop.permute.xlu0 %5293
    %5295 = vrot.lane.b32.xlu0 %v5153, 32
    %v5296 = vpop.permute.xlu0 %5295
    %5297 = vrot.lane.b32.xlu0 %v5154, 32
    %v5298 = vpop.permute.xlu0 %5297
    %5299 = vrot.lane.b32.xlu0 %v5155, 32
    %v5300 = vpop.permute.xlu0 %5299
    %5301 = vrot.lane.b32.xlu0 %v5156, 32
    %v5302 = vpop.permute.xlu0 %5301
    %5303 = vrot.lane.b32.xlu0 %v5157, 32
    %v5304 = vpop.permute.xlu0 %5303
    %5305 = vrot.lane.b32.xlu0 %v5158, 32
    %v5306 = vpop.permute.xlu0 %5305
    %5307 = vrot.lane.b32.xlu0 %v5159, 32
    %v5308 = vpop.permute.xlu0 %5307
    %5309 = vrot.lane.b32.xlu0 %v5160, 32
    %v5310 = vpop.permute.xlu0 %5309
    %5311 = vrot.lane.b32.xlu0 %v5161, 32
    %v5312 = vpop.permute.xlu0 %5311
    %5313 = vrot.lane.b32.xlu0 %v5162, 32
    %v5314 = vpop.permute.xlu0 %5313
    %5315 = vrot.lane.b32.xlu0 %v5163, 32
    %v5316 = vpop.permute.xlu0 %5315
    %5317 = vrot.lane.b32.xlu0 %v5164, 32
    %v5318 = vpop.permute.xlu0 %5317
    %5319 = vrot.lane.b32.xlu0 %v5165, 32
    %v5320 = vpop.permute.xlu0 %5319
    %5321 = vrot.lane.b32.xlu0 %v5166, 32
    %v5322 = vpop.permute.xlu0 %5321
    %5323 = vrot.lane.b32.xlu0 %v5167, 32
    %v5324 = vpop.permute.xlu0 %5323
    %5325 = vrot.lane.b32.xlu0 %v5168, 32
    %v5326 = vpop.permute.xlu0 %5325
    %5327 = vrot.lane.b32.xlu0 %v5169, 32
    %v5328 = vpop.permute.xlu0 %5327
    %5329 = vrot.lane.b32.xlu0 %v5170, 32
    %v5330 = vpop.permute.xlu0 %5329
    %5331 = vrot.lane.b32.xlu0 %v5171, 32
    %v5332 = vpop.permute.xlu0 %5331
    %5333 = vrot.lane.b32.xlu0 %v5172, 32
    %v5334 = vpop.permute.xlu0 %5333
    %5335 = vrot.lane.b32.xlu0 %v5173, 32
    %v5336 = vpop.permute.xlu0 %5335
    %5337 = vrot.lane.b32.xlu0 %v5174, 32
    %v5338 = vpop.permute.xlu0 %5337
    %5339 = vrot.lane.b32.xlu0 %v5175, 32
    %v5340 = vpop.permute.xlu0 %5339
    %5341 = vrot.lane.b32.xlu0 %v5176, 32
    %v5342 = vpop.permute.xlu0 %5341
    %5343 = vrot.lane.b32.xlu0 %v5177, 32
    %v5344 = vpop.permute.xlu0 %5343
    %5345 = vrot.lane.b32.xlu0 %v5178, 32
    %v5346 = vpop.permute.xlu0 %5345
    %5347 = vrot.lane.b32.xlu0 %v5179, 32
    %v5348 = vpop.permute.xlu0 %5347
    %5349 = vrot.lane.b32.xlu0 %v5180, 32
    %v5350 = vpop.permute.xlu0 %5349
    %5351 = vrot.lane.b32.xlu0 %v5181, 32
    %v5352 = vpop.permute.xlu0 %5351
    %5353 = vrot.lane.b32.xlu0 %v5182, 32
    %v5354 = vpop.permute.xlu0 %5353
    %5355 = vrot.lane.b32.xlu0 %v5183, 32
    %v5356 = vpop.permute.xlu0 %5355
    %5357 = vrot.lane.b32.xlu0 %v5184, 32
    %v5358 = vpop.permute.xlu0 %5357
    %5359 = vrot.lane.b32.xlu0 %v5185, 32
    %v5360 = vpop.permute.xlu0 %5359
    %5361 = vrot.lane.b32.xlu0 %v5186, 32
    %v5362 = vpop.permute.xlu0 %5361
    %5363 = vrot.lane.b32.xlu0 %v5187, 32
    %v5364 = vpop.permute.xlu0 %5363
    %5365 = vrot.lane.b32.xlu0 %v5188, 32
    %v5366 = vpop.permute.xlu0 %5365
    %5367 = vrot.lane.b32.xlu0 %v5189, 32
    %v5368 = vpop.permute.xlu0 %5367
    %5369 = vrot.lane.b32.xlu0 %v5190, 32
    %v5370 = vpop.permute.xlu0 %5369
    %5371 = vrot.lane.b32.xlu0 %v5191, 32
    %v5372 = vpop.permute.xlu0 %5371
    %5373 = vrot.lane.b32.xlu0 %v5192, 32
    %v5374 = vpop.permute.xlu0 %5373
    %5375 = vrot.lane.b32.xlu0 %v5193, 32
    %v5376 = vpop.permute.xlu0 %5375
    %5377 = vrot.lane.b32.xlu0 %v5194, 32
    %v5378 = vpop.permute.xlu0 %5377
    %5379 = vrot.lane.b32.xlu0 %v5195, 32
    %v5380 = vpop.permute.xlu0 %5379
    %5381 = vrot.lane.b32.xlu0 %v5196, 32
    %v5382 = vpop.permute.xlu0 %5381
    %5383 = vrot.lane.b32.xlu0 %v5197, 32
    %v5384 = vpop.permute.xlu0 %5383
    %5385 = vrot.lane.b32.xlu0 %v5198, 32
    %v5386 = vpop.permute.xlu0 %5385
    %5387 = vrot.lane.b32.xlu0 %v5199, 32
    %v5388 = vpop.permute.xlu0 %5387
    %5389 = vrot.lane.b32.xlu0 %v5200, 32
    %v5390 = vpop.permute.xlu0 %5389
    %5391 = vrot.lane.b32.xlu0 %v5201, 32
    %v5392 = vpop.permute.xlu0 %5391
    %5393 = vrot.lane.b32.xlu0 %v5202, 32
    %v5394 = vpop.permute.xlu0 %5393
    %5459 = vst.msk [vmem:[%s553 + $0x1] sm:$0xff] %vm1259, %v5268
    %5460 = vst.msk [vmem:[%s553 + $0x9] sm:$0xff] %vm1259, %v5270
    %5461 = vst.msk [vmem:[%s553 + $0x19] sm:$0xff] %vm1259, %v5272
    %5462 = vst.msk [vmem:[%s553 + $0x21] sm:$0xff] %vm1259, %v5274
    %5463 = vst.msk [vmem:[%s553 + $0x31] sm:$0xff] %vm1259, %v5276
    %5464 = vst.msk [vmem:[%s553 + $0x39] sm:$0xff] %vm1259, %v5278
    %5465 = vst.msk [vmem:[%s553 + $0x49] sm:$0xff] %vm1259, %v5280
    %5466 = vst.msk [vmem:[%s553 + $0x51] sm:$0xff] %vm1259, %v5282
    %5467 = vst.msk [vmem:[%s553 + $0x61] sm:$0xff] %vm1259, %v5284
    %5468 = vst.msk [vmem:[%s553 + $0x69] sm:$0xff] %vm1259, %v5286
    %5469 = vst.msk [vmem:[%s553 + $0x79] sm:$0xff] %vm1259, %v5288
    %5470 = vst.msk [vmem:[%s553 + $0x81] sm:$0xff] %vm1259, %v5290
    %5471 = vst.msk [vmem:[%s553 + $0x91] sm:$0xff] %vm1259, %v5292
    %5472 = vst.msk [vmem:[%s553 + $0x99] sm:$0xff] %vm1259, %v5294
    %5473 = vst.msk [vmem:[%s553 + $0xa9] sm:$0xff] %vm1259, %v5296
    %5474 = vst.msk [vmem:[%s553 + $0xb1] sm:$0xff] %vm1259, %v5298
    %5475 = vst.msk [vmem:[%s553 + $0xc1] sm:$0xff] %vm1259, %v5300
    %5476 = vst.msk [vmem:[%s553 + $0xc9] sm:$0xff] %vm1259, %v5302
    %5477 = vst.msk [vmem:[%s553 + $0xd9] sm:$0xff] %vm1259, %v5304
    %5478 = vst.msk [vmem:[%s553 + $0xe1] sm:$0xff] %vm1259, %v5306
    %5479 = vst.msk [vmem:[%s553 + $0xf1] sm:$0xff] %vm1259, %v5308
    %5480 = vst.msk [vmem:[%s553 + $0xf9] sm:$0xff] %vm1259, %v5310
    %5481 = vst.msk [vmem:[%s553 + $0x109] sm:$0xff] %vm1259, %v5312
    %5482 = vst.msk [vmem:[%s553 + $0x111] sm:$0xff] %vm1259, %v5314
    %5483 = vst.msk [vmem:[%s553 + $0x121] sm:$0xff] %vm1259, %v5316
    %5484 = vst.msk [vmem:[%s553 + $0x129] sm:$0xff] %vm1259, %v5318
    %5485 = vst.msk [vmem:[%s553 + $0x139] sm:$0xff] %vm1259, %v5320
    %5486 = vst.msk [vmem:[%s553 + $0x141] sm:$0xff] %vm1259, %v5322
    %5487 = vst.msk [vmem:[%s553 + $0x151] sm:$0xff] %vm1259, %v5324
    %5488 = vst.msk [vmem:[%s553 + $0x159] sm:$0xff] %vm1259, %v5326
    %5489 = vst.msk [vmem:[%s553 + $0x169] sm:$0xff] %vm1259, %v5328
    %5490 = vst.msk [vmem:[%s553 + $0x171] sm:$0xff] %vm1259, %v5330
    %5491 = vst.msk [vmem:[%s553 + $0x1b1] sm:$0xff] %vm1259, %v5332
    %5492 = vst.msk [vmem:[%s553 + $0x1b9] sm:$0xff] %vm1259, %v5334
    %5493 = vst.msk [vmem:[%s553 + $0x1c9] sm:$0xff] %vm1259, %v5336
    %5494 = vst.msk [vmem:[%s553 + $0x1d1] sm:$0xff] %vm1259, %v5338
    %5495 = vst.msk [vmem:[%s553 + $0x1e1] sm:$0xff] %vm1259, %v5340
    %5496 = vst.msk [vmem:[%s553 + $0x1e9] sm:$0xff] %vm1259, %v5342
    %5497 = vst.msk [vmem:[%s553 + $0x1f9] sm:$0xff] %vm1259, %v5344
    %5498 = vst.msk [vmem:[%s553 + $0x201] sm:$0xff] %vm1259, %v5346
    %5499 = vst.msk [vmem:[%s553 + $0x211] sm:$0xff] %vm1259, %v5348
    %5500 = vst.msk [vmem:[%s553 + $0x219] sm:$0xff] %vm1259, %v5350
    %5501 = vst.msk [vmem:[%s553 + $0x229] sm:$0xff] %vm1259, %v5352
    %5502 = vst.msk [vmem:[%s553 + $0x231] sm:$0xff] %vm1259, %v5354
    %5503 = vst.msk [vmem:[%s553 + $0x241] sm:$0xff] %vm1259, %v5356
    %5504 = vst.msk [vmem:[%s553 + $0x249] sm:$0xff] %vm1259, %v5358
    %5505 = vst.msk [vmem:[%s553 + $0x259] sm:$0xff] %vm1259, %v5360
    %5506 = vst.msk [vmem:[%s553 + $0x261] sm:$0xff] %vm1259, %v5362
    %5507 = vst.msk [vmem:[%s553 + $0x271] sm:$0xff] %vm1259, %v5364
    %5508 = vst.msk [vmem:[%s553 + $0x279] sm:$0xff] %vm1259, %v5366
    %5509 = vst.msk [vmem:[%s553 + $0x289] sm:$0xff] %vm1259, %v5368
    %5510 = vst.msk [vmem:[%s553 + $0x291] sm:$0xff] %vm1259, %v5370
    %5511 = vst.msk [vmem:[%s553 + $0x2a1] sm:$0xff] %vm1259, %v5372
    %5512 = vst.msk [vmem:[%s553 + $0x2a9] sm:$0xff] %vm1259, %v5374
    %5513 = vst.msk [vmem:[%s553 + $0x2b9] sm:$0xff] %vm1259, %v5376
    %5514 = vst.msk [vmem:[%s553 + $0x2c1] sm:$0xff] %vm1259, %v5378
    %5515 = vst.msk [vmem:[%s553 + $0x2d1] sm:$0xff] %vm1259, %v5380
    %5516 = vst.msk [vmem:[%s553 + $0x2d9] sm:$0xff] %vm1259, %v5382
    %5517 = vst.msk [vmem:[%s553 + $0x2e9] sm:$0xff] %vm1259, %v5384
    %5518 = vst.msk [vmem:[%s553 + $0x2f1] sm:$0xff] %vm1259, %v5386
    %5519 = vst.msk [vmem:[%s553 + $0x301] sm:$0xff] %vm1259, %v5388
    %5520 = vst.msk [vmem:[%s553 + $0x309] sm:$0xff] %vm1259, %v5390
    %5521 = vst.msk [vmem:[%s553 + $0x319] sm:$0xff] %vm1259, %v5392
    %5522 = vst.msk [vmem:[%s553 + $0x321] sm:$0xff] %vm1259, %v5394
    %v5523 = vld [vmem:[#allocation2] sm:$0xff]
    %v5524 = vld [vmem:[#allocation2 + $0x8] sm:$0xff]
    %v5525 = vld [vmem:[#allocation2 + $0x18] sm:$0xff]
    %v5526 = vld [vmem:[#allocation2 + $0x20] sm:$0xff]
    %v5527 = vld [vmem:[#allocation2 + $0x30] sm:$0xff]
    %v5528 = vld [vmem:[#allocation2 + $0x38] sm:$0xff]
    %v5529 = vld [vmem:[#allocation2 + $0x48] sm:$0xff]
    %v5530 = vld [vmem:[#allocation2 + $0x50] sm:$0xff]
    %v5531 = vld [vmem:[#allocation2 + $0x60] sm:$0xff]
    %v5532 = vld [vmem:[#allocation2 + $0x68] sm:$0xff]
    %v5533 = vld [vmem:[#allocation2 + $0x78] sm:$0xff]
    %v5534 = vld [vmem:[#allocation2 + $0x80] sm:$0xff]
    %v5535 = vld [vmem:[#allocation2 + $0x90] sm:$0xff]
    %v5536 = vld [vmem:[#allocation2 + $0x98] sm:$0xff]
    %v5537 = vld [vmem:[#allocation2 + $0xa8] sm:$0xff]
    %v5538 = vld [vmem:[#allocation2 + $0xb0] sm:$0xff]
    %v5539 = vld [vmem:[#allocation2 + $0xc0] sm:$0xff]
    %v5540 = vld [vmem:[#allocation2 + $0xc8] sm:$0xff]
    %v5541 = vld [vmem:[#allocation2 + $0xd8] sm:$0xff]
    %v5542 = vld [vmem:[#allocation2 + $0xe0] sm:$0xff]
    %v5543 = vld [vmem:[#allocation2 + $0xf0] sm:$0xff]
    %v5544 = vld [vmem:[#allocation2 + $0xf8] sm:$0xff]
    %v5545 = vld [vmem:[#allocation2 + $0x108] sm:$0xff]
    %v5546 = vld [vmem:[#allocation2 + $0x110] sm:$0xff]
    %v5547 = vld [vmem:[#allocation2 + $0x120] sm:$0xff]
    %v5548 = vld [vmem:[#allocation2 + $0x128] sm:$0xff]
    %v5549 = vld [vmem:[#allocation2 + $0x138] sm:$0xff]
    %v5550 = vld [vmem:[#allocation2 + $0x140] sm:$0xff]
    %v5551 = vld [vmem:[#allocation2 + $0x150] sm:$0xff]
    %v5552 = vld [vmem:[#allocation2 + $0x158] sm:$0xff]
    %v5553 = vld [vmem:[#allocation2 + $0x168] sm:$0xff]
    %v5554 = vld [vmem:[#allocation2 + $0x170] sm:$0xff]
    %v5555 = vld [vmem:[#allocation2 + $0x180] sm:$0xff]
    %v5556 = vld [vmem:[#allocation2 + $0x188] sm:$0xff]
    %v5557 = vld [vmem:[#allocation2 + $0x198] sm:$0xff]
    %v5558 = vld [vmem:[#allocation2 + $0x1a0] sm:$0xff]
    %v5559 = vld [vmem:[#allocation2 + $0x1b0] sm:$0xff]
    %v5560 = vld [vmem:[#allocation2 + $0x1b8] sm:$0xff]
    %v5561 = vld [vmem:[#allocation2 + $0x1c8] sm:$0xff]
    %v5562 = vld [vmem:[#allocation2 + $0x1d0] sm:$0xff]
    %v5563 = vld [vmem:[#allocation2 + $0x1e0] sm:$0xff]
    %v5564 = vld [vmem:[#allocation2 + $0x1e8] sm:$0xff]
    %v5565 = vld [vmem:[#allocation2 + $0x1f8] sm:$0xff]
    %v5566 = vld [vmem:[#allocation2 + $0x200] sm:$0xff]
    %v5567 = vld [vmem:[#allocation2 + $0x210] sm:$0xff]
    %v5568 = vld [vmem:[#allocation2 + $0x218] sm:$0xff]
    %v5569 = vld [vmem:[#allocation2 + $0x228] sm:$0xff]
    %v5570 = vld [vmem:[#allocation2 + $0x230] sm:$0xff]
    %v5571 = vld [vmem:[#allocation2 + $0x240] sm:$0xff]
    %v5572 = vld [vmem:[#allocation2 + $0x248] sm:$0xff]
    %v5573 = vld [vmem:[#allocation2 + $0x258] sm:$0xff]
    %v5574 = vld [vmem:[#allocation2 + $0x260] sm:$0xff]
    %v5575 = vld [vmem:[#allocation2 + $0x270] sm:$0xff]
    %v5576 = vld [vmem:[#allocation2 + $0x278] sm:$0xff]
    %v5577 = vld [vmem:[#allocation2 + $0x288] sm:$0xff]
    %v5578 = vld [vmem:[#allocation2 + $0x290] sm:$0xff]
    %v5579 = vld [vmem:[#allocation2 + $0x2a0] sm:$0xff]
    %v5580 = vld [vmem:[#allocation2 + $0x2a8] sm:$0xff]
    %v5581 = vld [vmem:[#allocation2 + $0x2b8] sm:$0xff]
    %v5582 = vld [vmem:[#allocation2 + $0x2c0] sm:$0xff]
    %v5583 = vld [vmem:[#allocation2 + $0x2d0] sm:$0xff]
    %v5584 = vld [vmem:[#allocation2 + $0x2d8] sm:$0xff]
    %v5585 = vld [vmem:[#allocation2 + $0x2e8] sm:$0xff]
    %v5586 = vld [vmem:[#allocation2 + $0x2f0] sm:$0xff]
    %v5587 = vld [vmem:[#allocation2 + $0x300] sm:$0xff]
    %v5588 = vld [vmem:[#allocation2 + $0x308] sm:$0xff]
    %v5589 = vld [vmem:[#allocation2 + $0x318] sm:$0xff]
    %v5590 = vld [vmem:[#allocation2 + $0x320] sm:$0xff]
    %v5591 = vld [vmem:[#allocation2 + $0x330] sm:$0xff]
    %v5592 = vld [vmem:[#allocation2 + $0x338] sm:$0xff]
    %v5593 = vld [vmem:[#allocation2 + $0x348] sm:$0xff]
    %v5594 = vld [vmem:[#allocation2 + $0x350] sm:$0xff]
    %5595 = vst.msk [vmem:[#allocation3] sm:$0xff] %vm59, %v5523
    %5596 = vst.msk [vmem:[#allocation3 + $0x10] sm:$0xff] %vm59, %v5524
    %5597 = vst.msk [vmem:[#allocation3 + $0x20] sm:$0xff] %vm59, %v5525
    %5598 = vst.msk [vmem:[#allocation3 + $0x30] sm:$0xff] %vm59, %v5526
    %5599 = vst.msk [vmem:[#allocation3 + $0x40] sm:$0xff] %vm59, %v5527
    %5600 = vst.msk [vmem:[#allocation3 + $0x50] sm:$0xff] %vm59, %v5528
    %5601 = vst.msk [vmem:[#allocation3 + $0x60] sm:$0xff] %vm59, %v5529
    %5602 = vst.msk [vmem:[#allocation3 + $0x70] sm:$0xff] %vm59, %v5530
    %5603 = vst.msk [vmem:[#allocation3 + $0x80] sm:$0xff] %vm59, %v5531
    %5604 = vst.msk [vmem:[#allocation3 + $0x90] sm:$0xff] %vm59, %v5532
    %5605 = vst.msk [vmem:[#allocation3 + $0xa0] sm:$0xff] %vm59, %v5533
    %5606 = vst.msk [vmem:[#allocation3 + $0xb0] sm:$0xff] %vm59, %v5534
    %5607 = vst.msk [vmem:[#allocation3 + $0xc0] sm:$0xff] %vm59, %v5535
    %5608 = vst.msk [vmem:[#allocation3 + $0xd0] sm:$0xff] %vm59, %v5536
    %5609 = vst.msk [vmem:[#allocation3 + $0xe0] sm:$0xff] %vm59, %v5537
    %5610 = vst.msk [vmem:[#allocation3 + $0xf0] sm:$0xff] %vm59, %v5538
    %5611 = vst.msk [vmem:[#allocation3 + $0x100] sm:$0xff] %vm59, %v5539
    %5612 = vst.msk [vmem:[#allocation3 + $0x110] sm:$0xff] %vm59, %v5540
    %5613 = vst.msk [vmem:[#allocation3 + $0x120] sm:$0xff] %vm59, %v5541
    %5614 = vst.msk [vmem:[#allocation3 + $0x130] sm:$0xff] %vm59, %v5542
    %5615 = vst.msk [vmem:[#allocation3 + $0x140] sm:$0xff] %vm59, %v5543
    %5616 = vst.msk [vmem:[#allocation3 + $0x150] sm:$0xff] %vm59, %v5544
    %5617 = vst.msk [vmem:[#allocation3 + $0x160] sm:$0xff] %vm59, %v5545
    %5618 = vst.msk [vmem:[#allocation3 + $0x170] sm:$0xff] %vm59, %v5546
    %5619 = vst.msk [vmem:[#allocation3 + $0x180] sm:$0xff] %vm59, %v5547
    %5620 = vst.msk [vmem:[#allocation3 + $0x190] sm:$0xff] %vm59, %v5548
    %5621 = vst.msk [vmem:[#allocation3 + $0x1a0] sm:$0xff] %vm59, %v5549
    %5622 = vst.msk [vmem:[#allocation3 + $0x1b0] sm:$0xff] %vm59, %v5550
    %5623 = vst.msk [vmem:[#allocation3 + $0x1c0] sm:$0xff] %vm59, %v5551
    %5624 = vst.msk [vmem:[#allocation3 + $0x1d0] sm:$0xff] %vm59, %v5552
    %5625 = vst.msk [vmem:[#allocation3 + $0x1e0] sm:$0xff] %vm59, %v5553
    %5626 = vst.msk [vmem:[#allocation3 + $0x1f0] sm:$0xff] %vm59, %v5554
    %5627 = vst.msk [vmem:[#allocation3 + $0x200] sm:$0xff] %vm59, %v5555
    %5628 = vst.msk [vmem:[#allocation3 + $0x210] sm:$0xff] %vm59, %v5556
    %5629 = vst.msk [vmem:[#allocation3 + $0x220] sm:$0xff] %vm59, %v5557
    %5630 = vst.msk [vmem:[#allocation3 + $0x230] sm:$0xff] %vm59, %v5558
    %5631 = vst.msk [vmem:[#allocation3 + $0x240] sm:$0xff] %vm59, %v5559
    %5632 = vst.msk [vmem:[#allocation3 + $0x250] sm:$0xff] %vm59, %v5560
    %5633 = vst.msk [vmem:[#allocation3 + $0x260] sm:$0xff] %vm59, %v5561
    %5634 = vst.msk [vmem:[#allocation3 + $0x270] sm:$0xff] %vm59, %v5562
    %5635 = vst.msk [vmem:[#allocation3 + $0x280] sm:$0xff] %vm59, %v5563
    %5636 = vst.msk [vmem:[#allocation3 + $0x290] sm:$0xff] %vm59, %v5564
    %5637 = vst.msk [vmem:[#allocation3 + $0x2a0] sm:$0xff] %vm59, %v5565
    %5638 = vst.msk [vmem:[#allocation3 + $0x2b0] sm:$0xff] %vm59, %v5566
    %5639 = vst.msk [vmem:[#allocation3 + $0x2c0] sm:$0xff] %vm59, %v5567
    %5640 = vst.msk [vmem:[#allocation3 + $0x2d0] sm:$0xff] %vm59, %v5568
    %5641 = vst.msk [vmem:[#allocation3 + $0x2e0] sm:$0xff] %vm59, %v5569
    %5642 = vst.msk [vmem:[#allocation3 + $0x2f0] sm:$0xff] %vm59, %v5570
    %5643 = vst.msk [vmem:[#allocation3 + $0x300] sm:$0xff] %vm59, %v5571
    %5644 = vst.msk [vmem:[#allocation3 + $0x310] sm:$0xff] %vm59, %v5572
    %5645 = vst.msk [vmem:[#allocation3 + $0x320] sm:$0xff] %vm59, %v5573
    %5646 = vst.msk [vmem:[#allocation3 + $0x330] sm:$0xff] %vm59, %v5574
    %5647 = vst.msk [vmem:[#allocation3 + $0x340] sm:$0xff] %vm59, %v5575
    %5648 = vst.msk [vmem:[#allocation3 + $0x350] sm:$0xff] %vm59, %v5576
    %5649 = vst.msk [vmem:[#allocation3 + $0x360] sm:$0xff] %vm59, %v5577
    %5650 = vst.msk [vmem:[#allocation3 + $0x370] sm:$0xff] %vm59, %v5578
    %5651 = vst.msk [vmem:[#allocation3 + $0x380] sm:$0xff] %vm59, %v5579
    %5652 = vst.msk [vmem:[#allocation3 + $0x390] sm:$0xff] %vm59, %v5580
    %5653 = vst.msk [vmem:[#allocation3 + $0x3a0] sm:$0xff] %vm59, %v5581
    %5654 = vst.msk [vmem:[#allocation3 + $0x3b0] sm:$0xff] %vm59, %v5582
    %5655 = vst.msk [vmem:[#allocation3 + $0x3c0] sm:$0xff] %vm59, %v5583
    %5656 = vst.msk [vmem:[#allocation3 + $0x3d0] sm:$0xff] %vm59, %v5584
    %5657 = vst.msk [vmem:[#allocation3 + $0x3e0] sm:$0xff] %vm59, %v5585
    %5658 = vst.msk [vmem:[#allocation3 + $0x3f0] sm:$0xff] %vm59, %v5586
    %5659 = vst.msk [vmem:[#allocation3 + $0x400] sm:$0xff] %vm59, %v5587
    %5660 = vst.msk [vmem:[#allocation3 + $0x410] sm:$0xff] %vm59, %v5588
    %5661 = vst.msk [vmem:[#allocation3 + $0x420] sm:$0xff] %vm59, %v5589
    %5662 = vst.msk [vmem:[#allocation3 + $0x430] sm:$0xff] %vm59, %v5590
    %5663 = vst.msk [vmem:[#allocation3 + $0x440] sm:$0xff] %vm59, %v5591
    %5664 = vst.msk [vmem:[#allocation3 + $0x450] sm:$0xff] %vm59, %v5592
    %5665 = vst.msk [vmem:[#allocation3 + $0x460] sm:$0xff] %vm59, %v5593
    %5666 = vst.msk [vmem:[#allocation3 + $0x470] sm:$0xff] %vm59, %v5594
    %v5667 = vld [vmem:[#allocation2 + $0x1] sm:$0xff]
    %v5668 = vld [vmem:[#allocation2 + $0x9] sm:$0xff]
    %v5669 = vld [vmem:[#allocation2 + $0x19] sm:$0xff]
    %v5670 = vld [vmem:[#allocation2 + $0x21] sm:$0xff]
    %v5671 = vld [vmem:[#allocation2 + $0x31] sm:$0xff]
    %v5672 = vld [vmem:[#allocation2 + $0x39] sm:$0xff]
    %v5673 = vld [vmem:[#allocation2 + $0x49] sm:$0xff]
    %v5674 = vld [vmem:[#allocation2 + $0x51] sm:$0xff]
    %v5675 = vld [vmem:[#allocation2 + $0x61] sm:$0xff]
    %v5676 = vld [vmem:[#allocation2 + $0x69] sm:$0xff]
    %v5677 = vld [vmem:[#allocation2 + $0x79] sm:$0xff]
    %v5678 = vld [vmem:[#allocation2 + $0x81] sm:$0xff]
    %v5679 = vld [vmem:[#allocation2 + $0x91] sm:$0xff]
    %v5680 = vld [vmem:[#allocation2 + $0x99] sm:$0xff]
    %v5681 = vld [vmem:[#allocation2 + $0xa9] sm:$0xff]
    %v5682 = vld [vmem:[#allocation2 + $0xb1] sm:$0xff]
    %v5683 = vld [vmem:[#allocation2 + $0xc1] sm:$0xff]
    %v5684 = vld [vmem:[#allocation2 + $0xc9] sm:$0xff]
    %v5685 = vld [vmem:[#allocation2 + $0xd9] sm:$0xff]
    %v5686 = vld [vmem:[#allocation2 + $0xe1] sm:$0xff]
    %v5687 = vld [vmem:[#allocation2 + $0xf1] sm:$0xff]
    %v5688 = vld [vmem:[#allocation2 + $0xf9] sm:$0xff]
    %v5689 = vld [vmem:[#allocation2 + $0x109] sm:$0xff]
    %v5690 = vld [vmem:[#allocation2 + $0x111] sm:$0xff]
    %v5691 = vld [vmem:[#allocation2 + $0x121] sm:$0xff]
    %v5692 = vld [vmem:[#allocation2 + $0x129] sm:$0xff]
    %v5693 = vld [vmem:[#allocation2 + $0x139] sm:$0xff]
    %v5694 = vld [vmem:[#allocation2 + $0x141] sm:$0xff]
    %v5695 = vld [vmem:[#allocation2 + $0x151] sm:$0xff]
    %v5696 = vld [vmem:[#allocation2 + $0x159] sm:$0xff]
    %v5697 = vld [vmem:[#allocation2 + $0x169] sm:$0xff]
    %v5698 = vld [vmem:[#allocation2 + $0x171] sm:$0xff]
    %v5699 = vld [vmem:[#allocation2 + $0x181] sm:$0xff]
    %v5700 = vld [vmem:[#allocation2 + $0x189] sm:$0xff]
    %v5701 = vld [vmem:[#allocation2 + $0x199] sm:$0xff]
    %v5702 = vld [vmem:[#allocation2 + $0x1a1] sm:$0xff]
    %v5703 = vld [vmem:[#allocation2 + $0x1b1] sm:$0xff]
    %v5704 = vld [vmem:[#allocation2 + $0x1b9] sm:$0xff]
    %v5705 = vld [vmem:[#allocation2 + $0x1c9] sm:$0xff]
    %v5706 = vld [vmem:[#allocation2 + $0x1d1] sm:$0xff]
    %v5707 = vld [vmem:[#allocation2 + $0x1e1] sm:$0xff]
    %v5708 = vld [vmem:[#allocation2 + $0x1e9] sm:$0xff]
    %v5709 = vld [vmem:[#allocation2 + $0x1f9] sm:$0xff]
    %v5710 = vld [vmem:[#allocation2 + $0x201] sm:$0xff]
    %v5711 = vld [vmem:[#allocation2 + $0x211] sm:$0xff]
    %v5712 = vld [vmem:[#allocation2 + $0x219] sm:$0xff]
    %v5713 = vld [vmem:[#allocation2 + $0x229] sm:$0xff]
    %v5714 = vld [vmem:[#allocation2 + $0x231] sm:$0xff]
    %v5715 = vld [vmem:[#allocation2 + $0x241] sm:$0xff]
    %v5716 = vld [vmem:[#allocation2 + $0x249] sm:$0xff]
    %v5717 = vld [vmem:[#allocation2 + $0x259] sm:$0xff]
    %v5718 = vld [vmem:[#allocation2 + $0x261] sm:$0xff]
    %v5719 = vld [vmem:[#allocation2 + $0x271] sm:$0xff]
    %v5720 = vld [vmem:[#allocation2 + $0x279] sm:$0xff]
    %v5721 = vld [vmem:[#allocation2 + $0x289] sm:$0xff]
    %v5722 = vld [vmem:[#allocation2 + $0x291] sm:$0xff]
    %v5723 = vld [vmem:[#allocation2 + $0x2a1] sm:$0xff]
    %v5724 = vld [vmem:[#allocation2 + $0x2a9] sm:$0xff]
    %v5725 = vld [vmem:[#allocation2 + $0x2b9] sm:$0xff]
    %v5726 = vld [vmem:[#allocation2 + $0x2c1] sm:$0xff]
    %v5727 = vld [vmem:[#allocation2 + $0x2d1] sm:$0xff]
    %v5728 = vld [vmem:[#allocation2 + $0x2d9] sm:$0xff]
    %v5729 = vld [vmem:[#allocation2 + $0x2e9] sm:$0xff]
    %v5730 = vld [vmem:[#allocation2 + $0x2f1] sm:$0xff]
    %v5731 = vld [vmem:[#allocation2 + $0x301] sm:$0xff]
    %v5732 = vld [vmem:[#allocation2 + $0x309] sm:$0xff]
    %v5733 = vld [vmem:[#allocation2 + $0x319] sm:$0xff]
    %v5734 = vld [vmem:[#allocation2 + $0x321] sm:$0xff]
    %v5735 = vld [vmem:[#allocation2 + $0x331] sm:$0xff]
    %v5736 = vld [vmem:[#allocation2 + $0x339] sm:$0xff]
    %v5737 = vld [vmem:[#allocation2 + $0x349] sm:$0xff]
    %v5738 = vld [vmem:[#allocation2 + $0x351] sm:$0xff]
    %5811 = vrot.lane.b32.xlu0 %v5667, 64
    %v5812 = vpop.permute.xlu0 %5811
    %5813 = vrot.lane.b32.xlu0 %v5668, 64
    %v5814 = vpop.permute.xlu0 %5813
    %5815 = vrot.lane.b32.xlu0 %v5669, 64
    %v5816 = vpop.permute.xlu0 %5815
    %5817 = vrot.lane.b32.xlu0 %v5670, 64
    %v5818 = vpop.permute.xlu0 %5817
    %5819 = vrot.lane.b32.xlu0 %v5671, 64
    %v5820 = vpop.permute.xlu0 %5819
    %5821 = vrot.lane.b32.xlu0 %v5672, 64
    %v5822 = vpop.permute.xlu0 %5821
    %5823 = vrot.lane.b32.xlu0 %v5673, 64
    %v5824 = vpop.permute.xlu0 %5823
    %5825 = vrot.lane.b32.xlu0 %v5674, 64
    %v5826 = vpop.permute.xlu0 %5825
    %5827 = vrot.lane.b32.xlu0 %v5675, 64
    %v5828 = vpop.permute.xlu0 %5827
    %5829 = vrot.lane.b32.xlu0 %v5676, 64
    %v5830 = vpop.permute.xlu0 %5829
    %5831 = vrot.lane.b32.xlu0 %v5677, 64
    %v5832 = vpop.permute.xlu0 %5831
    %5833 = vrot.lane.b32.xlu0 %v5678, 64
    %v5834 = vpop.permute.xlu0 %5833
    %5835 = vrot.lane.b32.xlu0 %v5679, 64
    %v5836 = vpop.permute.xlu0 %5835
    %5837 = vrot.lane.b32.xlu0 %v5680, 64
    %v5838 = vpop.permute.xlu0 %5837
    %5839 = vrot.lane.b32.xlu0 %v5681, 64
    %v5840 = vpop.permute.xlu0 %5839
    %5841 = vrot.lane.b32.xlu0 %v5682, 64
    %v5842 = vpop.permute.xlu0 %5841
    %5843 = vrot.lane.b32.xlu0 %v5683, 64
    %v5844 = vpop.permute.xlu0 %5843
    %5845 = vrot.lane.b32.xlu0 %v5684, 64
    %v5846 = vpop.permute.xlu0 %5845
    %5847 = vrot.lane.b32.xlu0 %v5685, 64
    %v5848 = vpop.permute.xlu0 %5847
    %5849 = vrot.lane.b32.xlu0 %v5686, 64
    %v5850 = vpop.permute.xlu0 %5849
    %5851 = vrot.lane.b32.xlu0 %v5687, 64
    %v5852 = vpop.permute.xlu0 %5851
    %5853 = vrot.lane.b32.xlu0 %v5688, 64
    %v5854 = vpop.permute.xlu0 %5853
    %5855 = vrot.lane.b32.xlu0 %v5689, 64
    %v5856 = vpop.permute.xlu0 %5855
    %5857 = vrot.lane.b32.xlu0 %v5690, 64
    %v5858 = vpop.permute.xlu0 %5857
    %5859 = vrot.lane.b32.xlu0 %v5691, 64
    %v5860 = vpop.permute.xlu0 %5859
    %5861 = vrot.lane.b32.xlu0 %v5692, 64
    %v5862 = vpop.permute.xlu0 %5861
    %5863 = vrot.lane.b32.xlu0 %v5693, 64
    %v5864 = vpop.permute.xlu0 %5863
    %5865 = vrot.lane.b32.xlu0 %v5694, 64
    %v5866 = vpop.permute.xlu0 %5865
    %5867 = vrot.lane.b32.xlu0 %v5695, 64
    %v5868 = vpop.permute.xlu0 %5867
    %5869 = vrot.lane.b32.xlu0 %v5696, 64
    %v5870 = vpop.permute.xlu0 %5869
    %5871 = vrot.lane.b32.xlu0 %v5697, 64
    %v5872 = vpop.permute.xlu0 %5871
    %5873 = vrot.lane.b32.xlu0 %v5698, 64
    %v5874 = vpop.permute.xlu0 %5873
    %5875 = vrot.lane.b32.xlu0 %v5699, 64
    %v5876 = vpop.permute.xlu0 %5875
    %5877 = vrot.lane.b32.xlu0 %v5700, 64
    %v5878 = vpop.permute.xlu0 %5877
    %5879 = vrot.lane.b32.xlu0 %v5701, 64
    %v5880 = vpop.permute.xlu0 %5879
    %5881 = vrot.lane.b32.xlu0 %v5702, 64
    %v5882 = vpop.permute.xlu0 %5881
    %5883 = vrot.lane.b32.xlu0 %v5703, 64
    %v5884 = vpop.permute.xlu0 %5883
    %5885 = vrot.lane.b32.xlu0 %v5704, 64
    %v5886 = vpop.permute.xlu0 %5885
    %5887 = vrot.lane.b32.xlu0 %v5705, 64
    %v5888 = vpop.permute.xlu0 %5887
    %5889 = vrot.lane.b32.xlu0 %v5706, 64
    %v5890 = vpop.permute.xlu0 %5889
    %5891 = vrot.lane.b32.xlu0 %v5707, 64
    %v5892 = vpop.permute.xlu0 %5891
    %5893 = vrot.lane.b32.xlu0 %v5708, 64
    %v5894 = vpop.permute.xlu0 %5893
    %5895 = vrot.lane.b32.xlu0 %v5709, 64
    %v5896 = vpop.permute.xlu0 %5895
    %5897 = vrot.lane.b32.xlu0 %v5710, 64
    %v5898 = vpop.permute.xlu0 %5897
    %5899 = vrot.lane.b32.xlu0 %v5711, 64
    %v5900 = vpop.permute.xlu0 %5899
    %5901 = vrot.lane.b32.xlu0 %v5712, 64
    %v5902 = vpop.permute.xlu0 %5901
    %5903 = vrot.lane.b32.xlu0 %v5713, 64
    %v5904 = vpop.permute.xlu0 %5903
    %5905 = vrot.lane.b32.xlu0 %v5714, 64
    %v5906 = vpop.permute.xlu0 %5905
    %5907 = vrot.lane.b32.xlu0 %v5715, 64
    %v5908 = vpop.permute.xlu0 %5907
    %5909 = vrot.lane.b32.xlu0 %v5716, 64
    %v5910 = vpop.permute.xlu0 %5909
    %5911 = vrot.lane.b32.xlu0 %v5717, 64
    %v5912 = vpop.permute.xlu0 %5911
    %5913 = vrot.lane.b32.xlu0 %v5718, 64
    %v5914 = vpop.permute.xlu0 %5913
    %5915 = vrot.lane.b32.xlu0 %v5719, 64
    %v5916 = vpop.permute.xlu0 %5915
    %5917 = vrot.lane.b32.xlu0 %v5720, 64
    %v5918 = vpop.permute.xlu0 %5917
    %5919 = vrot.lane.b32.xlu0 %v5721, 64
    %v5920 = vpop.permute.xlu0 %5919
    %5921 = vrot.lane.b32.xlu0 %v5722, 64
    %v5922 = vpop.permute.xlu0 %5921
    %5923 = vrot.lane.b32.xlu0 %v5723, 64
    %v5924 = vpop.permute.xlu0 %5923
    %5925 = vrot.lane.b32.xlu0 %v5724, 64
    %v5926 = vpop.permute.xlu0 %5925
    %5927 = vrot.lane.b32.xlu0 %v5725, 64
    %v5928 = vpop.permute.xlu0 %5927
    %5929 = vrot.lane.b32.xlu0 %v5726, 64
    %v5930 = vpop.permute.xlu0 %5929
    %5931 = vrot.lane.b32.xlu0 %v5727, 64
    %v5932 = vpop.permute.xlu0 %5931
    %5933 = vrot.lane.b32.xlu0 %v5728, 64
    %v5934 = vpop.permute.xlu0 %5933
    %5935 = vrot.lane.b32.xlu0 %v5729, 64
    %v5936 = vpop.permute.xlu0 %5935
    %5937 = vrot.lane.b32.xlu0 %v5730, 64
    %v5938 = vpop.permute.xlu0 %5937
    %5939 = vrot.lane.b32.xlu0 %v5731, 64
    %v5940 = vpop.permute.xlu0 %5939
    %5941 = vrot.lane.b32.xlu0 %v5732, 64
    %v5942 = vpop.permute.xlu0 %5941
    %5943 = vrot.lane.b32.xlu0 %v5733, 64
    %v5944 = vpop.permute.xlu0 %5943
    %5945 = vrot.lane.b32.xlu0 %v5734, 64
    %v5946 = vpop.permute.xlu0 %5945
    %5947 = vrot.lane.b32.xlu0 %v5735, 64
    %v5948 = vpop.permute.xlu0 %5947
    %5949 = vrot.lane.b32.xlu0 %v5736, 64
    %v5950 = vpop.permute.xlu0 %5949
    %5951 = vrot.lane.b32.xlu0 %v5737, 64
    %v5952 = vpop.permute.xlu0 %5951
    %5953 = vrot.lane.b32.xlu0 %v5738, 64
    %v5954 = vpop.permute.xlu0 %5953
    %6027 = vst.msk [vmem:[#allocation3] sm:$0xff] %vm1828, %v5812
    %6028 = vst.msk [vmem:[#allocation3 + $0x10] sm:$0xff] %vm1828, %v5814
    %6029 = vst.msk [vmem:[#allocation3 + $0x20] sm:$0xff] %vm1828, %v5816
    %6030 = vst.msk [vmem:[#allocation3 + $0x30] sm:$0xff] %vm1828, %v5818
    %6031 = vst.msk [vmem:[#allocation3 + $0x40] sm:$0xff] %vm1828, %v5820
    %6032 = vst.msk [vmem:[#allocation3 + $0x50] sm:$0xff] %vm1828, %v5822
    %6033 = vst.msk [vmem:[#allocation3 + $0x60] sm:$0xff] %vm1828, %v5824
    %6034 = vst.msk [vmem:[#allocation3 + $0x70] sm:$0xff] %vm1828, %v5826
    %6035 = vst.msk [vmem:[#allocation3 + $0x80] sm:$0xff] %vm1828, %v5828
    %6036 = vst.msk [vmem:[#allocation3 + $0x90] sm:$0xff] %vm1828, %v5830
    %6037 = vst.msk [vmem:[#allocation3 + $0xa0] sm:$0xff] %vm1828, %v5832
    %6038 = vst.msk [vmem:[#allocation3 + $0xb0] sm:$0xff] %vm1828, %v5834
    %6039 = vst.msk [vmem:[#allocation3 + $0xc0] sm:$0xff] %vm1828, %v5836
    %6040 = vst.msk [vmem:[#allocation3 + $0xd0] sm:$0xff] %vm1828, %v5838
    %6041 = vst.msk [vmem:[#allocation3 + $0xe0] sm:$0xff] %vm1828, %v5840
    %6042 = vst.msk [vmem:[#allocation3 + $0xf0] sm:$0xff] %vm1828, %v5842
    %6043 = vst.msk [vmem:[#allocation3 + $0x100] sm:$0xff] %vm1828, %v5844
    %6044 = vst.msk [vmem:[#allocation3 + $0x110] sm:$0xff] %vm1828, %v5846
    %6045 = vst.msk [vmem:[#allocation3 + $0x120] sm:$0xff] %vm1828, %v5848
    %6046 = vst.msk [vmem:[#allocation3 + $0x130] sm:$0xff] %vm1828, %v5850
    %6047 = vst.msk [vmem:[#allocation3 + $0x140] sm:$0xff] %vm1828, %v5852
    %6048 = vst.msk [vmem:[#allocation3 + $0x150] sm:$0xff] %vm1828, %v5854
    %6049 = vst.msk [vmem:[#allocation3 + $0x160] sm:$0xff] %vm1828, %v5856
    %6050 = vst.msk [vmem:[#allocation3 + $0x170] sm:$0xff] %vm1828, %v5858
    %6051 = vst.msk [vmem:[#allocation3 + $0x180] sm:$0xff] %vm1828, %v5860
    %6052 = vst.msk [vmem:[#allocation3 + $0x190] sm:$0xff] %vm1828, %v5862
    %6053 = vst.msk [vmem:[#allocation3 + $0x1a0] sm:$0xff] %vm1828, %v5864
    %6054 = vst.msk [vmem:[#allocation3 + $0x1b0] sm:$0xff] %vm1828, %v5866
    %6055 = vst.msk [vmem:[#allocation3 + $0x1c0] sm:$0xff] %vm1828, %v5868
    %6056 = vst.msk [vmem:[#allocation3 + $0x1d0] sm:$0xff] %vm1828, %v5870
    %6057 = vst.msk [vmem:[#allocation3 + $0x1e0] sm:$0xff] %vm1828, %v5872
    %6058 = vst.msk [vmem:[#allocation3 + $0x1f0] sm:$0xff] %vm1828, %v5874
    %6059 = vst.msk [vmem:[#allocation3 + $0x200] sm:$0xff] %vm1828, %v5876
    %6060 = vst.msk [vmem:[#allocation3 + $0x210] sm:$0xff] %vm1828, %v5878
    %6061 = vst.msk [vmem:[#allocation3 + $0x220] sm:$0xff] %vm1828, %v5880
    %6062 = vst.msk [vmem:[#allocation3 + $0x230] sm:$0xff] %vm1828, %v5882
    %6063 = vst.msk [vmem:[#allocation3 + $0x240] sm:$0xff] %vm1828, %v5884
    %6064 = vst.msk [vmem:[#allocation3 + $0x250] sm:$0xff] %vm1828, %v5886
    %6065 = vst.msk [vmem:[#allocation3 + $0x260] sm:$0xff] %vm1828, %v5888
    %6066 = vst.msk [vmem:[#allocation3 + $0x270] sm:$0xff] %vm1828, %v5890
    %6067 = vst.msk [vmem:[#allocation3 + $0x280] sm:$0xff] %vm1828, %v5892
    %6068 = vst.msk [vmem:[#allocation3 + $0x290] sm:$0xff] %vm1828, %v5894
    %6069 = vst.msk [vmem:[#allocation3 + $0x2a0] sm:$0xff] %vm1828, %v5896
    %6070 = vst.msk [vmem:[#allocation3 + $0x2b0] sm:$0xff] %vm1828, %v5898
    %6071 = vst.msk [vmem:[#allocation3 + $0x2c0] sm:$0xff] %vm1828, %v5900
    %6072 = vst.msk [vmem:[#allocation3 + $0x2d0] sm:$0xff] %vm1828, %v5902
    %6073 = vst.msk [vmem:[#allocation3 + $0x2e0] sm:$0xff] %vm1828, %v5904
    %6074 = vst.msk [vmem:[#allocation3 + $0x2f0] sm:$0xff] %vm1828, %v5906
    %6075 = vst.msk [vmem:[#allocation3 + $0x300] sm:$0xff] %vm1828, %v5908
    %6076 = vst.msk [vmem:[#allocation3 + $0x310] sm:$0xff] %vm1828, %v5910
    %6077 = vst.msk [vmem:[#allocation3 + $0x320] sm:$0xff] %vm1828, %v5912
    %6078 = vst.msk [vmem:[#allocation3 + $0x330] sm:$0xff] %vm1828, %v5914
    %6079 = vst.msk [vmem:[#allocation3 + $0x340] sm:$0xff] %vm1828, %v5916
    %6080 = vst.msk [vmem:[#allocation3 + $0x350] sm:$0xff] %vm1828, %v5918
    %6081 = vst.msk [vmem:[#allocation3 + $0x360] sm:$0xff] %vm1828, %v5920
    %6082 = vst.msk [vmem:[#allocation3 + $0x370] sm:$0xff] %vm1828, %v5922
    %6083 = vst.msk [vmem:[#allocation3 + $0x380] sm:$0xff] %vm1828, %v5924
    %6084 = vst.msk [vmem:[#allocation3 + $0x390] sm:$0xff] %vm1828, %v5926
    %6085 = vst.msk [vmem:[#allocation3 + $0x3a0] sm:$0xff] %vm1828, %v5928
    %6086 = vst.msk [vmem:[#allocation3 + $0x3b0] sm:$0xff] %vm1828, %v5930
    %6087 = vst.msk [vmem:[#allocation3 + $0x3c0] sm:$0xff] %vm1828, %v5932
    %6088 = vst.msk [vmem:[#allocation3 + $0x3d0] sm:$0xff] %vm1828, %v5934
    %6089 = vst.msk [vmem:[#allocation3 + $0x3e0] sm:$0xff] %vm1828, %v5936
    %6090 = vst.msk [vmem:[#allocation3 + $0x3f0] sm:$0xff] %vm1828, %v5938
    %6091 = vst.msk [vmem:[#allocation3 + $0x400] sm:$0xff] %vm1828, %v5940
    %6092 = vst.msk [vmem:[#allocation3 + $0x410] sm:$0xff] %vm1828, %v5942
    %6093 = vst.msk [vmem:[#allocation3 + $0x420] sm:$0xff] %vm1828, %v5944
    %6094 = vst.msk [vmem:[#allocation3 + $0x430] sm:$0xff] %vm1828, %v5946
    %6095 = vst.msk [vmem:[#allocation3 + $0x440] sm:$0xff] %vm1828, %v5948
    %6096 = vst.msk [vmem:[#allocation3 + $0x450] sm:$0xff] %vm1828, %v5950
    %6097 = vst.msk [vmem:[#allocation3 + $0x460] sm:$0xff] %vm1828, %v5952
    %6098 = vst.msk [vmem:[#allocation3 + $0x470] sm:$0xff] %vm1828, %v5954
    %v6099 = vld [vmem:[#allocation2 + $0x2] sm:$0xff]
    %v6100 = vld [vmem:[#allocation2 + $0xa] sm:$0xff]
    %v6101 = vld [vmem:[#allocation2 + $0x1a] sm:$0xff]
    %v6102 = vld [vmem:[#allocation2 + $0x22] sm:$0xff]
    %v6103 = vld [vmem:[#allocation2 + $0x32] sm:$0xff]
    %v6104 = vld [vmem:[#allocation2 + $0x3a] sm:$0xff]
    %v6105 = vld [vmem:[#allocation2 + $0x4a] sm:$0xff]
    %v6106 = vld [vmem:[#allocation2 + $0x52] sm:$0xff]
    %v6107 = vld [vmem:[#allocation2 + $0x62] sm:$0xff]
    %v6108 = vld [vmem:[#allocation2 + $0x6a] sm:$0xff]
    %v6109 = vld [vmem:[#allocation2 + $0x7a] sm:$0xff]
    %v6110 = vld [vmem:[#allocation2 + $0x82] sm:$0xff]
    %v6111 = vld [vmem:[#allocation2 + $0x92] sm:$0xff]
    %v6112 = vld [vmem:[#allocation2 + $0x9a] sm:$0xff]
    %v6113 = vld [vmem:[#allocation2 + $0xaa] sm:$0xff]
    %v6114 = vld [vmem:[#allocation2 + $0xb2] sm:$0xff]
    %v6115 = vld [vmem:[#allocation2 + $0xc2] sm:$0xff]
    %v6116 = vld [vmem:[#allocation2 + $0xca] sm:$0xff]
    %v6117 = vld [vmem:[#allocation2 + $0xda] sm:$0xff]
    %v6118 = vld [vmem:[#allocation2 + $0xe2] sm:$0xff]
    %v6119 = vld [vmem:[#allocation2 + $0xf2] sm:$0xff]
    %v6120 = vld [vmem:[#allocation2 + $0xfa] sm:$0xff]
    %v6121 = vld [vmem:[#allocation2 + $0x10a] sm:$0xff]
    %v6122 = vld [vmem:[#allocation2 + $0x112] sm:$0xff]
    %v6123 = vld [vmem:[#allocation2 + $0x122] sm:$0xff]
    %v6124 = vld [vmem:[#allocation2 + $0x12a] sm:$0xff]
    %v6125 = vld [vmem:[#allocation2 + $0x13a] sm:$0xff]
    %v6126 = vld [vmem:[#allocation2 + $0x142] sm:$0xff]
    %v6127 = vld [vmem:[#allocation2 + $0x152] sm:$0xff]
    %v6128 = vld [vmem:[#allocation2 + $0x15a] sm:$0xff]
    %v6129 = vld [vmem:[#allocation2 + $0x16a] sm:$0xff]
    %v6130 = vld [vmem:[#allocation2 + $0x172] sm:$0xff]
    %v6131 = vld [vmem:[#allocation2 + $0x182] sm:$0xff]
    %v6132 = vld [vmem:[#allocation2 + $0x18a] sm:$0xff]
    %v6133 = vld [vmem:[#allocation2 + $0x19a] sm:$0xff]
    %v6134 = vld [vmem:[#allocation2 + $0x1a2] sm:$0xff]
    %v6135 = vld [vmem:[#allocation2 + $0x1b2] sm:$0xff]
    %v6136 = vld [vmem:[#allocation2 + $0x1ba] sm:$0xff]
    %v6137 = vld [vmem:[#allocation2 + $0x1ca] sm:$0xff]
    %v6138 = vld [vmem:[#allocation2 + $0x1d2] sm:$0xff]
    %v6139 = vld [vmem:[#allocation2 + $0x1e2] sm:$0xff]
    %v6140 = vld [vmem:[#allocation2 + $0x1ea] sm:$0xff]
    %v6141 = vld [vmem:[#allocation2 + $0x1fa] sm:$0xff]
    %v6142 = vld [vmem:[#allocation2 + $0x202] sm:$0xff]
    %v6143 = vld [vmem:[#allocation2 + $0x212] sm:$0xff]
    %v6144 = vld [vmem:[#allocation2 + $0x21a] sm:$0xff]
    %v6145 = vld [vmem:[#allocation2 + $0x22a] sm:$0xff]
    %v6146 = vld [vmem:[#allocation2 + $0x232] sm:$0xff]
    %v6147 = vld [vmem:[#allocation2 + $0x242] sm:$0xff]
    %v6148 = vld [vmem:[#allocation2 + $0x24a] sm:$0xff]
    %v6149 = vld [vmem:[#allocation2 + $0x25a] sm:$0xff]
    %v6150 = vld [vmem:[#allocation2 + $0x262] sm:$0xff]
    %v6151 = vld [vmem:[#allocation2 + $0x272] sm:$0xff]
    %v6152 = vld [vmem:[#allocation2 + $0x27a] sm:$0xff]
    %v6153 = vld [vmem:[#allocation2 + $0x28a] sm:$0xff]
    %v6154 = vld [vmem:[#allocation2 + $0x292] sm:$0xff]
    %v6155 = vld [vmem:[#allocation2 + $0x2a2] sm:$0xff]
    %v6156 = vld [vmem:[#allocation2 + $0x2aa] sm:$0xff]
    %v6157 = vld [vmem:[#allocation2 + $0x2ba] sm:$0xff]
    %v6158 = vld [vmem:[#allocation2 + $0x2c2] sm:$0xff]
    %v6159 = vld [vmem:[#allocation2 + $0x2d2] sm:$0xff]
    %v6160 = vld [vmem:[#allocation2 + $0x2da] sm:$0xff]
    %v6161 = vld [vmem:[#allocation2 + $0x2ea] sm:$0xff]
    %v6162 = vld [vmem:[#allocation2 + $0x2f2] sm:$0xff]
    %v6163 = vld [vmem:[#allocation2 + $0x302] sm:$0xff]
    %v6164 = vld [vmem:[#allocation2 + $0x30a] sm:$0xff]
    %v6165 = vld [vmem:[#allocation2 + $0x31a] sm:$0xff]
    %v6166 = vld [vmem:[#allocation2 + $0x322] sm:$0xff]
    %v6167 = vld [vmem:[#allocation2 + $0x332] sm:$0xff]
    %v6168 = vld [vmem:[#allocation2 + $0x33a] sm:$0xff]
    %v6169 = vld [vmem:[#allocation2 + $0x34a] sm:$0xff]
    %v6170 = vld [vmem:[#allocation2 + $0x352] sm:$0xff]
    %6171 = vst.msk [vmem:[#allocation3 + $0x8] sm:$0xff] %vm59, %v6099
    %6172 = vst.msk [vmem:[#allocation3 + $0x18] sm:$0xff] %vm59, %v6100
    %6173 = vst.msk [vmem:[#allocation3 + $0x28] sm:$0xff] %vm59, %v6101
    %6174 = vst.msk [vmem:[#allocation3 + $0x38] sm:$0xff] %vm59, %v6102
    %6175 = vst.msk [vmem:[#allocation3 + $0x48] sm:$0xff] %vm59, %v6103
    %6176 = vst.msk [vmem:[#allocation3 + $0x58] sm:$0xff] %vm59, %v6104
    %6177 = vst.msk [vmem:[#allocation3 + $0x68] sm:$0xff] %vm59, %v6105
    %6178 = vst.msk [vmem:[#allocation3 + $0x78] sm:$0xff] %vm59, %v6106
    %6179 = vst.msk [vmem:[#allocation3 + $0x88] sm:$0xff] %vm59, %v6107
    %6180 = vst.msk [vmem:[#allocation3 + $0x98] sm:$0xff] %vm59, %v6108
    %6181 = vst.msk [vmem:[#allocation3 + $0xa8] sm:$0xff] %vm59, %v6109
    %6182 = vst.msk [vmem:[#allocation3 + $0xb8] sm:$0xff] %vm59, %v6110
    %6183 = vst.msk [vmem:[#allocation3 + $0xc8] sm:$0xff] %vm59, %v6111
    %6184 = vst.msk [vmem:[#allocation3 + $0xd8] sm:$0xff] %vm59, %v6112
    %6185 = vst.msk [vmem:[#allocation3 + $0xe8] sm:$0xff] %vm59, %v6113
    %6186 = vst.msk [vmem:[#allocation3 + $0xf8] sm:$0xff] %vm59, %v6114
    %6187 = vst.msk [vmem:[#allocation3 + $0x108] sm:$0xff] %vm59, %v6115
    %6188 = vst.msk [vmem:[#allocation3 + $0x118] sm:$0xff] %vm59, %v6116
    %6189 = vst.msk [vmem:[#allocation3 + $0x128] sm:$0xff] %vm59, %v6117
    %6190 = vst.msk [vmem:[#allocation3 + $0x138] sm:$0xff] %vm59, %v6118
    %6191 = vst.msk [vmem:[#allocation3 + $0x148] sm:$0xff] %vm59, %v6119
    %6192 = vst.msk [vmem:[#allocation3 + $0x158] sm:$0xff] %vm59, %v6120
    %6193 = vst.msk [vmem:[#allocation3 + $0x168] sm:$0xff] %vm59, %v6121
    %6194 = vst.msk [vmem:[#allocation3 + $0x178] sm:$0xff] %vm59, %v6122
    %6195 = vst.msk [vmem:[#allocation3 + $0x188] sm:$0xff] %vm59, %v6123
    %6196 = vst.msk [vmem:[#allocation3 + $0x198] sm:$0xff] %vm59, %v6124
    %6197 = vst.msk [vmem:[#allocation3 + $0x1a8] sm:$0xff] %vm59, %v6125
    %6198 = vst.msk [vmem:[#allocation3 + $0x1b8] sm:$0xff] %vm59, %v6126
    %6199 = vst.msk [vmem:[#allocation3 + $0x1c8] sm:$0xff] %vm59, %v6127
    %6200 = vst.msk [vmem:[#allocation3 + $0x1d8] sm:$0xff] %vm59, %v6128
    %6201 = vst.msk [vmem:[#allocation3 + $0x1e8] sm:$0xff] %vm59, %v6129
    %6202 = vst.msk [vmem:[#allocation3 + $0x1f8] sm:$0xff] %vm59, %v6130
    %6203 = vst.msk [vmem:[#allocation3 + $0x208] sm:$0xff] %vm59, %v6131
    %6204 = vst.msk [vmem:[#allocation3 + $0x218] sm:$0xff] %vm59, %v6132
    %6205 = vst.msk [vmem:[#allocation3 + $0x228] sm:$0xff] %vm59, %v6133
    %6206 = vst.msk [vmem:[#allocation3 + $0x238] sm:$0xff] %vm59, %v6134
    %6207 = vst.msk [vmem:[#allocation3 + $0x248] sm:$0xff] %vm59, %v6135
    %6208 = vst.msk [vmem:[#allocation3 + $0x258] sm:$0xff] %vm59, %v6136
    %6209 = vst.msk [vmem:[#allocation3 + $0x268] sm:$0xff] %vm59, %v6137
    %6210 = vst.msk [vmem:[#allocation3 + $0x278] sm:$0xff] %vm59, %v6138
    %6211 = vst.msk [vmem:[#allocation3 + $0x288] sm:$0xff] %vm59, %v6139
    %6212 = vst.msk [vmem:[#allocation3 + $0x298] sm:$0xff] %vm59, %v6140
    %6213 = vst.msk [vmem:[#allocation3 + $0x2a8] sm:$0xff] %vm59, %v6141
    %6214 = vst.msk [vmem:[#allocation3 + $0x2b8] sm:$0xff] %vm59, %v6142
    %6215 = vst.msk [vmem:[#allocation3 + $0x2c8] sm:$0xff] %vm59, %v6143
    %6216 = vst.msk [vmem:[#allocation3 + $0x2d8] sm:$0xff] %vm59, %v6144
    %6217 = vst.msk [vmem:[#allocation3 + $0x2e8] sm:$0xff] %vm59, %v6145
    %6218 = vst.msk [vmem:[#allocation3 + $0x2f8] sm:$0xff] %vm59, %v6146
    %6219 = vst.msk [vmem:[#allocation3 + $0x308] sm:$0xff] %vm59, %v6147
    %6220 = vst.msk [vmem:[#allocation3 + $0x318] sm:$0xff] %vm59, %v6148
    %6221 = vst.msk [vmem:[#allocation3 + $0x328] sm:$0xff] %vm59, %v6149
    %6222 = vst.msk [vmem:[#allocation3 + $0x338] sm:$0xff] %vm59, %v6150
    %6223 = vst.msk [vmem:[#allocation3 + $0x348] sm:$0xff] %vm59, %v6151
    %6224 = vst.msk [vmem:[#allocation3 + $0x358] sm:$0xff] %vm59, %v6152
    %6225 = vst.msk [vmem:[#allocation3 + $0x368] sm:$0xff] %vm59, %v6153
    %6226 = vst.msk [vmem:[#allocation3 + $0x378] sm:$0xff] %vm59, %v6154
    %6227 = vst.msk [vmem:[#allocation3 + $0x388] sm:$0xff] %vm59, %v6155
    %6228 = vst.msk [vmem:[#allocation3 + $0x398] sm:$0xff] %vm59, %v6156
    %6229 = vst.msk [vmem:[#allocation3 + $0x3a8] sm:$0xff] %vm59, %v6157
    %6230 = vst.msk [vmem:[#allocation3 + $0x3b8] sm:$0xff] %vm59, %v6158
    %6231 = vst.msk [vmem:[#allocation3 + $0x3c8] sm:$0xff] %vm59, %v6159
    %6232 = vst.msk [vmem:[#allocation3 + $0x3d8] sm:$0xff] %vm59, %v6160
    %6233 = vst.msk [vmem:[#allocation3 + $0x3e8] sm:$0xff] %vm59, %v6161
    %6234 = vst.msk [vmem:[#allocation3 + $0x3f8] sm:$0xff] %vm59, %v6162
    %6235 = vst.msk [vmem:[#allocation3 + $0x408] sm:$0xff] %vm59, %v6163
    %6236 = vst.msk [vmem:[#allocation3 + $0x418] sm:$0xff] %vm59, %v6164
    %6237 = vst.msk [vmem:[#allocation3 + $0x428] sm:$0xff] %vm59, %v6165
    %6238 = vst.msk [vmem:[#allocation3 + $0x438] sm:$0xff] %vm59, %v6166
    %6239 = vst.msk [vmem:[#allocation3 + $0x448] sm:$0xff] %vm59, %v6167
    %6240 = vst.msk [vmem:[#allocation3 + $0x458] sm:$0xff] %vm59, %v6168
    %6241 = vst.msk [vmem:[#allocation3 + $0x468] sm:$0xff] %vm59, %v6169
    %6242 = vst.msk [vmem:[#allocation3 + $0x478] sm:$0xff] %vm59, %v6170
    %v6243 = vld [vmem:[#allocation3] sm:$0xff]
    %v6244 = vld [vmem:[#allocation3 + $0x8] sm:$0xff]
    %v6245 = vld [vmem:[#allocation3 + $0x10] sm:$0xff]
    %v6246 = vld [vmem:[#allocation3 + $0x18] sm:$0xff]
    %v6247 = vld [vmem:[#allocation3 + $0x20] sm:$0xff]
    %v6248 = vld [vmem:[#allocation3 + $0x28] sm:$0xff]
    %v6249 = vld [vmem:[#allocation3 + $0x30] sm:$0xff]
    %v6250 = vld [vmem:[#allocation3 + $0x38] sm:$0xff]
    %v6251 = vld [vmem:[#allocation3 + $0x40] sm:$0xff]
    %v6252 = vld [vmem:[#allocation3 + $0x48] sm:$0xff]
    %v6253 = vld [vmem:[#allocation3 + $0x50] sm:$0xff]
    %v6254 = vld [vmem:[#allocation3 + $0x58] sm:$0xff]
    %v6255 = vld [vmem:[#allocation3 + $0x60] sm:$0xff]
    %v6256 = vld [vmem:[#allocation3 + $0x68] sm:$0xff]
    %v6257 = vld [vmem:[#allocation3 + $0x70] sm:$0xff]
    %v6258 = vld [vmem:[#allocation3 + $0x78] sm:$0xff]
    %v6259 = vld [vmem:[#allocation3 + $0x80] sm:$0xff]
    %v6260 = vld [vmem:[#allocation3 + $0x88] sm:$0xff]
    %v6261 = vld [vmem:[#allocation3 + $0x90] sm:$0xff]
    %v6262 = vld [vmem:[#allocation3 + $0x98] sm:$0xff]
    %v6263 = vld [vmem:[#allocation3 + $0xa0] sm:$0xff]
    %v6264 = vld [vmem:[#allocation3 + $0xa8] sm:$0xff]
    %v6265 = vld [vmem:[#allocation3 + $0xb0] sm:$0xff]
    %v6266 = vld [vmem:[#allocation3 + $0xb8] sm:$0xff]
    %v6267 = vld [vmem:[#allocation3 + $0xc0] sm:$0xff]
    %v6268 = vld [vmem:[#allocation3 + $0xc8] sm:$0xff]
    %v6269 = vld [vmem:[#allocation3 + $0xd0] sm:$0xff]
    %v6270 = vld [vmem:[#allocation3 + $0xd8] sm:$0xff]
    %v6271 = vld [vmem:[#allocation3 + $0xe0] sm:$0xff]
    %v6272 = vld [vmem:[#allocation3 + $0xe8] sm:$0xff]
    %v6273 = vld [vmem:[#allocation3 + $0xf0] sm:$0xff]
    %v6274 = vld [vmem:[#allocation3 + $0xf8] sm:$0xff]
    %v6275 = vld [vmem:[#allocation3 + $0x100] sm:$0xff]
    %v6276 = vld [vmem:[#allocation3 + $0x108] sm:$0xff]
    %v6277 = vld [vmem:[#allocation3 + $0x110] sm:$0xff]
    %v6278 = vld [vmem:[#allocation3 + $0x118] sm:$0xff]
    %v6279 = vld [vmem:[#allocation3 + $0x120] sm:$0xff]
    %v6280 = vld [vmem:[#allocation3 + $0x128] sm:$0xff]
    %v6281 = vld [vmem:[#allocation3 + $0x130] sm:$0xff]
    %v6282 = vld [vmem:[#allocation3 + $0x138] sm:$0xff]
    %v6283 = vld [vmem:[#allocation3 + $0x140] sm:$0xff]
    %v6284 = vld [vmem:[#allocation3 + $0x148] sm:$0xff]
    %v6285 = vld [vmem:[#allocation3 + $0x150] sm:$0xff]
    %v6286 = vld [vmem:[#allocation3 + $0x158] sm:$0xff]
    %v6287 = vld [vmem:[#allocation3 + $0x160] sm:$0xff]
    %v6288 = vld [vmem:[#allocation3 + $0x168] sm:$0xff]
    %v6289 = vld [vmem:[#allocation3 + $0x170] sm:$0xff]
    %v6290 = vld [vmem:[#allocation3 + $0x178] sm:$0xff]
    %v6291 = vld [vmem:[#allocation3 + $0x180] sm:$0xff]
    %v6292 = vld [vmem:[#allocation3 + $0x188] sm:$0xff]
    %v6293 = vld [vmem:[#allocation3 + $0x190] sm:$0xff]
    %v6294 = vld [vmem:[#allocation3 + $0x198] sm:$0xff]
    %v6295 = vld [vmem:[#allocation3 + $0x1a0] sm:$0xff]
    %v6296 = vld [vmem:[#allocation3 + $0x1a8] sm:$0xff]
    %v6297 = vld [vmem:[#allocation3 + $0x1b0] sm:$0xff]
    %v6298 = vld [vmem:[#allocation3 + $0x1b8] sm:$0xff]
    %v6299 = vld [vmem:[#allocation3 + $0x1c0] sm:$0xff]
    %v6300 = vld [vmem:[#allocation3 + $0x1c8] sm:$0xff]
    %v6301 = vld [vmem:[#allocation3 + $0x1d0] sm:$0xff]
    %v6302 = vld [vmem:[#allocation3 + $0x1d8] sm:$0xff]
    %v6303 = vld [vmem:[#allocation3 + $0x1e0] sm:$0xff]
    %v6304 = vld [vmem:[#allocation3 + $0x1e8] sm:$0xff]
    %v6305 = vld [vmem:[#allocation3 + $0x1f0] sm:$0xff]
    %v6306 = vld [vmem:[#allocation3 + $0x1f8] sm:$0xff]
    %v6307 = vld [vmem:[#allocation3 + $0x240] sm:$0xff]
    %v6308 = vld [vmem:[#allocation3 + $0x248] sm:$0xff]
    %v6309 = vld [vmem:[#allocation3 + $0x250] sm:$0xff]
    %v6310 = vld [vmem:[#allocation3 + $0x258] sm:$0xff]
    %v6311 = vld [vmem:[#allocation3 + $0x260] sm:$0xff]
    %v6312 = vld [vmem:[#allocation3 + $0x268] sm:$0xff]
    %v6313 = vld [vmem:[#allocation3 + $0x270] sm:$0xff]
    %v6314 = vld [vmem:[#allocation3 + $0x278] sm:$0xff]
    %v6315 = vld [vmem:[#allocation3 + $0x280] sm:$0xff]
    %v6316 = vld [vmem:[#allocation3 + $0x288] sm:$0xff]
    %v6317 = vld [vmem:[#allocation3 + $0x290] sm:$0xff]
    %v6318 = vld [vmem:[#allocation3 + $0x298] sm:$0xff]
    %v6319 = vld [vmem:[#allocation3 + $0x2a0] sm:$0xff]
    %v6320 = vld [vmem:[#allocation3 + $0x2a8] sm:$0xff]
    %v6321 = vld [vmem:[#allocation3 + $0x2b0] sm:$0xff]
    %v6322 = vld [vmem:[#allocation3 + $0x2b8] sm:$0xff]
    %v6323 = vld [vmem:[#allocation3 + $0x2c0] sm:$0xff]
    %v6324 = vld [vmem:[#allocation3 + $0x2c8] sm:$0xff]
    %v6325 = vld [vmem:[#allocation3 + $0x2d0] sm:$0xff]
    %v6326 = vld [vmem:[#allocation3 + $0x2d8] sm:$0xff]
    %v6327 = vld [vmem:[#allocation3 + $0x2e0] sm:$0xff]
    %v6328 = vld [vmem:[#allocation3 + $0x2e8] sm:$0xff]
    %v6329 = vld [vmem:[#allocation3 + $0x2f0] sm:$0xff]
    %v6330 = vld [vmem:[#allocation3 + $0x2f8] sm:$0xff]
    %v6331 = vld [vmem:[#allocation3 + $0x300] sm:$0xff]
    %v6332 = vld [vmem:[#allocation3 + $0x308] sm:$0xff]
    %v6333 = vld [vmem:[#allocation3 + $0x310] sm:$0xff]
    %v6334 = vld [vmem:[#allocation3 + $0x318] sm:$0xff]
    %v6335 = vld [vmem:[#allocation3 + $0x320] sm:$0xff]
    %v6336 = vld [vmem:[#allocation3 + $0x328] sm:$0xff]
    %v6337 = vld [vmem:[#allocation3 + $0x330] sm:$0xff]
    %v6338 = vld [vmem:[#allocation3 + $0x338] sm:$0xff]
    %v6339 = vld [vmem:[#allocation3 + $0x340] sm:$0xff]
    %v6340 = vld [vmem:[#allocation3 + $0x348] sm:$0xff]
    %v6341 = vld [vmem:[#allocation3 + $0x350] sm:$0xff]
    %v6342 = vld [vmem:[#allocation3 + $0x358] sm:$0xff]
    %v6343 = vld [vmem:[#allocation3 + $0x360] sm:$0xff]
    %v6344 = vld [vmem:[#allocation3 + $0x368] sm:$0xff]
    %v6345 = vld [vmem:[#allocation3 + $0x370] sm:$0xff]
    %v6346 = vld [vmem:[#allocation3 + $0x378] sm:$0xff]
    %v6347 = vld [vmem:[#allocation3 + $0x380] sm:$0xff]
    %v6348 = vld [vmem:[#allocation3 + $0x388] sm:$0xff]
    %v6349 = vld [vmem:[#allocation3 + $0x390] sm:$0xff]
    %v6350 = vld [vmem:[#allocation3 + $0x398] sm:$0xff]
    %v6351 = vld [vmem:[#allocation3 + $0x3a0] sm:$0xff]
    %v6352 = vld [vmem:[#allocation3 + $0x3a8] sm:$0xff]
    %v6353 = vld [vmem:[#allocation3 + $0x3b0] sm:$0xff]
    %v6354 = vld [vmem:[#allocation3 + $0x3b8] sm:$0xff]
    %v6355 = vld [vmem:[#allocation3 + $0x3c0] sm:$0xff]
    %v6356 = vld [vmem:[#allocation3 + $0x3c8] sm:$0xff]
    %v6357 = vld [vmem:[#allocation3 + $0x3d0] sm:$0xff]
    %v6358 = vld [vmem:[#allocation3 + $0x3d8] sm:$0xff]
    %v6359 = vld [vmem:[#allocation3 + $0x3e0] sm:$0xff]
    %v6360 = vld [vmem:[#allocation3 + $0x3e8] sm:$0xff]
    %v6361 = vld [vmem:[#allocation3 + $0x3f0] sm:$0xff]
    %v6362 = vld [vmem:[#allocation3 + $0x3f8] sm:$0xff]
    %v6363 = vld [vmem:[#allocation3 + $0x400] sm:$0xff]
    %v6364 = vld [vmem:[#allocation3 + $0x408] sm:$0xff]
    %v6365 = vld [vmem:[#allocation3 + $0x410] sm:$0xff]
    %v6366 = vld [vmem:[#allocation3 + $0x418] sm:$0xff]
    %v6367 = vld [vmem:[#allocation3 + $0x420] sm:$0xff]
    %v6368 = vld [vmem:[#allocation3 + $0x428] sm:$0xff]
    %v6369 = vld [vmem:[#allocation3 + $0x430] sm:$0xff]
    %v6370 = vld [vmem:[#allocation3 + $0x438] sm:$0xff]
    %v6371 = vld [vmem:[%s5] sm:$0xff]
    %v6372 = vld [vmem:[%s5 + $0x8] sm:$0xff]
    %v6373 = vld [vmem:[%s5 + $0x10] sm:$0xff]
    %v6374 = vld [vmem:[%s5 + $0x18] sm:$0xff]
    %v6375 = vld [vmem:[%s5 + $0x20] sm:$0xff]
    %v6376 = vld [vmem:[%s5 + $0x28] sm:$0xff]
    %v6377 = vld [vmem:[%s5 + $0x30] sm:$0xff]
    %v6378 = vld [vmem:[%s5 + $0x38] sm:$0xff]
    %v6379 = vld [vmem:[%s5 + $0x40] sm:$0xff]
    %v6380 = vld [vmem:[%s5 + $0x48] sm:$0xff]
    %v6381 = vld [vmem:[%s5 + $0x50] sm:$0xff]
    %v6382 = vld [vmem:[%s5 + $0x58] sm:$0xff]
    %v6383 = vld [vmem:[%s5 + $0x60] sm:$0xff]
    %v6384 = vld [vmem:[%s5 + $0x68] sm:$0xff]
    %v6385 = vld [vmem:[%s5 + $0x70] sm:$0xff]
    %v6386 = vld [vmem:[%s5 + $0x78] sm:$0xff]
    %v6387 = vld [vmem:[%s5 + $0x80] sm:$0xff]
    %v6388 = vld [vmem:[%s5 + $0x88] sm:$0xff]
    %v6389 = vld [vmem:[%s5 + $0x90] sm:$0xff]
    %v6390 = vld [vmem:[%s5 + $0x98] sm:$0xff]
    %v6391 = vld [vmem:[%s5 + $0xa0] sm:$0xff]
    %v6392 = vld [vmem:[%s5 + $0xa8] sm:$0xff]
    %v6393 = vld [vmem:[%s5 + $0xb0] sm:$0xff]
    %v6394 = vld [vmem:[%s5 + $0xb8] sm:$0xff]
    %v6395 = vld [vmem:[%s2197] sm:$0xff]
    %v6396 = vld [vmem:[%s2197 + $0x8] sm:$0xff]
    %v6397 = vld [vmem:[%s2197 + $0x10] sm:$0xff]
    %v6398 = vld [vmem:[%s2197 + $0x18] sm:$0xff]
    %v6399 = vld [vmem:[%s2197 + $0x20] sm:$0xff]
    %v6400 = vld [vmem:[%s2197 + $0x28] sm:$0xff]
    %v6401 = vld [vmem:[%s2197 + $0x30] sm:$0xff]
    %v6402 = vld [vmem:[%s2197 + $0x38] sm:$0xff]
    %v6403 = vld [vmem:[%s2197 + $0x40] sm:$0xff]
    %v6404 = vld [vmem:[%s2197 + $0x48] sm:$0xff]
    %v6405 = vld [vmem:[%s2197 + $0x50] sm:$0xff]
    %v6406 = vld [vmem:[%s2197 + $0x58] sm:$0xff]
    %v6407 = vld [vmem:[%s2197 + $0x60] sm:$0xff]
    %v6408 = vld [vmem:[%s2197 + $0x68] sm:$0xff]
    %v6409 = vld [vmem:[%s2197 + $0x70] sm:$0xff]
    %v6410 = vld [vmem:[%s2197 + $0x78] sm:$0xff]
    %v6411 = vld [vmem:[%s2197 + $0x80] sm:$0xff]
    %v6412 = vld [vmem:[%s2197 + $0x88] sm:$0xff]
    %v6413 = vld [vmem:[%s2197 + $0x90] sm:$0xff]
    %v6414 = vld [vmem:[%s2197 + $0x98] sm:$0xff]
    %v6415 = vld [vmem:[%s2197 + $0xa0] sm:$0xff]
    %v6416 = vld [vmem:[%s2197 + $0xa8] sm:$0xff]
    %v6417 = vld [vmem:[%s2197 + $0xb0] sm:$0xff]
    %v6418 = vld [vmem:[%s2197 + $0xb8] sm:$0xff]
    %v6419 = vld [vmem:[%s2197 + $0xc0] sm:$0xff]
    %v6420 = vld [vmem:[%s2197 + $0xc8] sm:$0xff]
    %v6421 = vld [vmem:[%s2197 + $0xd0] sm:$0xff]
    %v6422 = vld [vmem:[%s2197 + $0xd8] sm:$0xff]
    %v6423 = vld [vmem:[%s2197 + $0xe0] sm:$0xff]
    %v6424 = vld [vmem:[%s2197 + $0xe8] sm:$0xff]
    %v6425 = vld [vmem:[%s2197 + $0xf0] sm:$0xff]
    %v6426 = vld [vmem:[%s2197 + $0xf8] sm:$0xff]
    %v6427 = vld [vmem:[%s2197 + $0x100] sm:$0xff]
    %v6428 = vld [vmem:[%s2197 + $0x108] sm:$0xff]
    %v6429 = vld [vmem:[%s2197 + $0x110] sm:$0xff]
    %v6430 = vld [vmem:[%s2197 + $0x118] sm:$0xff]
    %v6431 = vld [vmem:[%s2197 + $0x120] sm:$0xff]
    %v6432 = vld [vmem:[%s2197 + $0x128] sm:$0xff]
    %v6433 = vld [vmem:[%s2197 + $0x130] sm:$0xff]
    %v6434 = vld [vmem:[%s2197 + $0x138] sm:$0xff]
    %v6435 = vld [vmem:[%s2197 + $0x140] sm:$0xff]
    %v6436 = vld [vmem:[%s2197 + $0x148] sm:$0xff]
    %v6437 = vld [vmem:[%s2197 + $0x150] sm:$0xff]
    %v6438 = vld [vmem:[%s2197 + $0x158] sm:$0xff]
    %v6439 = vld [vmem:[%s2197 + $0x160] sm:$0xff]
    %v6440 = vld [vmem:[%s2197 + $0x168] sm:$0xff]
    %v6441 = vld [vmem:[%s2197 + $0x170] sm:$0xff]
    %v6442 = vld [vmem:[%s2197 + $0x178] sm:$0xff]
    %v6443 = vld [vmem:[%s2197 + $0x180] sm:$0xff]
    %v6444 = vld [vmem:[%s2197 + $0x188] sm:$0xff]
    %v6445 = vld [vmem:[%s2197 + $0x190] sm:$0xff]
    %v6446 = vld [vmem:[%s2197 + $0x198] sm:$0xff]
    %v6447 = vld [vmem:[%s2197 + $0x1a0] sm:$0xff]
    %v6448 = vld [vmem:[%s2197 + $0x1a8] sm:$0xff]
    %v6449 = vld [vmem:[%s2197 + $0x1b0] sm:$0xff]
    %v6450 = vld [vmem:[%s2197 + $0x1b8] sm:$0xff]
    %v6451 = vld [vmem:[%s2197 + $0x1c0] sm:$0xff]
    %v6452 = vld [vmem:[%s2197 + $0x1c8] sm:$0xff]
    %v6453 = vld [vmem:[%s2197 + $0x1d0] sm:$0xff]
    %v6454 = vld [vmem:[%s2197 + $0x1d8] sm:$0xff]
    %v6455 = vld [vmem:[%s2197 + $0x1e0] sm:$0xff]
    %v6456 = vld [vmem:[%s2197 + $0x1e8] sm:$0xff]
    %v6457 = vld [vmem:[%s2197 + $0x1f0] sm:$0xff]
    %v6458 = vld [vmem:[%s2197 + $0x1f8] sm:$0xff]
    %v6459 = vld [vmem:[%s2197 + $0x240] sm:$0xff]
    %v6460 = vld [vmem:[%s2197 + $0x248] sm:$0xff]
    %v6461 = vld [vmem:[%s2197 + $0x250] sm:$0xff]
    %v6462 = vld [vmem:[%s2197 + $0x258] sm:$0xff]
    %v6463 = vld [vmem:[%s2197 + $0x260] sm:$0xff]
    %v6464 = vld [vmem:[%s2197 + $0x268] sm:$0xff]
    %v6465 = vld [vmem:[%s2197 + $0x270] sm:$0xff]
    %v6466 = vld [vmem:[%s2197 + $0x278] sm:$0xff]
    %v6467 = vld [vmem:[%s2197 + $0x280] sm:$0xff]
    %v6468 = vld [vmem:[%s2197 + $0x288] sm:$0xff]
    %v6469 = vld [vmem:[%s2197 + $0x290] sm:$0xff]
    %v6470 = vld [vmem:[%s2197 + $0x298] sm:$0xff]
    %v6471 = vld [vmem:[%s2197 + $0x2a0] sm:$0xff]
    %v6472 = vld [vmem:[%s2197 + $0x2a8] sm:$0xff]
    %v6473 = vld [vmem:[%s2197 + $0x2b0] sm:$0xff]
    %v6474 = vld [vmem:[%s2197 + $0x2b8] sm:$0xff]
    %v6475 = vld [vmem:[%s2197 + $0x2c0] sm:$0xff]
    %v6476 = vld [vmem:[%s2197 + $0x2c8] sm:$0xff]
    %v6477 = vld [vmem:[%s2197 + $0x2d0] sm:$0xff]
    %v6478 = vld [vmem:[%s2197 + $0x2d8] sm:$0xff]
    %v6479 = vld [vmem:[%s2197 + $0x2e0] sm:$0xff]
    %v6480 = vld [vmem:[%s2197 + $0x2e8] sm:$0xff]
    %v6481 = vld [vmem:[%s2197 + $0x2f0] sm:$0xff]
    %v6482 = vld [vmem:[%s2197 + $0x2f8] sm:$0xff]
    %v6483 = vld [vmem:[%s2197 + $0x300] sm:$0xff]
    %v6484 = vld [vmem:[%s2197 + $0x308] sm:$0xff]
    %v6485 = vld [vmem:[%s2197 + $0x310] sm:$0xff]
    %v6486 = vld [vmem:[%s2197 + $0x318] sm:$0xff]
    %v6487 = vld [vmem:[%s2197 + $0x320] sm:$0xff]
    %v6488 = vld [vmem:[%s2197 + $0x328] sm:$0xff]
    %v6489 = vld [vmem:[%s2197 + $0x330] sm:$0xff]
    %v6490 = vld [vmem:[%s2197 + $0x338] sm:$0xff]
    %v6491 = vld [vmem:[%s2197 + $0x340] sm:$0xff]
    %v6492 = vld [vmem:[%s2197 + $0x348] sm:$0xff]
    %v6493 = vld [vmem:[%s2197 + $0x350] sm:$0xff]
    %v6494 = vld [vmem:[%s2197 + $0x358] sm:$0xff]
    %v6495 = vld [vmem:[%s2197 + $0x360] sm:$0xff]
    %v6496 = vld [vmem:[%s2197 + $0x368] sm:$0xff]
    %v6497 = vld [vmem:[%s2197 + $0x370] sm:$0xff]
    %v6498 = vld [vmem:[%s2197 + $0x378] sm:$0xff]
    %v6499 = vld [vmem:[%s2197 + $0x380] sm:$0xff]
    %v6500 = vld [vmem:[%s2197 + $0x388] sm:$0xff]
    %v6501 = vld [vmem:[%s2197 + $0x390] sm:$0xff]
    %v6502 = vld [vmem:[%s2197 + $0x398] sm:$0xff]
    %v6503 = vld [vmem:[%s2197 + $0x3a0] sm:$0xff]
    %v6504 = vld [vmem:[%s2197 + $0x3a8] sm:$0xff]
    %v6505 = vld [vmem:[%s2197 + $0x3b0] sm:$0xff]
    %v6506 = vld [vmem:[%s2197 + $0x3b8] sm:$0xff]
    %v6507 = vld [vmem:[%s2197 + $0x3c0] sm:$0xff]
    %v6508 = vld [vmem:[%s2197 + $0x3c8] sm:$0xff]
    %v6509 = vld [vmem:[%s2197 + $0x3d0] sm:$0xff]
    %v6510 = vld [vmem:[%s2197 + $0x3d8] sm:$0xff]
    %v6511 = vld [vmem:[%s2197 + $0x3e0] sm:$0xff]
    %v6512 = vld [vmem:[%s2197 + $0x3e8] sm:$0xff]
    %v6513 = vld [vmem:[%s2197 + $0x3f0] sm:$0xff]
    %v6514 = vld [vmem:[%s2197 + $0x3f8] sm:$0xff]
    %v6515 = vld [vmem:[%s2197 + $0x400] sm:$0xff]
    %v6516 = vld [vmem:[%s2197 + $0x408] sm:$0xff]
    %v6517 = vld [vmem:[%s2197 + $0x410] sm:$0xff]
    %v6518 = vld [vmem:[%s2197 + $0x418] sm:$0xff]
    %v6519 = vld [vmem:[%s2197 + $0x420] sm:$0xff]
    %v6520 = vld [vmem:[%s2197 + $0x428] sm:$0xff]
    %v6521 = vld [vmem:[%s2197 + $0x430] sm:$0xff]
    %v6522 = vld [vmem:[%s2197 + $0x438] sm:$0xff]
    %s6523 = scalar_lea.vmem %s5, 192
    %v6524 = vld [vmem:[%s6523] sm:$0xff]
    %v6525 = vld [vmem:[%s6523 + $0x8] sm:$0xff]
    %v6526 = vld [vmem:[%s6523 + $0x10] sm:$0xff]
    %v6527 = vld [vmem:[%s6523 + $0x18] sm:$0xff]
    %v6528 = vld [vmem:[%s6523 + $0x20] sm:$0xff]
    %v6529 = vld [vmem:[%s6523 + $0x28] sm:$0xff]
    %v6530 = vld [vmem:[%s6523 + $0x30] sm:$0xff]
    %v6531 = vld [vmem:[%s6523 + $0x38] sm:$0xff]
    %v6532 = vld [vmem:[%s6523 + $0x40] sm:$0xff]
    %v6533 = vld [vmem:[%s6523 + $0x48] sm:$0xff]
    %v6534 = vld [vmem:[%s6523 + $0x50] sm:$0xff]
    %v6535 = vld [vmem:[%s6523 + $0x58] sm:$0xff]
    %v6536 = vld [vmem:[%s6523 + $0x60] sm:$0xff]
    %v6537 = vld [vmem:[%s6523 + $0x68] sm:$0xff]
    %v6538 = vld [vmem:[%s6523 + $0x70] sm:$0xff]
    %v6539 = vld [vmem:[%s6523 + $0x78] sm:$0xff]
    %v6540 = vld [vmem:[%s6523 + $0x80] sm:$0xff]
    %v6541 = vld [vmem:[%s6523 + $0x88] sm:$0xff]
    %v6542 = vld [vmem:[%s6523 + $0x90] sm:$0xff]
    %v6543 = vld [vmem:[%s6523 + $0x98] sm:$0xff]
    %v6544 = vld [vmem:[%s6523 + $0xa0] sm:$0xff]
    %v6545 = vld [vmem:[%s6523 + $0xa8] sm:$0xff]
    %v6546 = vld [vmem:[%s6523 + $0xb0] sm:$0xff]
    %v6547 = vld [vmem:[%s6523 + $0xb8] sm:$0xff]
    %v6549 = vsel %vm59, %v6396, 0
    %v6552 = vsel %vm59, %v6398, 0
    %v6555 = vsel %vm59, %v6400, 0
    %v6558 = vsel %vm59, %v6402, 0
    %v6561 = vsel %vm59, %v6404, 0
    %v6564 = vsel %vm59, %v6406, 0
    %v6567 = vsel %vm59, %v6408, 0
    %v6570 = vsel %vm59, %v6410, 0
    %v6573 = vsel %vm59, %v6412, 0
    %v6576 = vsel %vm59, %v6414, 0
    %v6579 = vsel %vm59, %v6416, 0
    %v6582 = vsel %vm59, %v6418, 0
    %v6585 = vsel %vm59, %v6420, 0
    %v6588 = vsel %vm59, %v6422, 0
    %v6591 = vsel %vm59, %v6424, 0
    %v6594 = vsel %vm59, %v6426, 0
    %v6597 = vsel %vm59, %v6428, 0
    %v6600 = vsel %vm59, %v6430, 0
    %v6603 = vsel %vm59, %v6432, 0
    %v6606 = vsel %vm59, %v6434, 0
    %v6609 = vsel %vm59, %v6436, 0
    %v6612 = vsel %vm59, %v6438, 0
    %v6615 = vsel %vm59, %v6440, 0
    %v6618 = vsel %vm59, %v6442, 0
    %v6621 = vsel %vm59, %v6444, 0
    %v6624 = vsel %vm59, %v6446, 0
    %v6627 = vsel %vm59, %v6448, 0
    %v6630 = vsel %vm59, %v6450, 0
    %v6633 = vsel %vm59, %v6452, 0
    %v6636 = vsel %vm59, %v6454, 0
    %v6639 = vsel %vm59, %v6456, 0
    %v6642 = vsel %vm59, %v6458, 0
    %v6645 = vsel %vm59, %v6460, 0
    %v6648 = vsel %vm59, %v6462, 0
    %v6651 = vsel %vm59, %v6464, 0
    %v6654 = vsel %vm59, %v6466, 0
    %v6657 = vsel %vm59, %v6468, 0
    %v6660 = vsel %vm59, %v6470, 0
    %v6663 = vsel %vm59, %v6472, 0
    %v6666 = vsel %vm59, %v6474, 0
    %v6669 = vsel %vm59, %v6476, 0
    %v6672 = vsel %vm59, %v6478, 0
    %v6675 = vsel %vm59, %v6480, 0
    %v6678 = vsel %vm59, %v6482, 0
    %v6681 = vsel %vm59, %v6484, 0
    %v6684 = vsel %vm59, %v6486, 0
    %v6687 = vsel %vm59, %v6488, 0
    %v6690 = vsel %vm59, %v6490, 0
    %v6693 = vsel %vm59, %v6492, 0
    %v6696 = vsel %vm59, %v6494, 0
    %v6699 = vsel %vm59, %v6496, 0
    %v6702 = vsel %vm59, %v6498, 0
    %v6705 = vsel %vm59, %v6500, 0
    %v6708 = vsel %vm59, %v6502, 0
    %v6711 = vsel %vm59, %v6504, 0
    %v6714 = vsel %vm59, %v6506, 0
    %v6717 = vsel %vm59, %v6508, 0
    %v6720 = vsel %vm59, %v6510, 0
    %v6723 = vsel %vm59, %v6512, 0
    %v6726 = vsel %vm59, %v6514, 0
    %v6729 = vsel %vm59, %v6516, 0
    %v6732 = vsel %vm59, %v6518, 0
    %v6735 = vsel %vm59, %v6520, 0
    %v6738 = vsel %vm59, %v6522, 0
    %6740 = vmatprep.subr.mxu0 0.0
    %6741 = vmatpush1.msra.mxu0 %v6524
    %6742 = vmatprep.subr.mxu0 0.0
    %6743 = vmatpush1.msra.mxu0 %v6525
    %6744 = vmatprep.subr.mxu0 0.0
    %6745 = vmatpush1.msra.mxu0 %v6526
    %6746 = vmatprep.subr.mxu0 0.0
    %6747 = vmatpush1.msra.mxu0 %v6527
    %6748 = vmatprep.subr.mxu0 0.0
    %6749 = vmatpush1.msra.mxu0 %v6528
    %6750 = vmatprep.subr.mxu0 0.0
    %6751 = vmatpush1.msra.mxu0 %v6529
    %6752 = vmatprep.subr.mxu0 0.0
    %6753 = vmatpush1.msra.mxu0 %v6530
    %6754 = vmatprep.subr.mxu0 0.0
    %6755 = vmatpush1.msra.mxu0 %v6531
    %6756 = vmatprep.subr.mxu0 0.0
    %6757 = vmatpush1.msra.mxu0 %v6532
    %6758 = vmatprep.subr.mxu0 0.0
    %6759 = vmatpush1.msra.mxu0 %v6533
    %6760 = vmatprep.subr.mxu0 0.0
    %6761 = vmatpush1.msra.mxu0 %v6534
    %6762 = vmatprep.subr.mxu0 0.0
    %6763 = vmatpush1.msra.mxu0 %v6535
    %6764 = vmatprep.subr.mxu0 0.0
    %6765 = vmatpush1.msra.mxu0 %v6536
    %6766 = vmatprep.subr.mxu0 0.0
    %6767 = vmatpush1.msra.mxu0 %v6537
    %6768 = vmatprep.subr.mxu0 0.0
    %6769 = vmatpush1.msra.mxu0 %v6538
    %6770 = vmatprep.subr.mxu0 0.0
    %6771 = vmatpush1.msra.mxu0 %v6539
    %6772 = vmatprep.subr.mxu0 0.0
    %6773 = vmatpush1.msra.mxu0 %v6540
    %6774 = vmatprep.subr.mxu0 0.0
    %6775 = vmatpush1.msra.mxu0 %v6541
    %6776 = vmatprep.subr.mxu0 0.0
    %6777 = vmatpush1.msra.mxu0 %v6542
    %6778 = vmatprep.subr.mxu0 0.0
    %6779 = vmatpush1.msra.mxu0 %v6543
    %6780 = vmatprep.subr.mxu0 0.0
    %6781 = vmatpush1.msra.mxu0 %v6544
    %6782 = vmatprep.subr.mxu0 0.0
    %6783 = vmatpush1.msra.mxu0 %v6545
    %6784 = vmatprep.subr.mxu0 0.0
    %6785 = vmatpush1.msra.mxu0 %v6546
    %6786 = vmatprep.subr.mxu0 0.0
    %6787 = vmatpush1.msra.mxu0 %v6547
    %6788 = vmatprep.subr.mxu0 0.0
    %6789 = vmatpush1.msra.mxu0 0.0
    %6790 = vmatprep.subr.mxu0 0.0
    %6791 = vmatpush1.msra.mxu0 0.0
    %6792 = vmatprep.subr.mxu0 0.0
    %6793 = vmatpush1.msra.mxu0 0.0
    %6794 = vmatprep.subr.mxu0 0.0
    %6795 = vmatpush1.msra.mxu0 0.0
    %6796 = vmatprep.subr.mxu0 0.0
    %6797 = vmatpush1.msra.mxu0 0.0
    %6798 = vmatprep.subr.mxu0 0.0
    %6799 = vmatpush1.msra.mxu0 0.0
    %6800 = vmatprep.subr.mxu0 0.0
    %6801 = vmatpush1.msra.mxu0 0.0
    %6802 = vmatprep.subr.mxu0 0.0
    %6803 = vmatpush1.msra.mxu0 0.0
    %6804 = vmatprep.mubr.f32.mxu0 %v6549
    %6805 = vmatmul.mubr.f32.gmra.mrb[0].mxu0 %v6395
    %v6806 = vpop.f32.mrb[0].mxu0
    %v6807 = vadd.f32 0.0, %v6806
    %v6808 = vpop.f32.mrb[0].mxu0
    %6809 = vmatprep.mubr.f32.mxu0 %v6552
    %6810 = vmatmul.mubr.f32.gmra.mrb[0].mxu0 %v6397
    %v6811 = vpop.f32.mrb[0].mxu0
    %v6812 = vadd.f32 0.0, %v6811
    %v6813 = vpop.f32.mrb[0].mxu0
    %6814 = vmatprep.mubr.f32.mxu0 %v6555
    %6815 = vmatmul.mubr.f32.gmra.mrb[0].mxu0 %v6399
    %v6816 = vpop.f32.mrb[0].mxu0
    %v6817 = vadd.f32 0.0, %v6816
    %v6818 = vpop.f32.mrb[0].mxu0
    %6819 = vmatprep.mubr.f32.mxu0 %v6558
    %6820 = vmatmul.mubr.f32.gmra.mrb[0].mxu0 %v6401
    %v6821 = vpop.f32.mrb[0].mxu0
    %v6822 = vadd.f32 0.0, %v6821
    %v6823 = vpop.f32.mrb[0].mxu0
    %6824 = vmatprep.mubr.f32.mxu0 %v6561
    %6825 = vmatmul.mubr.f32.gmra.mrb[0].mxu0 %v6403
    %v6826 = vpop.f32.mrb[0].mxu0
    %v6827 = vadd.f32 0.0, %v6826
    %v6828 = vpop.f32.mrb[0].mxu0
    %6829 = vmatprep.mubr.f32.mxu0 %v6564
    %6830 = vmatmul.mubr.f32.gmra.mrb[0].mxu0 %v6405
    %v6831 = vpop.f32.mrb[0].mxu0
    %v6832 = vadd.f32 0.0, %v6831
    %v6833 = vpop.f32.mrb[0].mxu0
    %6834 = vmatprep.mubr.f32.mxu0 %v6567
    %6835 = vmatmul.mubr.f32.gmra.mrb[0].mxu0 %v6407
    %v6836 = vpop.f32.mrb[0].mxu0
    %v6837 = vadd.f32 0.0, %v6836
    %v6838 = vpop.f32.mrb[0].mxu0
    %6839 = vmatprep.mubr.f32.mxu0 %v6570
    %6840 = vmatmul.mubr.f32.gmra.mrb[0].mxu0 %v6409
    %v6841 = vpop.f32.mrb[0].mxu0
    %v6842 = vadd.f32 0.0, %v6841
    %v6843 = vpop.f32.mrb[0].mxu0
    %6844 = vmatprep.mubr.f32.mxu0 %v6573
    %6845 = vmatmul.mubr.f32.gmra.mrb[0].mxu0 %v6411
    %v6846 = vpop.f32.mrb[0].mxu0
    %v6847 = vadd.f32 0.0, %v6846
    %v6848 = vpop.f32.mrb[0].mxu0
    %6849 = vmatprep.mubr.f32.mxu0 %v6576
    %6850 = vmatmul.mubr.f32.gmra.mrb[0].mxu0 %v6413
    %v6851 = vpop.f32.mrb[0].mxu0
    %v6852 = vadd.f32 0.0, %v6851
    %v6853 = vpop.f32.mrb[0].mxu0
    %6854 = vmatprep.mubr.f32.mxu0 %v6579
    %6855 = vmatmul.mubr.f32.gmra.mrb[0].mxu0 %v6415
    %v6856 = vpop.f32.mrb[0].mxu0
    %v6857 = vadd.f32 0.0, %v6856
    %v6858 = vpop.f32.mrb[0].mxu0
    %6859 = vmatprep.mubr.f32.mxu0 %v6582
    %6860 = vmatmul.mubr.f32.gmra.mrb[0].mxu0 %v6417
    %v6861 = vpop.f32.mrb[0].mxu0
    %v6862 = vadd.f32 0.0, %v6861
    %v6863 = vpop.f32.mrb[0].mxu0
    %6864 = vmatprep.mubr.f32.mxu0 %v6585
    %6865 = vmatmul.mubr.f32.gmra.mrb[0].mxu0 %v6419
    %v6866 = vpop.f32.mrb[0].mxu0
    %v6867 = vadd.f32 0.0, %v6866
    %v6868 = vpop.f32.mrb[0].mxu0
    %6869 = vmatprep.mubr.f32.mxu0 %v6588
    %6870 = vmatmul.mubr.f32.gmra.mrb[0].mxu0 %v6421
    %v6871 = vpop.f32.mrb[0].mxu0
    %v6872 = vadd.f32 0.0, %v6871
    %v6873 = vpop.f32.mrb[0].mxu0
    %6874 = vmatprep.mubr.f32.mxu0 %v6591
    %6875 = vmatmul.mubr.f32.gmra.mrb[0].mxu0 %v6423
    %v6876 = vpop.f32.mrb[0].mxu0
    %v6877 = vadd.f32 0.0, %v6876
    %v6878 = vpop.f32.mrb[0].mxu0
    %6879 = vmatprep.mubr.f32.mxu0 %v6594
    %6880 = vmatmul.mubr.f32.gmra.mrb[0].mxu0 %v6425
    %v6881 = vpop.f32.mrb[0].mxu0
    %v6882 = vadd.f32 0.0, %v6881
    %v6883 = vpop.f32.mrb[0].mxu0
    %6884 = vmatprep.mubr.f32.mxu0 %v6597
    %6885 = vmatmul.mubr.f32.gmra.mrb[0].mxu0 %v6427
    %v6886 = vpop.f32.mrb[0].mxu0
    %v6887 = vadd.f32 0.0, %v6886
    %v6888 = vpop.f32.mrb[0].mxu0
    %6889 = vmatprep.mubr.f32.mxu0 %v6600
    %6890 = vmatmul.mubr.f32.gmra.mrb[0].mxu0 %v6429
    %v6891 = vpop.f32.mrb[0].mxu0
    %v6892 = vadd.f32 0.0, %v6891
    %v6893 = vpop.f32.mrb[0].mxu0
    %6894 = vmatprep.mubr.f32.mxu0 %v6603
    %6895 = vmatmul.mubr.f32.gmra.mrb[0].mxu0 %v6431
    %v6896 = vpop.f32.mrb[0].mxu0
    %v6897 = vadd.f32 0.0, %v6896
    %v6898 = vpop.f32.mrb[0].mxu0
    %6899 = vmatprep.mubr.f32.mxu0 %v6606
    %6900 = vmatmul.mubr.f32.gmra.mrb[0].mxu0 %v6433
    %v6901 = vpop.f32.mrb[0].mxu0
    %v6902 = vadd.f32 0.0, %v6901
    %v6903 = vpop.f32.mrb[0].mxu0
    %6904 = vmatprep.mubr.f32.mxu0 %v6609
    %6905 = vmatmul.mubr.f32.gmra.mrb[0].mxu0 %v6435
    %v6906 = vpop.f32.mrb[0].mxu0
    %v6907 = vadd.f32 0.0, %v6906
    %v6908 = vpop.f32.mrb[0].mxu0
    %6909 = vmatprep.mubr.f32.mxu0 %v6612
    %6910 = vmatmul.mubr.f32.gmra.mrb[0].mxu0 %v6437
    %v6911 = vpop.f32.mrb[0].mxu0
    %v6912 = vadd.f32 0.0, %v6911
    %v6913 = vpop.f32.mrb[0].mxu0
    %6914 = vmatprep.mubr.f32.mxu0 %v6615
    %6915 = vmatmul.mubr.f32.gmra.mrb[0].mxu0 %v6439
    %v6916 = vpop.f32.mrb[0].mxu0
    %v6917 = vadd.f32 0.0, %v6916
    %v6918 = vpop.f32.mrb[0].mxu0
    %6919 = vmatprep.mubr.f32.mxu0 %v6618
    %6920 = vmatmul.mubr.f32.gmra.mrb[0].mxu0 %v6441
    %v6921 = vpop.f32.mrb[0].mxu0
    %v6922 = vadd.f32 0.0, %v6921
    %v6923 = vpop.f32.mrb[0].mxu0
    %6924 = vmatprep.mubr.f32.mxu0 %v6621
    %6925 = vmatmul.mubr.f32.gmra.mrb[0].mxu0 %v6443
    %v6926 = vpop.f32.mrb[0].mxu0
    %v6927 = vadd.f32 0.0, %v6926
    %v6928 = vpop.f32.mrb[0].mxu0
    %6929 = vmatprep.mubr.f32.mxu0 %v6624
    %6930 = vmatmul.mubr.f32.gmra.mrb[0].mxu0 %v6445
    %v6931 = vpop.f32.mrb[0].mxu0
    %v6932 = vadd.f32 0.0, %v6931
    %v6933 = vpop.f32.mrb[0].mxu0
    %6934 = vmatprep.mubr.f32.mxu0 %v6627
    %6935 = vmatmul.mubr.f32.gmra.mrb[0].mxu0 %v6447
    %v6936 = vpop.f32.mrb[0].mxu0
    %v6937 = vadd.f32 0.0, %v6936
    %v6938 = vpop.f32.mrb[0].mxu0
    %6939 = vmatprep.mubr.f32.mxu0 %v6630
    %6940 = vmatmul.mubr.f32.gmra.mrb[0].mxu0 %v6449
    %v6941 = vpop.f32.mrb[0].mxu0
    %v6942 = vadd.f32 0.0, %v6941
    %v6943 = vpop.f32.mrb[0].mxu0
    %6944 = vmatprep.mubr.f32.mxu0 %v6633
    %6945 = vmatmul.mubr.f32.gmra.mrb[0].mxu0 %v6451
    %v6946 = vpop.f32.mrb[0].mxu0
    %v6947 = vadd.f32 0.0, %v6946
    %v6948 = vpop.f32.mrb[0].mxu0
    %6949 = vmatprep.mubr.f32.mxu0 %v6636
    %6950 = vmatmul.mubr.f32.gmra.mrb[0].mxu0 %v6453
    %v6951 = vpop.f32.mrb[0].mxu0
    %v6952 = vadd.f32 0.0, %v6951
    %v6953 = vpop.f32.mrb[0].mxu0
    %6954 = vmatprep.mubr.f32.mxu0 %v6639
    %6955 = vmatmul.mubr.f32.gmra.mrb[0].mxu0 %v6455
    %v6956 = vpop.f32.mrb[0].mxu0
    %v6957 = vadd.f32 0.0, %v6956
    %v6958 = vpop.f32.mrb[0].mxu0
    %6959 = vmatprep.mubr.f32.mxu0 %v6642
    %6960 = vmatmul.mubr.f32.gmra.mrb[0].mxu0 %v6457
    %v6961 = vpop.f32.mrb[0].mxu0
    %v6962 = vadd.f32 0.0, %v6961
    %v6963 = vpop.f32.mrb[0].mxu0
    %6964 = vmatprep.mubr.f32.mxu0 %v6645
    %6965 = vmatmul.mubr.f32.gmra.mrb[0].mxu0 %v6459
    %v6966 = vpop.f32.mrb[0].mxu0
    %v6967 = vadd.f32 0.0, %v6966
    %v6968 = vpop.f32.mrb[0].mxu0
    %6969 = vmatprep.mubr.f32.mxu0 %v6648
    %6970 = vmatmul.mubr.f32.gmra.mrb[0].mxu0 %v6461
    %v6971 = vpop.f32.mrb[0].mxu0
    %v6972 = vadd.f32 0.0, %v6971
    %v6973 = vpop.f32.mrb[0].mxu0
    %6974 = vmatprep.mubr.f32.mxu0 %v6651
    %6975 = vmatmul.mubr.f32.gmra.mrb[0].mxu0 %v6463
    %v6976 = vpop.f32.mrb[0].mxu0
    %v6977 = vadd.f32 0.0, %v6976
    %v6978 = vpop.f32.mrb[0].mxu0
    %6979 = vmatprep.mubr.f32.mxu0 %v6654
    %6980 = vmatmul.mubr.f32.gmra.mrb[0].mxu0 %v6465
    %v6981 = vpop.f32.mrb[0].mxu0
    %v6982 = vadd.f32 0.0, %v6981
    %v6983 = vpop.f32.mrb[0].mxu0
    %6984 = vmatprep.mubr.f32.mxu0 %v6657
    %6985 = vmatmul.mubr.f32.gmra.mrb[0].mxu0 %v6467
    %v6986 = vpop.f32.mrb[0].mxu0
    %v6987 = vadd.f32 0.0, %v6986
    %v6988 = vpop.f32.mrb[0].mxu0
    %6989 = vmatprep.mubr.f32.mxu0 %v6660
    %6990 = vmatmul.mubr.f32.gmra.mrb[0].mxu0 %v6469
    %v6991 = vpop.f32.mrb[0].mxu0
    %v6992 = vadd.f32 0.0, %v6991
    %v6993 = vpop.f32.mrb[0].mxu0
    %6994 = vmatprep.mubr.f32.mxu0 %v6663
    %6995 = vmatmul.mubr.f32.gmra.mrb[0].mxu0 %v6471
    %v6996 = vpop.f32.mrb[0].mxu0
    %v6997 = vadd.f32 0.0, %v6996
    %v6998 = vpop.f32.mrb[0].mxu0
    %6999 = vmatprep.mubr.f32.mxu0 %v6666
    %7000 = vmatmul.mubr.f32.gmra.mrb[0].mxu0 %v6473
    %v7001 = vpop.f32.mrb[0].mxu0
    %v7002 = vadd.f32 0.0, %v7001
    %v7003 = vpop.f32.mrb[0].mxu0
    %7004 = vmatprep.mubr.f32.mxu0 %v6669
    %7005 = vmatmul.mubr.f32.gmra.mrb[0].mxu0 %v6475
    %v7006 = vpop.f32.mrb[0].mxu0
    %v7007 = vadd.f32 0.0, %v7006
    %v7008 = vpop.f32.mrb[0].mxu0
    %7009 = vmatprep.mubr.f32.mxu0 %v6672
    %7010 = vmatmul.mubr.f32.gmra.mrb[0].mxu0 %v6477
    %v7011 = vpop.f32.mrb[0].mxu0
    %v7012 = vadd.f32 0.0, %v7011
    %v7013 = vpop.f32.mrb[0].mxu0
    %7014 = vmatprep.mubr.f32.mxu0 %v6675
    %7015 = vmatmul.mubr.f32.gmra.mrb[0].mxu0 %v6479
    %v7016 = vpop.f32.mrb[0].mxu0
    %v7017 = vadd.f32 0.0, %v7016
    %v7018 = vpop.f32.mrb[0].mxu0
    %7019 = vmatprep.mubr.f32.mxu0 %v6678
    %7020 = vmatmul.mubr.f32.gmra.mrb[0].mxu0 %v6481
    %v7021 = vpop.f32.mrb[0].mxu0
    %v7022 = vadd.f32 0.0, %v7021
    %v7023 = vpop.f32.mrb[0].mxu0
    %7024 = vmatprep.mubr.f32.mxu0 %v6681
    %7025 = vmatmul.mubr.f32.gmra.mrb[0].mxu0 %v6483
    %v7026 = vpop.f32.mrb[0].mxu0
    %v7027 = vadd.f32 0.0, %v7026
    %v7028 = vpop.f32.mrb[0].mxu0
    %7029 = vmatprep.mubr.f32.mxu0 %v6684
    %7030 = vmatmul.mubr.f32.gmra.mrb[0].mxu0 %v6485
    %v7031 = vpop.f32.mrb[0].mxu0
    %v7032 = vadd.f32 0.0, %v7031
    %v7033 = vpop.f32.mrb[0].mxu0
    %7034 = vmatprep.mubr.f32.mxu0 %v6687
    %7035 = vmatmul.mubr.f32.gmra.mrb[0].mxu0 %v6487
    %v7036 = vpop.f32.mrb[0].mxu0
    %v7037 = vadd.f32 0.0, %v7036
    %v7038 = vpop.f32.mrb[0].mxu0
    %7039 = vmatprep.mubr.f32.mxu0 %v6690
    %7040 = vmatmul.mubr.f32.gmra.mrb[0].mxu0 %v6489
    %v7041 = vpop.f32.mrb[0].mxu0
    %v7042 = vadd.f32 0.0, %v7041
    %v7043 = vpop.f32.mrb[0].mxu0
    %7044 = vmatprep.mubr.f32.mxu0 %v6693
    %7045 = vmatmul.mubr.f32.gmra.mrb[0].mxu0 %v6491
    %v7046 = vpop.f32.mrb[0].mxu0
    %v7047 = vadd.f32 0.0, %v7046
    %v7048 = vpop.f32.mrb[0].mxu0
    %7049 = vmatprep.mubr.f32.mxu0 %v6696
    %7050 = vmatmul.mubr.f32.gmra.mrb[0].mxu0 %v6493
    %v7051 = vpop.f32.mrb[0].mxu0
    %v7052 = vadd.f32 0.0, %v7051
    %v7053 = vpop.f32.mrb[0].mxu0
    %7054 = vmatprep.mubr.f32.mxu0 %v6699
    %7055 = vmatmul.mubr.f32.gmra.mrb[0].mxu0 %v6495
    %v7056 = vpop.f32.mrb[0].mxu0
    %v7057 = vadd.f32 0.0, %v7056
    %v7058 = vpop.f32.mrb[0].mxu0
    %7059 = vmatprep.mubr.f32.mxu0 %v6702
    %7060 = vmatmul.mubr.f32.gmra.mrb[0].mxu0 %v6497
    %v7061 = vpop.f32.mrb[0].mxu0
    %v7062 = vadd.f32 0.0, %v7061
    %v7063 = vpop.f32.mrb[0].mxu0
    %7064 = vmatprep.mubr.f32.mxu0 %v6705
    %7065 = vmatmul.mubr.f32.gmra.mrb[0].mxu0 %v6499
    %v7066 = vpop.f32.mrb[0].mxu0
    %v7067 = vadd.f32 0.0, %v7066
    %v7068 = vpop.f32.mrb[0].mxu0
    %7069 = vmatprep.mubr.f32.mxu0 %v6708
    %7070 = vmatmul.mubr.f32.gmra.mrb[0].mxu0 %v6501
    %v7071 = vpop.f32.mrb[0].mxu0
    %v7072 = vadd.f32 0.0, %v7071
    %v7073 = vpop.f32.mrb[0].mxu0
    %7074 = vmatprep.mubr.f32.mxu0 %v6711
    %7075 = vmatmul.mubr.f32.gmra.mrb[0].mxu0 %v6503
    %v7076 = vpop.f32.mrb[0].mxu0
    %v7077 = vadd.f32 0.0, %v7076
    %v7078 = vpop.f32.mrb[0].mxu0
    %7079 = vmatprep.mubr.f32.mxu0 %v6714
    %7080 = vmatmul.mubr.f32.gmra.mrb[0].mxu0 %v6505
    %v7081 = vpop.f32.mrb[0].mxu0
    %v7082 = vadd.f32 0.0, %v7081
    %v7083 = vpop.f32.mrb[0].mxu0
    %7084 = vmatprep.mubr.f32.mxu0 %v6717
    %7085 = vmatmul.mubr.f32.gmra.mrb[0].mxu0 %v6507
    %v7086 = vpop.f32.mrb[0].mxu0
    %v7087 = vadd.f32 0.0, %v7086
    %v7088 = vpop.f32.mrb[0].mxu0
    %7089 = vmatprep.mubr.f32.mxu0 %v6720
    %7090 = vmatmul.mubr.f32.gmra.mrb[0].mxu0 %v6509
    %v7091 = vpop.f32.mrb[0].mxu0
    %v7092 = vadd.f32 0.0, %v7091
    %v7093 = vpop.f32.mrb[0].mxu0
    %7094 = vmatprep.mubr.f32.mxu0 %v6723
    %7095 = vmatmul.mubr.f32.gmra.mrb[0].mxu0 %v6511
    %v7096 = vpop.f32.mrb[0].mxu0
    %v7097 = vadd.f32 0.0, %v7096
    %v7098 = vpop.f32.mrb[0].mxu0
    %7099 = vmatprep.mubr.f32.mxu0 %v6726
    %7100 = vmatmul.mubr.f32.gmra.mrb[0].mxu0 %v6513
    %v7101 = vpop.f32.mrb[0].mxu0
    %v7102 = vadd.f32 0.0, %v7101
    %v7103 = vpop.f32.mrb[0].mxu0
    %7104 = vmatprep.mubr.f32.mxu0 %v6729
    %7105 = vmatmul.mubr.f32.gmra.mrb[0].mxu0 %v6515
    %v7106 = vpop.f32.mrb[0].mxu0
    %v7107 = vadd.f32 0.0, %v7106
    %v7108 = vpop.f32.mrb[0].mxu0
    %7109 = vmatprep.mubr.f32.mxu0 %v6732
    %7110 = vmatmul.mubr.f32.gmra.mrb[0].mxu0 %v6517
    %v7111 = vpop.f32.mrb[0].mxu0
    %v7112 = vadd.f32 0.0, %v7111
    %v7113 = vpop.f32.mrb[0].mxu0
    %7114 = vmatprep.mubr.f32.mxu0 %v6735
    %7115 = vmatmul.mubr.f32.gmra.mrb[0].mxu0 %v6519
    %v7116 = vpop.f32.mrb[0].mxu0
    %v7117 = vadd.f32 0.0, %v7116
    %v7118 = vpop.f32.mrb[0].mxu0
    %7119 = vmatprep.mubr.f32.mxu0 %v6738
    %7120 = vmatmul.mubr.f32.gmra.mrb[0].mxu0 %v6521
    %v7121 = vpop.f32.mrb[0].mxu0
    %v7122 = vadd.f32 0.0, %v7121
    %v7123 = vpop.f32.mrb[0].mxu0
    %7124 = vdwg.mxu0
    %v7126 = vsel %vm59, %v6244, 0
    %v7129 = vsel %vm59, %v6246, 0
    %v7132 = vsel %vm59, %v6248, 0
    %v7135 = vsel %vm59, %v6250, 0
    %v7138 = vsel %vm59, %v6252, 0
    %v7141 = vsel %vm59, %v6254, 0
    %v7144 = vsel %vm59, %v6256, 0
    %v7147 = vsel %vm59, %v6258, 0
    %v7150 = vsel %vm59, %v6260, 0
    %v7153 = vsel %vm59, %v6262, 0
    %v7156 = vsel %vm59, %v6264, 0
    %v7159 = vsel %vm59, %v6266, 0
    %v7162 = vsel %vm59, %v6268, 0
    %v7165 = vsel %vm59, %v6270, 0
    %v7168 = vsel %vm59, %v6272, 0
    %v7171 = vsel %vm59, %v6274, 0
    %v7174 = vsel %vm59, %v6276, 0
    %v7177 = vsel %vm59, %v6278, 0
    %v7180 = vsel %vm59, %v6280, 0
    %v7183 = vsel %vm59, %v6282, 0
    %v7186 = vsel %vm59, %v6284, 0
    %v7189 = vsel %vm59, %v6286, 0
    %v7192 = vsel %vm59, %v6288, 0
    %v7195 = vsel %vm59, %v6290, 0
    %v7198 = vsel %vm59, %v6292, 0
    %v7201 = vsel %vm59, %v6294, 0
    %v7204 = vsel %vm59, %v6296, 0
    %v7207 = vsel %vm59, %v6298, 0
    %v7210 = vsel %vm59, %v6300, 0
    %v7213 = vsel %vm59, %v6302, 0
    %v7216 = vsel %vm59, %v6304, 0
    %v7219 = vsel %vm59, %v6306, 0
    %v7222 = vsel %vm59, %v6308, 0
    %v7225 = vsel %vm59, %v6310, 0
    %v7228 = vsel %vm59, %v6312, 0
    %v7231 = vsel %vm59, %v6314, 0
    %v7234 = vsel %vm59, %v6316, 0
    %v7237 = vsel %vm59, %v6318, 0
    %v7240 = vsel %vm59, %v6320, 0
    %v7243 = vsel %vm59, %v6322, 0
    %v7246 = vsel %vm59, %v6324, 0
    %v7249 = vsel %vm59, %v6326, 0
    %v7252 = vsel %vm59, %v6328, 0
    %v7255 = vsel %vm59, %v6330, 0
    %v7258 = vsel %vm59, %v6332, 0
    %v7261 = vsel %vm59, %v6334, 0
    %v7264 = vsel %vm59, %v6336, 0
    %v7267 = vsel %vm59, %v6338, 0
    %v7270 = vsel %vm59, %v6340, 0
    %v7273 = vsel %vm59, %v6342, 0
    %v7276 = vsel %vm59, %v6344, 0
    %v7279 = vsel %vm59, %v6346, 0
    %v7282 = vsel %vm59, %v6348, 0
    %v7285 = vsel %vm59, %v6350, 0
    %v7288 = vsel %vm59, %v6352, 0
    %v7291 = vsel %vm59, %v6354, 0
    %v7294 = vsel %vm59, %v6356, 0
    %v7297 = vsel %vm59, %v6358, 0
    %v7300 = vsel %vm59, %v6360, 0
    %v7303 = vsel %vm59, %v6362, 0
    %v7306 = vsel %vm59, %v6364, 0
    %v7309 = vsel %vm59, %v6366, 0
    %v7312 = vsel %vm59, %v6368, 0
    %v7315 = vsel %vm59, %v6370, 0
    %7317 = vmatprep.subr.mxu0 0.0
    %7318 = vmatpush1.msra.mxu0 %v6371
    %7319 = vmatprep.subr.mxu0 0.0
    %7320 = vmatpush1.msra.mxu0 %v6372
    %7321 = vmatprep.subr.mxu0 0.0
    %7322 = vmatpush1.msra.mxu0 %v6373
    %7323 = vmatprep.subr.mxu0 0.0
    %7324 = vmatpush1.msra.mxu0 %v6374
    %7325 = vmatprep.subr.mxu0 0.0
    %7326 = vmatpush1.msra.mxu0 %v6375
    %7327 = vmatprep.subr.mxu0 0.0
    %7328 = vmatpush1.msra.mxu0 %v6376
    %7329 = vmatprep.subr.mxu0 0.0
    %7330 = vmatpush1.msra.mxu0 %v6377
    %7331 = vmatprep.subr.mxu0 0.0
    %7332 = vmatpush1.msra.mxu0 %v6378
    %7333 = vmatprep.subr.mxu0 0.0
    %7334 = vmatpush1.msra.mxu0 %v6379
    %7335 = vmatprep.subr.mxu0 0.0
    %7336 = vmatpush1.msra.mxu0 %v6380
    %7337 = vmatprep.subr.mxu0 0.0
    %7338 = vmatpush1.msra.mxu0 %v6381
    %7339 = vmatprep.subr.mxu0 0.0
    %7340 = vmatpush1.msra.mxu0 %v6382
    %7341 = vmatprep.subr.mxu0 0.0
    %7342 = vmatpush1.msra.mxu0 %v6383
    %7343 = vmatprep.subr.mxu0 0.0
    %7344 = vmatpush1.msra.mxu0 %v6384
    %7345 = vmatprep.subr.mxu0 0.0
    %7346 = vmatpush1.msra.mxu0 %v6385
    %7347 = vmatprep.subr.mxu0 0.0
    %7348 = vmatpush1.msra.mxu0 %v6386
    %7349 = vmatprep.subr.mxu0 0.0
    %7350 = vmatpush1.msra.mxu0 %v6387
    %7351 = vmatprep.subr.mxu0 0.0
    %7352 = vmatpush1.msra.mxu0 %v6388
    %7353 = vmatprep.subr.mxu0 0.0
    %7354 = vmatpush1.msra.mxu0 %v6389
    %7355 = vmatprep.subr.mxu0 0.0
    %7356 = vmatpush1.msra.mxu0 %v6390
    %7357 = vmatprep.subr.mxu0 0.0
    %7358 = vmatpush1.msra.mxu0 %v6391
    %7359 = vmatprep.subr.mxu0 0.0
    %7360 = vmatpush1.msra.mxu0 %v6392
    %7361 = vmatprep.subr.mxu0 0.0
    %7362 = vmatpush1.msra.mxu0 %v6393
    %7363 = vmatprep.subr.mxu0 0.0
    %7364 = vmatpush1.msra.mxu0 %v6394
    %7365 = vmatprep.subr.mxu0 0.0
    %7366 = vmatpush1.msra.mxu0 0.0
    %7367 = vmatprep.subr.mxu0 0.0
    %7368 = vmatpush1.msra.mxu0 0.0
    %7369 = vmatprep.subr.mxu0 0.0
    %7370 = vmatpush1.msra.mxu0 0.0
    %7371 = vmatprep.subr.mxu0 0.0
    %7372 = vmatpush1.msra.mxu0 0.0
    %7373 = vmatprep.subr.mxu0 0.0
    %7374 = vmatpush1.msra.mxu0 0.0
    %7375 = vmatprep.subr.mxu0 0.0
    %7376 = vmatpush1.msra.mxu0 0.0
    %7377 = vmatprep.subr.mxu0 0.0
    %7378 = vmatpush1.msra.mxu0 0.0
    %7379 = vmatprep.subr.mxu0 0.0
    %7380 = vmatpush1.msra.mxu0 0.0
    %7381 = vmatprep.mubr.f32.mxu0 %v7126
    %7382 = vmatmul.mubr.f32.gmra.mrb[0].mxu0 %v6243
    %v7383 = vpop.f32.mrb[0].mxu0
    %v7384 = vadd.f32 %v6807, %v7383
    %v7385 = vpop.f32.mrb[0].mxu0
    %7386 = vmatprep.mubr.f32.mxu0 %v7129
    %7387 = vmatmul.mubr.f32.gmra.mrb[0].mxu0 %v6245
    %v7388 = vpop.f32.mrb[0].mxu0
    %v7389 = vadd.f32 %v6812, %v7388
    %v7390 = vpop.f32.mrb[0].mxu0
    %7391 = vmatprep.mubr.f32.mxu0 %v7132
    %7392 = vmatmul.mubr.f32.gmra.mrb[0].mxu0 %v6247
    %v7393 = vpop.f32.mrb[0].mxu0
    %v7394 = vadd.f32 %v6817, %v7393
    %v7395 = vpop.f32.mrb[0].mxu0
    %7396 = vmatprep.mubr.f32.mxu0 %v7135
    %7397 = vmatmul.mubr.f32.gmra.mrb[0].mxu0 %v6249
    %v7398 = vpop.f32.mrb[0].mxu0
    %v7399 = vadd.f32 %v6822, %v7398
    %v7400 = vpop.f32.mrb[0].mxu0
    %7401 = vmatprep.mubr.f32.mxu0 %v7138
    %7402 = vmatmul.mubr.f32.gmra.mrb[0].mxu0 %v6251
    %v7403 = vpop.f32.mrb[0].mxu0
    %v7404 = vadd.f32 %v6827, %v7403
    %v7405 = vpop.f32.mrb[0].mxu0
    %7406 = vmatprep.mubr.f32.mxu0 %v7141
    %7407 = vmatmul.mubr.f32.gmra.mrb[0].mxu0 %v6253
    %v7408 = vpop.f32.mrb[0].mxu0
    %v7409 = vadd.f32 %v6832, %v7408
    %v7410 = vpop.f32.mrb[0].mxu0
    %7411 = vmatprep.mubr.f32.mxu0 %v7144
    %7412 = vmatmul.mubr.f32.gmra.mrb[0].mxu0 %v6255
    %v7413 = vpop.f32.mrb[0].mxu0
    %v7414 = vadd.f32 %v6837, %v7413
    %v7415 = vpop.f32.mrb[0].mxu0
    %7416 = vmatprep.mubr.f32.mxu0 %v7147
    %7417 = vmatmul.mubr.f32.gmra.mrb[0].mxu0 %v6257
    %v7418 = vpop.f32.mrb[0].mxu0
    %v7419 = vadd.f32 %v6842, %v7418
    %v7420 = vpop.f32.mrb[0].mxu0
    %7421 = vmatprep.mubr.f32.mxu0 %v7150
    %7422 = vmatmul.mubr.f32.gmra.mrb[0].mxu0 %v6259
    %v7423 = vpop.f32.mrb[0].mxu0
    %v7424 = vadd.f32 %v6847, %v7423
    %v7425 = vpop.f32.mrb[0].mxu0
    %7426 = vmatprep.mubr.f32.mxu0 %v7153
    %7427 = vmatmul.mubr.f32.gmra.mrb[0].mxu0 %v6261
    %v7428 = vpop.f32.mrb[0].mxu0
    %v7429 = vadd.f32 %v6852, %v7428
    %v7430 = vpop.f32.mrb[0].mxu0
    %7431 = vmatprep.mubr.f32.mxu0 %v7156
    %7432 = vmatmul.mubr.f32.gmra.mrb[0].mxu0 %v6263
    %v7433 = vpop.f32.mrb[0].mxu0
    %v7434 = vadd.f32 %v6857, %v7433
    %v7435 = vpop.f32.mrb[0].mxu0
    %7436 = vmatprep.mubr.f32.mxu0 %v7159
    %7437 = vmatmul.mubr.f32.gmra.mrb[0].mxu0 %v6265
    %v7438 = vpop.f32.mrb[0].mxu0
    %v7439 = vadd.f32 %v6862, %v7438
    %v7440 = vpop.f32.mrb[0].mxu0
    %7441 = vmatprep.mubr.f32.mxu0 %v7162
    %7442 = vmatmul.mubr.f32.gmra.mrb[0].mxu0 %v6267
    %v7443 = vpop.f32.mrb[0].mxu0
    %v7444 = vadd.f32 %v6867, %v7443
    %v7445 = vpop.f32.mrb[0].mxu0
    %7446 = vmatprep.mubr.f32.mxu0 %v7165
    %7447 = vmatmul.mubr.f32.gmra.mrb[0].mxu0 %v6269
    %v7448 = vpop.f32.mrb[0].mxu0
    %v7449 = vadd.f32 %v6872, %v7448
    %v7450 = vpop.f32.mrb[0].mxu0
    %7451 = vmatprep.mubr.f32.mxu0 %v7168
    %7452 = vmatmul.mubr.f32.gmra.mrb[0].mxu0 %v6271
    %v7453 = vpop.f32.mrb[0].mxu0
    %v7454 = vadd.f32 %v6877, %v7453
    %v7455 = vpop.f32.mrb[0].mxu0
    %7456 = vmatprep.mubr.f32.mxu0 %v7171
    %7457 = vmatmul.mubr.f32.gmra.mrb[0].mxu0 %v6273
    %v7458 = vpop.f32.mrb[0].mxu0
    %v7459 = vadd.f32 %v6882, %v7458
    %v7460 = vpop.f32.mrb[0].mxu0
    %7461 = vmatprep.mubr.f32.mxu0 %v7174
    %7462 = vmatmul.mubr.f32.gmra.mrb[0].mxu0 %v6275
    %v7463 = vpop.f32.mrb[0].mxu0
    %v7464 = vadd.f32 %v6887, %v7463
    %v7465 = vpop.f32.mrb[0].mxu0
    %7466 = vmatprep.mubr.f32.mxu0 %v7177
    %7467 = vmatmul.mubr.f32.gmra.mrb[0].mxu0 %v6277
    %v7468 = vpop.f32.mrb[0].mxu0
    %v7469 = vadd.f32 %v6892, %v7468
    %v7470 = vpop.f32.mrb[0].mxu0
    %7471 = vmatprep.mubr.f32.mxu0 %v7180
    %7472 = vmatmul.mubr.f32.gmra.mrb[0].mxu0 %v6279
    %v7473 = vpop.f32.mrb[0].mxu0
    %v7474 = vadd.f32 %v6897, %v7473
    %v7475 = vpop.f32.mrb[0].mxu0
    %7476 = vmatprep.mubr.f32.mxu0 %v7183
    %7477 = vmatmul.mubr.f32.gmra.mrb[0].mxu0 %v6281
    %v7478 = vpop.f32.mrb[0].mxu0
    %v7479 = vadd.f32 %v6902, %v7478
    %v7480 = vpop.f32.mrb[0].mxu0
    %7481 = vmatprep.mubr.f32.mxu0 %v7186
    %7482 = vmatmul.mubr.f32.gmra.mrb[0].mxu0 %v6283
    %v7483 = vpop.f32.mrb[0].mxu0
    %v7484 = vadd.f32 %v6907, %v7483
    %v7485 = vpop.f32.mrb[0].mxu0
    %7486 = vmatprep.mubr.f32.mxu0 %v7189
    %7487 = vmatmul.mubr.f32.gmra.mrb[0].mxu0 %v6285
    %v7488 = vpop.f32.mrb[0].mxu0
    %v7489 = vadd.f32 %v6912, %v7488
    %v7490 = vpop.f32.mrb[0].mxu0
    %7491 = vmatprep.mubr.f32.mxu0 %v7192
    %7492 = vmatmul.mubr.f32.gmra.mrb[0].mxu0 %v6287
    %v7493 = vpop.f32.mrb[0].mxu0
    %v7494 = vadd.f32 %v6917, %v7493
    %v7495 = vpop.f32.mrb[0].mxu0
    %7496 = vmatprep.mubr.f32.mxu0 %v7195
    %7497 = vmatmul.mubr.f32.gmra.mrb[0].mxu0 %v6289
    %v7498 = vpop.f32.mrb[0].mxu0
    %v7499 = vadd.f32 %v6922, %v7498
    %v7500 = vpop.f32.mrb[0].mxu0
    %7501 = vmatprep.mubr.f32.mxu0 %v7198
    %7502 = vmatmul.mubr.f32.gmra.mrb[0].mxu0 %v6291
    %v7503 = vpop.f32.mrb[0].mxu0
    %v7504 = vadd.f32 %v6927, %v7503
    %v7505 = vpop.f32.mrb[0].mxu0
    %7506 = vmatprep.mubr.f32.mxu0 %v7201
    %7507 = vmatmul.mubr.f32.gmra.mrb[0].mxu0 %v6293
    %v7508 = vpop.f32.mrb[0].mxu0
    %v7509 = vadd.f32 %v6932, %v7508
    %v7510 = vpop.f32.mrb[0].mxu0
    %7511 = vmatprep.mubr.f32.mxu0 %v7204
    %7512 = vmatmul.mubr.f32.gmra.mrb[0].mxu0 %v6295
    %v7513 = vpop.f32.mrb[0].mxu0
    %v7514 = vadd.f32 %v6937, %v7513
    %v7515 = vpop.f32.mrb[0].mxu0
    %7516 = vmatprep.mubr.f32.mxu0 %v7207
    %7517 = vmatmul.mubr.f32.gmra.mrb[0].mxu0 %v6297
    %v7518 = vpop.f32.mrb[0].mxu0
    %v7519 = vadd.f32 %v6942, %v7518
    %v7520 = vpop.f32.mrb[0].mxu0
    %7521 = vmatprep.mubr.f32.mxu0 %v7210
    %7522 = vmatmul.mubr.f32.gmra.mrb[0].mxu0 %v6299
    %v7523 = vpop.f32.mrb[0].mxu0
    %v7524 = vadd.f32 %v6947, %v7523
    %v7525 = vpop.f32.mrb[0].mxu0
    %7526 = vmatprep.mubr.f32.mxu0 %v7213
    %7527 = vmatmul.mubr.f32.gmra.mrb[0].mxu0 %v6301
    %v7528 = vpop.f32.mrb[0].mxu0
    %v7529 = vadd.f32 %v6952, %v7528
    %v7530 = vpop.f32.mrb[0].mxu0
    %7531 = vmatprep.mubr.f32.mxu0 %v7216
    %7532 = vmatmul.mubr.f32.gmra.mrb[0].mxu0 %v6303
    %v7533 = vpop.f32.mrb[0].mxu0
    %v7534 = vadd.f32 %v6957, %v7533
    %v7535 = vpop.f32.mrb[0].mxu0
    %7536 = vmatprep.mubr.f32.mxu0 %v7219
    %7537 = vmatmul.mubr.f32.gmra.mrb[0].mxu0 %v6305
    %v7538 = vpop.f32.mrb[0].mxu0
    %v7539 = vadd.f32 %v6962, %v7538
    %v7540 = vpop.f32.mrb[0].mxu0
    %7541 = vmatprep.mubr.f32.mxu0 %v7222
    %7542 = vmatmul.mubr.f32.gmra.mrb[0].mxu0 %v6307
    %v7543 = vpop.f32.mrb[0].mxu0
    %v7544 = vadd.f32 %v6967, %v7543
    %v7545 = vpop.f32.mrb[0].mxu0
    %7546 = vmatprep.mubr.f32.mxu0 %v7225
    %7547 = vmatmul.mubr.f32.gmra.mrb[0].mxu0 %v6309
    %v7548 = vpop.f32.mrb[0].mxu0
    %v7549 = vadd.f32 %v6972, %v7548
    %v7550 = vpop.f32.mrb[0].mxu0
    %7551 = vmatprep.mubr.f32.mxu0 %v7228
    %7552 = vmatmul.mubr.f32.gmra.mrb[0].mxu0 %v6311
    %v7553 = vpop.f32.mrb[0].mxu0
    %v7554 = vadd.f32 %v6977, %v7553
    %v7555 = vpop.f32.mrb[0].mxu0
    %7556 = vmatprep.mubr.f32.mxu0 %v7231
    %7557 = vmatmul.mubr.f32.gmra.mrb[0].mxu0 %v6313
    %v7558 = vpop.f32.mrb[0].mxu0
    %v7559 = vadd.f32 %v6982, %v7558
    %v7560 = vpop.f32.mrb[0].mxu0
    %7561 = vmatprep.mubr.f32.mxu0 %v7234
    %7562 = vmatmul.mubr.f32.gmra.mrb[0].mxu0 %v6315
    %v7563 = vpop.f32.mrb[0].mxu0
    %v7564 = vadd.f32 %v6987, %v7563
    %v7565 = vpop.f32.mrb[0].mxu0
    %7566 = vmatprep.mubr.f32.mxu0 %v7237
    %7567 = vmatmul.mubr.f32.gmra.mrb[0].mxu0 %v6317
    %v7568 = vpop.f32.mrb[0].mxu0
    %v7569 = vadd.f32 %v6992, %v7568
    %v7570 = vpop.f32.mrb[0].mxu0
    %7571 = vmatprep.mubr.f32.mxu0 %v7240
    %7572 = vmatmul.mubr.f32.gmra.mrb[0].mxu0 %v6319
    %v7573 = vpop.f32.mrb[0].mxu0
    %v7574 = vadd.f32 %v6997, %v7573
    %v7575 = vpop.f32.mrb[0].mxu0
    %7576 = vmatprep.mubr.f32.mxu0 %v7243
    %7577 = vmatmul.mubr.f32.gmra.mrb[0].mxu0 %v6321
    %v7578 = vpop.f32.mrb[0].mxu0
    %v7579 = vadd.f32 %v7002, %v7578
    %v7580 = vpop.f32.mrb[0].mxu0
    %7581 = vmatprep.mubr.f32.mxu0 %v7246
    %7582 = vmatmul.mubr.f32.gmra.mrb[0].mxu0 %v6323
    %v7583 = vpop.f32.mrb[0].mxu0
    %v7584 = vadd.f32 %v7007, %v7583
    %v7585 = vpop.f32.mrb[0].mxu0
    %7586 = vmatprep.mubr.f32.mxu0 %v7249
    %7587 = vmatmul.mubr.f32.gmra.mrb[0].mxu0 %v6325
    %v7588 = vpop.f32.mrb[0].mxu0
    %v7589 = vadd.f32 %v7012, %v7588
    %v7590 = vpop.f32.mrb[0].mxu0
    %7591 = vmatprep.mubr.f32.mxu0 %v7252
    %7592 = vmatmul.mubr.f32.gmra.mrb[0].mxu0 %v6327
    %v7593 = vpop.f32.mrb[0].mxu0
    %v7594 = vadd.f32 %v7017, %v7593
    %v7595 = vpop.f32.mrb[0].mxu0
    %7596 = vmatprep.mubr.f32.mxu0 %v7255
    %7597 = vmatmul.mubr.f32.gmra.mrb[0].mxu0 %v6329
    %v7598 = vpop.f32.mrb[0].mxu0
    %v7599 = vadd.f32 %v7022, %v7598
    %v7600 = vpop.f32.mrb[0].mxu0
    %7601 = vmatprep.mubr.f32.mxu0 %v7258
    %7602 = vmatmul.mubr.f32.gmra.mrb[0].mxu0 %v6331
    %v7603 = vpop.f32.mrb[0].mxu0
    %v7604 = vadd.f32 %v7027, %v7603
    %v7605 = vpop.f32.mrb[0].mxu0
    %7606 = vmatprep.mubr.f32.mxu0 %v7261
    %7607 = vmatmul.mubr.f32.gmra.mrb[0].mxu0 %v6333
    %v7608 = vpop.f32.mrb[0].mxu0
    %v7609 = vadd.f32 %v7032, %v7608
    %v7610 = vpop.f32.mrb[0].mxu0
    %7611 = vmatprep.mubr.f32.mxu0 %v7264
    %7612 = vmatmul.mubr.f32.gmra.mrb[0].mxu0 %v6335
    %v7613 = vpop.f32.mrb[0].mxu0
    %v7614 = vadd.f32 %v7037, %v7613
    %v7615 = vpop.f32.mrb[0].mxu0
    %7616 = vmatprep.mubr.f32.mxu0 %v7267
    %7617 = vmatmul.mubr.f32.gmra.mrb[0].mxu0 %v6337
    %v7618 = vpop.f32.mrb[0].mxu0
    %v7619 = vadd.f32 %v7042, %v7618
    %v7620 = vpop.f32.mrb[0].mxu0
    %7621 = vmatprep.mubr.f32.mxu0 %v7270
    %7622 = vmatmul.mubr.f32.gmra.mrb[0].mxu0 %v6339
    %v7623 = vpop.f32.mrb[0].mxu0
    %v7624 = vadd.f32 %v7047, %v7623
    %v7625 = vpop.f32.mrb[0].mxu0
    %7626 = vmatprep.mubr.f32.mxu0 %v7273
    %7627 = vmatmul.mubr.f32.gmra.mrb[0].mxu0 %v6341
    %v7628 = vpop.f32.mrb[0].mxu0
    %v7629 = vadd.f32 %v7052, %v7628
    %v7630 = vpop.f32.mrb[0].mxu0
    %7631 = vmatprep.mubr.f32.mxu0 %v7276
    %7632 = vmatmul.mubr.f32.gmra.mrb[0].mxu0 %v6343
    %v7633 = vpop.f32.mrb[0].mxu0
    %v7634 = vadd.f32 %v7057, %v7633
    %v7635 = vpop.f32.mrb[0].mxu0
    %7636 = vmatprep.mubr.f32.mxu0 %v7279
    %7637 = vmatmul.mubr.f32.gmra.mrb[0].mxu0 %v6345
    %v7638 = vpop.f32.mrb[0].mxu0
    %v7639 = vadd.f32 %v7062, %v7638
    %v7640 = vpop.f32.mrb[0].mxu0
    %7641 = vmatprep.mubr.f32.mxu0 %v7282
    %7642 = vmatmul.mubr.f32.gmra.mrb[0].mxu0 %v6347
    %v7643 = vpop.f32.mrb[0].mxu0
    %v7644 = vadd.f32 %v7067, %v7643
    %v7645 = vpop.f32.mrb[0].mxu0
    %7646 = vmatprep.mubr.f32.mxu0 %v7285
    %7647 = vmatmul.mubr.f32.gmra.mrb[0].mxu0 %v6349
    %v7648 = vpop.f32.mrb[0].mxu0
    %v7649 = vadd.f32 %v7072, %v7648
    %v7650 = vpop.f32.mrb[0].mxu0
    %7651 = vmatprep.mubr.f32.mxu0 %v7288
    %7652 = vmatmul.mubr.f32.gmra.mrb[0].mxu0 %v6351
    %v7653 = vpop.f32.mrb[0].mxu0
    %v7654 = vadd.f32 %v7077, %v7653
    %v7655 = vpop.f32.mrb[0].mxu0
    %7656 = vmatprep.mubr.f32.mxu0 %v7291
    %7657 = vmatmul.mubr.f32.gmra.mrb[0].mxu0 %v6353
    %v7658 = vpop.f32.mrb[0].mxu0
    %v7659 = vadd.f32 %v7082, %v7658
    %v7660 = vpop.f32.mrb[0].mxu0
    %7661 = vmatprep.mubr.f32.mxu0 %v7294
    %7662 = vmatmul.mubr.f32.gmra.mrb[0].mxu0 %v6355
    %v7663 = vpop.f32.mrb[0].mxu0
    %v7664 = vadd.f32 %v7087, %v7663
    %v7665 = vpop.f32.mrb[0].mxu0
    %7666 = vmatprep.mubr.f32.mxu0 %v7297
    %7667 = vmatmul.mubr.f32.gmra.mrb[0].mxu0 %v6357
    %v7668 = vpop.f32.mrb[0].mxu0
    %v7669 = vadd.f32 %v7092, %v7668
    %v7670 = vpop.f32.mrb[0].mxu0
    %7671 = vmatprep.mubr.f32.mxu0 %v7300
    %7672 = vmatmul.mubr.f32.gmra.mrb[0].mxu0 %v6359
    %v7673 = vpop.f32.mrb[0].mxu0
    %v7674 = vadd.f32 %v7097, %v7673
    %v7675 = vpop.f32.mrb[0].mxu0
    %7676 = vmatprep.mubr.f32.mxu0 %v7303
    %7677 = vmatmul.mubr.f32.gmra.mrb[0].mxu0 %v6361
    %v7678 = vpop.f32.mrb[0].mxu0
    %v7679 = vadd.f32 %v7102, %v7678
    %v7680 = vpop.f32.mrb[0].mxu0
    %7681 = vmatprep.mubr.f32.mxu0 %v7306
    %7682 = vmatmul.mubr.f32.gmra.mrb[0].mxu0 %v6363
    %v7683 = vpop.f32.mrb[0].mxu0
    %v7684 = vadd.f32 %v7107, %v7683
    %v7685 = vpop.f32.mrb[0].mxu0
    %7686 = vmatprep.mubr.f32.mxu0 %v7309
    %7687 = vmatmul.mubr.f32.gmra.mrb[0].mxu0 %v6365
    %v7688 = vpop.f32.mrb[0].mxu0
    %v7689 = vadd.f32 %v7112, %v7688
    %v7690 = vpop.f32.mrb[0].mxu0
    %7691 = vmatprep.mubr.f32.mxu0 %v7312
    %7692 = vmatmul.mubr.f32.gmra.mrb[0].mxu0 %v6367
    %v7693 = vpop.f32.mrb[0].mxu0
    %v7694 = vadd.f32 %v7117, %v7693
    %v7695 = vpop.f32.mrb[0].mxu0
    %7696 = vmatprep.mubr.f32.mxu0 %v7315
    %7697 = vmatmul.mubr.f32.gmra.mrb[0].mxu0 %v6369
    %v7698 = vpop.f32.mrb[0].mxu0
    %v7699 = vadd.f32 %v7122, %v7698
    %v7700 = vpop.f32.mrb[0].mxu0
    %7701 = vdwg.mxu0
    %v7702 = vld [vmem:[%s3505] sm:$0xff]
    %v7703 = vld [vmem:[%s3505 + $0x8] sm:$0xff]
    %v7704 = vld [vmem:[%s3505 + $0x10] sm:$0xff]
    %v7705 = vld [vmem:[%s3505 + $0x18] sm:$0xff]
    %v7706 = vld [vmem:[%s3505 + $0x20] sm:$0xff]
    %v7707 = vld [vmem:[%s3505 + $0x28] sm:$0xff]
    %v7708 = vld [vmem:[%s3505 + $0x30] sm:$0xff]
    %v7709 = vld [vmem:[%s3505 + $0x38] sm:$0xff]
    %v7710 = vld [vmem:[%s3505 + $0x40] sm:$0xff]
    %v7711 = vld [vmem:[%s3505 + $0x48] sm:$0xff]
    %v7712 = vld [vmem:[%s3505 + $0x50] sm:$0xff]
    %v7713 = vld [vmem:[%s3505 + $0x58] sm:$0xff]
    %v7714 = vld [vmem:[%s3505 + $0x60] sm:$0xff]
    %v7715 = vld [vmem:[%s3505 + $0x68] sm:$0xff]
    %v7716 = vld [vmem:[%s3505 + $0x70] sm:$0xff]
    %v7717 = vld [vmem:[%s3505 + $0x78] sm:$0xff]
    %v7718 = vld [vmem:[%s3505 + $0x80] sm:$0xff]
    %v7719 = vld [vmem:[%s3505 + $0x88] sm:$0xff]
    %v7720 = vld [vmem:[%s3505 + $0x90] sm:$0xff]
    %v7721 = vld [vmem:[%s3505 + $0x98] sm:$0xff]
    %v7722 = vld [vmem:[%s3505 + $0xa0] sm:$0xff]
    %v7723 = vld [vmem:[%s3505 + $0xa8] sm:$0xff]
    %v7724 = vld [vmem:[%s3505 + $0xb0] sm:$0xff]
    %v7725 = vld [vmem:[%s3505 + $0xb8] sm:$0xff]
    %v7726 = vld [vmem:[%s3505 + $0xc0] sm:$0xff]
    %v7727 = vld [vmem:[%s3505 + $0xc8] sm:$0xff]
    %v7728 = vld [vmem:[%s3505 + $0xd0] sm:$0xff]
    %v7729 = vld [vmem:[%s3505 + $0xd8] sm:$0xff]
    %v7730 = vld [vmem:[%s3505 + $0xe0] sm:$0xff]
    %v7731 = vld [vmem:[%s3505 + $0xe8] sm:$0xff]
    %v7732 = vld [vmem:[%s3505 + $0xf0] sm:$0xff]
    %v7733 = vld [vmem:[%s3505 + $0xf8] sm:$0xff]
    %v7734 = vld [vmem:[%s3505 + $0x100] sm:$0xff]
    %v7735 = vld [vmem:[%s3505 + $0x108] sm:$0xff]
    %v7736 = vld [vmem:[%s3505 + $0x110] sm:$0xff]
    %v7737 = vld [vmem:[%s3505 + $0x118] sm:$0xff]
    %v7738 = vld [vmem:[%s3505 + $0x120] sm:$0xff]
    %v7739 = vld [vmem:[%s3505 + $0x128] sm:$0xff]
    %v7740 = vld [vmem:[%s3505 + $0x130] sm:$0xff]
    %v7741 = vld [vmem:[%s3505 + $0x138] sm:$0xff]
    %v7742 = vld [vmem:[%s3505 + $0x140] sm:$0xff]
    %v7743 = vld [vmem:[%s3505 + $0x148] sm:$0xff]
    %v7744 = vld [vmem:[%s3505 + $0x150] sm:$0xff]
    %v7745 = vld [vmem:[%s3505 + $0x158] sm:$0xff]
    %v7746 = vld [vmem:[%s3505 + $0x160] sm:$0xff]
    %v7747 = vld [vmem:[%s3505 + $0x168] sm:$0xff]
    %v7748 = vld [vmem:[%s3505 + $0x170] sm:$0xff]
    %v7749 = vld [vmem:[%s3505 + $0x178] sm:$0xff]
    %v7750 = vld [vmem:[%s3505 + $0x180] sm:$0xff]
    %v7751 = vld [vmem:[%s3505 + $0x188] sm:$0xff]
    %v7752 = vld [vmem:[%s3505 + $0x190] sm:$0xff]
    %v7753 = vld [vmem:[%s3505 + $0x198] sm:$0xff]
    %v7754 = vld [vmem:[%s3505 + $0x1a0] sm:$0xff]
    %v7755 = vld [vmem:[%s3505 + $0x1a8] sm:$0xff]
    %v7756 = vld [vmem:[%s3505 + $0x1b0] sm:$0xff]
    %v7757 = vld [vmem:[%s3505 + $0x1b8] sm:$0xff]
    %v7758 = vld [vmem:[%s3505 + $0x1c0] sm:$0xff]
    %v7759 = vld [vmem:[%s3505 + $0x1c8] sm:$0xff]
    %v7760 = vld [vmem:[%s3505 + $0x1d0] sm:$0xff]
    %v7761 = vld [vmem:[%s3505 + $0x1d8] sm:$0xff]
    %v7762 = vld [vmem:[%s3505 + $0x1e0] sm:$0xff]
    %v7763 = vld [vmem:[%s3505 + $0x1e8] sm:$0xff]
    %v7764 = vld [vmem:[%s3505 + $0x1f0] sm:$0xff]
    %v7765 = vld [vmem:[%s3505 + $0x1f8] sm:$0xff]
    %v7766 = vld [vmem:[%s3505 + $0x240] sm:$0xff]
    %v7767 = vld [vmem:[%s3505 + $0x248] sm:$0xff]
    %v7768 = vld [vmem:[%s3505 + $0x250] sm:$0xff]
    %v7769 = vld [vmem:[%s3505 + $0x258] sm:$0xff]
    %v7770 = vld [vmem:[%s3505 + $0x260] sm:$0xff]
    %v7771 = vld [vmem:[%s3505 + $0x268] sm:$0xff]
    %v7772 = vld [vmem:[%s3505 + $0x270] sm:$0xff]
    %v7773 = vld [vmem:[%s3505 + $0x278] sm:$0xff]
    %v7774 = vld [vmem:[%s3505 + $0x280] sm:$0xff]
    %v7775 = vld [vmem:[%s3505 + $0x288] sm:$0xff]
    %v7776 = vld [vmem:[%s3505 + $0x290] sm:$0xff]
    %v7777 = vld [vmem:[%s3505 + $0x298] sm:$0xff]
    %v7778 = vld [vmem:[%s3505 + $0x2a0] sm:$0xff]
    %v7779 = vld [vmem:[%s3505 + $0x2a8] sm:$0xff]
    %v7780 = vld [vmem:[%s3505 + $0x2b0] sm:$0xff]
    %v7781 = vld [vmem:[%s3505 + $0x2b8] sm:$0xff]
    %v7782 = vld [vmem:[%s3505 + $0x2c0] sm:$0xff]
    %v7783 = vld [vmem:[%s3505 + $0x2c8] sm:$0xff]
    %v7784 = vld [vmem:[%s3505 + $0x2d0] sm:$0xff]
    %v7785 = vld [vmem:[%s3505 + $0x2d8] sm:$0xff]
    %v7786 = vld [vmem:[%s3505 + $0x2e0] sm:$0xff]
    %v7787 = vld [vmem:[%s3505 + $0x2e8] sm:$0xff]
    %v7788 = vld [vmem:[%s3505 + $0x2f0] sm:$0xff]
    %v7789 = vld [vmem:[%s3505 + $0x2f8] sm:$0xff]
    %v7790 = vld [vmem:[%s3505 + $0x300] sm:$0xff]
    %v7791 = vld [vmem:[%s3505 + $0x308] sm:$0xff]
    %v7792 = vld [vmem:[%s3505 + $0x310] sm:$0xff]
    %v7793 = vld [vmem:[%s3505 + $0x318] sm:$0xff]
    %v7794 = vld [vmem:[%s3505 + $0x320] sm:$0xff]
    %v7795 = vld [vmem:[%s3505 + $0x328] sm:$0xff]
    %v7796 = vld [vmem:[%s3505 + $0x330] sm:$0xff]
    %v7797 = vld [vmem:[%s3505 + $0x338] sm:$0xff]
    %v7798 = vld [vmem:[%s3505 + $0x340] sm:$0xff]
    %v7799 = vld [vmem:[%s3505 + $0x348] sm:$0xff]
    %v7800 = vld [vmem:[%s3505 + $0x350] sm:$0xff]
    %v7801 = vld [vmem:[%s3505 + $0x358] sm:$0xff]
    %v7802 = vld [vmem:[%s3505 + $0x360] sm:$0xff]
    %v7803 = vld [vmem:[%s3505 + $0x368] sm:$0xff]
    %v7804 = vld [vmem:[%s3505 + $0x370] sm:$0xff]
    %v7805 = vld [vmem:[%s3505 + $0x378] sm:$0xff]
    %v7806 = vld [vmem:[%s3505 + $0x380] sm:$0xff]
    %v7807 = vld [vmem:[%s3505 + $0x388] sm:$0xff]
    %v7808 = vld [vmem:[%s3505 + $0x390] sm:$0xff]
    %v7809 = vld [vmem:[%s3505 + $0x398] sm:$0xff]
    %v7810 = vld [vmem:[%s3505 + $0x3a0] sm:$0xff]
    %v7811 = vld [vmem:[%s3505 + $0x3a8] sm:$0xff]
    %v7812 = vld [vmem:[%s3505 + $0x3b0] sm:$0xff]
    %v7813 = vld [vmem:[%s3505 + $0x3b8] sm:$0xff]
    %v7814 = vld [vmem:[%s3505 + $0x3c0] sm:$0xff]
    %v7815 = vld [vmem:[%s3505 + $0x3c8] sm:$0xff]
    %v7816 = vld [vmem:[%s3505 + $0x3d0] sm:$0xff]
    %v7817 = vld [vmem:[%s3505 + $0x3d8] sm:$0xff]
    %v7818 = vld [vmem:[%s3505 + $0x3e0] sm:$0xff]
    %v7819 = vld [vmem:[%s3505 + $0x3e8] sm:$0xff]
    %v7820 = vld [vmem:[%s3505 + $0x3f0] sm:$0xff]
    %v7821 = vld [vmem:[%s3505 + $0x3f8] sm:$0xff]
    %v7822 = vld [vmem:[%s3505 + $0x400] sm:$0xff]
    %v7823 = vld [vmem:[%s3505 + $0x408] sm:$0xff]
    %v7824 = vld [vmem:[%s3505 + $0x410] sm:$0xff]
    %v7825 = vld [vmem:[%s3505 + $0x418] sm:$0xff]
    %v7826 = vld [vmem:[%s3505 + $0x420] sm:$0xff]
    %v7827 = vld [vmem:[%s3505 + $0x428] sm:$0xff]
    %v7828 = vld [vmem:[%s3505 + $0x430] sm:$0xff]
    %v7829 = vld [vmem:[%s3505 + $0x438] sm:$0xff]
    %s7830 = scalar_lea.vmem %s5, 384
    %v7831 = vld [vmem:[%s7830] sm:$0xff]
    %v7832 = vld [vmem:[%s7830 + $0x8] sm:$0xff]
    %v7833 = vld [vmem:[%s7830 + $0x10] sm:$0xff]
    %v7834 = vld [vmem:[%s7830 + $0x18] sm:$0xff]
    %v7835 = vld [vmem:[%s7830 + $0x20] sm:$0xff]
    %v7836 = vld [vmem:[%s7830 + $0x28] sm:$0xff]
    %v7837 = vld [vmem:[%s7830 + $0x30] sm:$0xff]
    %v7838 = vld [vmem:[%s7830 + $0x38] sm:$0xff]
    %v7839 = vld [vmem:[%s7830 + $0x40] sm:$0xff]
    %v7840 = vld [vmem:[%s7830 + $0x48] sm:$0xff]
    %v7841 = vld [vmem:[%s7830 + $0x50] sm:$0xff]
    %v7842 = vld [vmem:[%s7830 + $0x58] sm:$0xff]
    %v7843 = vld [vmem:[%s7830 + $0x60] sm:$0xff]
    %v7844 = vld [vmem:[%s7830 + $0x68] sm:$0xff]
    %v7845 = vld [vmem:[%s7830 + $0x70] sm:$0xff]
    %v7846 = vld [vmem:[%s7830 + $0x78] sm:$0xff]
    %v7847 = vld [vmem:[%s7830 + $0x80] sm:$0xff]
    %v7848 = vld [vmem:[%s7830 + $0x88] sm:$0xff]
    %v7849 = vld [vmem:[%s7830 + $0x90] sm:$0xff]
    %v7850 = vld [vmem:[%s7830 + $0x98] sm:$0xff]
    %v7851 = vld [vmem:[%s7830 + $0xa0] sm:$0xff]
    %v7852 = vld [vmem:[%s7830 + $0xa8] sm:$0xff]
    %v7853 = vld [vmem:[%s7830 + $0xb0] sm:$0xff]
    %v7854 = vld [vmem:[%s7830 + $0xb8] sm:$0xff]
    %v7856 = vsel %vm59, %v7703, 0
    %v7859 = vsel %vm59, %v7705, 0
    %v7862 = vsel %vm59, %v7707, 0
    %v7865 = vsel %vm59, %v7709, 0
    %v7868 = vsel %vm59, %v7711, 0
    %v7871 = vsel %vm59, %v7713, 0
    %v7874 = vsel %vm59, %v7715, 0
    %v7877 = vsel %vm59, %v7717, 0
    %v7880 = vsel %vm59, %v7719, 0
    %v7883 = vsel %vm59, %v7721, 0
    %v7886 = vsel %vm59, %v7723, 0
    %v7889 = vsel %vm59, %v7725, 0
    %v7892 = vsel %vm59, %v7727, 0
    %v7895 = vsel %vm59, %v7729, 0
    %v7898 = vsel %vm59, %v7731, 0
    %v7901 = vsel %vm59, %v7733, 0
    %v7904 = vsel %vm59, %v7735, 0
    %v7907 = vsel %vm59, %v7737, 0
    %v7910 = vsel %vm59, %v7739, 0
    %v7913 = vsel %vm59, %v7741, 0
    %v7916 = vsel %vm59, %v7743, 0
    %v7919 = vsel %vm59, %v7745, 0
    %v7922 = vsel %vm59, %v7747, 0
    %v7925 = vsel %vm59, %v7749, 0
    %v7928 = vsel %vm59, %v7751, 0
    %v7931 = vsel %vm59, %v7753, 0
    %v7934 = vsel %vm59, %v7755, 0
    %v7937 = vsel %vm59, %v7757, 0
    %v7940 = vsel %vm59, %v7759, 0
    %v7943 = vsel %vm59, %v7761, 0
    %v7946 = vsel %vm59, %v7763, 0
    %v7949 = vsel %vm59, %v7765, 0
    %v7952 = vsel %vm59, %v7767, 0
    %v7955 = vsel %vm59, %v7769, 0
    %v7958 = vsel %vm59, %v7771, 0
    %v7961 = vsel %vm59, %v7773, 0
    %v7964 = vsel %vm59, %v7775, 0
    %v7967 = vsel %vm59, %v7777, 0
    %v7970 = vsel %vm59, %v7779, 0
    %v7973 = vsel %vm59, %v7781, 0
    %v7976 = vsel %vm59, %v7783, 0
    %v7979 = vsel %vm59, %v7785, 0
    %v7982 = vsel %vm59, %v7787, 0
    %v7985 = vsel %vm59, %v7789, 0
    %v7988 = vsel %vm59, %v7791, 0
    %v7991 = vsel %vm59, %v7793, 0
    %v7994 = vsel %vm59, %v7795, 0
    %v7997 = vsel %vm59, %v7797, 0
    %v8000 = vsel %vm59, %v7799, 0
    %v8003 = vsel %vm59, %v7801, 0
    %v8006 = vsel %vm59, %v7803, 0
    %v8009 = vsel %vm59, %v7805, 0
    %v8012 = vsel %vm59, %v7807, 0
    %v8015 = vsel %vm59, %v7809, 0
    %v8018 = vsel %vm59, %v7811, 0
    %v8021 = vsel %vm59, %v7813, 0
    %v8024 = vsel %vm59, %v7815, 0
    %v8027 = vsel %vm59, %v7817, 0
    %v8030 = vsel %vm59, %v7819, 0
    %v8033 = vsel %vm59, %v7821, 0
    %v8036 = vsel %vm59, %v7823, 0
    %v8039 = vsel %vm59, %v7825, 0
    %v8042 = vsel %vm59, %v7827, 0
    %v8045 = vsel %vm59, %v7829, 0
    %8047 = vmatprep.subr.mxu0 0.0
    %8048 = vmatpush1.msra.mxu0 %v7831
    %8049 = vmatprep.subr.mxu0 0.0
    %8050 = vmatpush1.msra.mxu0 %v7832
    %8051 = vmatprep.subr.mxu0 0.0
    %8052 = vmatpush1.msra.mxu0 %v7833
    %8053 = vmatprep.subr.mxu0 0.0
    %8054 = vmatpush1.msra.mxu0 %v7834
    %8055 = vmatprep.subr.mxu0 0.0
    %8056 = vmatpush1.msra.mxu0 %v7835
    %8057 = vmatprep.subr.mxu0 0.0
    %8058 = vmatpush1.msra.mxu0 %v7836
    %8059 = vmatprep.subr.mxu0 0.0
    %8060 = vmatpush1.msra.mxu0 %v7837
    %8061 = vmatprep.subr.mxu0 0.0
    %8062 = vmatpush1.msra.mxu0 %v7838
    %8063 = vmatprep.subr.mxu0 0.0
    %8064 = vmatpush1.msra.mxu0 %v7839
    %8065 = vmatprep.subr.mxu0 0.0
    %8066 = vmatpush1.msra.mxu0 %v7840
    %8067 = vmatprep.subr.mxu0 0.0
    %8068 = vmatpush1.msra.mxu0 %v7841
    %8069 = vmatprep.subr.mxu0 0.0
    %8070 = vmatpush1.msra.mxu0 %v7842
    %8071 = vmatprep.subr.mxu0 0.0
    %8072 = vmatpush1.msra.mxu0 %v7843
    %8073 = vmatprep.subr.mxu0 0.0
    %8074 = vmatpush1.msra.mxu0 %v7844
    %8075 = vmatprep.subr.mxu0 0.0
    %8076 = vmatpush1.msra.mxu0 %v7845
    %8077 = vmatprep.subr.mxu0 0.0
    %8078 = vmatpush1.msra.mxu0 %v7846
    %8079 = vmatprep.subr.mxu0 0.0
    %8080 = vmatpush1.msra.mxu0 %v7847
    %8081 = vmatprep.subr.mxu0 0.0
    %8082 = vmatpush1.msra.mxu0 %v7848
    %8083 = vmatprep.subr.mxu0 0.0
    %8084 = vmatpush1.msra.mxu0 %v7849
    %8085 = vmatprep.subr.mxu0 0.0
    %8086 = vmatpush1.msra.mxu0 %v7850
    %8087 = vmatprep.subr.mxu0 0.0
    %8088 = vmatpush1.msra.mxu0 %v7851
    %8089 = vmatprep.subr.mxu0 0.0
    %8090 = vmatpush1.msra.mxu0 %v7852
    %8091 = vmatprep.subr.mxu0 0.0
    %8092 = vmatpush1.msra.mxu0 %v7853
    %8093 = vmatprep.subr.mxu0 0.0
    %8094 = vmatpush1.msra.mxu0 %v7854
    %8095 = vmatprep.subr.mxu0 0.0
    %8096 = vmatpush1.msra.mxu0 0.0
    %8097 = vmatprep.subr.mxu0 0.0
    %8098 = vmatpush1.msra.mxu0 0.0
    %8099 = vmatprep.subr.mxu0 0.0
    %8100 = vmatpush1.msra.mxu0 0.0
    %8101 = vmatprep.subr.mxu0 0.0
    %8102 = vmatpush1.msra.mxu0 0.0
    %8103 = vmatprep.subr.mxu0 0.0
    %8104 = vmatpush1.msra.mxu0 0.0
    %8105 = vmatprep.subr.mxu0 0.0
    %8106 = vmatpush1.msra.mxu0 0.0
    %8107 = vmatprep.subr.mxu0 0.0
    %8108 = vmatpush1.msra.mxu0 0.0
    %8109 = vmatprep.subr.mxu0 0.0
    %8110 = vmatpush1.msra.mxu0 0.0
    %8111 = vmatprep.mubr.f32.mxu0 %v7856
    %8112 = vmatmul.mubr.f32.gmra.mrb[0].mxu0 %v7702
    %v8113 = vpop.f32.mrb[0].mxu0
    %v8114 = vadd.f32 0.0, %v8113
    %v8115 = vpop.f32.mrb[0].mxu0
    %8116 = vmatprep.mubr.f32.mxu0 %v7859
    %8117 = vmatmul.mubr.f32.gmra.mrb[0].mxu0 %v7704
    %v8118 = vpop.f32.mrb[0].mxu0
    %v8119 = vadd.f32 0.0, %v8118
    %v8120 = vpop.f32.mrb[0].mxu0
    %8121 = vmatprep.mubr.f32.mxu0 %v7862
    %8122 = vmatmul.mubr.f32.gmra.mrb[0].mxu0 %v7706
    %v8123 = vpop.f32.mrb[0].mxu0
    %v8124 = vadd.f32 0.0, %v8123
    %v8125 = vpop.f32.mrb[0].mxu0
    %8126 = vmatprep.mubr.f32.mxu0 %v7865
    %8127 = vmatmul.mubr.f32.gmra.mrb[0].mxu0 %v7708
    %v8128 = vpop.f32.mrb[0].mxu0
    %v8129 = vadd.f32 0.0, %v8128
    %v8130 = vpop.f32.mrb[0].mxu0
    %8131 = vmatprep.mubr.f32.mxu0 %v7868
    %8132 = vmatmul.mubr.f32.gmra.mrb[0].mxu0 %v7710
    %v8133 = vpop.f32.mrb[0].mxu0
    %v8134 = vadd.f32 0.0, %v8133
    %v8135 = vpop.f32.mrb[0].mxu0
    %8136 = vmatprep.mubr.f32.mxu0 %v7871
    %8137 = vmatmul.mubr.f32.gmra.mrb[0].mxu0 %v7712
    %v8138 = vpop.f32.mrb[0].mxu0
    %v8139 = vadd.f32 0.0, %v8138
    %v8140 = vpop.f32.mrb[0].mxu0
    %8141 = vmatprep.mubr.f32.mxu0 %v7874
    %8142 = vmatmul.mubr.f32.gmra.mrb[0].mxu0 %v7714
    %v8143 = vpop.f32.mrb[0].mxu0
    %v8144 = vadd.f32 0.0, %v8143
    %v8145 = vpop.f32.mrb[0].mxu0
    %8146 = vmatprep.mubr.f32.mxu0 %v7877
    %8147 = vmatmul.mubr.f32.gmra.mrb[0].mxu0 %v7716
    %v8148 = vpop.f32.mrb[0].mxu0
    %v8149 = vadd.f32 0.0, %v8148
    %v8150 = vpop.f32.mrb[0].mxu0
    %8151 = vmatprep.mubr.f32.mxu0 %v7880
    %8152 = vmatmul.mubr.f32.gmra.mrb[0].mxu0 %v7718
    %v8153 = vpop.f32.mrb[0].mxu0
    %v8154 = vadd.f32 0.0, %v8153
    %v8155 = vpop.f32.mrb[0].mxu0
    %8156 = vmatprep.mubr.f32.mxu0 %v7883
    %8157 = vmatmul.mubr.f32.gmra.mrb[0].mxu0 %v7720
    %v8158 = vpop.f32.mrb[0].mxu0
    %v8159 = vadd.f32 0.0, %v8158
    %v8160 = vpop.f32.mrb[0].mxu0
    %8161 = vmatprep.mubr.f32.mxu0 %v7886
    %8162 = vmatmul.mubr.f32.gmra.mrb[0].mxu0 %v7722
    %v8163 = vpop.f32.mrb[0].mxu0
    %v8164 = vadd.f32 0.0, %v8163
    %v8165 = vpop.f32.mrb[0].mxu0
    %8166 = vmatprep.mubr.f32.mxu0 %v7889
    %8167 = vmatmul.mubr.f32.gmra.mrb[0].mxu0 %v7724
    %v8168 = vpop.f32.mrb[0].mxu0
    %v8169 = vadd.f32 0.0, %v8168
    %v8170 = vpop.f32.mrb[0].mxu0
    %8171 = vmatprep.mubr.f32.mxu0 %v7892
    %8172 = vmatmul.mubr.f32.gmra.mrb[0].mxu0 %v7726
    %v8173 = vpop.f32.mrb[0].mxu0
    %v8174 = vadd.f32 0.0, %v8173
    %v8175 = vpop.f32.mrb[0].mxu0
    %8176 = vmatprep.mubr.f32.mxu0 %v7895
    %8177 = vmatmul.mubr.f32.gmra.mrb[0].mxu0 %v7728
    %v8178 = vpop.f32.mrb[0].mxu0
    %v8179 = vadd.f32 0.0, %v8178
    %v8180 = vpop.f32.mrb[0].mxu0
    %8181 = vmatprep.mubr.f32.mxu0 %v7898
    %8182 = vmatmul.mubr.f32.gmra.mrb[0].mxu0 %v7730
    %v8183 = vpop.f32.mrb[0].mxu0
    %v8184 = vadd.f32 0.0, %v8183
    %v8185 = vpop.f32.mrb[0].mxu0
    %8186 = vmatprep.mubr.f32.mxu0 %v7901
    %8187 = vmatmul.mubr.f32.gmra.mrb[0].mxu0 %v7732
    %v8188 = vpop.f32.mrb[0].mxu0
    %v8189 = vadd.f32 0.0, %v8188
    %v8190 = vpop.f32.mrb[0].mxu0
    %8191 = vmatprep.mubr.f32.mxu0 %v7904
    %8192 = vmatmul.mubr.f32.gmra.mrb[0].mxu0 %v7734
    %v8193 = vpop.f32.mrb[0].mxu0
    %v8194 = vadd.f32 0.0, %v8193
    %v8195 = vpop.f32.mrb[0].mxu0
    %8196 = vmatprep.mubr.f32.mxu0 %v7907
    %8197 = vmatmul.mubr.f32.gmra.mrb[0].mxu0 %v7736
    %v8198 = vpop.f32.mrb[0].mxu0
    %v8199 = vadd.f32 0.0, %v8198
    %v8200 = vpop.f32.mrb[0].mxu0
    %8201 = vmatprep.mubr.f32.mxu0 %v7910
    %8202 = vmatmul.mubr.f32.gmra.mrb[0].mxu0 %v7738
    %v8203 = vpop.f32.mrb[0].mxu0
    %v8204 = vadd.f32 0.0, %v8203
    %v8205 = vpop.f32.mrb[0].mxu0
    %8206 = vmatprep.mubr.f32.mxu0 %v7913
    %8207 = vmatmul.mubr.f32.gmra.mrb[0].mxu0 %v7740
    %v8208 = vpop.f32.mrb[0].mxu0
    %v8209 = vadd.f32 0.0, %v8208
    %v8210 = vpop.f32.mrb[0].mxu0
    %8211 = vmatprep.mubr.f32.mxu0 %v7916
    %8212 = vmatmul.mubr.f32.gmra.mrb[0].mxu0 %v7742
    %v8213 = vpop.f32.mrb[0].mxu0
    %v8214 = vadd.f32 0.0, %v8213
    %v8215 = vpop.f32.mrb[0].mxu0
    %8216 = vmatprep.mubr.f32.mxu0 %v7919
    %8217 = vmatmul.mubr.f32.gmra.mrb[0].mxu0 %v7744
    %v8218 = vpop.f32.mrb[0].mxu0
    %v8219 = vadd.f32 0.0, %v8218
    %v8220 = vpop.f32.mrb[0].mxu0
    %8221 = vmatprep.mubr.f32.mxu0 %v7922
    %8222 = vmatmul.mubr.f32.gmra.mrb[0].mxu0 %v7746
    %v8223 = vpop.f32.mrb[0].mxu0
    %v8224 = vadd.f32 0.0, %v8223
    %v8225 = vpop.f32.mrb[0].mxu0
    %8226 = vmatprep.mubr.f32.mxu0 %v7925
    %8227 = vmatmul.mubr.f32.gmra.mrb[0].mxu0 %v7748
    %v8228 = vpop.f32.mrb[0].mxu0
    %v8229 = vadd.f32 0.0, %v8228
    %v8230 = vpop.f32.mrb[0].mxu0
    %8231 = vmatprep.mubr.f32.mxu0 %v7928
    %8232 = vmatmul.mubr.f32.gmra.mrb[0].mxu0 %v7750
    %v8233 = vpop.f32.mrb[0].mxu0
    %v8234 = vadd.f32 0.0, %v8233
    %v8235 = vpop.f32.mrb[0].mxu0
    %8236 = vmatprep.mubr.f32.mxu0 %v7931
    %8237 = vmatmul.mubr.f32.gmra.mrb[0].mxu0 %v7752
    %v8238 = vpop.f32.mrb[0].mxu0
    %v8239 = vadd.f32 0.0, %v8238
    %v8240 = vpop.f32.mrb[0].mxu0
    %8241 = vmatprep.mubr.f32.mxu0 %v7934
    %8242 = vmatmul.mubr.f32.gmra.mrb[0].mxu0 %v7754
    %v8243 = vpop.f32.mrb[0].mxu0
    %v8244 = vadd.f32 0.0, %v8243
    %v8245 = vpop.f32.mrb[0].mxu0
    %8246 = vmatprep.mubr.f32.mxu0 %v7937
    %8247 = vmatmul.mubr.f32.gmra.mrb[0].mxu0 %v7756
    %v8248 = vpop.f32.mrb[0].mxu0
    %v8249 = vadd.f32 0.0, %v8248
    %v8250 = vpop.f32.mrb[0].mxu0
    %8251 = vmatprep.mubr.f32.mxu0 %v7940
    %8252 = vmatmul.mubr.f32.gmra.mrb[0].mxu0 %v7758
    %v8253 = vpop.f32.mrb[0].mxu0
    %v8254 = vadd.f32 0.0, %v8253
    %v8255 = vpop.f32.mrb[0].mxu0
    %8256 = vmatprep.mubr.f32.mxu0 %v7943
    %8257 = vmatmul.mubr.f32.gmra.mrb[0].mxu0 %v7760
    %v8258 = vpop.f32.mrb[0].mxu0
    %v8259 = vadd.f32 0.0, %v8258
    %v8260 = vpop.f32.mrb[0].mxu0
    %8261 = vmatprep.mubr.f32.mxu0 %v7946
    %8262 = vmatmul.mubr.f32.gmra.mrb[0].mxu0 %v7762
    %v8263 = vpop.f32.mrb[0].mxu0
    %v8264 = vadd.f32 0.0, %v8263
    %v8265 = vpop.f32.mrb[0].mxu0
    %8266 = vmatprep.mubr.f32.mxu0 %v7949
    %8267 = vmatmul.mubr.f32.gmra.mrb[0].mxu0 %v7764
    %v8268 = vpop.f32.mrb[0].mxu0
    %v8269 = vadd.f32 0.0, %v8268
    %v8270 = vpop.f32.mrb[0].mxu0
    %8271 = vmatprep.mubr.f32.mxu0 %v7952
    %8272 = vmatmul.mubr.f32.gmra.mrb[0].mxu0 %v7766
    %v8273 = vpop.f32.mrb[0].mxu0
    %v8274 = vadd.f32 0.0, %v8273
    %v8275 = vpop.f32.mrb[0].mxu0
    %8276 = vmatprep.mubr.f32.mxu0 %v7955
    %8277 = vmatmul.mubr.f32.gmra.mrb[0].mxu0 %v7768
    %v8278 = vpop.f32.mrb[0].mxu0
    %v8279 = vadd.f32 0.0, %v8278
    %v8280 = vpop.f32.mrb[0].mxu0
    %8281 = vmatprep.mubr.f32.mxu0 %v7958
    %8282 = vmatmul.mubr.f32.gmra.mrb[0].mxu0 %v7770
    %v8283 = vpop.f32.mrb[0].mxu0
    %v8284 = vadd.f32 0.0, %v8283
    %v8285 = vpop.f32.mrb[0].mxu0
    %8286 = vmatprep.mubr.f32.mxu0 %v7961
    %8287 = vmatmul.mubr.f32.gmra.mrb[0].mxu0 %v7772
    %v8288 = vpop.f32.mrb[0].mxu0
    %v8289 = vadd.f32 0.0, %v8288
    %v8290 = vpop.f32.mrb[0].mxu0
    %8291 = vmatprep.mubr.f32.mxu0 %v7964
    %8292 = vmatmul.mubr.f32.gmra.mrb[0].mxu0 %v7774
    %v8293 = vpop.f32.mrb[0].mxu0
    %v8294 = vadd.f32 0.0, %v8293
    %v8295 = vpop.f32.mrb[0].mxu0
    %8296 = vmatprep.mubr.f32.mxu0 %v7967
    %8297 = vmatmul.mubr.f32.gmra.mrb[0].mxu0 %v7776
    %v8298 = vpop.f32.mrb[0].mxu0
    %v8299 = vadd.f32 0.0, %v8298
    %v8300 = vpop.f32.mrb[0].mxu0
    %8301 = vmatprep.mubr.f32.mxu0 %v7970
    %8302 = vmatmul.mubr.f32.gmra.mrb[0].mxu0 %v7778
    %v8303 = vpop.f32.mrb[0].mxu0
    %v8304 = vadd.f32 0.0, %v8303
    %v8305 = vpop.f32.mrb[0].mxu0
    %8306 = vmatprep.mubr.f32.mxu0 %v7973
    %8307 = vmatmul.mubr.f32.gmra.mrb[0].mxu0 %v7780
    %v8308 = vpop.f32.mrb[0].mxu0
    %v8309 = vadd.f32 0.0, %v8308
    %v8310 = vpop.f32.mrb[0].mxu0
    %8311 = vmatprep.mubr.f32.mxu0 %v7976
    %8312 = vmatmul.mubr.f32.gmra.mrb[0].mxu0 %v7782
    %v8313 = vpop.f32.mrb[0].mxu0
    %v8314 = vadd.f32 0.0, %v8313
    %v8315 = vpop.f32.mrb[0].mxu0
    %8316 = vmatprep.mubr.f32.mxu0 %v7979
    %8317 = vmatmul.mubr.f32.gmra.mrb[0].mxu0 %v7784
    %v8318 = vpop.f32.mrb[0].mxu0
    %v8319 = vadd.f32 0.0, %v8318
    %v8320 = vpop.f32.mrb[0].mxu0
    %8321 = vmatprep.mubr.f32.mxu0 %v7982
    %8322 = vmatmul.mubr.f32.gmra.mrb[0].mxu0 %v7786
    %v8323 = vpop.f32.mrb[0].mxu0
    %v8324 = vadd.f32 0.0, %v8323
    %v8325 = vpop.f32.mrb[0].mxu0
    %8326 = vmatprep.mubr.f32.mxu0 %v7985
    %8327 = vmatmul.mubr.f32.gmra.mrb[0].mxu0 %v7788
    %v8328 = vpop.f32.mrb[0].mxu0
    %v8329 = vadd.f32 0.0, %v8328
    %v8330 = vpop.f32.mrb[0].mxu0
    %8331 = vmatprep.mubr.f32.mxu0 %v7988
    %8332 = vmatmul.mubr.f32.gmra.mrb[0].mxu0 %v7790
    %v8333 = vpop.f32.mrb[0].mxu0
    %v8334 = vadd.f32 0.0, %v8333
    %v8335 = vpop.f32.mrb[0].mxu0
    %8336 = vmatprep.mubr.f32.mxu0 %v7991
    %8337 = vmatmul.mubr.f32.gmra.mrb[0].mxu0 %v7792
    %v8338 = vpop.f32.mrb[0].mxu0
    %v8339 = vadd.f32 0.0, %v8338
    %v8340 = vpop.f32.mrb[0].mxu0
    %8341 = vmatprep.mubr.f32.mxu0 %v7994
    %8342 = vmatmul.mubr.f32.gmra.mrb[0].mxu0 %v7794
    %v8343 = vpop.f32.mrb[0].mxu0
    %v8344 = vadd.f32 0.0, %v8343
    %v8345 = vpop.f32.mrb[0].mxu0
    %8346 = vmatprep.mubr.f32.mxu0 %v7997
    %8347 = vmatmul.mubr.f32.gmra.mrb[0].mxu0 %v7796
    %v8348 = vpop.f32.mrb[0].mxu0
    %v8349 = vadd.f32 0.0, %v8348
    %v8350 = vpop.f32.mrb[0].mxu0
    %8351 = vmatprep.mubr.f32.mxu0 %v8000
    %8352 = vmatmul.mubr.f32.gmra.mrb[0].mxu0 %v7798
    %v8353 = vpop.f32.mrb[0].mxu0
    %v8354 = vadd.f32 0.0, %v8353
    %v8355 = vpop.f32.mrb[0].mxu0
    %8356 = vmatprep.mubr.f32.mxu0 %v8003
    %8357 = vmatmul.mubr.f32.gmra.mrb[0].mxu0 %v7800
    %v8358 = vpop.f32.mrb[0].mxu0
    %v8359 = vadd.f32 0.0, %v8358
    %v8360 = vpop.f32.mrb[0].mxu0
    %8361 = vmatprep.mubr.f32.mxu0 %v8006
    %8362 = vmatmul.mubr.f32.gmra.mrb[0].mxu0 %v7802
    %v8363 = vpop.f32.mrb[0].mxu0
    %v8364 = vadd.f32 0.0, %v8363
    %v8365 = vpop.f32.mrb[0].mxu0
    %8366 = vmatprep.mubr.f32.mxu0 %v8009
    %8367 = vmatmul.mubr.f32.gmra.mrb[0].mxu0 %v7804
    %v8368 = vpop.f32.mrb[0].mxu0
    %v8369 = vadd.f32 0.0, %v8368
    %v8370 = vpop.f32.mrb[0].mxu0
    %8371 = vmatprep.mubr.f32.mxu0 %v8012
    %8372 = vmatmul.mubr.f32.gmra.mrb[0].mxu0 %v7806
    %v8373 = vpop.f32.mrb[0].mxu0
    %v8374 = vadd.f32 0.0, %v8373
    %v8375 = vpop.f32.mrb[0].mxu0
    %8376 = vmatprep.mubr.f32.mxu0 %v8015
    %8377 = vmatmul.mubr.f32.gmra.mrb[0].mxu0 %v7808
    %v8378 = vpop.f32.mrb[0].mxu0
    %v8379 = vadd.f32 0.0, %v8378
    %v8380 = vpop.f32.mrb[0].mxu0
    %8381 = vmatprep.mubr.f32.mxu0 %v8018
    %8382 = vmatmul.mubr.f32.gmra.mrb[0].mxu0 %v7810
    %v8383 = vpop.f32.mrb[0].mxu0
    %v8384 = vadd.f32 0.0, %v8383
    %v8385 = vpop.f32.mrb[0].mxu0
    %8386 = vmatprep.mubr.f32.mxu0 %v8021
    %8387 = vmatmul.mubr.f32.gmra.mrb[0].mxu0 %v7812
    %v8388 = vpop.f32.mrb[0].mxu0
    %v8389 = vadd.f32 0.0, %v8388
    %v8390 = vpop.f32.mrb[0].mxu0
    %8391 = vmatprep.mubr.f32.mxu0 %v8024
    %8392 = vmatmul.mubr.f32.gmra.mrb[0].mxu0 %v7814
    %v8393 = vpop.f32.mrb[0].mxu0
    %v8394 = vadd.f32 0.0, %v8393
    %v8395 = vpop.f32.mrb[0].mxu0
    %8396 = vmatprep.mubr.f32.mxu0 %v8027
    %8397 = vmatmul.mubr.f32.gmra.mrb[0].mxu0 %v7816
    %v8398 = vpop.f32.mrb[0].mxu0
    %v8399 = vadd.f32 0.0, %v8398
    %v8400 = vpop.f32.mrb[0].mxu0
    %8401 = vmatprep.mubr.f32.mxu0 %v8030
    %8402 = vmatmul.mubr.f32.gmra.mrb[0].mxu0 %v7818
    %v8403 = vpop.f32.mrb[0].mxu0
    %v8404 = vadd.f32 0.0, %v8403
    %v8405 = vpop.f32.mrb[0].mxu0
    %8406 = vmatprep.mubr.f32.mxu0 %v8033
    %8407 = vmatmul.mubr.f32.gmra.mrb[0].mxu0 %v7820
    %v8408 = vpop.f32.mrb[0].mxu0
    %v8409 = vadd.f32 0.0, %v8408
    %v8410 = vpop.f32.mrb[0].mxu0
    %8411 = vmatprep.mubr.f32.mxu0 %v8036
    %8412 = vmatmul.mubr.f32.gmra.mrb[0].mxu0 %v7822
    %v8413 = vpop.f32.mrb[0].mxu0
    %v8414 = vadd.f32 0.0, %v8413
    %v8415 = vpop.f32.mrb[0].mxu0
    %8416 = vmatprep.mubr.f32.mxu0 %v8039
    %8417 = vmatmul.mubr.f32.gmra.mrb[0].mxu0 %v7824
    %v8418 = vpop.f32.mrb[0].mxu0
    %v8419 = vadd.f32 0.0, %v8418
    %v8420 = vpop.f32.mrb[0].mxu0
    %8421 = vmatprep.mubr.f32.mxu0 %v8042
    %8422 = vmatmul.mubr.f32.gmra.mrb[0].mxu0 %v7826
    %v8423 = vpop.f32.mrb[0].mxu0
    %v8424 = vadd.f32 0.0, %v8423
    %v8425 = vpop.f32.mrb[0].mxu0
    %8426 = vmatprep.mubr.f32.mxu0 %v8045
    %8427 = vmatmul.mubr.f32.gmra.mrb[0].mxu0 %v7828
    %v8428 = vpop.f32.mrb[0].mxu0
    %v8429 = vadd.f32 0.0, %v8428
    %v8430 = vpop.f32.mrb[0].mxu0
    %8431 = vdwg.mxu0
    %v8432 = vadd.f32 %v7384, %v8114
    %v8433 = vadd.f32 %v7389, %v8119
    %v8434 = vadd.f32 %v7394, %v8124
    %v8435 = vadd.f32 %v7399, %v8129
    %v8436 = vadd.f32 %v7404, %v8134
    %v8437 = vadd.f32 %v7409, %v8139
    %v8438 = vadd.f32 %v7414, %v8144
    %v8439 = vadd.f32 %v7419, %v8149
    %v8440 = vadd.f32 %v7424, %v8154
    %v8441 = vadd.f32 %v7429, %v8159
    %v8442 = vadd.f32 %v7434, %v8164
    %v8443 = vadd.f32 %v7439, %v8169
    %v8444 = vadd.f32 %v7444, %v8174
    %v8445 = vadd.f32 %v7449, %v8179
    %v8446 = vadd.f32 %v7454, %v8184
    %v8447 = vadd.f32 %v7459, %v8189
    %v8448 = vadd.f32 %v7464, %v8194
    %v8449 = vadd.f32 %v7469, %v8199
    %v8450 = vadd.f32 %v7474, %v8204
    %v8451 = vadd.f32 %v7479, %v8209
    %v8452 = vadd.f32 %v7484, %v8214
    %v8453 = vadd.f32 %v7489, %v8219
    %v8454 = vadd.f32 %v7494, %v8224
    %v8455 = vadd.f32 %v7499, %v8229
    %v8456 = vadd.f32 %v7504, %v8234
    %v8457 = vadd.f32 %v7509, %v8239
    %v8458 = vadd.f32 %v7514, %v8244
    %v8459 = vadd.f32 %v7519, %v8249
    %v8460 = vadd.f32 %v7524, %v8254
    %v8461 = vadd.f32 %v7529, %v8259
    %v8462 = vadd.f32 %v7534, %v8264
    %v8463 = vadd.f32 %v7539, %v8269
    %v8464 = vadd.f32 %v7544, %v8274
    %v8465 = vadd.f32 %v7549, %v8279
    %v8466 = vadd.f32 %v7554, %v8284
    %v8467 = vadd.f32 %v7559, %v8289
    %v8468 = vadd.f32 %v7564, %v8294
    %v8469 = vadd.f32 %v7569, %v8299
    %v8470 = vadd.f32 %v7574, %v8304
    %v8471 = vadd.f32 %v7579, %v8309
    %v8472 = vadd.f32 %v7584, %v8314
    %v8473 = vadd.f32 %v7589, %v8319
    %v8474 = vadd.f32 %v7594, %v8324
    %v8475 = vadd.f32 %v7599, %v8329
    %v8476 = vadd.f32 %v7604, %v8334
    %v8477 = vadd.f32 %v7609, %v8339
    %v8478 = vadd.f32 %v7614, %v8344
    %v8479 = vadd.f32 %v7619, %v8349
    %v8480 = vadd.f32 %v7624, %v8354
    %v8481 = vadd.f32 %v7629, %v8359
    %v8482 = vadd.f32 %v7634, %v8364
    %v8483 = vadd.f32 %v7639, %v8369
    %v8484 = vadd.f32 %v7644, %v8374
    %v8485 = vadd.f32 %v7649, %v8379
    %v8486 = vadd.f32 %v7654, %v8384
    %v8487 = vadd.f32 %v7659, %v8389
    %v8488 = vadd.f32 %v7664, %v8394
    %v8489 = vadd.f32 %v7669, %v8399
    %v8490 = vadd.f32 %v7674, %v8404
    %v8491 = vadd.f32 %v7679, %v8409
    %v8492 = vadd.f32 %v7684, %v8414
    %v8493 = vadd.f32 %v7689, %v8419
    %v8494 = vadd.f32 %v7694, %v8424
    %v8495 = vadd.f32 %v7699, %v8429
    %v8496 = vld [vmem:[%s6] sm:$0x1]
    %v8498 = vlaneseq
    %v8499 = vshrl.u32 %v8498, 7
    %v8500 = vsub.s32 0, %v8499
    %v8501 = vrot.slane %v8496, %v8500
    %v8503 = vadd.f32 %v8432, %v8501
    %v8504 = vadd.f32 %v8433, %v8501
    %v8505 = vadd.f32 %v8434, %v8501
    %v8506 = vadd.f32 %v8435, %v8501
    %v8507 = vadd.f32 %v8436, %v8501
    %v8508 = vadd.f32 %v8437, %v8501
    %v8509 = vadd.f32 %v8438, %v8501
    %v8510 = vadd.f32 %v8439, %v8501
    %v8511 = vadd.f32 %v8440, %v8501
    %v8512 = vadd.f32 %v8441, %v8501
    %v8513 = vadd.f32 %v8442, %v8501
    %v8514 = vadd.f32 %v8443, %v8501
    %v8515 = vadd.f32 %v8444, %v8501
    %v8516 = vadd.f32 %v8445, %v8501
    %v8517 = vadd.f32 %v8446, %v8501
    %v8518 = vadd.f32 %v8447, %v8501
    %v8519 = vadd.f32 %v8448, %v8501
    %v8520 = vadd.f32 %v8449, %v8501
    %v8521 = vadd.f32 %v8450, %v8501
    %v8522 = vadd.f32 %v8451, %v8501
    %v8523 = vadd.f32 %v8452, %v8501
    %v8524 = vadd.f32 %v8453, %v8501
    %v8525 = vadd.f32 %v8454, %v8501
    %v8526 = vadd.f32 %v8455, %v8501
    %v8527 = vadd.f32 %v8456, %v8501
    %v8528 = vadd.f32 %v8457, %v8501
    %v8529 = vadd.f32 %v8458, %v8501
    %v8530 = vadd.f32 %v8459, %v8501
    %v8531 = vadd.f32 %v8460, %v8501
    %v8532 = vadd.f32 %v8461, %v8501
    %v8533 = vadd.f32 %v8462, %v8501
    %v8534 = vadd.f32 %v8463, %v8501
    %v8535 = vadd.f32 %v8464, %v8501
    %v8536 = vadd.f32 %v8465, %v8501
    %v8537 = vadd.f32 %v8466, %v8501
    %v8538 = vadd.f32 %v8467, %v8501
    %v8539 = vadd.f32 %v8468, %v8501
    %v8540 = vadd.f32 %v8469, %v8501
    %v8541 = vadd.f32 %v8470, %v8501
    %v8542 = vadd.f32 %v8471, %v8501
    %v8543 = vadd.f32 %v8472, %v8501
    %v8544 = vadd.f32 %v8473, %v8501
    %v8545 = vadd.f32 %v8474, %v8501
    %v8546 = vadd.f32 %v8475, %v8501
    %v8547 = vadd.f32 %v8476, %v8501
    %v8548 = vadd.f32 %v8477, %v8501
    %v8549 = vadd.f32 %v8478, %v8501
    %v8550 = vadd.f32 %v8479, %v8501
    %v8551 = vadd.f32 %v8480, %v8501
    %v8552 = vadd.f32 %v8481, %v8501
    %v8553 = vadd.f32 %v8482, %v8501
    %v8554 = vadd.f32 %v8483, %v8501
    %v8555 = vadd.f32 %v8484, %v8501
    %v8556 = vadd.f32 %v8485, %v8501
    %v8557 = vadd.f32 %v8486, %v8501
    %v8558 = vadd.f32 %v8487, %v8501
    %v8559 = vadd.f32 %v8488, %v8501
    %v8560 = vadd.f32 %v8489, %v8501
    %v8561 = vadd.f32 %v8490, %v8501
    %v8562 = vadd.f32 %v8491, %v8501
    %v8563 = vadd.f32 %v8492, %v8501
    %v8564 = vadd.f32 %v8493, %v8501
    %v8565 = vadd.f32 %v8494, %v8501
    %v8566 = vadd.f32 %v8495, %v8501
    %v8567 = vadd.f32 %v4371, %v8503
    %v8568 = vadd.f32 %v4372, %v8504
    %v8569 = vadd.f32 %v4373, %v8505
    %v8570 = vadd.f32 %v4374, %v8506
    %v8571 = vadd.f32 %v4375, %v8507
    %v8572 = vadd.f32 %v4376, %v8508
    %v8573 = vadd.f32 %v4377, %v8509
    %v8574 = vadd.f32 %v4378, %v8510
    %v8575 = vadd.f32 %v4379, %v8511
    %v8576 = vadd.f32 %v4380, %v8512
    %v8577 = vadd.f32 %v4381, %v8513
    %v8578 = vadd.f32 %v4382, %v8514
    %v8579 = vadd.f32 %v4383, %v8515
    %v8580 = vadd.f32 %v4384, %v8516
    %v8581 = vadd.f32 %v4385, %v8517
    %v8582 = vadd.f32 %v4386, %v8518
    %v8583 = vadd.f32 %v4387, %v8519
    %v8584 = vadd.f32 %v4388, %v8520
    %v8585 = vadd.f32 %v4389, %v8521
    %v8586 = vadd.f32 %v4390, %v8522
    %v8587 = vadd.f32 %v4391, %v8523
    %v8588 = vadd.f32 %v4392, %v8524
    %v8589 = vadd.f32 %v4393, %v8525
    %v8590 = vadd.f32 %v4394, %v8526
    %v8591 = vadd.f32 %v4395, %v8527
    %v8592 = vadd.f32 %v4396, %v8528
    %v8593 = vadd.f32 %v4397, %v8529
    %v8594 = vadd.f32 %v4398, %v8530
    %v8595 = vadd.f32 %v4399, %v8531
    %v8596 = vadd.f32 %v4400, %v8532
    %v8597 = vadd.f32 %v4401, %v8533
    %v8598 = vadd.f32 %v4402, %v8534
    %v8599 = vadd.f32 %v4403, %v8535
    %v8600 = vadd.f32 %v4404, %v8536
    %v8601 = vadd.f32 %v4405, %v8537
    %v8602 = vadd.f32 %v4406, %v8538
    %v8603 = vadd.f32 %v4407, %v8539
    %v8604 = vadd.f32 %v4408, %v8540
    %v8605 = vadd.f32 %v4409, %v8541
    %v8606 = vadd.f32 %v4410, %v8542
    %v8607 = vadd.f32 %v4411, %v8543
    %v8608 = vadd.f32 %v4412, %v8544
    %v8609 = vadd.f32 %v4413, %v8545
    %v8610 = vadd.f32 %v4414, %v8546
    %v8611 = vadd.f32 %v4415, %v8547
    %v8612 = vadd.f32 %v4416, %v8548
    %v8613 = vadd.f32 %v4417, %v8549
    %v8614 = vadd.f32 %v4418, %v8550
    %v8615 = vadd.f32 %v4419, %v8551
    %v8616 = vadd.f32 %v4420, %v8552
    %v8617 = vadd.f32 %v4421, %v8553
    %v8618 = vadd.f32 %v4422, %v8554
    %v8619 = vadd.f32 %v4423, %v8555
    %v8620 = vadd.f32 %v4424, %v8556
    %v8621 = vadd.f32 %v4425, %v8557
    %v8622 = vadd.f32 %v4426, %v8558
    %v8623 = vadd.f32 %v4427, %v8559
    %v8624 = vadd.f32 %v4428, %v8560
    %v8625 = vadd.f32 %v4429, %v8561
    %v8626 = vadd.f32 %v4430, %v8562
    %v8627 = vadd.f32 %v4431, %v8563
    %v8628 = vadd.f32 %v4432, %v8564
    %v8629 = vadd.f32 %v4433, %v8565
    %v8630 = vadd.f32 %v4434, %v8566
    %8631 = vst.msk [vmem:[%s553 + $0x1] sm:$0xff] %vm554, %v8567
    %8632 = vst.msk [vmem:[%s553 + $0x9] sm:$0xff] %vm554, %v8568
    %8633 = vst.msk [vmem:[%s553 + $0x19] sm:$0xff] %vm554, %v8569
    %8634 = vst.msk [vmem:[%s553 + $0x21] sm:$0xff] %vm554, %v8570
    %8635 = vst.msk [vmem:[%s553 + $0x31] sm:$0xff] %vm554, %v8571
    %8636 = vst.msk [vmem:[%s553 + $0x39] sm:$0xff] %vm554, %v8572
    %8637 = vst.msk [vmem:[%s553 + $0x49] sm:$0xff] %vm554, %v8573
    %8638 = vst.msk [vmem:[%s553 + $0x51] sm:$0xff] %vm554, %v8574
    %8639 = vst.msk [vmem:[%s553 + $0x61] sm:$0xff] %vm554, %v8575
    %8640 = vst.msk [vmem:[%s553 + $0x69] sm:$0xff] %vm554, %v8576
    %8641 = vst.msk [vmem:[%s553 + $0x79] sm:$0xff] %vm554, %v8577
    %8642 = vst.msk [vmem:[%s553 + $0x81] sm:$0xff] %vm554, %v8578
    %8643 = vst.msk [vmem:[%s553 + $0x91] sm:$0xff] %vm554, %v8579
    %8644 = vst.msk [vmem:[%s553 + $0x99] sm:$0xff] %vm554, %v8580
    %8645 = vst.msk [vmem:[%s553 + $0xa9] sm:$0xff] %vm554, %v8581
    %8646 = vst.msk [vmem:[%s553 + $0xb1] sm:$0xff] %vm554, %v8582
    %8647 = vst.msk [vmem:[%s553 + $0xc1] sm:$0xff] %vm554, %v8583
    %8648 = vst.msk [vmem:[%s553 + $0xc9] sm:$0xff] %vm554, %v8584
    %8649 = vst.msk [vmem:[%s553 + $0xd9] sm:$0xff] %vm554, %v8585
    %8650 = vst.msk [vmem:[%s553 + $0xe1] sm:$0xff] %vm554, %v8586
    %8651 = vst.msk [vmem:[%s553 + $0xf1] sm:$0xff] %vm554, %v8587
    %8652 = vst.msk [vmem:[%s553 + $0xf9] sm:$0xff] %vm554, %v8588
    %8653 = vst.msk [vmem:[%s553 + $0x109] sm:$0xff] %vm554, %v8589
    %8654 = vst.msk [vmem:[%s553 + $0x111] sm:$0xff] %vm554, %v8590
    %8655 = vst.msk [vmem:[%s553 + $0x121] sm:$0xff] %vm554, %v8591
    %8656 = vst.msk [vmem:[%s553 + $0x129] sm:$0xff] %vm554, %v8592
    %8657 = vst.msk [vmem:[%s553 + $0x139] sm:$0xff] %vm554, %v8593
    %8658 = vst.msk [vmem:[%s553 + $0x141] sm:$0xff] %vm554, %v8594
    %8659 = vst.msk [vmem:[%s553 + $0x151] sm:$0xff] %vm554, %v8595
    %8660 = vst.msk [vmem:[%s553 + $0x159] sm:$0xff] %vm554, %v8596
    %8661 = vst.msk [vmem:[%s553 + $0x169] sm:$0xff] %vm554, %v8597
    %8662 = vst.msk [vmem:[%s553 + $0x171] sm:$0xff] %vm554, %v8598
    %8663 = vst.msk [vmem:[%s553 + $0x1b1] sm:$0xff] %vm554, %v8599
    %8664 = vst.msk [vmem:[%s553 + $0x1b9] sm:$0xff] %vm554, %v8600
    %8665 = vst.msk [vmem:[%s553 + $0x1c9] sm:$0xff] %vm554, %v8601
    %8666 = vst.msk [vmem:[%s553 + $0x1d1] sm:$0xff] %vm554, %v8602
    %8667 = vst.msk [vmem:[%s553 + $0x1e1] sm:$0xff] %vm554, %v8603
    %8668 = vst.msk [vmem:[%s553 + $0x1e9] sm:$0xff] %vm554, %v8604
    %8669 = vst.msk [vmem:[%s553 + $0x1f9] sm:$0xff] %vm554, %v8605
    %8670 = vst.msk [vmem:[%s553 + $0x201] sm:$0xff] %vm554, %v8606
    %8671 = vst.msk [vmem:[%s553 + $0x211] sm:$0xff] %vm554, %v8607
    %8672 = vst.msk [vmem:[%s553 + $0x219] sm:$0xff] %vm554, %v8608
    %8673 = vst.msk [vmem:[%s553 + $0x229] sm:$0xff] %vm554, %v8609
    %8674 = vst.msk [vmem:[%s553 + $0x231] sm:$0xff] %vm554, %v8610
    %8675 = vst.msk [vmem:[%s553 + $0x241] sm:$0xff] %vm554, %v8611
    %8676 = vst.msk [vmem:[%s553 + $0x249] sm:$0xff] %vm554, %v8612
    %8677 = vst.msk [vmem:[%s553 + $0x259] sm:$0xff] %vm554, %v8613
    %8678 = vst.msk [vmem:[%s553 + $0x261] sm:$0xff] %vm554, %v8614
    %8679 = vst.msk [vmem:[%s553 + $0x271] sm:$0xff] %vm554, %v8615
    %8680 = vst.msk [vmem:[%s553 + $0x279] sm:$0xff] %vm554, %v8616
    %8681 = vst.msk [vmem:[%s553 + $0x289] sm:$0xff] %vm554, %v8617
    %8682 = vst.msk [vmem:[%s553 + $0x291] sm:$0xff] %vm554, %v8618
    %8683 = vst.msk [vmem:[%s553 + $0x2a1] sm:$0xff] %vm554, %v8619
    %8684 = vst.msk [vmem:[%s553 + $0x2a9] sm:$0xff] %vm554, %v8620
    %8685 = vst.msk [vmem:[%s553 + $0x2b9] sm:$0xff] %vm554, %v8621
    %8686 = vst.msk [vmem:[%s553 + $0x2c1] sm:$0xff] %vm554, %v8622
    %8687 = vst.msk [vmem:[%s553 + $0x2d1] sm:$0xff] %vm554, %v8623
    %8688 = vst.msk [vmem:[%s553 + $0x2d9] sm:$0xff] %vm554, %v8624
    %8689 = vst.msk [vmem:[%s553 + $0x2e9] sm:$0xff] %vm554, %v8625
    %8690 = vst.msk [vmem:[%s553 + $0x2f1] sm:$0xff] %vm554, %v8626
    %8691 = vst.msk [vmem:[%s553 + $0x301] sm:$0xff] %vm554, %v8627
    %8692 = vst.msk [vmem:[%s553 + $0x309] sm:$0xff] %vm554, %v8628
    %8693 = vst.msk [vmem:[%s553 + $0x319] sm:$0xff] %vm554, %v8629
    %8694 = vst.msk [vmem:[%s553 + $0x321] sm:$0xff] %vm554, %v8630
    %v8695 = vld [vmem:[#allocation2] sm:$0xff]
    %v8696 = vld [vmem:[#allocation2 + $0x8] sm:$0xff]
    %v8697 = vld [vmem:[#allocation2 + $0x18] sm:$0xff]
    %v8698 = vld [vmem:[#allocation2 + $0x20] sm:$0xff]
    %v8699 = vld [vmem:[#allocation2 + $0x30] sm:$0xff]
    %v8700 = vld [vmem:[#allocation2 + $0x38] sm:$0xff]
    %v8701 = vld [vmem:[#allocation2 + $0x48] sm:$0xff]
    %v8702 = vld [vmem:[#allocation2 + $0x50] sm:$0xff]
    %v8703 = vld [vmem:[#allocation2 + $0x60] sm:$0xff]
    %v8704 = vld [vmem:[#allocation2 + $0x68] sm:$0xff]
    %v8705 = vld [vmem:[#allocation2 + $0x78] sm:$0xff]
    %v8706 = vld [vmem:[#allocation2 + $0x80] sm:$0xff]
    %v8707 = vld [vmem:[#allocation2 + $0x90] sm:$0xff]
    %v8708 = vld [vmem:[#allocation2 + $0x98] sm:$0xff]
    %v8709 = vld [vmem:[#allocation2 + $0xa8] sm:$0xff]
    %v8710 = vld [vmem:[#allocation2 + $0xb0] sm:$0xff]
    %v8711 = vld [vmem:[#allocation2 + $0xc0] sm:$0xff]
    %v8712 = vld [vmem:[#allocation2 + $0xc8] sm:$0xff]
    %v8713 = vld [vmem:[#allocation2 + $0xd8] sm:$0xff]
    %v8714 = vld [vmem:[#allocation2 + $0xe0] sm:$0xff]
    %v8715 = vld [vmem:[#allocation2 + $0xf0] sm:$0xff]
    %v8716 = vld [vmem:[#allocation2 + $0xf8] sm:$0xff]
    %v8717 = vld [vmem:[#allocation2 + $0x108] sm:$0xff]
    %v8718 = vld [vmem:[#allocation2 + $0x110] sm:$0xff]
    %v8719 = vld [vmem:[#allocation2 + $0x120] sm:$0xff]
    %v8720 = vld [vmem:[#allocation2 + $0x128] sm:$0xff]
    %v8721 = vld [vmem:[#allocation2 + $0x138] sm:$0xff]
    %v8722 = vld [vmem:[#allocation2 + $0x140] sm:$0xff]
    %v8723 = vld [vmem:[#allocation2 + $0x150] sm:$0xff]
    %v8724 = vld [vmem:[#allocation2 + $0x158] sm:$0xff]
    %v8725 = vld [vmem:[#allocation2 + $0x168] sm:$0xff]
    %v8726 = vld [vmem:[#allocation2 + $0x170] sm:$0xff]
    %v8727 = vld [vmem:[#allocation2 + $0x180] sm:$0xff]
    %v8728 = vld [vmem:[#allocation2 + $0x188] sm:$0xff]
    %v8729 = vld [vmem:[#allocation2 + $0x198] sm:$0xff]
    %v8730 = vld [vmem:[#allocation2 + $0x1a0] sm:$0xff]
    %v8731 = vld [vmem:[#allocation2 + $0x1b0] sm:$0xff]
    %v8732 = vld [vmem:[#allocation2 + $0x1b8] sm:$0xff]
    %v8733 = vld [vmem:[#allocation2 + $0x1c8] sm:$0xff]
    %v8734 = vld [vmem:[#allocation2 + $0x1d0] sm:$0xff]
    %v8735 = vld [vmem:[#allocation2 + $0x1e0] sm:$0xff]
    %v8736 = vld [vmem:[#allocation2 + $0x1e8] sm:$0xff]
    %v8737 = vld [vmem:[#allocation2 + $0x1f8] sm:$0xff]
    %v8738 = vld [vmem:[#allocation2 + $0x200] sm:$0xff]
    %v8739 = vld [vmem:[#allocation2 + $0x210] sm:$0xff]
    %v8740 = vld [vmem:[#allocation2 + $0x218] sm:$0xff]
    %v8741 = vld [vmem:[#allocation2 + $0x228] sm:$0xff]
    %v8742 = vld [vmem:[#allocation2 + $0x230] sm:$0xff]
    %v8743 = vld [vmem:[#allocation2 + $0x240] sm:$0xff]
    %v8744 = vld [vmem:[#allocation2 + $0x248] sm:$0xff]
    %v8745 = vld [vmem:[#allocation2 + $0x258] sm:$0xff]
    %v8746 = vld [vmem:[#allocation2 + $0x260] sm:$0xff]
    %v8747 = vld [vmem:[#allocation2 + $0x270] sm:$0xff]
    %v8748 = vld [vmem:[#allocation2 + $0x278] sm:$0xff]
    %v8749 = vld [vmem:[#allocation2 + $0x288] sm:$0xff]
    %v8750 = vld [vmem:[#allocation2 + $0x290] sm:$0xff]
    %v8751 = vld [vmem:[#allocation2 + $0x2a0] sm:$0xff]
    %v8752 = vld [vmem:[#allocation2 + $0x2a8] sm:$0xff]
    %v8753 = vld [vmem:[#allocation2 + $0x2b8] sm:$0xff]
    %v8754 = vld [vmem:[#allocation2 + $0x2c0] sm:$0xff]
    %v8755 = vld [vmem:[#allocation2 + $0x2d0] sm:$0xff]
    %v8756 = vld [vmem:[#allocation2 + $0x2d8] sm:$0xff]
    %v8757 = vld [vmem:[#allocation2 + $0x2e8] sm:$0xff]
    %v8758 = vld [vmem:[#allocation2 + $0x2f0] sm:$0xff]
    %v8759 = vld [vmem:[#allocation2 + $0x300] sm:$0xff]
    %v8760 = vld [vmem:[#allocation2 + $0x308] sm:$0xff]
    %v8761 = vld [vmem:[#allocation2 + $0x318] sm:$0xff]
    %v8762 = vld [vmem:[#allocation2 + $0x320] sm:$0xff]
    %v8763 = vld [vmem:[#allocation2 + $0x330] sm:$0xff]
    %v8764 = vld [vmem:[#allocation2 + $0x338] sm:$0xff]
    %v8765 = vld [vmem:[#allocation2 + $0x348] sm:$0xff]
    %v8766 = vld [vmem:[#allocation2 + $0x350] sm:$0xff]
    %8767 = vst.msk [vmem:[#allocation3] sm:$0xff] %vm554, %v8695
    %8768 = vst.msk [vmem:[#allocation3 + $0x10] sm:$0xff] %vm554, %v8696
    %8769 = vst.msk [vmem:[#allocation3 + $0x20] sm:$0xff] %vm554, %v8697
    %8770 = vst.msk [vmem:[#allocation3 + $0x30] sm:$0xff] %vm554, %v8698
    %8771 = vst.msk [vmem:[#allocation3 + $0x40] sm:$0xff] %vm554, %v8699
    %8772 = vst.msk [vmem:[#allocation3 + $0x50] sm:$0xff] %vm554, %v8700
    %8773 = vst.msk [vmem:[#allocation3 + $0x60] sm:$0xff] %vm554, %v8701
    %8774 = vst.msk [vmem:[#allocation3 + $0x70] sm:$0xff] %vm554, %v8702
    %8775 = vst.msk [vmem:[#allocation3 + $0x80] sm:$0xff] %vm554, %v8703
    %8776 = vst.msk [vmem:[#allocation3 + $0x90] sm:$0xff] %vm554, %v8704
    %8777 = vst.msk [vmem:[#allocation3 + $0xa0] sm:$0xff] %vm554, %v8705
    %8778 = vst.msk [vmem:[#allocation3 + $0xb0] sm:$0xff] %vm554, %v8706
    %8779 = vst.msk [vmem:[#allocation3 + $0xc0] sm:$0xff] %vm554, %v8707
    %8780 = vst.msk [vmem:[#allocation3 + $0xd0] sm:$0xff] %vm554, %v8708
    %8781 = vst.msk [vmem:[#allocation3 + $0xe0] sm:$0xff] %vm554, %v8709
    %8782 = vst.msk [vmem:[#allocation3 + $0xf0] sm:$0xff] %vm554, %v8710
    %8783 = vst.msk [vmem:[#allocation3 + $0x100] sm:$0xff] %vm554, %v8711
    %8784 = vst.msk [vmem:[#allocation3 + $0x110] sm:$0xff] %vm554, %v8712
    %8785 = vst.msk [vmem:[#allocation3 + $0x120] sm:$0xff] %vm554, %v8713
    %8786 = vst.msk [vmem:[#allocation3 + $0x130] sm:$0xff] %vm554, %v8714
    %8787 = vst.msk [vmem:[#allocation3 + $0x140] sm:$0xff] %vm554, %v8715
    %8788 = vst.msk [vmem:[#allocation3 + $0x150] sm:$0xff] %vm554, %v8716
    %8789 = vst.msk [vmem:[#allocation3 + $0x160] sm:$0xff] %vm554, %v8717
    %8790 = vst.msk [vmem:[#allocation3 + $0x170] sm:$0xff] %vm554, %v8718
    %8791 = vst.msk [vmem:[#allocation3 + $0x180] sm:$0xff] %vm554, %v8719
    %8792 = vst.msk [vmem:[#allocation3 + $0x190] sm:$0xff] %vm554, %v8720
    %8793 = vst.msk [vmem:[#allocation3 + $0x1a0] sm:$0xff] %vm554, %v8721
    %8794 = vst.msk [vmem:[#allocation3 + $0x1b0] sm:$0xff] %vm554, %v8722
    %8795 = vst.msk [vmem:[#allocation3 + $0x1c0] sm:$0xff] %vm554, %v8723
    %8796 = vst.msk [vmem:[#allocation3 + $0x1d0] sm:$0xff] %vm554, %v8724
    %8797 = vst.msk [vmem:[#allocation3 + $0x1e0] sm:$0xff] %vm554, %v8725
    %8798 = vst.msk [vmem:[#allocation3 + $0x1f0] sm:$0xff] %vm554, %v8726
    %8799 = vst.msk [vmem:[#allocation3 + $0x200] sm:$0xff] %vm554, %v8727
    %8800 = vst.msk [vmem:[#allocation3 + $0x210] sm:$0xff] %vm554, %v8728
    %8801 = vst.msk [vmem:[#allocation3 + $0x220] sm:$0xff] %vm554, %v8729
    %8802 = vst.msk [vmem:[#allocation3 + $0x230] sm:$0xff] %vm554, %v8730
    %8803 = vst.msk [vmem:[#allocation3 + $0x240] sm:$0xff] %vm554, %v8731
    %8804 = vst.msk [vmem:[#allocation3 + $0x250] sm:$0xff] %vm554, %v8732
    %8805 = vst.msk [vmem:[#allocation3 + $0x260] sm:$0xff] %vm554, %v8733
    %8806 = vst.msk [vmem:[#allocation3 + $0x270] sm:$0xff] %vm554, %v8734
    %8807 = vst.msk [vmem:[#allocation3 + $0x280] sm:$0xff] %vm554, %v8735
    %8808 = vst.msk [vmem:[#allocation3 + $0x290] sm:$0xff] %vm554, %v8736
    %8809 = vst.msk [vmem:[#allocation3 + $0x2a0] sm:$0xff] %vm554, %v8737
    %8810 = vst.msk [vmem:[#allocation3 + $0x2b0] sm:$0xff] %vm554, %v8738
    %8811 = vst.msk [vmem:[#allocation3 + $0x2c0] sm:$0xff] %vm554, %v8739
    %8812 = vst.msk [vmem:[#allocation3 + $0x2d0] sm:$0xff] %vm554, %v8740
    %8813 = vst.msk [vmem:[#allocation3 + $0x2e0] sm:$0xff] %vm554, %v8741
    %8814 = vst.msk [vmem:[#allocation3 + $0x2f0] sm:$0xff] %vm554, %v8742
    %8815 = vst.msk [vmem:[#allocation3 + $0x300] sm:$0xff] %vm554, %v8743
    %8816 = vst.msk [vmem:[#allocation3 + $0x310] sm:$0xff] %vm554, %v8744
    %8817 = vst.msk [vmem:[#allocation3 + $0x320] sm:$0xff] %vm554, %v8745
    %8818 = vst.msk [vmem:[#allocation3 + $0x330] sm:$0xff] %vm554, %v8746
    %8819 = vst.msk [vmem:[#allocation3 + $0x340] sm:$0xff] %vm554, %v8747
    %8820 = vst.msk [vmem:[#allocation3 + $0x350] sm:$0xff] %vm554, %v8748
    %8821 = vst.msk [vmem:[#allocation3 + $0x360] sm:$0xff] %vm554, %v8749
    %8822 = vst.msk [vmem:[#allocation3 + $0x370] sm:$0xff] %vm554, %v8750
    %8823 = vst.msk [vmem:[#allocation3 + $0x380] sm:$0xff] %vm554, %v8751
    %8824 = vst.msk [vmem:[#allocation3 + $0x390] sm:$0xff] %vm554, %v8752
    %8825 = vst.msk [vmem:[#allocation3 + $0x3a0] sm:$0xff] %vm554, %v8753
    %8826 = vst.msk [vmem:[#allocation3 + $0x3b0] sm:$0xff] %vm554, %v8754
    %8827 = vst.msk [vmem:[#allocation3 + $0x3c0] sm:$0xff] %vm554, %v8755
    %8828 = vst.msk [vmem:[#allocation3 + $0x3d0] sm:$0xff] %vm554, %v8756
    %8829 = vst.msk [vmem:[#allocation3 + $0x3e0] sm:$0xff] %vm554, %v8757
    %8830 = vst.msk [vmem:[#allocation3 + $0x3f0] sm:$0xff] %vm554, %v8758
    %8831 = vst.msk [vmem:[#allocation3 + $0x400] sm:$0xff] %vm554, %v8759
    %8832 = vst.msk [vmem:[#allocation3 + $0x410] sm:$0xff] %vm554, %v8760
    %8833 = vst.msk [vmem:[#allocation3 + $0x420] sm:$0xff] %vm554, %v8761
    %8834 = vst.msk [vmem:[#allocation3 + $0x430] sm:$0xff] %vm554, %v8762
    %8835 = vst.msk [vmem:[#allocation3 + $0x440] sm:$0xff] %vm554, %v8763
    %8836 = vst.msk [vmem:[#allocation3 + $0x450] sm:$0xff] %vm554, %v8764
    %8837 = vst.msk [vmem:[#allocation3 + $0x460] sm:$0xff] %vm554, %v8765
    %8838 = vst.msk [vmem:[#allocation3 + $0x470] sm:$0xff] %vm554, %v8766
    %v8839 = vld [vmem:[#allocation2 + $0x1] sm:$0xff]
    %v8840 = vld [vmem:[#allocation2 + $0x9] sm:$0xff]
    %v8841 = vld [vmem:[#allocation2 + $0x19] sm:$0xff]
    %v8842 = vld [vmem:[#allocation2 + $0x21] sm:$0xff]
    %v8843 = vld [vmem:[#allocation2 + $0x31] sm:$0xff]
    %v8844 = vld [vmem:[#allocation2 + $0x39] sm:$0xff]
    %v8845 = vld [vmem:[#allocation2 + $0x49] sm:$0xff]
    %v8846 = vld [vmem:[#allocation2 + $0x51] sm:$0xff]
    %v8847 = vld [vmem:[#allocation2 + $0x61] sm:$0xff]
    %v8848 = vld [vmem:[#allocation2 + $0x69] sm:$0xff]
    %v8849 = vld [vmem:[#allocation2 + $0x79] sm:$0xff]
    %v8850 = vld [vmem:[#allocation2 + $0x81] sm:$0xff]
    %v8851 = vld [vmem:[#allocation2 + $0x91] sm:$0xff]
    %v8852 = vld [vmem:[#allocation2 + $0x99] sm:$0xff]
    %v8853 = vld [vmem:[#allocation2 + $0xa9] sm:$0xff]
    %v8854 = vld [vmem:[#allocation2 + $0xb1] sm:$0xff]
    %v8855 = vld [vmem:[#allocation2 + $0xc1] sm:$0xff]
    %v8856 = vld [vmem:[#allocation2 + $0xc9] sm:$0xff]
    %v8857 = vld [vmem:[#allocation2 + $0xd9] sm:$0xff]
    %v8858 = vld [vmem:[#allocation2 + $0xe1] sm:$0xff]
    %v8859 = vld [vmem:[#allocation2 + $0xf1] sm:$0xff]
    %v8860 = vld [vmem:[#allocation2 + $0xf9] sm:$0xff]
    %v8861 = vld [vmem:[#allocation2 + $0x109] sm:$0xff]
    %v8862 = vld [vmem:[#allocation2 + $0x111] sm:$0xff]
    %v8863 = vld [vmem:[#allocation2 + $0x121] sm:$0xff]
    %v8864 = vld [vmem:[#allocation2 + $0x129] sm:$0xff]
    %v8865 = vld [vmem:[#allocation2 + $0x139] sm:$0xff]
    %v8866 = vld [vmem:[#allocation2 + $0x141] sm:$0xff]
    %v8867 = vld [vmem:[#allocation2 + $0x151] sm:$0xff]
    %v8868 = vld [vmem:[#allocation2 + $0x159] sm:$0xff]
    %v8869 = vld [vmem:[#allocation2 + $0x169] sm:$0xff]
    %v8870 = vld [vmem:[#allocation2 + $0x171] sm:$0xff]
    %v8871 = vld [vmem:[#allocation2 + $0x181] sm:$0xff]
    %v8872 = vld [vmem:[#allocation2 + $0x189] sm:$0xff]
    %v8873 = vld [vmem:[#allocation2 + $0x199] sm:$0xff]
    %v8874 = vld [vmem:[#allocation2 + $0x1a1] sm:$0xff]
    %v8875 = vld [vmem:[#allocation2 + $0x1b1] sm:$0xff]
    %v8876 = vld [vmem:[#allocation2 + $0x1b9] sm:$0xff]
    %v8877 = vld [vmem:[#allocation2 + $0x1c9] sm:$0xff]
    %v8878 = vld [vmem:[#allocation2 + $0x1d1] sm:$0xff]
    %v8879 = vld [vmem:[#allocation2 + $0x1e1] sm:$0xff]
    %v8880 = vld [vmem:[#allocation2 + $0x1e9] sm:$0xff]
    %v8881 = vld [vmem:[#allocation2 + $0x1f9] sm:$0xff]
    %v8882 = vld [vmem:[#allocation2 + $0x201] sm:$0xff]
    %v8883 = vld [vmem:[#allocation2 + $0x211] sm:$0xff]
    %v8884 = vld [vmem:[#allocation2 + $0x219] sm:$0xff]
    %v8885 = vld [vmem:[#allocation2 + $0x229] sm:$0xff]
    %v8886 = vld [vmem:[#allocation2 + $0x231] sm:$0xff]
    %v8887 = vld [vmem:[#allocation2 + $0x241] sm:$0xff]
    %v8888 = vld [vmem:[#allocation2 + $0x249] sm:$0xff]
    %v8889 = vld [vmem:[#allocation2 + $0x259] sm:$0xff]
    %v8890 = vld [vmem:[#allocation2 + $0x261] sm:$0xff]
    %v8891 = vld [vmem:[#allocation2 + $0x271] sm:$0xff]
    %v8892 = vld [vmem:[#allocation2 + $0x279] sm:$0xff]
    %v8893 = vld [vmem:[#allocation2 + $0x289] sm:$0xff]
    %v8894 = vld [vmem:[#allocation2 + $0x291] sm:$0xff]
    %v8895 = vld [vmem:[#allocation2 + $0x2a1] sm:$0xff]
    %v8896 = vld [vmem:[#allocation2 + $0x2a9] sm:$0xff]
    %v8897 = vld [vmem:[#allocation2 + $0x2b9] sm:$0xff]
    %v8898 = vld [vmem:[#allocation2 + $0x2c1] sm:$0xff]
    %v8899 = vld [vmem:[#allocation2 + $0x2d1] sm:$0xff]
    %v8900 = vld [vmem:[#allocation2 + $0x2d9] sm:$0xff]
    %v8901 = vld [vmem:[#allocation2 + $0x2e9] sm:$0xff]
    %v8902 = vld [vmem:[#allocation2 + $0x2f1] sm:$0xff]
    %v8903 = vld [vmem:[#allocation2 + $0x301] sm:$0xff]
    %v8904 = vld [vmem:[#allocation2 + $0x309] sm:$0xff]
    %v8905 = vld [vmem:[#allocation2 + $0x319] sm:$0xff]
    %v8906 = vld [vmem:[#allocation2 + $0x321] sm:$0xff]
    %v8907 = vld [vmem:[#allocation2 + $0x331] sm:$0xff]
    %v8908 = vld [vmem:[#allocation2 + $0x339] sm:$0xff]
    %v8909 = vld [vmem:[#allocation2 + $0x349] sm:$0xff]
    %v8910 = vld [vmem:[#allocation2 + $0x351] sm:$0xff]
    %8983 = vrot.lane.b32.xlu0 %v8839, 32
    %v8984 = vpop.permute.xlu0 %8983
    %8985 = vrot.lane.b32.xlu0 %v8840, 32
    %v8986 = vpop.permute.xlu0 %8985
    %8987 = vrot.lane.b32.xlu0 %v8841, 32
    %v8988 = vpop.permute.xlu0 %8987
    %8989 = vrot.lane.b32.xlu0 %v8842, 32
    %v8990 = vpop.permute.xlu0 %8989
    %8991 = vrot.lane.b32.xlu0 %v8843, 32
    %v8992 = vpop.permute.xlu0 %8991
    %8993 = vrot.lane.b32.xlu0 %v8844, 32
    %v8994 = vpop.permute.xlu0 %8993
    %8995 = vrot.lane.b32.xlu0 %v8845, 32
    %v8996 = vpop.permute.xlu0 %8995
    %8997 = vrot.lane.b32.xlu0 %v8846, 32
    %v8998 = vpop.permute.xlu0 %8997
    %8999 = vrot.lane.b32.xlu0 %v8847, 32
    %v9000 = vpop.permute.xlu0 %8999
    %9001 = vrot.lane.b32.xlu0 %v8848, 32
    %v9002 = vpop.permute.xlu0 %9001
    %9003 = vrot.lane.b32.xlu0 %v8849, 32
    %v9004 = vpop.permute.xlu0 %9003
    %9005 = vrot.lane.b32.xlu0 %v8850, 32
    %v9006 = vpop.permute.xlu0 %9005
    %9007 = vrot.lane.b32.xlu0 %v8851, 32
    %v9008 = vpop.permute.xlu0 %9007
    %9009 = vrot.lane.b32.xlu0 %v8852, 32
    %v9010 = vpop.permute.xlu0 %9009
    %9011 = vrot.lane.b32.xlu0 %v8853, 32
    %v9012 = vpop.permute.xlu0 %9011
    %9013 = vrot.lane.b32.xlu0 %v8854, 32
    %v9014 = vpop.permute.xlu0 %9013
    %9015 = vrot.lane.b32.xlu0 %v8855, 32
    %v9016 = vpop.permute.xlu0 %9015
    %9017 = vrot.lane.b32.xlu0 %v8856, 32
    %v9018 = vpop.permute.xlu0 %9017
    %9019 = vrot.lane.b32.xlu0 %v8857, 32
    %v9020 = vpop.permute.xlu0 %9019
    %9021 = vrot.lane.b32.xlu0 %v8858, 32
    %v9022 = vpop.permute.xlu0 %9021
    %9023 = vrot.lane.b32.xlu0 %v8859, 32
    %v9024 = vpop.permute.xlu0 %9023
    %9025 = vrot.lane.b32.xlu0 %v8860, 32
    %v9026 = vpop.permute.xlu0 %9025
    %9027 = vrot.lane.b32.xlu0 %v8861, 32
    %v9028 = vpop.permute.xlu0 %9027
    %9029 = vrot.lane.b32.xlu0 %v8862, 32
    %v9030 = vpop.permute.xlu0 %9029
    %9031 = vrot.lane.b32.xlu0 %v8863, 32
    %v9032 = vpop.permute.xlu0 %9031
    %9033 = vrot.lane.b32.xlu0 %v8864, 32
    %v9034 = vpop.permute.xlu0 %9033
    %9035 = vrot.lane.b32.xlu0 %v8865, 32
    %v9036 = vpop.permute.xlu0 %9035
    %9037 = vrot.lane.b32.xlu0 %v8866, 32
    %v9038 = vpop.permute.xlu0 %9037
    %9039 = vrot.lane.b32.xlu0 %v8867, 32
    %v9040 = vpop.permute.xlu0 %9039
    %9041 = vrot.lane.b32.xlu0 %v8868, 32
    %v9042 = vpop.permute.xlu0 %9041
    %9043 = vrot.lane.b32.xlu0 %v8869, 32
    %v9044 = vpop.permute.xlu0 %9043
    %9045 = vrot.lane.b32.xlu0 %v8870, 32
    %v9046 = vpop.permute.xlu0 %9045
    %9047 = vrot.lane.b32.xlu0 %v8871, 32
    %v9048 = vpop.permute.xlu0 %9047
    %9049 = vrot.lane.b32.xlu0 %v8872, 32
    %v9050 = vpop.permute.xlu0 %9049
    %9051 = vrot.lane.b32.xlu0 %v8873, 32
    %v9052 = vpop.permute.xlu0 %9051
    %9053 = vrot.lane.b32.xlu0 %v8874, 32
    %v9054 = vpop.permute.xlu0 %9053
    %9055 = vrot.lane.b32.xlu0 %v8875, 32
    %v9056 = vpop.permute.xlu0 %9055
    %9057 = vrot.lane.b32.xlu0 %v8876, 32
    %v9058 = vpop.permute.xlu0 %9057
    %9059 = vrot.lane.b32.xlu0 %v8877, 32
    %v9060 = vpop.permute.xlu0 %9059
    %9061 = vrot.lane.b32.xlu0 %v8878, 32
    %v9062 = vpop.permute.xlu0 %9061
    %9063 = vrot.lane.b32.xlu0 %v8879, 32
    %v9064 = vpop.permute.xlu0 %9063
    %9065 = vrot.lane.b32.xlu0 %v8880, 32
    %v9066 = vpop.permute.xlu0 %9065
    %9067 = vrot.lane.b32.xlu0 %v8881, 32
    %v9068 = vpop.permute.xlu0 %9067
    %9069 = vrot.lane.b32.xlu0 %v8882, 32
    %v9070 = vpop.permute.xlu0 %9069
    %9071 = vrot.lane.b32.xlu0 %v8883, 32
    %v9072 = vpop.permute.xlu0 %9071
    %9073 = vrot.lane.b32.xlu0 %v8884, 32
    %v9074 = vpop.permute.xlu0 %9073
    %9075 = vrot.lane.b32.xlu0 %v8885, 32
    %v9076 = vpop.permute.xlu0 %9075
    %9077 = vrot.lane.b32.xlu0 %v8886, 32
    %v9078 = vpop.permute.xlu0 %9077
    %9079 = vrot.lane.b32.xlu0 %v8887, 32
    %v9080 = vpop.permute.xlu0 %9079
    %9081 = vrot.lane.b32.xlu0 %v8888, 32
    %v9082 = vpop.permute.xlu0 %9081
    %9083 = vrot.lane.b32.xlu0 %v8889, 32
    %v9084 = vpop.permute.xlu0 %9083
    %9085 = vrot.lane.b32.xlu0 %v8890, 32
    %v9086 = vpop.permute.xlu0 %9085
    %9087 = vrot.lane.b32.xlu0 %v8891, 32
    %v9088 = vpop.permute.xlu0 %9087
    %9089 = vrot.lane.b32.xlu0 %v8892, 32
    %v9090 = vpop.permute.xlu0 %9089
    %9091 = vrot.lane.b32.xlu0 %v8893, 32
    %v9092 = vpop.permute.xlu0 %9091
    %9093 = vrot.lane.b32.xlu0 %v8894, 32
    %v9094 = vpop.permute.xlu0 %9093
    %9095 = vrot.lane.b32.xlu0 %v8895, 32
    %v9096 = vpop.permute.xlu0 %9095
    %9097 = vrot.lane.b32.xlu0 %v8896, 32
    %v9098 = vpop.permute.xlu0 %9097
    %9099 = vrot.lane.b32.xlu0 %v8897, 32
    %v9100 = vpop.permute.xlu0 %9099
    %9101 = vrot.lane.b32.xlu0 %v8898, 32
    %v9102 = vpop.permute.xlu0 %9101
    %9103 = vrot.lane.b32.xlu0 %v8899, 32
    %v9104 = vpop.permute.xlu0 %9103
    %9105 = vrot.lane.b32.xlu0 %v8900, 32
    %v9106 = vpop.permute.xlu0 %9105
    %9107 = vrot.lane.b32.xlu0 %v8901, 32
    %v9108 = vpop.permute.xlu0 %9107
    %9109 = vrot.lane.b32.xlu0 %v8902, 32
    %v9110 = vpop.permute.xlu0 %9109
    %9111 = vrot.lane.b32.xlu0 %v8903, 32
    %v9112 = vpop.permute.xlu0 %9111
    %9113 = vrot.lane.b32.xlu0 %v8904, 32
    %v9114 = vpop.permute.xlu0 %9113
    %9115 = vrot.lane.b32.xlu0 %v8905, 32
    %v9116 = vpop.permute.xlu0 %9115
    %9117 = vrot.lane.b32.xlu0 %v8906, 32
    %v9118 = vpop.permute.xlu0 %9117
    %9119 = vrot.lane.b32.xlu0 %v8907, 32
    %v9120 = vpop.permute.xlu0 %9119
    %9121 = vrot.lane.b32.xlu0 %v8908, 32
    %v9122 = vpop.permute.xlu0 %9121
    %9123 = vrot.lane.b32.xlu0 %v8909, 32
    %v9124 = vpop.permute.xlu0 %9123
    %9125 = vrot.lane.b32.xlu0 %v8910, 32
    %v9126 = vpop.permute.xlu0 %9125
    %9199 = vst.msk [vmem:[#allocation3] sm:$0xff] %vm1259, %v8984
    %9200 = vst.msk [vmem:[#allocation3 + $0x10] sm:$0xff] %vm1259, %v8986
    %9201 = vst.msk [vmem:[#allocation3 + $0x20] sm:$0xff] %vm1259, %v8988
    %9202 = vst.msk [vmem:[#allocation3 + $0x30] sm:$0xff] %vm1259, %v8990
    %9203 = vst.msk [vmem:[#allocation3 + $0x40] sm:$0xff] %vm1259, %v8992
    %9204 = vst.msk [vmem:[#allocation3 + $0x50] sm:$0xff] %vm1259, %v8994
    %9205 = vst.msk [vmem:[#allocation3 + $0x60] sm:$0xff] %vm1259, %v8996
    %9206 = vst.msk [vmem:[#allocation3 + $0x70] sm:$0xff] %vm1259, %v8998
    %9207 = vst.msk [vmem:[#allocation3 + $0x80] sm:$0xff] %vm1259, %v9000
    %9208 = vst.msk [vmem:[#allocation3 + $0x90] sm:$0xff] %vm1259, %v9002
    %9209 = vst.msk [vmem:[#allocation3 + $0xa0] sm:$0xff] %vm1259, %v9004
    %9210 = vst.msk [vmem:[#allocation3 + $0xb0] sm:$0xff] %vm1259, %v9006
    %9211 = vst.msk [vmem:[#allocation3 + $0xc0] sm:$0xff] %vm1259, %v9008
    %9212 = vst.msk [vmem:[#allocation3 + $0xd0] sm:$0xff] %vm1259, %v9010
    %9213 = vst.msk [vmem:[#allocation3 + $0xe0] sm:$0xff] %vm1259, %v9012
    %9214 = vst.msk [vmem:[#allocation3 + $0xf0] sm:$0xff] %vm1259, %v9014
    %9215 = vst.msk [vmem:[#allocation3 + $0x100] sm:$0xff] %vm1259, %v9016
    %9216 = vst.msk [vmem:[#allocation3 + $0x110] sm:$0xff] %vm1259, %v9018
    %9217 = vst.msk [vmem:[#allocation3 + $0x120] sm:$0xff] %vm1259, %v9020
    %9218 = vst.msk [vmem:[#allocation3 + $0x130] sm:$0xff] %vm1259, %v9022
    %9219 = vst.msk [vmem:[#allocation3 + $0x140] sm:$0xff] %vm1259, %v9024
    %9220 = vst.msk [vmem:[#allocation3 + $0x150] sm:$0xff] %vm1259, %v9026
    %9221 = vst.msk [vmem:[#allocation3 + $0x160] sm:$0xff] %vm1259, %v9028
    %9222 = vst.msk [vmem:[#allocation3 + $0x170] sm:$0xff] %vm1259, %v9030
    %9223 = vst.msk [vmem:[#allocation3 + $0x180] sm:$0xff] %vm1259, %v9032
    %9224 = vst.msk [vmem:[#allocation3 + $0x190] sm:$0xff] %vm1259, %v9034
    %9225 = vst.msk [vmem:[#allocation3 + $0x1a0] sm:$0xff] %vm1259, %v9036
    %9226 = vst.msk [vmem:[#allocation3 + $0x1b0] sm:$0xff] %vm1259, %v9038
    %9227 = vst.msk [vmem:[#allocation3 + $0x1c0] sm:$0xff] %vm1259, %v9040
    %9228 = vst.msk [vmem:[#allocation3 + $0x1d0] sm:$0xff] %vm1259, %v9042
    %9229 = vst.msk [vmem:[#allocation3 + $0x1e0] sm:$0xff] %vm1259, %v9044
    %9230 = vst.msk [vmem:[#allocation3 + $0x1f0] sm:$0xff] %vm1259, %v9046
    %9231 = vst.msk [vmem:[#allocation3 + $0x200] sm:$0xff] %vm1259, %v9048
    %9232 = vst.msk [vmem:[#allocation3 + $0x210] sm:$0xff] %vm1259, %v9050
    %9233 = vst.msk [vmem:[#allocation3 + $0x220] sm:$0xff] %vm1259, %v9052
    %9234 = vst.msk [vmem:[#allocation3 + $0x230] sm:$0xff] %vm1259, %v9054
    %9235 = vst.msk [vmem:[#allocation3 + $0x240] sm:$0xff] %vm1259, %v9056
    %9236 = vst.msk [vmem:[#allocation3 + $0x250] sm:$0xff] %vm1259, %v9058
    %9237 = vst.msk [vmem:[#allocation3 + $0x260] sm:$0xff] %vm1259, %v9060
    %9238 = vst.msk [vmem:[#allocation3 + $0x270] sm:$0xff] %vm1259, %v9062
    %9239 = vst.msk [vmem:[#allocation3 + $0x280] sm:$0xff] %vm1259, %v9064
    %9240 = vst.msk [vmem:[#allocation3 + $0x290] sm:$0xff] %vm1259, %v9066
    %9241 = vst.msk [vmem:[#allocation3 + $0x2a0] sm:$0xff] %vm1259, %v9068
    %9242 = vst.msk [vmem:[#allocation3 + $0x2b0] sm:$0xff] %vm1259, %v9070
    %9243 = vst.msk [vmem:[#allocation3 + $0x2c0] sm:$0xff] %vm1259, %v9072
    %9244 = vst.msk [vmem:[#allocation3 + $0x2d0] sm:$0xff] %vm1259, %v9074
    %9245 = vst.msk [vmem:[#allocation3 + $0x2e0] sm:$0xff] %vm1259, %v9076
    %9246 = vst.msk [vmem:[#allocation3 + $0x2f0] sm:$0xff] %vm1259, %v9078
    %9247 = vst.msk [vmem:[#allocation3 + $0x300] sm:$0xff] %vm1259, %v9080
    %9248 = vst.msk [vmem:[#allocation3 + $0x310] sm:$0xff] %vm1259, %v9082
    %9249 = vst.msk [vmem:[#allocation3 + $0x320] sm:$0xff] %vm1259, %v9084
    %9250 = vst.msk [vmem:[#allocation3 + $0x330] sm:$0xff] %vm1259, %v9086
    %9251 = vst.msk [vmem:[#allocation3 + $0x340] sm:$0xff] %vm1259, %v9088
    %9252 = vst.msk [vmem:[#allocation3 + $0x350] sm:$0xff] %vm1259, %v9090
    %9253 = vst.msk [vmem:[#allocation3 + $0x360] sm:$0xff] %vm1259, %v9092
    %9254 = vst.msk [vmem:[#allocation3 + $0x370] sm:$0xff] %vm1259, %v9094
    %9255 = vst.msk [vmem:[#allocation3 + $0x380] sm:$0xff] %vm1259, %v9096
    %9256 = vst.msk [vmem:[#allocation3 + $0x390] sm:$0xff] %vm1259, %v9098
    %9257 = vst.msk [vmem:[#allocation3 + $0x3a0] sm:$0xff] %vm1259, %v9100
    %9258 = vst.msk [vmem:[#allocation3 + $0x3b0] sm:$0xff] %vm1259, %v9102
    %9259 = vst.msk [vmem:[#allocation3 + $0x3c0] sm:$0xff] %vm1259, %v9104
    %9260 = vst.msk [vmem:[#allocation3 + $0x3d0] sm:$0xff] %vm1259, %v9106
    %9261 = vst.msk [vmem:[#allocation3 + $0x3e0] sm:$0xff] %vm1259, %v9108
    %9262 = vst.msk [vmem:[#allocation3 + $0x3f0] sm:$0xff] %vm1259, %v9110
    %9263 = vst.msk [vmem:[#allocation3 + $0x400] sm:$0xff] %vm1259, %v9112
    %9264 = vst.msk [vmem:[#allocation3 + $0x410] sm:$0xff] %vm1259, %v9114
    %9265 = vst.msk [vmem:[#allocation3 + $0x420] sm:$0xff] %vm1259, %v9116
    %9266 = vst.msk [vmem:[#allocation3 + $0x430] sm:$0xff] %vm1259, %v9118
    %9267 = vst.msk [vmem:[#allocation3 + $0x440] sm:$0xff] %vm1259, %v9120
    %9268 = vst.msk [vmem:[#allocation3 + $0x450] sm:$0xff] %vm1259, %v9122
    %9269 = vst.msk [vmem:[#allocation3 + $0x460] sm:$0xff] %vm1259, %v9124
    %9270 = vst.msk [vmem:[#allocation3 + $0x470] sm:$0xff] %vm1259, %v9126
    %v9271 = vld [vmem:[#allocation2 + $0x2] sm:$0xff]
    %v9272 = vld [vmem:[#allocation2 + $0xa] sm:$0xff]
    %v9273 = vld [vmem:[#allocation2 + $0x1a] sm:$0xff]
    %v9274 = vld [vmem:[#allocation2 + $0x22] sm:$0xff]
    %v9275 = vld [vmem:[#allocation2 + $0x32] sm:$0xff]
    %v9276 = vld [vmem:[#allocation2 + $0x3a] sm:$0xff]
    %v9277 = vld [vmem:[#allocation2 + $0x4a] sm:$0xff]
    %v9278 = vld [vmem:[#allocation2 + $0x52] sm:$0xff]
    %v9279 = vld [vmem:[#allocation2 + $0x62] sm:$0xff]
    %v9280 = vld [vmem:[#allocation2 + $0x6a] sm:$0xff]
    %v9281 = vld [vmem:[#allocation2 + $0x7a] sm:$0xff]
    %v9282 = vld [vmem:[#allocation2 + $0x82] sm:$0xff]
    %v9283 = vld [vmem:[#allocation2 + $0x92] sm:$0xff]
    %v9284 = vld [vmem:[#allocation2 + $0x9a] sm:$0xff]
    %v9285 = vld [vmem:[#allocation2 + $0xaa] sm:$0xff]
    %v9286 = vld [vmem:[#allocation2 + $0xb2] sm:$0xff]
    %v9287 = vld [vmem:[#allocation2 + $0xc2] sm:$0xff]
    %v9288 = vld [vmem:[#allocation2 + $0xca] sm:$0xff]
    %v9289 = vld [vmem:[#allocation2 + $0xda] sm:$0xff]
    %v9290 = vld [vmem:[#allocation2 + $0xe2] sm:$0xff]
    %v9291 = vld [vmem:[#allocation2 + $0xf2] sm:$0xff]
    %v9292 = vld [vmem:[#allocation2 + $0xfa] sm:$0xff]
    %v9293 = vld [vmem:[#allocation2 + $0x10a] sm:$0xff]
    %v9294 = vld [vmem:[#allocation2 + $0x112] sm:$0xff]
    %v9295 = vld [vmem:[#allocation2 + $0x122] sm:$0xff]
    %v9296 = vld [vmem:[#allocation2 + $0x12a] sm:$0xff]
    %v9297 = vld [vmem:[#allocation2 + $0x13a] sm:$0xff]
    %v9298 = vld [vmem:[#allocation2 + $0x142] sm:$0xff]
    %v9299 = vld [vmem:[#allocation2 + $0x152] sm:$0xff]
    %v9300 = vld [vmem:[#allocation2 + $0x15a] sm:$0xff]
    %v9301 = vld [vmem:[#allocation2 + $0x16a] sm:$0xff]
    %v9302 = vld [vmem:[#allocation2 + $0x172] sm:$0xff]
    %v9303 = vld [vmem:[#allocation2 + $0x182] sm:$0xff]
    %v9304 = vld [vmem:[#allocation2 + $0x18a] sm:$0xff]
    %v9305 = vld [vmem:[#allocation2 + $0x19a] sm:$0xff]
    %v9306 = vld [vmem:[#allocation2 + $0x1a2] sm:$0xff]
    %v9307 = vld [vmem:[#allocation2 + $0x1b2] sm:$0xff]
    %v9308 = vld [vmem:[#allocation2 + $0x1ba] sm:$0xff]
    %v9309 = vld [vmem:[#allocation2 + $0x1ca] sm:$0xff]
    %v9310 = vld [vmem:[#allocation2 + $0x1d2] sm:$0xff]
    %v9311 = vld [vmem:[#allocation2 + $0x1e2] sm:$0xff]
    %v9312 = vld [vmem:[#allocation2 + $0x1ea] sm:$0xff]
    %v9313 = vld [vmem:[#allocation2 + $0x1fa] sm:$0xff]
    %v9314 = vld [vmem:[#allocation2 + $0x202] sm:$0xff]
    %v9315 = vld [vmem:[#allocation2 + $0x212] sm:$0xff]
    %v9316 = vld [vmem:[#allocation2 + $0x21a] sm:$0xff]
    %v9317 = vld [vmem:[#allocation2 + $0x22a] sm:$0xff]
    %v9318 = vld [vmem:[#allocation2 + $0x232] sm:$0xff]
    %v9319 = vld [vmem:[#allocation2 + $0x242] sm:$0xff]
    %v9320 = vld [vmem:[#allocation2 + $0x24a] sm:$0xff]
    %v9321 = vld [vmem:[#allocation2 + $0x25a] sm:$0xff]
    %v9322 = vld [vmem:[#allocation2 + $0x262] sm:$0xff]
    %v9323 = vld [vmem:[#allocation2 + $0x272] sm:$0xff]
    %v9324 = vld [vmem:[#allocation2 + $0x27a] sm:$0xff]
    %v9325 = vld [vmem:[#allocation2 + $0x28a] sm:$0xff]
    %v9326 = vld [vmem:[#allocation2 + $0x292] sm:$0xff]
    %v9327 = vld [vmem:[#allocation2 + $0x2a2] sm:$0xff]
    %v9328 = vld [vmem:[#allocation2 + $0x2aa] sm:$0xff]
    %v9329 = vld [vmem:[#allocation2 + $0x2ba] sm:$0xff]
    %v9330 = vld [vmem:[#allocation2 + $0x2c2] sm:$0xff]
    %v9331 = vld [vmem:[#allocation2 + $0x2d2] sm:$0xff]
    %v9332 = vld [vmem:[#allocation2 + $0x2da] sm:$0xff]
    %v9333 = vld [vmem:[#allocation2 + $0x2ea] sm:$0xff]
    %v9334 = vld [vmem:[#allocation2 + $0x2f2] sm:$0xff]
    %v9335 = vld [vmem:[#allocation2 + $0x302] sm:$0xff]
    %v9336 = vld [vmem:[#allocation2 + $0x30a] sm:$0xff]
    %v9337 = vld [vmem:[#allocation2 + $0x31a] sm:$0xff]
    %v9338 = vld [vmem:[#allocation2 + $0x322] sm:$0xff]
    %v9339 = vld [vmem:[#allocation2 + $0x332] sm:$0xff]
    %v9340 = vld [vmem:[#allocation2 + $0x33a] sm:$0xff]
    %v9341 = vld [vmem:[#allocation2 + $0x34a] sm:$0xff]
    %v9342 = vld [vmem:[#allocation2 + $0x352] sm:$0xff]
    %9415 = vrot.lane.b32.xlu0 %v9271, 64
    %v9416 = vpop.permute.xlu0 %9415
    %9417 = vrot.lane.b32.xlu0 %v9272, 64
    %v9418 = vpop.permute.xlu0 %9417
    %9419 = vrot.lane.b32.xlu0 %v9273, 64
    %v9420 = vpop.permute.xlu0 %9419
    %9421 = vrot.lane.b32.xlu0 %v9274, 64
    %v9422 = vpop.permute.xlu0 %9421
    %9423 = vrot.lane.b32.xlu0 %v9275, 64
    %v9424 = vpop.permute.xlu0 %9423
    %9425 = vrot.lane.b32.xlu0 %v9276, 64
    %v9426 = vpop.permute.xlu0 %9425
    %9427 = vrot.lane.b32.xlu0 %v9277, 64
    %v9428 = vpop.permute.xlu0 %9427
    %9429 = vrot.lane.b32.xlu0 %v9278, 64
    %v9430 = vpop.permute.xlu0 %9429
    %9431 = vrot.lane.b32.xlu0 %v9279, 64
    %v9432 = vpop.permute.xlu0 %9431
    %9433 = vrot.lane.b32.xlu0 %v9280, 64
    %v9434 = vpop.permute.xlu0 %9433
    %9435 = vrot.lane.b32.xlu0 %v9281, 64
    %v9436 = vpop.permute.xlu0 %9435
    %9437 = vrot.lane.b32.xlu0 %v9282, 64
    %v9438 = vpop.permute.xlu0 %9437
    %9439 = vrot.lane.b32.xlu0 %v9283, 64
    %v9440 = vpop.permute.xlu0 %9439
    %9441 = vrot.lane.b32.xlu0 %v9284, 64
    %v9442 = vpop.permute.xlu0 %9441
    %9443 = vrot.lane.b32.xlu0 %v9285, 64
    %v9444 = vpop.permute.xlu0 %9443
    %9445 = vrot.lane.b32.xlu0 %v9286, 64
    %v9446 = vpop.permute.xlu0 %9445
    %9447 = vrot.lane.b32.xlu0 %v9287, 64
    %v9448 = vpop.permute.xlu0 %9447
    %9449 = vrot.lane.b32.xlu0 %v9288, 64
    %v9450 = vpop.permute.xlu0 %9449
    %9451 = vrot.lane.b32.xlu0 %v9289, 64
    %v9452 = vpop.permute.xlu0 %9451
    %9453 = vrot.lane.b32.xlu0 %v9290, 64
    %v9454 = vpop.permute.xlu0 %9453
    %9455 = vrot.lane.b32.xlu0 %v9291, 64
    %v9456 = vpop.permute.xlu0 %9455
    %9457 = vrot.lane.b32.xlu0 %v9292, 64
    %v9458 = vpop.permute.xlu0 %9457
    %9459 = vrot.lane.b32.xlu0 %v9293, 64
    %v9460 = vpop.permute.xlu0 %9459
    %9461 = vrot.lane.b32.xlu0 %v9294, 64
    %v9462 = vpop.permute.xlu0 %9461
    %9463 = vrot.lane.b32.xlu0 %v9295, 64
    %v9464 = vpop.permute.xlu0 %9463
    %9465 = vrot.lane.b32.xlu0 %v9296, 64
    %v9466 = vpop.permute.xlu0 %9465
    %9467 = vrot.lane.b32.xlu0 %v9297, 64
    %v9468 = vpop.permute.xlu0 %9467
    %9469 = vrot.lane.b32.xlu0 %v9298, 64
    %v9470 = vpop.permute.xlu0 %9469
    %9471 = vrot.lane.b32.xlu0 %v9299, 64
    %v9472 = vpop.permute.xlu0 %9471
    %9473 = vrot.lane.b32.xlu0 %v9300, 64
    %v9474 = vpop.permute.xlu0 %9473
    %9475 = vrot.lane.b32.xlu0 %v9301, 64
    %v9476 = vpop.permute.xlu0 %9475
    %9477 = vrot.lane.b32.xlu0 %v9302, 64
    %v9478 = vpop.permute.xlu0 %9477
    %9479 = vrot.lane.b32.xlu0 %v9303, 64
    %v9480 = vpop.permute.xlu0 %9479
    %9481 = vrot.lane.b32.xlu0 %v9304, 64
    %v9482 = vpop.permute.xlu0 %9481
    %9483 = vrot.lane.b32.xlu0 %v9305, 64
    %v9484 = vpop.permute.xlu0 %9483
    %9485 = vrot.lane.b32.xlu0 %v9306, 64
    %v9486 = vpop.permute.xlu0 %9485
    %9487 = vrot.lane.b32.xlu0 %v9307, 64
    %v9488 = vpop.permute.xlu0 %9487
    %9489 = vrot.lane.b32.xlu0 %v9308, 64
    %v9490 = vpop.permute.xlu0 %9489
    %9491 = vrot.lane.b32.xlu0 %v9309, 64
    %v9492 = vpop.permute.xlu0 %9491
    %9493 = vrot.lane.b32.xlu0 %v9310, 64
    %v9494 = vpop.permute.xlu0 %9493
    %9495 = vrot.lane.b32.xlu0 %v9311, 64
    %v9496 = vpop.permute.xlu0 %9495
    %9497 = vrot.lane.b32.xlu0 %v9312, 64
    %v9498 = vpop.permute.xlu0 %9497
    %9499 = vrot.lane.b32.xlu0 %v9313, 64
    %v9500 = vpop.permute.xlu0 %9499
    %9501 = vrot.lane.b32.xlu0 %v9314, 64
    %v9502 = vpop.permute.xlu0 %9501
    %9503 = vrot.lane.b32.xlu0 %v9315, 64
    %v9504 = vpop.permute.xlu0 %9503
    %9505 = vrot.lane.b32.xlu0 %v9316, 64
    %v9506 = vpop.permute.xlu0 %9505
    %9507 = vrot.lane.b32.xlu0 %v9317, 64
    %v9508 = vpop.permute.xlu0 %9507
    %9509 = vrot.lane.b32.xlu0 %v9318, 64
    %v9510 = vpop.permute.xlu0 %9509
    %9511 = vrot.lane.b32.xlu0 %v9319, 64
    %v9512 = vpop.permute.xlu0 %9511
    %9513 = vrot.lane.b32.xlu0 %v9320, 64
    %v9514 = vpop.permute.xlu0 %9513
    %9515 = vrot.lane.b32.xlu0 %v9321, 64
    %v9516 = vpop.permute.xlu0 %9515
    %9517 = vrot.lane.b32.xlu0 %v9322, 64
    %v9518 = vpop.permute.xlu0 %9517
    %9519 = vrot.lane.b32.xlu0 %v9323, 64
    %v9520 = vpop.permute.xlu0 %9519
    %9521 = vrot.lane.b32.xlu0 %v9324, 64
    %v9522 = vpop.permute.xlu0 %9521
    %9523 = vrot.lane.b32.xlu0 %v9325, 64
    %v9524 = vpop.permute.xlu0 %9523
    %9525 = vrot.lane.b32.xlu0 %v9326, 64
    %v9526 = vpop.permute.xlu0 %9525
    %9527 = vrot.lane.b32.xlu0 %v9327, 64
    %v9528 = vpop.permute.xlu0 %9527
    %9529 = vrot.lane.b32.xlu0 %v9328, 64
    %v9530 = vpop.permute.xlu0 %9529
    %9531 = vrot.lane.b32.xlu0 %v9329, 64
    %v9532 = vpop.permute.xlu0 %9531
    %9533 = vrot.lane.b32.xlu0 %v9330, 64
    %v9534 = vpop.permute.xlu0 %9533
    %9535 = vrot.lane.b32.xlu0 %v9331, 64
    %v9536 = vpop.permute.xlu0 %9535
    %9537 = vrot.lane.b32.xlu0 %v9332, 64
    %v9538 = vpop.permute.xlu0 %9537
    %9539 = vrot.lane.b32.xlu0 %v9333, 64
    %v9540 = vpop.permute.xlu0 %9539
    %9541 = vrot.lane.b32.xlu0 %v9334, 64
    %v9542 = vpop.permute.xlu0 %9541
    %9543 = vrot.lane.b32.xlu0 %v9335, 64
    %v9544 = vpop.permute.xlu0 %9543
    %9545 = vrot.lane.b32.xlu0 %v9336, 64
    %v9546 = vpop.permute.xlu0 %9545
    %9547 = vrot.lane.b32.xlu0 %v9337, 64
    %v9548 = vpop.permute.xlu0 %9547
    %9549 = vrot.lane.b32.xlu0 %v9338, 64
    %v9550 = vpop.permute.xlu0 %9549
    %9551 = vrot.lane.b32.xlu0 %v9339, 64
    %v9552 = vpop.permute.xlu0 %9551
    %9553 = vrot.lane.b32.xlu0 %v9340, 64
    %v9554 = vpop.permute.xlu0 %9553
    %9555 = vrot.lane.b32.xlu0 %v9341, 64
    %v9556 = vpop.permute.xlu0 %9555
    %9557 = vrot.lane.b32.xlu0 %v9342, 64
    %v9558 = vpop.permute.xlu0 %9557
    %vm9631 = vcmask 785920
    %9632 = vst.msk [vmem:[#allocation3] sm:$0xff] %vm9631, %v9416
    %9633 = vst.msk [vmem:[#allocation3 + $0x10] sm:$0xff] %vm9631, %v9418
    %9634 = vst.msk [vmem:[#allocation3 + $0x20] sm:$0xff] %vm9631, %v9420
    %9635 = vst.msk [vmem:[#allocation3 + $0x30] sm:$0xff] %vm9631, %v9422
    %9636 = vst.msk [vmem:[#allocation3 + $0x40] sm:$0xff] %vm9631, %v9424
    %9637 = vst.msk [vmem:[#allocation3 + $0x50] sm:$0xff] %vm9631, %v9426
    %9638 = vst.msk [vmem:[#allocation3 + $0x60] sm:$0xff] %vm9631, %v9428
    %9639 = vst.msk [vmem:[#allocation3 + $0x70] sm:$0xff] %vm9631, %v9430
    %9640 = vst.msk [vmem:[#allocation3 + $0x80] sm:$0xff] %vm9631, %v9432
    %9641 = vst.msk [vmem:[#allocation3 + $0x90] sm:$0xff] %vm9631, %v9434
    %9642 = vst.msk [vmem:[#allocation3 + $0xa0] sm:$0xff] %vm9631, %v9436
    %9643 = vst.msk [vmem:[#allocation3 + $0xb0] sm:$0xff] %vm9631, %v9438
    %9644 = vst.msk [vmem:[#allocation3 + $0xc0] sm:$0xff] %vm9631, %v9440
    %9645 = vst.msk [vmem:[#allocation3 + $0xd0] sm:$0xff] %vm9631, %v9442
    %9646 = vst.msk [vmem:[#allocation3 + $0xe0] sm:$0xff] %vm9631, %v9444
    %9647 = vst.msk [vmem:[#allocation3 + $0xf0] sm:$0xff] %vm9631, %v9446
    %9648 = vst.msk [vmem:[#allocation3 + $0x100] sm:$0xff] %vm9631, %v9448
    %9649 = vst.msk [vmem:[#allocation3 + $0x110] sm:$0xff] %vm9631, %v9450
    %9650 = vst.msk [vmem:[#allocation3 + $0x120] sm:$0xff] %vm9631, %v9452
    %9651 = vst.msk [vmem:[#allocation3 + $0x130] sm:$0xff] %vm9631, %v9454
    %9652 = vst.msk [vmem:[#allocation3 + $0x140] sm:$0xff] %vm9631, %v9456
    %9653 = vst.msk [vmem:[#allocation3 + $0x150] sm:$0xff] %vm9631, %v9458
    %9654 = vst.msk [vmem:[#allocation3 + $0x160] sm:$0xff] %vm9631, %v9460
    %9655 = vst.msk [vmem:[#allocation3 + $0x170] sm:$0xff] %vm9631, %v9462
    %9656 = vst.msk [vmem:[#allocation3 + $0x180] sm:$0xff] %vm9631, %v9464
    %9657 = vst.msk [vmem:[#allocation3 + $0x190] sm:$0xff] %vm9631, %v9466
    %9658 = vst.msk [vmem:[#allocation3 + $0x1a0] sm:$0xff] %vm9631, %v9468
    %9659 = vst.msk [vmem:[#allocation3 + $0x1b0] sm:$0xff] %vm9631, %v9470
    %9660 = vst.msk [vmem:[#allocation3 + $0x1c0] sm:$0xff] %vm9631, %v9472
    %9661 = vst.msk [vmem:[#allocation3 + $0x1d0] sm:$0xff] %vm9631, %v9474
    %9662 = vst.msk [vmem:[#allocation3 + $0x1e0] sm:$0xff] %vm9631, %v9476
    %9663 = vst.msk [vmem:[#allocation3 + $0x1f0] sm:$0xff] %vm9631, %v9478
    %9664 = vst.msk [vmem:[#allocation3 + $0x200] sm:$0xff] %vm9631, %v9480
    %9665 = vst.msk [vmem:[#allocation3 + $0x210] sm:$0xff] %vm9631, %v9482
    %9666 = vst.msk [vmem:[#allocation3 + $0x220] sm:$0xff] %vm9631, %v9484
    %9667 = vst.msk [vmem:[#allocation3 + $0x230] sm:$0xff] %vm9631, %v9486
    %9668 = vst.msk [vmem:[#allocation3 + $0x240] sm:$0xff] %vm9631, %v9488
    %9669 = vst.msk [vmem:[#allocation3 + $0x250] sm:$0xff] %vm9631, %v9490
    %9670 = vst.msk [vmem:[#allocation3 + $0x260] sm:$0xff] %vm9631, %v9492
    %9671 = vst.msk [vmem:[#allocation3 + $0x270] sm:$0xff] %vm9631, %v9494
    %9672 = vst.msk [vmem:[#allocation3 + $0x280] sm:$0xff] %vm9631, %v9496
    %9673 = vst.msk [vmem:[#allocation3 + $0x290] sm:$0xff] %vm9631, %v9498
    %9674 = vst.msk [vmem:[#allocation3 + $0x2a0] sm:$0xff] %vm9631, %v9500
    %9675 = vst.msk [vmem:[#allocation3 + $0x2b0] sm:$0xff] %vm9631, %v9502
    %9676 = vst.msk [vmem:[#allocation3 + $0x2c0] sm:$0xff] %vm9631, %v9504
    %9677 = vst.msk [vmem:[#allocation3 + $0x2d0] sm:$0xff] %vm9631, %v9506
    %9678 = vst.msk [vmem:[#allocation3 + $0x2e0] sm:$0xff] %vm9631, %v9508
    %9679 = vst.msk [vmem:[#allocation3 + $0x2f0] sm:$0xff] %vm9631, %v9510
    %9680 = vst.msk [vmem:[#allocation3 + $0x300] sm:$0xff] %vm9631, %v9512
    %9681 = vst.msk [vmem:[#allocation3 + $0x310] sm:$0xff] %vm9631, %v9514
    %9682 = vst.msk [vmem:[#allocation3 + $0x320] sm:$0xff] %vm9631, %v9516
    %9683 = vst.msk [vmem:[#allocation3 + $0x330] sm:$0xff] %vm9631, %v9518
    %9684 = vst.msk [vmem:[#allocation3 + $0x340] sm:$0xff] %vm9631, %v9520
    %9685 = vst.msk [vmem:[#allocation3 + $0x350] sm:$0xff] %vm9631, %v9522
    %9686 = vst.msk [vmem:[#allocation3 + $0x360] sm:$0xff] %vm9631, %v9524
    %9687 = vst.msk [vmem:[#allocation3 + $0x370] sm:$0xff] %vm9631, %v9526
    %9688 = vst.msk [vmem:[#allocation3 + $0x380] sm:$0xff] %vm9631, %v9528
    %9689 = vst.msk [vmem:[#allocation3 + $0x390] sm:$0xff] %vm9631, %v9530
    %9690 = vst.msk [vmem:[#allocation3 + $0x3a0] sm:$0xff] %vm9631, %v9532
    %9691 = vst.msk [vmem:[#allocation3 + $0x3b0] sm:$0xff] %vm9631, %v9534
    %9692 = vst.msk [vmem:[#allocation3 + $0x3c0] sm:$0xff] %vm9631, %v9536
    %9693 = vst.msk [vmem:[#allocation3 + $0x3d0] sm:$0xff] %vm9631, %v9538
    %9694 = vst.msk [vmem:[#allocation3 + $0x3e0] sm:$0xff] %vm9631, %v9540
    %9695 = vst.msk [vmem:[#allocation3 + $0x3f0] sm:$0xff] %vm9631, %v9542
    %9696 = vst.msk [vmem:[#allocation3 + $0x400] sm:$0xff] %vm9631, %v9544
    %9697 = vst.msk [vmem:[#allocation3 + $0x410] sm:$0xff] %vm9631, %v9546
    %9698 = vst.msk [vmem:[#allocation3 + $0x420] sm:$0xff] %vm9631, %v9548
    %9699 = vst.msk [vmem:[#allocation3 + $0x430] sm:$0xff] %vm9631, %v9550
    %9700 = vst.msk [vmem:[#allocation3 + $0x440] sm:$0xff] %vm9631, %v9552
    %9701 = vst.msk [vmem:[#allocation3 + $0x450] sm:$0xff] %vm9631, %v9554
    %9702 = vst.msk [vmem:[#allocation3 + $0x460] sm:$0xff] %vm9631, %v9556
    %9703 = vst.msk [vmem:[#allocation3 + $0x470] sm:$0xff] %vm9631, %v9558
    %v9704 = vld [vmem:[#allocation3] sm:$0xff]
    %v9705 = vld [vmem:[#allocation3 + $0x10] sm:$0xff]
    %v9706 = vld [vmem:[#allocation3 + $0x20] sm:$0xff]
    %v9707 = vld [vmem:[#allocation3 + $0x30] sm:$0xff]
    %v9708 = vld [vmem:[#allocation3 + $0x40] sm:$0xff]
    %v9709 = vld [vmem:[#allocation3 + $0x50] sm:$0xff]
    %v9710 = vld [vmem:[#allocation3 + $0x60] sm:$0xff]
    %v9711 = vld [vmem:[#allocation3 + $0x70] sm:$0xff]
    %v9712 = vld [vmem:[#allocation3 + $0x80] sm:$0xff]
    %v9713 = vld [vmem:[#allocation3 + $0x90] sm:$0xff]
    %v9714 = vld [vmem:[#allocation3 + $0xa0] sm:$0xff]
    %v9715 = vld [vmem:[#allocation3 + $0xb0] sm:$0xff]
    %v9716 = vld [vmem:[#allocation3 + $0xc0] sm:$0xff]
    %v9717 = vld [vmem:[#allocation3 + $0xd0] sm:$0xff]
    %v9718 = vld [vmem:[#allocation3 + $0xe0] sm:$0xff]
    %v9719 = vld [vmem:[#allocation3 + $0xf0] sm:$0xff]
    %v9720 = vld [vmem:[#allocation3 + $0x100] sm:$0xff]
    %v9721 = vld [vmem:[#allocation3 + $0x110] sm:$0xff]
    %v9722 = vld [vmem:[#allocation3 + $0x120] sm:$0xff]
    %v9723 = vld [vmem:[#allocation3 + $0x130] sm:$0xff]
    %v9724 = vld [vmem:[#allocation3 + $0x140] sm:$0xff]
    %v9725 = vld [vmem:[#allocation3 + $0x150] sm:$0xff]
    %v9726 = vld [vmem:[#allocation3 + $0x160] sm:$0xff]
    %v9727 = vld [vmem:[#allocation3 + $0x170] sm:$0xff]
    %v9728 = vld [vmem:[#allocation3 + $0x180] sm:$0xff]
    %v9729 = vld [vmem:[#allocation3 + $0x190] sm:$0xff]
    %v9730 = vld [vmem:[#allocation3 + $0x1a0] sm:$0xff]
    %v9731 = vld [vmem:[#allocation3 + $0x1b0] sm:$0xff]
    %v9732 = vld [vmem:[#allocation3 + $0x1c0] sm:$0xff]
    %v9733 = vld [vmem:[#allocation3 + $0x1d0] sm:$0xff]
    %v9734 = vld [vmem:[#allocation3 + $0x1e0] sm:$0xff]
    %v9735 = vld [vmem:[#allocation3 + $0x1f0] sm:$0xff]
    %v9736 = vld [vmem:[#allocation3 + $0x240] sm:$0xff]
    %v9737 = vld [vmem:[#allocation3 + $0x250] sm:$0xff]
    %v9738 = vld [vmem:[#allocation3 + $0x260] sm:$0xff]
    %v9739 = vld [vmem:[#allocation3 + $0x270] sm:$0xff]
    %v9740 = vld [vmem:[#allocation3 + $0x280] sm:$0xff]
    %v9741 = vld [vmem:[#allocation3 + $0x290] sm:$0xff]
    %v9742 = vld [vmem:[#allocation3 + $0x2a0] sm:$0xff]
    %v9743 = vld [vmem:[#allocation3 + $0x2b0] sm:$0xff]
    %v9744 = vld [vmem:[#allocation3 + $0x2c0] sm:$0xff]
    %v9745 = vld [vmem:[#allocation3 + $0x2d0] sm:$0xff]
    %v9746 = vld [vmem:[#allocation3 + $0x2e0] sm:$0xff]
    %v9747 = vld [vmem:[#allocation3 + $0x2f0] sm:$0xff]
    %v9748 = vld [vmem:[#allocation3 + $0x300] sm:$0xff]
    %v9749 = vld [vmem:[#allocation3 + $0x310] sm:$0xff]
    %v9750 = vld [vmem:[#allocation3 + $0x320] sm:$0xff]
    %v9751 = vld [vmem:[#allocation3 + $0x330] sm:$0xff]
    %v9752 = vld [vmem:[#allocation3 + $0x340] sm:$0xff]
    %v9753 = vld [vmem:[#allocation3 + $0x350] sm:$0xff]
    %v9754 = vld [vmem:[#allocation3 + $0x360] sm:$0xff]
    %v9755 = vld [vmem:[#allocation3 + $0x370] sm:$0xff]
    %v9756 = vld [vmem:[#allocation3 + $0x380] sm:$0xff]
    %v9757 = vld [vmem:[#allocation3 + $0x390] sm:$0xff]
    %v9758 = vld [vmem:[#allocation3 + $0x3a0] sm:$0xff]
    %v9759 = vld [vmem:[#allocation3 + $0x3b0] sm:$0xff]
    %v9760 = vld [vmem:[#allocation3 + $0x3c0] sm:$0xff]
    %v9761 = vld [vmem:[#allocation3 + $0x3d0] sm:$0xff]
    %v9762 = vld [vmem:[#allocation3 + $0x3e0] sm:$0xff]
    %v9763 = vld [vmem:[#allocation3 + $0x3f0] sm:$0xff]
    %v9764 = vld [vmem:[#allocation3 + $0x400] sm:$0xff]
    %v9765 = vld [vmem:[#allocation3 + $0x410] sm:$0xff]
    %v9766 = vld [vmem:[#allocation3 + $0x420] sm:$0xff]
    %v9767 = vld [vmem:[#allocation3 + $0x430] sm:$0xff]
    %v9768 = vld [vmem:[#allocation7] sm:$0xff]
    %v9769 = vld [vmem:[#allocation7 + $0x8] sm:$0xff]
    %v9770 = vld [vmem:[#allocation7 + $0x10] sm:$0xff]
    %v9771 = vld [vmem:[#allocation7 + $0x18] sm:$0xff]
    %v9772 = vld [vmem:[#allocation7 + $0x20] sm:$0xff]
    %v9773 = vld [vmem:[#allocation7 + $0x28] sm:$0xff]
    %v9774 = vld [vmem:[#allocation7 + $0x30] sm:$0xff]
    %v9775 = vld [vmem:[#allocation7 + $0x38] sm:$0xff]
    %v9776 = vld [vmem:[#allocation7 + $0x40] sm:$0xff]
    %v9777 = vld [vmem:[#allocation7 + $0x48] sm:$0xff]
    %v9778 = vld [vmem:[#allocation7 + $0x50] sm:$0xff]
    %v9779 = vld [vmem:[#allocation7 + $0x58] sm:$0xff]
    %v9780 = vld [vmem:[%s2197] sm:$0xff]
    %v9781 = vld [vmem:[%s2197 + $0x10] sm:$0xff]
    %v9782 = vld [vmem:[%s2197 + $0x20] sm:$0xff]
    %v9783 = vld [vmem:[%s2197 + $0x30] sm:$0xff]
    %v9784 = vld [vmem:[%s2197 + $0x40] sm:$0xff]
    %v9785 = vld [vmem:[%s2197 + $0x50] sm:$0xff]
    %v9786 = vld [vmem:[%s2197 + $0x60] sm:$0xff]
    %v9787 = vld [vmem:[%s2197 + $0x70] sm:$0xff]
    %v9788 = vld [vmem:[%s2197 + $0x80] sm:$0xff]
    %v9789 = vld [vmem:[%s2197 + $0x90] sm:$0xff]
    %v9790 = vld [vmem:[%s2197 + $0xa0] sm:$0xff]
    %v9791 = vld [vmem:[%s2197 + $0xb0] sm:$0xff]
    %v9792 = vld [vmem:[%s2197 + $0xc0] sm:$0xff]
    %v9793 = vld [vmem:[%s2197 + $0xd0] sm:$0xff]
    %v9794 = vld [vmem:[%s2197 + $0xe0] sm:$0xff]
    %v9795 = vld [vmem:[%s2197 + $0xf0] sm:$0xff]
    %v9796 = vld [vmem:[%s2197 + $0x100] sm:$0xff]
    %v9797 = vld [vmem:[%s2197 + $0x110] sm:$0xff]
    %v9798 = vld [vmem:[%s2197 + $0x120] sm:$0xff]
    %v9799 = vld [vmem:[%s2197 + $0x130] sm:$0xff]
    %v9800 = vld [vmem:[%s2197 + $0x140] sm:$0xff]
    %v9801 = vld [vmem:[%s2197 + $0x150] sm:$0xff]
    %v9802 = vld [vmem:[%s2197 + $0x160] sm:$0xff]
    %v9803 = vld [vmem:[%s2197 + $0x170] sm:$0xff]
    %v9804 = vld [vmem:[%s2197 + $0x180] sm:$0xff]
    %v9805 = vld [vmem:[%s2197 + $0x190] sm:$0xff]
    %v9806 = vld [vmem:[%s2197 + $0x1a0] sm:$0xff]
    %v9807 = vld [vmem:[%s2197 + $0x1b0] sm:$0xff]
    %v9808 = vld [vmem:[%s2197 + $0x1c0] sm:$0xff]
    %v9809 = vld [vmem:[%s2197 + $0x1d0] sm:$0xff]
    %v9810 = vld [vmem:[%s2197 + $0x1e0] sm:$0xff]
    %v9811 = vld [vmem:[%s2197 + $0x1f0] sm:$0xff]
    %v9812 = vld [vmem:[%s2197 + $0x240] sm:$0xff]
    %v9813 = vld [vmem:[%s2197 + $0x250] sm:$0xff]
    %v9814 = vld [vmem:[%s2197 + $0x260] sm:$0xff]
    %v9815 = vld [vmem:[%s2197 + $0x270] sm:$0xff]
    %v9816 = vld [vmem:[%s2197 + $0x280] sm:$0xff]
    %v9817 = vld [vmem:[%s2197 + $0x290] sm:$0xff]
    %v9818 = vld [vmem:[%s2197 + $0x2a0] sm:$0xff]
    %v9819 = vld [vmem:[%s2197 + $0x2b0] sm:$0xff]
    %v9820 = vld [vmem:[%s2197 + $0x2c0] sm:$0xff]
    %v9821 = vld [vmem:[%s2197 + $0x2d0] sm:$0xff]
    %v9822 = vld [vmem:[%s2197 + $0x2e0] sm:$0xff]
    %v9823 = vld [vmem:[%s2197 + $0x2f0] sm:$0xff]
    %v9824 = vld [vmem:[%s2197 + $0x300] sm:$0xff]
    %v9825 = vld [vmem:[%s2197 + $0x310] sm:$0xff]
    %v9826 = vld [vmem:[%s2197 + $0x320] sm:$0xff]
    %v9827 = vld [vmem:[%s2197 + $0x330] sm:$0xff]
    %v9828 = vld [vmem:[%s2197 + $0x340] sm:$0xff]
    %v9829 = vld [vmem:[%s2197 + $0x350] sm:$0xff]
    %v9830 = vld [vmem:[%s2197 + $0x360] sm:$0xff]
    %v9831 = vld [vmem:[%s2197 + $0x370] sm:$0xff]
    %v9832 = vld [vmem:[%s2197 + $0x380] sm:$0xff]
    %v9833 = vld [vmem:[%s2197 + $0x390] sm:$0xff]
    %v9834 = vld [vmem:[%s2197 + $0x3a0] sm:$0xff]
    %v9835 = vld [vmem:[%s2197 + $0x3b0] sm:$0xff]
    %v9836 = vld [vmem:[%s2197 + $0x3c0] sm:$0xff]
    %v9837 = vld [vmem:[%s2197 + $0x3d0] sm:$0xff]
    %v9838 = vld [vmem:[%s2197 + $0x3e0] sm:$0xff]
    %v9839 = vld [vmem:[%s2197 + $0x3f0] sm:$0xff]
    %v9840 = vld [vmem:[%s2197 + $0x400] sm:$0xff]
    %v9841 = vld [vmem:[%s2197 + $0x410] sm:$0xff]
    %v9842 = vld [vmem:[%s2197 + $0x420] sm:$0xff]
    %v9843 = vld [vmem:[%s2197 + $0x430] sm:$0xff]
    %s9844 = scalar_lea.vmem [#allocation7], 96
    %v9845 = vld [vmem:[%s9844] sm:$0xff]
    %v9846 = vld [vmem:[%s9844 + $0x8] sm:$0xff]
    %v9847 = vld [vmem:[%s9844 + $0x10] sm:$0xff]
    %v9848 = vld [vmem:[%s9844 + $0x18] sm:$0xff]
    %v9849 = vld [vmem:[%s9844 + $0x20] sm:$0xff]
    %v9850 = vld [vmem:[%s9844 + $0x28] sm:$0xff]
    %v9851 = vld [vmem:[%s9844 + $0x30] sm:$0xff]
    %v9852 = vld [vmem:[%s9844 + $0x38] sm:$0xff]
    %v9853 = vld [vmem:[%s9844 + $0x40] sm:$0xff]
    %v9854 = vld [vmem:[%s9844 + $0x48] sm:$0xff]
    %v9855 = vld [vmem:[%s9844 + $0x50] sm:$0xff]
    %v9856 = vld [vmem:[%s9844 + $0x58] sm:$0xff]
    %vm9857 = vcmask 785408
    %v9859 = vsel %vm9857, %v9780, 0
    %v9862 = vsel %vm9857, %v9781, 0
    %v9865 = vsel %vm9857, %v9782, 0
    %v9868 = vsel %vm9857, %v9783, 0
    %v9871 = vsel %vm9857, %v9784, 0
    %v9874 = vsel %vm9857, %v9785, 0
    %v9877 = vsel %vm9857, %v9786, 0
    %v9880 = vsel %vm9857, %v9787, 0
    %v9883 = vsel %vm9857, %v9788, 0
    %v9886 = vsel %vm9857, %v9789, 0
    %v9889 = vsel %vm9857, %v9790, 0
    %v9892 = vsel %vm9857, %v9791, 0
    %v9895 = vsel %vm9857, %v9792, 0
    %v9898 = vsel %vm9857, %v9793, 0
    %v9901 = vsel %vm9857, %v9794, 0
    %v9904 = vsel %vm9857, %v9795, 0
    %v9907 = vsel %vm9857, %v9796, 0
    %v9910 = vsel %vm9857, %v9797, 0
    %v9913 = vsel %vm9857, %v9798, 0
    %v9916 = vsel %vm9857, %v9799, 0
    %v9919 = vsel %vm9857, %v9800, 0
    %v9922 = vsel %vm9857, %v9801, 0
    %v9925 = vsel %vm9857, %v9802, 0
    %v9928 = vsel %vm9857, %v9803, 0
    %v9931 = vsel %vm9857, %v9804, 0
    %v9934 = vsel %vm9857, %v9805, 0
    %v9937 = vsel %vm9857, %v9806, 0
    %v9940 = vsel %vm9857, %v9807, 0
    %v9943 = vsel %vm9857, %v9808, 0
    %v9946 = vsel %vm9857, %v9809, 0
    %v9949 = vsel %vm9857, %v9810, 0
    %v9952 = vsel %vm9857, %v9811, 0
    %v9955 = vsel %vm9857, %v9812, 0
    %v9958 = vsel %vm9857, %v9813, 0
    %v9961 = vsel %vm9857, %v9814, 0
    %v9964 = vsel %vm9857, %v9815, 0
    %v9967 = vsel %vm9857, %v9816, 0
    %v9970 = vsel %vm9857, %v9817, 0
    %v9973 = vsel %vm9857, %v9818, 0
    %v9976 = vsel %vm9857, %v9819, 0
    %v9979 = vsel %vm9857, %v9820, 0
    %v9982 = vsel %vm9857, %v9821, 0
    %v9985 = vsel %vm9857, %v9822, 0
    %v9988 = vsel %vm9857, %v9823, 0
    %v9991 = vsel %vm9857, %v9824, 0
    %v9994 = vsel %vm9857, %v9825, 0
    %v9997 = vsel %vm9857, %v9826, 0
    %v10000 = vsel %vm9857, %v9827, 0
    %v10003 = vsel %vm9857, %v9828, 0
    %v10006 = vsel %vm9857, %v9829, 0
    %v10009 = vsel %vm9857, %v9830, 0
    %v10012 = vsel %vm9857, %v9831, 0
    %v10015 = vsel %vm9857, %v9832, 0
    %v10018 = vsel %vm9857, %v9833, 0
    %v10021 = vsel %vm9857, %v9834, 0
    %v10024 = vsel %vm9857, %v9835, 0
    %v10027 = vsel %vm9857, %v9836, 0
    %v10030 = vsel %vm9857, %v9837, 0
    %v10033 = vsel %vm9857, %v9838, 0
    %v10036 = vsel %vm9857, %v9839, 0
    %v10039 = vsel %vm9857, %v9840, 0
    %v10042 = vsel %vm9857, %v9841, 0
    %v10045 = vsel %vm9857, %v9842, 0
    %v10048 = vsel %vm9857, %v9843, 0
    %10050 = vmatprep.subr.mxu0 0.0
    %10051 = vmatpush1.msra.mxu0 %v9845
    %10052 = vmatprep.subr.mxu0 0.0
    %10053 = vmatpush1.msra.mxu0 %v9846
    %10054 = vmatprep.subr.mxu0 0.0
    %10055 = vmatpush1.msra.mxu0 %v9847
    %10056 = vmatprep.subr.mxu0 0.0
    %10057 = vmatpush1.msra.mxu0 %v9848
    %10058 = vmatprep.subr.mxu0 0.0
    %10059 = vmatpush1.msra.mxu0 %v9849
    %10060 = vmatprep.subr.mxu0 0.0
    %10061 = vmatpush1.msra.mxu0 %v9850
    %10062 = vmatprep.subr.mxu0 0.0
    %10063 = vmatpush1.msra.mxu0 %v9851
    %10064 = vmatprep.subr.mxu0 0.0
    %10065 = vmatpush1.msra.mxu0 %v9852
    %10066 = vmatprep.subr.mxu0 0.0
    %10067 = vmatpush1.msra.mxu0 %v9853
    %10068 = vmatprep.subr.mxu0 0.0
    %10069 = vmatpush1.msra.mxu0 %v9854
    %10070 = vmatprep.subr.mxu0 0.0
    %10071 = vmatpush1.msra.mxu0 %v9855
    %10072 = vmatprep.subr.mxu0 0.0
    %10073 = vmatpush1.msra.mxu0 %v9856
    %10074 = vmatprep.subr.mxu0 0.0
    %10075 = vmatpush1.msra.mxu0 0.0
    %10076 = vmatprep.subr.mxu0 0.0
    %10077 = vmatpush1.msra.mxu0 0.0
    %10078 = vmatprep.subr.mxu0 0.0
    %10079 = vmatpush1.msra.mxu0 0.0
    %10080 = vmatprep.subr.mxu0 0.0
    %10081 = vmatpush1.msra.mxu0 0.0
    %10082 = vmatprep.subr.mxu0 0.0
    %10083 = vmatpush1.msra.mxu0 0.0
    %10084 = vmatprep.subr.mxu0 0.0
    %10085 = vmatpush1.msra.mxu0 0.0
    %10086 = vmatprep.subr.mxu0 0.0
    %10087 = vmatpush1.msra.mxu0 0.0
    %10088 = vmatprep.subr.mxu0 0.0
    %10089 = vmatpush1.msra.mxu0 0.0
    %10090 = vmatprep.subr.mxu0 0.0
    %10091 = vmatpush1.msra.mxu0 0.0
    %10092 = vmatprep.subr.mxu0 0.0
    %10093 = vmatpush1.msra.mxu0 0.0
    %10094 = vmatprep.subr.mxu0 0.0
    %10095 = vmatpush1.msra.mxu0 0.0
    %10096 = vmatprep.subr.mxu0 0.0
    %10097 = vmatpush1.msra.mxu0 0.0
    %10098 = vmatprep.subr.mxu0 0.0
    %10099 = vmatpush1.msra.mxu0 0.0
    %10100 = vmatprep.subr.mxu0 0.0
    %10101 = vmatpush1.msra.mxu0 0.0
    %10102 = vmatprep.subr.mxu0 0.0
    %10103 = vmatpush1.msra.mxu0 0.0
    %10104 = vmatprep.subr.mxu0 0.0
    %10105 = vmatpush1.msra.mxu0 0.0
    %10106 = vmatprep.subr.mxu0 0.0
    %10107 = vmatpush1.msra.mxu0 0.0
    %10108 = vmatprep.subr.mxu0 0.0
    %10109 = vmatpush1.msra.mxu0 0.0
    %10110 = vmatprep.subr.mxu0 0.0
    %10111 = vmatpush1.msra.mxu0 0.0
    %10112 = vmatprep.subr.mxu0 0.0
    %10113 = vmatpush1.msra.mxu0 0.0
    %10114 = vmatprep.mubr.f32.mxu0 0.0
    %10115 = vmatmul.mubr.f32.gmra.mrb[0].mxu0 %v9859
    %v10116 = vpop.f32.mrb[0].mxu0
    %v10117 = vadd.f32 0.0, %v10116
    %v10118 = vpop.f32.mrb[0].mxu0
    %10119 = vmatprep.mubr.f32.mxu0 0.0
    %10120 = vmatmul.mubr.f32.gmra.mrb[0].mxu0 %v9862
    %v10121 = vpop.f32.mrb[0].mxu0
    %v10122 = vadd.f32 0.0, %v10121
    %v10123 = vpop.f32.mrb[0].mxu0
    %10124 = vmatprep.mubr.f32.mxu0 0.0
    %10125 = vmatmul.mubr.f32.gmra.mrb[0].mxu0 %v9865
    %v10126 = vpop.f32.mrb[0].mxu0
    %v10127 = vadd.f32 0.0, %v10126
    %v10128 = vpop.f32.mrb[0].mxu0
    %10129 = vmatprep.mubr.f32.mxu0 0.0
    %10130 = vmatmul.mubr.f32.gmra.mrb[0].mxu0 %v9868
    %v10131 = vpop.f32.mrb[0].mxu0
    %v10132 = vadd.f32 0.0, %v10131
    %v10133 = vpop.f32.mrb[0].mxu0
    %10134 = vmatprep.mubr.f32.mxu0 0.0
    %10135 = vmatmul.mubr.f32.gmra.mrb[0].mxu0 %v9871
    %v10136 = vpop.f32.mrb[0].mxu0
    %v10137 = vadd.f32 0.0, %v10136
    %v10138 = vpop.f32.mrb[0].mxu0
    %10139 = vmatprep.mubr.f32.mxu0 0.0
    %10140 = vmatmul.mubr.f32.gmra.mrb[0].mxu0 %v9874
    %v10141 = vpop.f32.mrb[0].mxu0
    %v10142 = vadd.f32 0.0, %v10141
    %v10143 = vpop.f32.mrb[0].mxu0
    %10144 = vmatprep.mubr.f32.mxu0 0.0
    %10145 = vmatmul.mubr.f32.gmra.mrb[0].mxu0 %v9877
    %v10146 = vpop.f32.mrb[0].mxu0
    %v10147 = vadd.f32 0.0, %v10146
    %v10148 = vpop.f32.mrb[0].mxu0
    %10149 = vmatprep.mubr.f32.mxu0 0.0
    %10150 = vmatmul.mubr.f32.gmra.mrb[0].mxu0 %v9880
    %v10151 = vpop.f32.mrb[0].mxu0
    %v10152 = vadd.f32 0.0, %v10151
    %v10153 = vpop.f32.mrb[0].mxu0
    %10154 = vmatprep.mubr.f32.mxu0 0.0
    %10155 = vmatmul.mubr.f32.gmra.mrb[0].mxu0 %v9883
    %v10156 = vpop.f32.mrb[0].mxu0
    %v10157 = vadd.f32 0.0, %v10156
    %v10158 = vpop.f32.mrb[0].mxu0
    %10159 = vmatprep.mubr.f32.mxu0 0.0
    %10160 = vmatmul.mubr.f32.gmra.mrb[0].mxu0 %v9886
    %v10161 = vpop.f32.mrb[0].mxu0
    %v10162 = vadd.f32 0.0, %v10161
    %v10163 = vpop.f32.mrb[0].mxu0
    %10164 = vmatprep.mubr.f32.mxu0 0.0
    %10165 = vmatmul.mubr.f32.gmra.mrb[0].mxu0 %v9889
    %v10166 = vpop.f32.mrb[0].mxu0
    %v10167 = vadd.f32 0.0, %v10166
    %v10168 = vpop.f32.mrb[0].mxu0
    %10169 = vmatprep.mubr.f32.mxu0 0.0
    %10170 = vmatmul.mubr.f32.gmra.mrb[0].mxu0 %v9892
    %v10171 = vpop.f32.mrb[0].mxu0
    %v10172 = vadd.f32 0.0, %v10171
    %v10173 = vpop.f32.mrb[0].mxu0
    %10174 = vmatprep.mubr.f32.mxu0 0.0
    %10175 = vmatmul.mubr.f32.gmra.mrb[0].mxu0 %v9895
    %v10176 = vpop.f32.mrb[0].mxu0
    %v10177 = vadd.f32 0.0, %v10176
    %v10178 = vpop.f32.mrb[0].mxu0
    %10179 = vmatprep.mubr.f32.mxu0 0.0
    %10180 = vmatmul.mubr.f32.gmra.mrb[0].mxu0 %v9898
    %v10181 = vpop.f32.mrb[0].mxu0
    %v10182 = vadd.f32 0.0, %v10181
    %v10183 = vpop.f32.mrb[0].mxu0
    %10184 = vmatprep.mubr.f32.mxu0 0.0
    %10185 = vmatmul.mubr.f32.gmra.mrb[0].mxu0 %v9901
    %v10186 = vpop.f32.mrb[0].mxu0
    %v10187 = vadd.f32 0.0, %v10186
    %v10188 = vpop.f32.mrb[0].mxu0
    %10189 = vmatprep.mubr.f32.mxu0 0.0
    %10190 = vmatmul.mubr.f32.gmra.mrb[0].mxu0 %v9904
    %v10191 = vpop.f32.mrb[0].mxu0
    %v10192 = vadd.f32 0.0, %v10191
    %v10193 = vpop.f32.mrb[0].mxu0
    %10194 = vmatprep.mubr.f32.mxu0 0.0
    %10195 = vmatmul.mubr.f32.gmra.mrb[0].mxu0 %v9907
    %v10196 = vpop.f32.mrb[0].mxu0
    %v10197 = vadd.f32 0.0, %v10196
    %v10198 = vpop.f32.mrb[0].mxu0
    %10199 = vmatprep.mubr.f32.mxu0 0.0
    %10200 = vmatmul.mubr.f32.gmra.mrb[0].mxu0 %v9910
    %v10201 = vpop.f32.mrb[0].mxu0
    %v10202 = vadd.f32 0.0, %v10201
    %v10203 = vpop.f32.mrb[0].mxu0
    %10204 = vmatprep.mubr.f32.mxu0 0.0
    %10205 = vmatmul.mubr.f32.gmra.mrb[0].mxu0 %v9913
    %v10206 = vpop.f32.mrb[0].mxu0
    %v10207 = vadd.f32 0.0, %v10206
    %v10208 = vpop.f32.mrb[0].mxu0
    %10209 = vmatprep.mubr.f32.mxu0 0.0
    %10210 = vmatmul.mubr.f32.gmra.mrb[0].mxu0 %v9916
    %v10211 = vpop.f32.mrb[0].mxu0
    %v10212 = vadd.f32 0.0, %v10211
    %v10213 = vpop.f32.mrb[0].mxu0
    %10214 = vmatprep.mubr.f32.mxu0 0.0
    %10215 = vmatmul.mubr.f32.gmra.mrb[0].mxu0 %v9919
    %v10216 = vpop.f32.mrb[0].mxu0
    %v10217 = vadd.f32 0.0, %v10216
    %v10218 = vpop.f32.mrb[0].mxu0
    %10219 = vmatprep.mubr.f32.mxu0 0.0
    %10220 = vmatmul.mubr.f32.gmra.mrb[0].mxu0 %v9922
    %v10221 = vpop.f32.mrb[0].mxu0
    %v10222 = vadd.f32 0.0, %v10221
    %v10223 = vpop.f32.mrb[0].mxu0
    %10224 = vmatprep.mubr.f32.mxu0 0.0
    %10225 = vmatmul.mubr.f32.gmra.mrb[0].mxu0 %v9925
    %v10226 = vpop.f32.mrb[0].mxu0
    %v10227 = vadd.f32 0.0, %v10226
    %v10228 = vpop.f32.mrb[0].mxu0
    %10229 = vmatprep.mubr.f32.mxu0 0.0
    %10230 = vmatmul.mubr.f32.gmra.mrb[0].mxu0 %v9928
    %v10231 = vpop.f32.mrb[0].mxu0
    %v10232 = vadd.f32 0.0, %v10231
    %v10233 = vpop.f32.mrb[0].mxu0
    %10234 = vmatprep.mubr.f32.mxu0 0.0
    %10235 = vmatmul.mubr.f32.gmra.mrb[0].mxu0 %v9931
    %v10236 = vpop.f32.mrb[0].mxu0
    %v10237 = vadd.f32 0.0, %v10236
    %v10238 = vpop.f32.mrb[0].mxu0
    %10239 = vmatprep.mubr.f32.mxu0 0.0
    %10240 = vmatmul.mubr.f32.gmra.mrb[0].mxu0 %v9934
    %v10241 = vpop.f32.mrb[0].mxu0
    %v10242 = vadd.f32 0.0, %v10241
    %v10243 = vpop.f32.mrb[0].mxu0
    %10244 = vmatprep.mubr.f32.mxu0 0.0
    %10245 = vmatmul.mubr.f32.gmra.mrb[0].mxu0 %v9937
    %v10246 = vpop.f32.mrb[0].mxu0
    %v10247 = vadd.f32 0.0, %v10246
    %v10248 = vpop.f32.mrb[0].mxu0
    %10249 = vmatprep.mubr.f32.mxu0 0.0
    %10250 = vmatmul.mubr.f32.gmra.mrb[0].mxu0 %v9940
    %v10251 = vpop.f32.mrb[0].mxu0
    %v10252 = vadd.f32 0.0, %v10251
    %v10253 = vpop.f32.mrb[0].mxu0
    %10254 = vmatprep.mubr.f32.mxu0 0.0
    %10255 = vmatmul.mubr.f32.gmra.mrb[0].mxu0 %v9943
    %v10256 = vpop.f32.mrb[0].mxu0
    %v10257 = vadd.f32 0.0, %v10256
    %v10258 = vpop.f32.mrb[0].mxu0
    %10259 = vmatprep.mubr.f32.mxu0 0.0
    %10260 = vmatmul.mubr.f32.gmra.mrb[0].mxu0 %v9946
    %v10261 = vpop.f32.mrb[0].mxu0
    %v10262 = vadd.f32 0.0, %v10261
    %v10263 = vpop.f32.mrb[0].mxu0
    %10264 = vmatprep.mubr.f32.mxu0 0.0
    %10265 = vmatmul.mubr.f32.gmra.mrb[0].mxu0 %v9949
    %v10266 = vpop.f32.mrb[0].mxu0
    %v10267 = vadd.f32 0.0, %v10266
    %v10268 = vpop.f32.mrb[0].mxu0
    %10269 = vmatprep.mubr.f32.mxu0 0.0
    %10270 = vmatmul.mubr.f32.gmra.mrb[0].mxu0 %v9952
    %v10271 = vpop.f32.mrb[0].mxu0
    %v10272 = vadd.f32 0.0, %v10271
    %v10273 = vpop.f32.mrb[0].mxu0
    %10274 = vmatprep.mubr.f32.mxu0 0.0
    %10275 = vmatmul.mubr.f32.gmra.mrb[0].mxu0 %v9955
    %v10276 = vpop.f32.mrb[0].mxu0
    %v10277 = vadd.f32 0.0, %v10276
    %v10278 = vpop.f32.mrb[0].mxu0
    %10279 = vmatprep.mubr.f32.mxu0 0.0
    %10280 = vmatmul.mubr.f32.gmra.mrb[0].mxu0 %v9958
    %v10281 = vpop.f32.mrb[0].mxu0
    %v10282 = vadd.f32 0.0, %v10281
    %v10283 = vpop.f32.mrb[0].mxu0
    %10284 = vmatprep.mubr.f32.mxu0 0.0
    %10285 = vmatmul.mubr.f32.gmra.mrb[0].mxu0 %v9961
    %v10286 = vpop.f32.mrb[0].mxu0
    %v10287 = vadd.f32 0.0, %v10286
    %v10288 = vpop.f32.mrb[0].mxu0
    %10289 = vmatprep.mubr.f32.mxu0 0.0
    %10290 = vmatmul.mubr.f32.gmra.mrb[0].mxu0 %v9964
    %v10291 = vpop.f32.mrb[0].mxu0
    %v10292 = vadd.f32 0.0, %v10291
    %v10293 = vpop.f32.mrb[0].mxu0
    %10294 = vmatprep.mubr.f32.mxu0 0.0
    %10295 = vmatmul.mubr.f32.gmra.mrb[0].mxu0 %v9967
    %v10296 = vpop.f32.mrb[0].mxu0
    %v10297 = vadd.f32 0.0, %v10296
    %v10298 = vpop.f32.mrb[0].mxu0
    %10299 = vmatprep.mubr.f32.mxu0 0.0
    %10300 = vmatmul.mubr.f32.gmra.mrb[0].mxu0 %v9970
    %v10301 = vpop.f32.mrb[0].mxu0
    %v10302 = vadd.f32 0.0, %v10301
    %v10303 = vpop.f32.mrb[0].mxu0
    %10304 = vmatprep.mubr.f32.mxu0 0.0
    %10305 = vmatmul.mubr.f32.gmra.mrb[0].mxu0 %v9973
    %v10306 = vpop.f32.mrb[0].mxu0
    %v10307 = vadd.f32 0.0, %v10306
    %v10308 = vpop.f32.mrb[0].mxu0
    %10309 = vmatprep.mubr.f32.mxu0 0.0
    %10310 = vmatmul.mubr.f32.gmra.mrb[0].mxu0 %v9976
    %v10311 = vpop.f32.mrb[0].mxu0
    %v10312 = vadd.f32 0.0, %v10311
    %v10313 = vpop.f32.mrb[0].mxu0
    %10314 = vmatprep.mubr.f32.mxu0 0.0
    %10315 = vmatmul.mubr.f32.gmra.mrb[0].mxu0 %v9979
    %v10316 = vpop.f32.mrb[0].mxu0
    %v10317 = vadd.f32 0.0, %v10316
    %v10318 = vpop.f32.mrb[0].mxu0
    %10319 = vmatprep.mubr.f32.mxu0 0.0
    %10320 = vmatmul.mubr.f32.gmra.mrb[0].mxu0 %v9982
    %v10321 = vpop.f32.mrb[0].mxu0
    %v10322 = vadd.f32 0.0, %v10321
    %v10323 = vpop.f32.mrb[0].mxu0
    %10324 = vmatprep.mubr.f32.mxu0 0.0
    %10325 = vmatmul.mubr.f32.gmra.mrb[0].mxu0 %v9985
    %v10326 = vpop.f32.mrb[0].mxu0
    %v10327 = vadd.f32 0.0, %v10326
    %v10328 = vpop.f32.mrb[0].mxu0
    %10329 = vmatprep.mubr.f32.mxu0 0.0
    %10330 = vmatmul.mubr.f32.gmra.mrb[0].mxu0 %v9988
    %v10331 = vpop.f32.mrb[0].mxu0
    %v10332 = vadd.f32 0.0, %v10331
    %v10333 = vpop.f32.mrb[0].mxu0
    %10334 = vmatprep.mubr.f32.mxu0 0.0
    %10335 = vmatmul.mubr.f32.gmra.mrb[0].mxu0 %v9991
    %v10336 = vpop.f32.mrb[0].mxu0
    %v10337 = vadd.f32 0.0, %v10336
    %v10338 = vpop.f32.mrb[0].mxu0
    %10339 = vmatprep.mubr.f32.mxu0 0.0
    %10340 = vmatmul.mubr.f32.gmra.mrb[0].mxu0 %v9994
    %v10341 = vpop.f32.mrb[0].mxu0
    %v10342 = vadd.f32 0.0, %v10341
    %v10343 = vpop.f32.mrb[0].mxu0
    %10344 = vmatprep.mubr.f32.mxu0 0.0
    %10345 = vmatmul.mubr.f32.gmra.mrb[0].mxu0 %v9997
    %v10346 = vpop.f32.mrb[0].mxu0
    %v10347 = vadd.f32 0.0, %v10346
    %v10348 = vpop.f32.mrb[0].mxu0
    %10349 = vmatprep.mubr.f32.mxu0 0.0
    %10350 = vmatmul.mubr.f32.gmra.mrb[0].mxu0 %v10000
    %v10351 = vpop.f32.mrb[0].mxu0
    %v10352 = vadd.f32 0.0, %v10351
    %v10353 = vpop.f32.mrb[0].mxu0
    %10354 = vmatprep.mubr.f32.mxu0 0.0
    %10355 = vmatmul.mubr.f32.gmra.mrb[0].mxu0 %v10003
    %v10356 = vpop.f32.mrb[0].mxu0
    %v10357 = vadd.f32 0.0, %v10356
    %v10358 = vpop.f32.mrb[0].mxu0
    %10359 = vmatprep.mubr.f32.mxu0 0.0
    %10360 = vmatmul.mubr.f32.gmra.mrb[0].mxu0 %v10006
    %v10361 = vpop.f32.mrb[0].mxu0
    %v10362 = vadd.f32 0.0, %v10361
    %v10363 = vpop.f32.mrb[0].mxu0
    %10364 = vmatprep.mubr.f32.mxu0 0.0
    %10365 = vmatmul.mubr.f32.gmra.mrb[0].mxu0 %v10009
    %v10366 = vpop.f32.mrb[0].mxu0
    %v10367 = vadd.f32 0.0, %v10366
    %v10368 = vpop.f32.mrb[0].mxu0
    %10369 = vmatprep.mubr.f32.mxu0 0.0
    %10370 = vmatmul.mubr.f32.gmra.mrb[0].mxu0 %v10012
    %v10371 = vpop.f32.mrb[0].mxu0
    %v10372 = vadd.f32 0.0, %v10371
    %v10373 = vpop.f32.mrb[0].mxu0
    %10374 = vmatprep.mubr.f32.mxu0 0.0
    %10375 = vmatmul.mubr.f32.gmra.mrb[0].mxu0 %v10015
    %v10376 = vpop.f32.mrb[0].mxu0
    %v10377 = vadd.f32 0.0, %v10376
    %v10378 = vpop.f32.mrb[0].mxu0
    %10379 = vmatprep.mubr.f32.mxu0 0.0
    %10380 = vmatmul.mubr.f32.gmra.mrb[0].mxu0 %v10018
    %v10381 = vpop.f32.mrb[0].mxu0
    %v10382 = vadd.f32 0.0, %v10381
    %v10383 = vpop.f32.mrb[0].mxu0
    %10384 = vmatprep.mubr.f32.mxu0 0.0
    %10385 = vmatmul.mubr.f32.gmra.mrb[0].mxu0 %v10021
    %v10386 = vpop.f32.mrb[0].mxu0
    %v10387 = vadd.f32 0.0, %v10386
    %v10388 = vpop.f32.mrb[0].mxu0
    %10389 = vmatprep.mubr.f32.mxu0 0.0
    %10390 = vmatmul.mubr.f32.gmra.mrb[0].mxu0 %v10024
    %v10391 = vpop.f32.mrb[0].mxu0
    %v10392 = vadd.f32 0.0, %v10391
    %v10393 = vpop.f32.mrb[0].mxu0
    %10394 = vmatprep.mubr.f32.mxu0 0.0
    %10395 = vmatmul.mubr.f32.gmra.mrb[0].mxu0 %v10027
    %v10396 = vpop.f32.mrb[0].mxu0
    %v10397 = vadd.f32 0.0, %v10396
    %v10398 = vpop.f32.mrb[0].mxu0
    %10399 = vmatprep.mubr.f32.mxu0 0.0
    %10400 = vmatmul.mubr.f32.gmra.mrb[0].mxu0 %v10030
    %v10401 = vpop.f32.mrb[0].mxu0
    %v10402 = vadd.f32 0.0, %v10401
    %v10403 = vpop.f32.mrb[0].mxu0
    %10404 = vmatprep.mubr.f32.mxu0 0.0
    %10405 = vmatmul.mubr.f32.gmra.mrb[0].mxu0 %v10033
    %v10406 = vpop.f32.mrb[0].mxu0
    %v10407 = vadd.f32 0.0, %v10406
    %v10408 = vpop.f32.mrb[0].mxu0
    %10409 = vmatprep.mubr.f32.mxu0 0.0
    %10410 = vmatmul.mubr.f32.gmra.mrb[0].mxu0 %v10036
    %v10411 = vpop.f32.mrb[0].mxu0
    %v10412 = vadd.f32 0.0, %v10411
    %v10413 = vpop.f32.mrb[0].mxu0
    %10414 = vmatprep.mubr.f32.mxu0 0.0
    %10415 = vmatmul.mubr.f32.gmra.mrb[0].mxu0 %v10039
    %v10416 = vpop.f32.mrb[0].mxu0
    %v10417 = vadd.f32 0.0, %v10416
    %v10418 = vpop.f32.mrb[0].mxu0
    %10419 = vmatprep.mubr.f32.mxu0 0.0
    %10420 = vmatmul.mubr.f32.gmra.mrb[0].mxu0 %v10042
    %v10421 = vpop.f32.mrb[0].mxu0
    %v10422 = vadd.f32 0.0, %v10421
    %v10423 = vpop.f32.mrb[0].mxu0
    %10424 = vmatprep.mubr.f32.mxu0 0.0
    %10425 = vmatmul.mubr.f32.gmra.mrb[0].mxu0 %v10045
    %v10426 = vpop.f32.mrb[0].mxu0
    %v10427 = vadd.f32 0.0, %v10426
    %v10428 = vpop.f32.mrb[0].mxu0
    %10429 = vmatprep.mubr.f32.mxu0 0.0
    %10430 = vmatmul.mubr.f32.gmra.mrb[0].mxu0 %v10048
    %v10431 = vpop.f32.mrb[0].mxu0
    %v10432 = vadd.f32 0.0, %v10431
    %v10433 = vpop.f32.mrb[0].mxu0
    %10434 = vdwg.mxu0
    %v10436 = vsel %vm9857, %v9704, 0
    %v10439 = vsel %vm9857, %v9705, 0
    %v10442 = vsel %vm9857, %v9706, 0
    %v10445 = vsel %vm9857, %v9707, 0
    %v10448 = vsel %vm9857, %v9708, 0
    %v10451 = vsel %vm9857, %v9709, 0
    %v10454 = vsel %vm9857, %v9710, 0
    %v10457 = vsel %vm9857, %v9711, 0
    %v10460 = vsel %vm9857, %v9712, 0
    %v10463 = vsel %vm9857, %v9713, 0
    %v10466 = vsel %vm9857, %v9714, 0
    %v10469 = vsel %vm9857, %v9715, 0
    %v10472 = vsel %vm9857, %v9716, 0
    %v10475 = vsel %vm9857, %v9717, 0
    %v10478 = vsel %vm9857, %v9718, 0
    %v10481 = vsel %vm9857, %v9719, 0
    %v10484 = vsel %vm9857, %v9720, 0
    %v10487 = vsel %vm9857, %v9721, 0
    %v10490 = vsel %vm9857, %v9722, 0
    %v10493 = vsel %vm9857, %v9723, 0
    %v10496 = vsel %vm9857, %v9724, 0
    %v10499 = vsel %vm9857, %v9725, 0
    %v10502 = vsel %vm9857, %v9726, 0
    %v10505 = vsel %vm9857, %v9727, 0
    %v10508 = vsel %vm9857, %v9728, 0
    %v10511 = vsel %vm9857, %v9729, 0
    %v10514 = vsel %vm9857, %v9730, 0
    %v10517 = vsel %vm9857, %v9731, 0
    %v10520 = vsel %vm9857, %v9732, 0
    %v10523 = vsel %vm9857, %v9733, 0
    %v10526 = vsel %vm9857, %v9734, 0
    %v10529 = vsel %vm9857, %v9735, 0
    %v10532 = vsel %vm9857, %v9736, 0
    %v10535 = vsel %vm9857, %v9737, 0
    %v10538 = vsel %vm9857, %v9738, 0
    %v10541 = vsel %vm9857, %v9739, 0
    %v10544 = vsel %vm9857, %v9740, 0
    %v10547 = vsel %vm9857, %v9741, 0
    %v10550 = vsel %vm9857, %v9742, 0
    %v10553 = vsel %vm9857, %v9743, 0
    %v10556 = vsel %vm9857, %v9744, 0
    %v10559 = vsel %vm9857, %v9745, 0
    %v10562 = vsel %vm9857, %v9746, 0
    %v10565 = vsel %vm9857, %v9747, 0
    %v10568 = vsel %vm9857, %v9748, 0
    %v10571 = vsel %vm9857, %v9749, 0
    %v10574 = vsel %vm9857, %v9750, 0
    %v10577 = vsel %vm9857, %v9751, 0
    %v10580 = vsel %vm9857, %v9752, 0
    %v10583 = vsel %vm9857, %v9753, 0
    %v10586 = vsel %vm9857, %v9754, 0
    %v10589 = vsel %vm9857, %v9755, 0
    %v10592 = vsel %vm9857, %v9756, 0
    %v10595 = vsel %vm9857, %v9757, 0
    %v10598 = vsel %vm9857, %v9758, 0
    %v10601 = vsel %vm9857, %v9759, 0
    %v10604 = vsel %vm9857, %v9760, 0
    %v10607 = vsel %vm9857, %v9761, 0
    %v10610 = vsel %vm9857, %v9762, 0
    %v10613 = vsel %vm9857, %v9763, 0
    %v10616 = vsel %vm9857, %v9764, 0
    %v10619 = vsel %vm9857, %v9765, 0
    %v10622 = vsel %vm9857, %v9766, 0
    %v10625 = vsel %vm9857, %v9767, 0
    %10627 = vmatprep.subr.mxu0 0.0
    %10628 = vmatpush1.msra.mxu0 %v9768
    %10629 = vmatprep.subr.mxu0 0.0
    %10630 = vmatpush1.msra.mxu0 %v9769
    %10631 = vmatprep.subr.mxu0 0.0
    %10632 = vmatpush1.msra.mxu0 %v9770
    %10633 = vmatprep.subr.mxu0 0.0
    %10634 = vmatpush1.msra.mxu0 %v9771
    %10635 = vmatprep.subr.mxu0 0.0
    %10636 = vmatpush1.msra.mxu0 %v9772
    %10637 = vmatprep.subr.mxu0 0.0
    %10638 = vmatpush1.msra.mxu0 %v9773
    %10639 = vmatprep.subr.mxu0 0.0
    %10640 = vmatpush1.msra.mxu0 %v9774
    %10641 = vmatprep.subr.mxu0 0.0
    %10642 = vmatpush1.msra.mxu0 %v9775
    %10643 = vmatprep.subr.mxu0 0.0
    %10644 = vmatpush1.msra.mxu0 %v9776
    %10645 = vmatprep.subr.mxu0 0.0
    %10646 = vmatpush1.msra.mxu0 %v9777
    %10647 = vmatprep.subr.mxu0 0.0
    %10648 = vmatpush1.msra.mxu0 %v9778
    %10649 = vmatprep.subr.mxu0 0.0
    %10650 = vmatpush1.msra.mxu0 %v9779
    %10651 = vmatprep.subr.mxu0 0.0
    %10652 = vmatpush1.msra.mxu0 0.0
    %10653 = vmatprep.subr.mxu0 0.0
    %10654 = vmatpush1.msra.mxu0 0.0
    %10655 = vmatprep.subr.mxu0 0.0
    %10656 = vmatpush1.msra.mxu0 0.0
    %10657 = vmatprep.subr.mxu0 0.0
    %10658 = vmatpush1.msra.mxu0 0.0
    %10659 = vmatprep.subr.mxu0 0.0
    %10660 = vmatpush1.msra.mxu0 0.0
    %10661 = vmatprep.subr.mxu0 0.0
    %10662 = vmatpush1.msra.mxu0 0.0
    %10663 = vmatprep.subr.mxu0 0.0
    %10664 = vmatpush1.msra.mxu0 0.0
    %10665 = vmatprep.subr.mxu0 0.0
    %10666 = vmatpush1.msra.mxu0 0.0
    %10667 = vmatprep.subr.mxu0 0.0
    %10668 = vmatpush1.msra.mxu0 0.0
    %10669 = vmatprep.subr.mxu0 0.0
    %10670 = vmatpush1.msra.mxu0 0.0
    %10671 = vmatprep.subr.mxu0 0.0
    %10672 = vmatpush1.msra.mxu0 0.0
    %10673 = vmatprep.subr.mxu0 0.0
    %10674 = vmatpush1.msra.mxu0 0.0
    %10675 = vmatprep.subr.mxu0 0.0
    %10676 = vmatpush1.msra.mxu0 0.0
    %10677 = vmatprep.subr.mxu0 0.0
    %10678 = vmatpush1.msra.mxu0 0.0
    %10679 = vmatprep.subr.mxu0 0.0
    %10680 = vmatpush1.msra.mxu0 0.0
    %10681 = vmatprep.subr.mxu0 0.0
    %10682 = vmatpush1.msra.mxu0 0.0
    %10683 = vmatprep.subr.mxu0 0.0
    %10684 = vmatpush1.msra.mxu0 0.0
    %10685 = vmatprep.subr.mxu0 0.0
    %10686 = vmatpush1.msra.mxu0 0.0
    %10687 = vmatprep.subr.mxu0 0.0
    %10688 = vmatpush1.msra.mxu0 0.0
    %10689 = vmatprep.subr.mxu0 0.0
    %10690 = vmatpush1.msra.mxu0 0.0
    %10691 = vmatprep.mubr.f32.mxu0 0.0
    %10692 = vmatmul.mubr.f32.gmra.mrb[0].mxu0 %v10436
    %v10693 = vpop.f32.mrb[0].mxu0
    %v10694 = vadd.f32 %v10117, %v10693
    %v10695 = vpop.f32.mrb[0].mxu0
    %10696 = vmatprep.mubr.f32.mxu0 0.0
    %10697 = vmatmul.mubr.f32.gmra.mrb[0].mxu0 %v10439
    %v10698 = vpop.f32.mrb[0].mxu0
    %v10699 = vadd.f32 %v10122, %v10698
    %v10700 = vpop.f32.mrb[0].mxu0
    %10701 = vmatprep.mubr.f32.mxu0 0.0
    %10702 = vmatmul.mubr.f32.gmra.mrb[0].mxu0 %v10442
    %v10703 = vpop.f32.mrb[0].mxu0
    %v10704 = vadd.f32 %v10127, %v10703
    %v10705 = vpop.f32.mrb[0].mxu0
    %10706 = vmatprep.mubr.f32.mxu0 0.0
    %10707 = vmatmul.mubr.f32.gmra.mrb[0].mxu0 %v10445
    %v10708 = vpop.f32.mrb[0].mxu0
    %v10709 = vadd.f32 %v10132, %v10708
    %v10710 = vpop.f32.mrb[0].mxu0
    %10711 = vmatprep.mubr.f32.mxu0 0.0
    %10712 = vmatmul.mubr.f32.gmra.mrb[0].mxu0 %v10448
    %v10713 = vpop.f32.mrb[0].mxu0
    %v10714 = vadd.f32 %v10137, %v10713
    %v10715 = vpop.f32.mrb[0].mxu0
    %10716 = vmatprep.mubr.f32.mxu0 0.0
    %10717 = vmatmul.mubr.f32.gmra.mrb[0].mxu0 %v10451
    %v10718 = vpop.f32.mrb[0].mxu0
    %v10719 = vadd.f32 %v10142, %v10718
    %v10720 = vpop.f32.mrb[0].mxu0
    %10721 = vmatprep.mubr.f32.mxu0 0.0
    %10722 = vmatmul.mubr.f32.gmra.mrb[0].mxu0 %v10454
    %v10723 = vpop.f32.mrb[0].mxu0
    %v10724 = vadd.f32 %v10147, %v10723
    %v10725 = vpop.f32.mrb[0].mxu0
    %10726 = vmatprep.mubr.f32.mxu0 0.0
    %10727 = vmatmul.mubr.f32.gmra.mrb[0].mxu0 %v10457
    %v10728 = vpop.f32.mrb[0].mxu0
    %v10729 = vadd.f32 %v10152, %v10728
    %v10730 = vpop.f32.mrb[0].mxu0
    %10731 = vmatprep.mubr.f32.mxu0 0.0
    %10732 = vmatmul.mubr.f32.gmra.mrb[0].mxu0 %v10460
    %v10733 = vpop.f32.mrb[0].mxu0
    %v10734 = vadd.f32 %v10157, %v10733
    %v10735 = vpop.f32.mrb[0].mxu0
    %10736 = vmatprep.mubr.f32.mxu0 0.0
    %10737 = vmatmul.mubr.f32.gmra.mrb[0].mxu0 %v10463
    %v10738 = vpop.f32.mrb[0].mxu0
    %v10739 = vadd.f32 %v10162, %v10738
    %v10740 = vpop.f32.mrb[0].mxu0
    %10741 = vmatprep.mubr.f32.mxu0 0.0
    %10742 = vmatmul.mubr.f32.gmra.mrb[0].mxu0 %v10466
    %v10743 = vpop.f32.mrb[0].mxu0
    %v10744 = vadd.f32 %v10167, %v10743
    %v10745 = vpop.f32.mrb[0].mxu0
    %10746 = vmatprep.mubr.f32.mxu0 0.0
    %10747 = vmatmul.mubr.f32.gmra.mrb[0].mxu0 %v10469
    %v10748 = vpop.f32.mrb[0].mxu0
    %v10749 = vadd.f32 %v10172, %v10748
    %v10750 = vpop.f32.mrb[0].mxu0
    %10751 = vmatprep.mubr.f32.mxu0 0.0
    %10752 = vmatmul.mubr.f32.gmra.mrb[0].mxu0 %v10472
    %v10753 = vpop.f32.mrb[0].mxu0
    %v10754 = vadd.f32 %v10177, %v10753
    %v10755 = vpop.f32.mrb[0].mxu0
    %10756 = vmatprep.mubr.f32.mxu0 0.0
    %10757 = vmatmul.mubr.f32.gmra.mrb[0].mxu0 %v10475
    %v10758 = vpop.f32.mrb[0].mxu0
    %v10759 = vadd.f32 %v10182, %v10758
    %v10760 = vpop.f32.mrb[0].mxu0
    %10761 = vmatprep.mubr.f32.mxu0 0.0
    %10762 = vmatmul.mubr.f32.gmra.mrb[0].mxu0 %v10478
    %v10763 = vpop.f32.mrb[0].mxu0
    %v10764 = vadd.f32 %v10187, %v10763
    %v10765 = vpop.f32.mrb[0].mxu0
    %10766 = vmatprep.mubr.f32.mxu0 0.0
    %10767 = vmatmul.mubr.f32.gmra.mrb[0].mxu0 %v10481
    %v10768 = vpop.f32.mrb[0].mxu0
    %v10769 = vadd.f32 %v10192, %v10768
    %v10770 = vpop.f32.mrb[0].mxu0
    %10771 = vmatprep.mubr.f32.mxu0 0.0
    %10772 = vmatmul.mubr.f32.gmra.mrb[0].mxu0 %v10484
    %v10773 = vpop.f32.mrb[0].mxu0
    %v10774 = vadd.f32 %v10197, %v10773
    %v10775 = vpop.f32.mrb[0].mxu0
    %10776 = vmatprep.mubr.f32.mxu0 0.0
    %10777 = vmatmul.mubr.f32.gmra.mrb[0].mxu0 %v10487
    %v10778 = vpop.f32.mrb[0].mxu0
    %v10779 = vadd.f32 %v10202, %v10778
    %v10780 = vpop.f32.mrb[0].mxu0
    %10781 = vmatprep.mubr.f32.mxu0 0.0
    %10782 = vmatmul.mubr.f32.gmra.mrb[0].mxu0 %v10490
    %v10783 = vpop.f32.mrb[0].mxu0
    %v10784 = vadd.f32 %v10207, %v10783
    %v10785 = vpop.f32.mrb[0].mxu0
    %10786 = vmatprep.mubr.f32.mxu0 0.0
    %10787 = vmatmul.mubr.f32.gmra.mrb[0].mxu0 %v10493
    %v10788 = vpop.f32.mrb[0].mxu0
    %v10789 = vadd.f32 %v10212, %v10788
    %v10790 = vpop.f32.mrb[0].mxu0
    %10791 = vmatprep.mubr.f32.mxu0 0.0
    %10792 = vmatmul.mubr.f32.gmra.mrb[0].mxu0 %v10496
    %v10793 = vpop.f32.mrb[0].mxu0
    %v10794 = vadd.f32 %v10217, %v10793
    %v10795 = vpop.f32.mrb[0].mxu0
    %10796 = vmatprep.mubr.f32.mxu0 0.0
    %10797 = vmatmul.mubr.f32.gmra.mrb[0].mxu0 %v10499
    %v10798 = vpop.f32.mrb[0].mxu0
    %v10799 = vadd.f32 %v10222, %v10798
    %v10800 = vpop.f32.mrb[0].mxu0
    %10801 = vmatprep.mubr.f32.mxu0 0.0
    %10802 = vmatmul.mubr.f32.gmra.mrb[0].mxu0 %v10502
    %v10803 = vpop.f32.mrb[0].mxu0
    %v10804 = vadd.f32 %v10227, %v10803
    %v10805 = vpop.f32.mrb[0].mxu0
    %10806 = vmatprep.mubr.f32.mxu0 0.0
    %10807 = vmatmul.mubr.f32.gmra.mrb[0].mxu0 %v10505
    %v10808 = vpop.f32.mrb[0].mxu0
    %v10809 = vadd.f32 %v10232, %v10808
    %v10810 = vpop.f32.mrb[0].mxu0
    %10811 = vmatprep.mubr.f32.mxu0 0.0
    %10812 = vmatmul.mubr.f32.gmra.mrb[0].mxu0 %v10508
    %v10813 = vpop.f32.mrb[0].mxu0
    %v10814 = vadd.f32 %v10237, %v10813
    %v10815 = vpop.f32.mrb[0].mxu0
    %10816 = vmatprep.mubr.f32.mxu0 0.0
    %10817 = vmatmul.mubr.f32.gmra.mrb[0].mxu0 %v10511
    %v10818 = vpop.f32.mrb[0].mxu0
    %v10819 = vadd.f32 %v10242, %v10818
    %v10820 = vpop.f32.mrb[0].mxu0
    %10821 = vmatprep.mubr.f32.mxu0 0.0
    %10822 = vmatmul.mubr.f32.gmra.mrb[0].mxu0 %v10514
    %v10823 = vpop.f32.mrb[0].mxu0
    %v10824 = vadd.f32 %v10247, %v10823
    %v10825 = vpop.f32.mrb[0].mxu0
    %10826 = vmatprep.mubr.f32.mxu0 0.0
    %10827 = vmatmul.mubr.f32.gmra.mrb[0].mxu0 %v10517
    %v10828 = vpop.f32.mrb[0].mxu0
    %v10829 = vadd.f32 %v10252, %v10828
    %v10830 = vpop.f32.mrb[0].mxu0
    %10831 = vmatprep.mubr.f32.mxu0 0.0
    %10832 = vmatmul.mubr.f32.gmra.mrb[0].mxu0 %v10520
    %v10833 = vpop.f32.mrb[0].mxu0
    %v10834 = vadd.f32 %v10257, %v10833
    %v10835 = vpop.f32.mrb[0].mxu0
    %10836 = vmatprep.mubr.f32.mxu0 0.0
    %10837 = vmatmul.mubr.f32.gmra.mrb[0].mxu0 %v10523
    %v10838 = vpop.f32.mrb[0].mxu0
    %v10839 = vadd.f32 %v10262, %v10838
    %v10840 = vpop.f32.mrb[0].mxu0
    %10841 = vmatprep.mubr.f32.mxu0 0.0
    %10842 = vmatmul.mubr.f32.gmra.mrb[0].mxu0 %v10526
    %v10843 = vpop.f32.mrb[0].mxu0
    %v10844 = vadd.f32 %v10267, %v10843
    %v10845 = vpop.f32.mrb[0].mxu0
    %10846 = vmatprep.mubr.f32.mxu0 0.0
    %10847 = vmatmul.mubr.f32.gmra.mrb[0].mxu0 %v10529
    %v10848 = vpop.f32.mrb[0].mxu0
    %v10849 = vadd.f32 %v10272, %v10848
    %v10850 = vpop.f32.mrb[0].mxu0
    %10851 = vmatprep.mubr.f32.mxu0 0.0
    %10852 = vmatmul.mubr.f32.gmra.mrb[0].mxu0 %v10532
    %v10853 = vpop.f32.mrb[0].mxu0
    %v10854 = vadd.f32 %v10277, %v10853
    %v10855 = vpop.f32.mrb[0].mxu0
    %10856 = vmatprep.mubr.f32.mxu0 0.0
    %10857 = vmatmul.mubr.f32.gmra.mrb[0].mxu0 %v10535
    %v10858 = vpop.f32.mrb[0].mxu0
    %v10859 = vadd.f32 %v10282, %v10858
    %v10860 = vpop.f32.mrb[0].mxu0
    %10861 = vmatprep.mubr.f32.mxu0 0.0
    %10862 = vmatmul.mubr.f32.gmra.mrb[0].mxu0 %v10538
    %v10863 = vpop.f32.mrb[0].mxu0
    %v10864 = vadd.f32 %v10287, %v10863
    %v10865 = vpop.f32.mrb[0].mxu0
    %10866 = vmatprep.mubr.f32.mxu0 0.0
    %10867 = vmatmul.mubr.f32.gmra.mrb[0].mxu0 %v10541
    %v10868 = vpop.f32.mrb[0].mxu0
    %v10869 = vadd.f32 %v10292, %v10868
    %v10870 = vpop.f32.mrb[0].mxu0
    %10871 = vmatprep.mubr.f32.mxu0 0.0
    %10872 = vmatmul.mubr.f32.gmra.mrb[0].mxu0 %v10544
    %v10873 = vpop.f32.mrb[0].mxu0
    %v10874 = vadd.f32 %v10297, %v10873
    %v10875 = vpop.f32.mrb[0].mxu0
    %10876 = vmatprep.mubr.f32.mxu0 0.0
    %10877 = vmatmul.mubr.f32.gmra.mrb[0].mxu0 %v10547
    %v10878 = vpop.f32.mrb[0].mxu0
    %v10879 = vadd.f32 %v10302, %v10878
    %v10880 = vpop.f32.mrb[0].mxu0
    %10881 = vmatprep.mubr.f32.mxu0 0.0
    %10882 = vmatmul.mubr.f32.gmra.mrb[0].mxu0 %v10550
    %v10883 = vpop.f32.mrb[0].mxu0
    %v10884 = vadd.f32 %v10307, %v10883
    %v10885 = vpop.f32.mrb[0].mxu0
    %10886 = vmatprep.mubr.f32.mxu0 0.0
    %10887 = vmatmul.mubr.f32.gmra.mrb[0].mxu0 %v10553
    %v10888 = vpop.f32.mrb[0].mxu0
    %v10889 = vadd.f32 %v10312, %v10888
    %v10890 = vpop.f32.mrb[0].mxu0
    %10891 = vmatprep.mubr.f32.mxu0 0.0
    %10892 = vmatmul.mubr.f32.gmra.mrb[0].mxu0 %v10556
    %v10893 = vpop.f32.mrb[0].mxu0
    %v10894 = vadd.f32 %v10317, %v10893
    %v10895 = vpop.f32.mrb[0].mxu0
    %10896 = vmatprep.mubr.f32.mxu0 0.0
    %10897 = vmatmul.mubr.f32.gmra.mrb[0].mxu0 %v10559
    %v10898 = vpop.f32.mrb[0].mxu0
    %v10899 = vadd.f32 %v10322, %v10898
    %v10900 = vpop.f32.mrb[0].mxu0
    %10901 = vmatprep.mubr.f32.mxu0 0.0
    %10902 = vmatmul.mubr.f32.gmra.mrb[0].mxu0 %v10562
    %v10903 = vpop.f32.mrb[0].mxu0
    %v10904 = vadd.f32 %v10327, %v10903
    %v10905 = vpop.f32.mrb[0].mxu0
    %10906 = vmatprep.mubr.f32.mxu0 0.0
    %10907 = vmatmul.mubr.f32.gmra.mrb[0].mxu0 %v10565
    %v10908 = vpop.f32.mrb[0].mxu0
    %v10909 = vadd.f32 %v10332, %v10908
    %v10910 = vpop.f32.mrb[0].mxu0
    %10911 = vmatprep.mubr.f32.mxu0 0.0
    %10912 = vmatmul.mubr.f32.gmra.mrb[0].mxu0 %v10568
    %v10913 = vpop.f32.mrb[0].mxu0
    %v10914 = vadd.f32 %v10337, %v10913
    %v10915 = vpop.f32.mrb[0].mxu0
    %10916 = vmatprep.mubr.f32.mxu0 0.0
    %10917 = vmatmul.mubr.f32.gmra.mrb[0].mxu0 %v10571
    %v10918 = vpop.f32.mrb[0].mxu0
    %v10919 = vadd.f32 %v10342, %v10918
    %v10920 = vpop.f32.mrb[0].mxu0
    %10921 = vmatprep.mubr.f32.mxu0 0.0
    %10922 = vmatmul.mubr.f32.gmra.mrb[0].mxu0 %v10574
    %v10923 = vpop.f32.mrb[0].mxu0
    %v10924 = vadd.f32 %v10347, %v10923
    %v10925 = vpop.f32.mrb[0].mxu0
    %10926 = vmatprep.mubr.f32.mxu0 0.0
    %10927 = vmatmul.mubr.f32.gmra.mrb[0].mxu0 %v10577
    %v10928 = vpop.f32.mrb[0].mxu0
    %v10929 = vadd.f32 %v10352, %v10928
    %v10930 = vpop.f32.mrb[0].mxu0
    %10931 = vmatprep.mubr.f32.mxu0 0.0
    %10932 = vmatmul.mubr.f32.gmra.mrb[0].mxu0 %v10580
    %v10933 = vpop.f32.mrb[0].mxu0
    %v10934 = vadd.f32 %v10357, %v10933
    %v10935 = vpop.f32.mrb[0].mxu0
    %10936 = vmatprep.mubr.f32.mxu0 0.0
    %10937 = vmatmul.mubr.f32.gmra.mrb[0].mxu0 %v10583
    %v10938 = vpop.f32.mrb[0].mxu0
    %v10939 = vadd.f32 %v10362, %v10938
    %v10940 = vpop.f32.mrb[0].mxu0
    %10941 = vmatprep.mubr.f32.mxu0 0.0
    %10942 = vmatmul.mubr.f32.gmra.mrb[0].mxu0 %v10586
    %v10943 = vpop.f32.mrb[0].mxu0
    %v10944 = vadd.f32 %v10367, %v10943
    %v10945 = vpop.f32.mrb[0].mxu0
    %10946 = vmatprep.mubr.f32.mxu0 0.0
    %10947 = vmatmul.mubr.f32.gmra.mrb[0].mxu0 %v10589
    %v10948 = vpop.f32.mrb[0].mxu0
    %v10949 = vadd.f32 %v10372, %v10948
    %v10950 = vpop.f32.mrb[0].mxu0
    %10951 = vmatprep.mubr.f32.mxu0 0.0
    %10952 = vmatmul.mubr.f32.gmra.mrb[0].mxu0 %v10592
    %v10953 = vpop.f32.mrb[0].mxu0
    %v10954 = vadd.f32 %v10377, %v10953
    %v10955 = vpop.f32.mrb[0].mxu0
    %10956 = vmatprep.mubr.f32.mxu0 0.0
    %10957 = vmatmul.mubr.f32.gmra.mrb[0].mxu0 %v10595
    %v10958 = vpop.f32.mrb[0].mxu0
    %v10959 = vadd.f32 %v10382, %v10958
    %v10960 = vpop.f32.mrb[0].mxu0
    %10961 = vmatprep.mubr.f32.mxu0 0.0
    %10962 = vmatmul.mubr.f32.gmra.mrb[0].mxu0 %v10598
    %v10963 = vpop.f32.mrb[0].mxu0
    %v10964 = vadd.f32 %v10387, %v10963
    %v10965 = vpop.f32.mrb[0].mxu0
    %10966 = vmatprep.mubr.f32.mxu0 0.0
    %10967 = vmatmul.mubr.f32.gmra.mrb[0].mxu0 %v10601
    %v10968 = vpop.f32.mrb[0].mxu0
    %v10969 = vadd.f32 %v10392, %v10968
    %v10970 = vpop.f32.mrb[0].mxu0
    %10971 = vmatprep.mubr.f32.mxu0 0.0
    %10972 = vmatmul.mubr.f32.gmra.mrb[0].mxu0 %v10604
    %v10973 = vpop.f32.mrb[0].mxu0
    %v10974 = vadd.f32 %v10397, %v10973
    %v10975 = vpop.f32.mrb[0].mxu0
    %10976 = vmatprep.mubr.f32.mxu0 0.0
    %10977 = vmatmul.mubr.f32.gmra.mrb[0].mxu0 %v10607
    %v10978 = vpop.f32.mrb[0].mxu0
    %v10979 = vadd.f32 %v10402, %v10978
    %v10980 = vpop.f32.mrb[0].mxu0
    %10981 = vmatprep.mubr.f32.mxu0 0.0
    %10982 = vmatmul.mubr.f32.gmra.mrb[0].mxu0 %v10610
    %v10983 = vpop.f32.mrb[0].mxu0
    %v10984 = vadd.f32 %v10407, %v10983
    %v10985 = vpop.f32.mrb[0].mxu0
    %10986 = vmatprep.mubr.f32.mxu0 0.0
    %10987 = vmatmul.mubr.f32.gmra.mrb[0].mxu0 %v10613
    %v10988 = vpop.f32.mrb[0].mxu0
    %v10989 = vadd.f32 %v10412, %v10988
    %v10990 = vpop.f32.mrb[0].mxu0
    %10991 = vmatprep.mubr.f32.mxu0 0.0
    %10992 = vmatmul.mubr.f32.gmra.mrb[0].mxu0 %v10616
    %v10993 = vpop.f32.mrb[0].mxu0
    %v10994 = vadd.f32 %v10417, %v10993
    %v10995 = vpop.f32.mrb[0].mxu0
    %10996 = vmatprep.mubr.f32.mxu0 0.0
    %10997 = vmatmul.mubr.f32.gmra.mrb[0].mxu0 %v10619
    %v10998 = vpop.f32.mrb[0].mxu0
    %v10999 = vadd.f32 %v10422, %v10998
    %v11000 = vpop.f32.mrb[0].mxu0
    %11001 = vmatprep.mubr.f32.mxu0 0.0
    %11002 = vmatmul.mubr.f32.gmra.mrb[0].mxu0 %v10622
    %v11003 = vpop.f32.mrb[0].mxu0
    %v11004 = vadd.f32 %v10427, %v11003
    %v11005 = vpop.f32.mrb[0].mxu0
    %11006 = vmatprep.mubr.f32.mxu0 0.0
    %11007 = vmatmul.mubr.f32.gmra.mrb[0].mxu0 %v10625
    %v11008 = vpop.f32.mrb[0].mxu0
    %v11009 = vadd.f32 %v10432, %v11008
    %v11010 = vpop.f32.mrb[0].mxu0
    %11011 = vdwg.mxu0
    %v11012 = vld [vmem:[%s3505] sm:$0xff]
    %v11013 = vld [vmem:[%s3505 + $0x10] sm:$0xff]
    %v11014 = vld [vmem:[%s3505 + $0x20] sm:$0xff]
    %v11015 = vld [vmem:[%s3505 + $0x30] sm:$0xff]
    %v11016 = vld [vmem:[%s3505 + $0x40] sm:$0xff]
    %v11017 = vld [vmem:[%s3505 + $0x50] sm:$0xff]
    %v11018 = vld [vmem:[%s3505 + $0x60] sm:$0xff]
    %v11019 = vld [vmem:[%s3505 + $0x70] sm:$0xff]
    %v11020 = vld [vmem:[%s3505 + $0x80] sm:$0xff]
    %v11021 = vld [vmem:[%s3505 + $0x90] sm:$0xff]
    %v11022 = vld [vmem:[%s3505 + $0xa0] sm:$0xff]
    %v11023 = vld [vmem:[%s3505 + $0xb0] sm:$0xff]
    %v11024 = vld [vmem:[%s3505 + $0xc0] sm:$0xff]
    %v11025 = vld [vmem:[%s3505 + $0xd0] sm:$0xff]
    %v11026 = vld [vmem:[%s3505 + $0xe0] sm:$0xff]
    %v11027 = vld [vmem:[%s3505 + $0xf0] sm:$0xff]
    %v11028 = vld [vmem:[%s3505 + $0x100] sm:$0xff]
    %v11029 = vld [vmem:[%s3505 + $0x110] sm:$0xff]
    %v11030 = vld [vmem:[%s3505 + $0x120] sm:$0xff]
    %v11031 = vld [vmem:[%s3505 + $0x130] sm:$0xff]
    %v11032 = vld [vmem:[%s3505 + $0x140] sm:$0xff]
    %v11033 = vld [vmem:[%s3505 + $0x150] sm:$0xff]
    %v11034 = vld [vmem:[%s3505 + $0x160] sm:$0xff]
    %v11035 = vld [vmem:[%s3505 + $0x170] sm:$0xff]
    %v11036 = vld [vmem:[%s3505 + $0x180] sm:$0xff]
    %v11037 = vld [vmem:[%s3505 + $0x190] sm:$0xff]
    %v11038 = vld [vmem:[%s3505 + $0x1a0] sm:$0xff]
    %v11039 = vld [vmem:[%s3505 + $0x1b0] sm:$0xff]
    %v11040 = vld [vmem:[%s3505 + $0x1c0] sm:$0xff]
    %v11041 = vld [vmem:[%s3505 + $0x1d0] sm:$0xff]
    %v11042 = vld [vmem:[%s3505 + $0x1e0] sm:$0xff]
    %v11043 = vld [vmem:[%s3505 + $0x1f0] sm:$0xff]
    %v11044 = vld [vmem:[%s3505 + $0x240] sm:$0xff]
    %v11045 = vld [vmem:[%s3505 + $0x250] sm:$0xff]
    %v11046 = vld [vmem:[%s3505 + $0x260] sm:$0xff]
    %v11047 = vld [vmem:[%s3505 + $0x270] sm:$0xff]
    %v11048 = vld [vmem:[%s3505 + $0x280] sm:$0xff]
    %v11049 = vld [vmem:[%s3505 + $0x290] sm:$0xff]
    %v11050 = vld [vmem:[%s3505 + $0x2a0] sm:$0xff]
    %v11051 = vld [vmem:[%s3505 + $0x2b0] sm:$0xff]
    %v11052 = vld [vmem:[%s3505 + $0x2c0] sm:$0xff]
    %v11053 = vld [vmem:[%s3505 + $0x2d0] sm:$0xff]
    %v11054 = vld [vmem:[%s3505 + $0x2e0] sm:$0xff]
    %v11055 = vld [vmem:[%s3505 + $0x2f0] sm:$0xff]
    %v11056 = vld [vmem:[%s3505 + $0x300] sm:$0xff]
    %v11057 = vld [vmem:[%s3505 + $0x310] sm:$0xff]
    %v11058 = vld [vmem:[%s3505 + $0x320] sm:$0xff]
    %v11059 = vld [vmem:[%s3505 + $0x330] sm:$0xff]
    %v11060 = vld [vmem:[%s3505 + $0x340] sm:$0xff]
    %v11061 = vld [vmem:[%s3505 + $0x350] sm:$0xff]
    %v11062 = vld [vmem:[%s3505 + $0x360] sm:$0xff]
    %v11063 = vld [vmem:[%s3505 + $0x370] sm:$0xff]
    %v11064 = vld [vmem:[%s3505 + $0x380] sm:$0xff]
    %v11065 = vld [vmem:[%s3505 + $0x390] sm:$0xff]
    %v11066 = vld [vmem:[%s3505 + $0x3a0] sm:$0xff]
    %v11067 = vld [vmem:[%s3505 + $0x3b0] sm:$0xff]
    %v11068 = vld [vmem:[%s3505 + $0x3c0] sm:$0xff]
    %v11069 = vld [vmem:[%s3505 + $0x3d0] sm:$0xff]
    %v11070 = vld [vmem:[%s3505 + $0x3e0] sm:$0xff]
    %v11071 = vld [vmem:[%s3505 + $0x3f0] sm:$0xff]
    %v11072 = vld [vmem:[%s3505 + $0x400] sm:$0xff]
    %v11073 = vld [vmem:[%s3505 + $0x410] sm:$0xff]
    %v11074 = vld [vmem:[%s3505 + $0x420] sm:$0xff]
    %v11075 = vld [vmem:[%s3505 + $0x430] sm:$0xff]
    %s11076 = scalar_lea.vmem [#allocation7], 192
    %v11077 = vld [vmem:[%s11076] sm:$0xff]
    %v11078 = vld [vmem:[%s11076 + $0x8] sm:$0xff]
    %v11079 = vld [vmem:[%s11076 + $0x10] sm:$0xff]
    %v11080 = vld [vmem:[%s11076 + $0x18] sm:$0xff]
    %v11081 = vld [vmem:[%s11076 + $0x20] sm:$0xff]
    %v11082 = vld [vmem:[%s11076 + $0x28] sm:$0xff]
    %v11083 = vld [vmem:[%s11076 + $0x30] sm:$0xff]
    %v11084 = vld [vmem:[%s11076 + $0x38] sm:$0xff]
    %v11085 = vld [vmem:[%s11076 + $0x40] sm:$0xff]
    %v11086 = vld [vmem:[%s11076 + $0x48] sm:$0xff]
    %v11087 = vld [vmem:[%s11076 + $0x50] sm:$0xff]
    %v11088 = vld [vmem:[%s11076 + $0x58] sm:$0xff]
    %v11090 = vsel %vm9857, %v11012, 0
    %v11093 = vsel %vm9857, %v11013, 0
    %v11096 = vsel %vm9857, %v11014, 0
    %v11099 = vsel %vm9857, %v11015, 0
    %v11102 = vsel %vm9857, %v11016, 0
    %v11105 = vsel %vm9857, %v11017, 0
    %v11108 = vsel %vm9857, %v11018, 0
    %v11111 = vsel %vm9857, %v11019, 0
    %v11114 = vsel %vm9857, %v11020, 0
    %v11117 = vsel %vm9857, %v11021, 0
    %v11120 = vsel %vm9857, %v11022, 0
    %v11123 = vsel %vm9857, %v11023, 0
    %v11126 = vsel %vm9857, %v11024, 0
    %v11129 = vsel %vm9857, %v11025, 0
    %v11132 = vsel %vm9857, %v11026, 0
    %v11135 = vsel %vm9857, %v11027, 0
    %v11138 = vsel %vm9857, %v11028, 0
    %v11141 = vsel %vm9857, %v11029, 0
    %v11144 = vsel %vm9857, %v11030, 0
    %v11147 = vsel %vm9857, %v11031, 0
    %v11150 = vsel %vm9857, %v11032, 0
    %v11153 = vsel %vm9857, %v11033, 0
    %v11156 = vsel %vm9857, %v11034, 0
    %v11159 = vsel %vm9857, %v11035, 0
    %v11162 = vsel %vm9857, %v11036, 0
    %v11165 = vsel %vm9857, %v11037, 0
    %v11168 = vsel %vm9857, %v11038, 0
    %v11171 = vsel %vm9857, %v11039, 0
    %v11174 = vsel %vm9857, %v11040, 0
    %v11177 = vsel %vm9857, %v11041, 0
    %v11180 = vsel %vm9857, %v11042, 0
    %v11183 = vsel %vm9857, %v11043, 0
    %v11186 = vsel %vm9857, %v11044, 0
    %v11189 = vsel %vm9857, %v11045, 0
    %v11192 = vsel %vm9857, %v11046, 0
    %v11195 = vsel %vm9857, %v11047, 0
    %v11198 = vsel %vm9857, %v11048, 0
    %v11201 = vsel %vm9857, %v11049, 0
    %v11204 = vsel %vm9857, %v11050, 0
    %v11207 = vsel %vm9857, %v11051, 0
    %v11210 = vsel %vm9857, %v11052, 0
    %v11213 = vsel %vm9857, %v11053, 0
    %v11216 = vsel %vm9857, %v11054, 0
    %v11219 = vsel %vm9857, %v11055, 0
    %v11222 = vsel %vm9857, %v11056, 0
    %v11225 = vsel %vm9857, %v11057, 0
    %v11228 = vsel %vm9857, %v11058, 0
    %v11231 = vsel %vm9857, %v11059, 0
    %v11234 = vsel %vm9857, %v11060, 0
    %v11237 = vsel %vm9857, %v11061, 0
    %v11240 = vsel %vm9857, %v11062, 0
    %v11243 = vsel %vm9857, %v11063, 0
    %v11246 = vsel %vm9857, %v11064, 0
    %v11249 = vsel %vm9857, %v11065, 0
    %v11252 = vsel %vm9857, %v11066, 0
    %v11255 = vsel %vm9857, %v11067, 0
    %v11258 = vsel %vm9857, %v11068, 0
    %v11261 = vsel %vm9857, %v11069, 0
    %v11264 = vsel %vm9857, %v11070, 0
    %v11267 = vsel %vm9857, %v11071, 0
    %v11270 = vsel %vm9857, %v11072, 0
    %v11273 = vsel %vm9857, %v11073, 0
    %v11276 = vsel %vm9857, %v11074, 0
    %v11279 = vsel %vm9857, %v11075, 0
    %11281 = vmatprep.subr.mxu0 0.0
    %11282 = vmatpush1.msra.mxu0 %v11077
    %11283 = vmatprep.subr.mxu0 0.0
    %11284 = vmatpush1.msra.mxu0 %v11078
    %11285 = vmatprep.subr.mxu0 0.0
    %11286 = vmatpush1.msra.mxu0 %v11079
    %11287 = vmatprep.subr.mxu0 0.0
    %11288 = vmatpush1.msra.mxu0 %v11080
    %11289 = vmatprep.subr.mxu0 0.0
    %11290 = vmatpush1.msra.mxu0 %v11081
    %11291 = vmatprep.subr.mxu0 0.0
    %11292 = vmatpush1.msra.mxu0 %v11082
    %11293 = vmatprep.subr.mxu0 0.0
    %11294 = vmatpush1.msra.mxu0 %v11083
    %11295 = vmatprep.subr.mxu0 0.0
    %11296 = vmatpush1.msra.mxu0 %v11084
    %11297 = vmatprep.subr.mxu0 0.0
    %11298 = vmatpush1.msra.mxu0 %v11085
    %11299 = vmatprep.subr.mxu0 0.0
    %11300 = vmatpush1.msra.mxu0 %v11086
    %11301 = vmatprep.subr.mxu0 0.0
    %11302 = vmatpush1.msra.mxu0 %v11087
    %11303 = vmatprep.subr.mxu0 0.0
    %11304 = vmatpush1.msra.mxu0 %v11088
    %11305 = vmatprep.subr.mxu0 0.0
    %11306 = vmatpush1.msra.mxu0 0.0
    %11307 = vmatprep.subr.mxu0 0.0
    %11308 = vmatpush1.msra.mxu0 0.0
    %11309 = vmatprep.subr.mxu0 0.0
    %11310 = vmatpush1.msra.mxu0 0.0
    %11311 = vmatprep.subr.mxu0 0.0
    %11312 = vmatpush1.msra.mxu0 0.0
    %11313 = vmatprep.subr.mxu0 0.0
    %11314 = vmatpush1.msra.mxu0 0.0
    %11315 = vmatprep.subr.mxu0 0.0
    %11316 = vmatpush1.msra.mxu0 0.0
    %11317 = vmatprep.subr.mxu0 0.0
    %11318 = vmatpush1.msra.mxu0 0.0
    %11319 = vmatprep.subr.mxu0 0.0
    %11320 = vmatpush1.msra.mxu0 0.0
    %11321 = vmatprep.subr.mxu0 0.0
    %11322 = vmatpush1.msra.mxu0 0.0
    %11323 = vmatprep.subr.mxu0 0.0
    %11324 = vmatpush1.msra.mxu0 0.0
    %11325 = vmatprep.subr.mxu0 0.0
    %11326 = vmatpush1.msra.mxu0 0.0
    %11327 = vmatprep.subr.mxu0 0.0
    %11328 = vmatpush1.msra.mxu0 0.0
    %11329 = vmatprep.subr.mxu0 0.0
    %11330 = vmatpush1.msra.mxu0 0.0
    %11331 = vmatprep.subr.mxu0 0.0
    %11332 = vmatpush1.msra.mxu0 0.0
    %11333 = vmatprep.subr.mxu0 0.0
    %11334 = vmatpush1.msra.mxu0 0.0
    %11335 = vmatprep.subr.mxu0 0.0
    %11336 = vmatpush1.msra.mxu0 0.0
    %11337 = vmatprep.subr.mxu0 0.0
    %11338 = vmatpush1.msra.mxu0 0.0
    %11339 = vmatprep.subr.mxu0 0.0
    %11340 = vmatpush1.msra.mxu0 0.0
    %11341 = vmatprep.subr.mxu0 0.0
    %11342 = vmatpush1.msra.mxu0 0.0
    %11343 = vmatprep.subr.mxu0 0.0
    %11344 = vmatpush1.msra.mxu0 0.0
    %11345 = vmatprep.mubr.f32.mxu0 0.0
    %11346 = vmatmul.mubr.f32.gmra.mrb[0].mxu0 %v11090
    %v11347 = vpop.f32.mrb[0].mxu0
    %v11348 = vadd.f32 0.0, %v11347
    %v11349 = vpop.f32.mrb[0].mxu0
    %11350 = vmatprep.mubr.f32.mxu0 0.0
    %11351 = vmatmul.mubr.f32.gmra.mrb[0].mxu0 %v11093
    %v11352 = vpop.f32.mrb[0].mxu0
    %v11353 = vadd.f32 0.0, %v11352
    %v11354 = vpop.f32.mrb[0].mxu0
    %11355 = vmatprep.mubr.f32.mxu0 0.0
    %11356 = vmatmul.mubr.f32.gmra.mrb[0].mxu0 %v11096
    %v11357 = vpop.f32.mrb[0].mxu0
    %v11358 = vadd.f32 0.0, %v11357
    %v11359 = vpop.f32.mrb[0].mxu0
    %11360 = vmatprep.mubr.f32.mxu0 0.0
    %11361 = vmatmul.mubr.f32.gmra.mrb[0].mxu0 %v11099
    %v11362 = vpop.f32.mrb[0].mxu0
    %v11363 = vadd.f32 0.0, %v11362
    %v11364 = vpop.f32.mrb[0].mxu0
    %11365 = vmatprep.mubr.f32.mxu0 0.0
    %11366 = vmatmul.mubr.f32.gmra.mrb[0].mxu0 %v11102
    %v11367 = vpop.f32.mrb[0].mxu0
    %v11368 = vadd.f32 0.0, %v11367
    %v11369 = vpop.f32.mrb[0].mxu0
    %11370 = vmatprep.mubr.f32.mxu0 0.0
    %11371 = vmatmul.mubr.f32.gmra.mrb[0].mxu0 %v11105
    %v11372 = vpop.f32.mrb[0].mxu0
    %v11373 = vadd.f32 0.0, %v11372
    %v11374 = vpop.f32.mrb[0].mxu0
    %11375 = vmatprep.mubr.f32.mxu0 0.0
    %11376 = vmatmul.mubr.f32.gmra.mrb[0].mxu0 %v11108
    %v11377 = vpop.f32.mrb[0].mxu0
    %v11378 = vadd.f32 0.0, %v11377
    %v11379 = vpop.f32.mrb[0].mxu0
    %11380 = vmatprep.mubr.f32.mxu0 0.0
    %11381 = vmatmul.mubr.f32.gmra.mrb[0].mxu0 %v11111
    %v11382 = vpop.f32.mrb[0].mxu0
    %v11383 = vadd.f32 0.0, %v11382
    %v11384 = vpop.f32.mrb[0].mxu0
    %11385 = vmatprep.mubr.f32.mxu0 0.0
    %11386 = vmatmul.mubr.f32.gmra.mrb[0].mxu0 %v11114
    %v11387 = vpop.f32.mrb[0].mxu0
    %v11388 = vadd.f32 0.0, %v11387
    %v11389 = vpop.f32.mrb[0].mxu0
    %11390 = vmatprep.mubr.f32.mxu0 0.0
    %11391 = vmatmul.mubr.f32.gmra.mrb[0].mxu0 %v11117
    %v11392 = vpop.f32.mrb[0].mxu0
    %v11393 = vadd.f32 0.0, %v11392
    %v11394 = vpop.f32.mrb[0].mxu0
    %11395 = vmatprep.mubr.f32.mxu0 0.0
    %11396 = vmatmul.mubr.f32.gmra.mrb[0].mxu0 %v11120
    %v11397 = vpop.f32.mrb[0].mxu0
    %v11398 = vadd.f32 0.0, %v11397
    %v11399 = vpop.f32.mrb[0].mxu0
    %11400 = vmatprep.mubr.f32.mxu0 0.0
    %11401 = vmatmul.mubr.f32.gmra.mrb[0].mxu0 %v11123
    %v11402 = vpop.f32.mrb[0].mxu0
    %v11403 = vadd.f32 0.0, %v11402
    %v11404 = vpop.f32.mrb[0].mxu0
    %11405 = vmatprep.mubr.f32.mxu0 0.0
    %11406 = vmatmul.mubr.f32.gmra.mrb[0].mxu0 %v11126
    %v11407 = vpop.f32.mrb[0].mxu0
    %v11408 = vadd.f32 0.0, %v11407
    %v11409 = vpop.f32.mrb[0].mxu0
    %11410 = vmatprep.mubr.f32.mxu0 0.0
    %11411 = vmatmul.mubr.f32.gmra.mrb[0].mxu0 %v11129
    %v11412 = vpop.f32.mrb[0].mxu0
    %v11413 = vadd.f32 0.0, %v11412
    %v11414 = vpop.f32.mrb[0].mxu0
    %11415 = vmatprep.mubr.f32.mxu0 0.0
    %11416 = vmatmul.mubr.f32.gmra.mrb[0].mxu0 %v11132
    %v11417 = vpop.f32.mrb[0].mxu0
    %v11418 = vadd.f32 0.0, %v11417
    %v11419 = vpop.f32.mrb[0].mxu0
    %11420 = vmatprep.mubr.f32.mxu0 0.0
    %11421 = vmatmul.mubr.f32.gmra.mrb[0].mxu0 %v11135
    %v11422 = vpop.f32.mrb[0].mxu0
    %v11423 = vadd.f32 0.0, %v11422
    %v11424 = vpop.f32.mrb[0].mxu0
    %11425 = vmatprep.mubr.f32.mxu0 0.0
    %11426 = vmatmul.mubr.f32.gmra.mrb[0].mxu0 %v11138
    %v11427 = vpop.f32.mrb[0].mxu0
    %v11428 = vadd.f32 0.0, %v11427
    %v11429 = vpop.f32.mrb[0].mxu0
    %11430 = vmatprep.mubr.f32.mxu0 0.0
    %11431 = vmatmul.mubr.f32.gmra.mrb[0].mxu0 %v11141
    %v11432 = vpop.f32.mrb[0].mxu0
    %v11433 = vadd.f32 0.0, %v11432
    %v11434 = vpop.f32.mrb[0].mxu0
    %11435 = vmatprep.mubr.f32.mxu0 0.0
    %11436 = vmatmul.mubr.f32.gmra.mrb[0].mxu0 %v11144
    %v11437 = vpop.f32.mrb[0].mxu0
    %v11438 = vadd.f32 0.0, %v11437
    %v11439 = vpop.f32.mrb[0].mxu0
    %11440 = vmatprep.mubr.f32.mxu0 0.0
    %11441 = vmatmul.mubr.f32.gmra.mrb[0].mxu0 %v11147
    %v11442 = vpop.f32.mrb[0].mxu0
    %v11443 = vadd.f32 0.0, %v11442
    %v11444 = vpop.f32.mrb[0].mxu0
    %11445 = vmatprep.mubr.f32.mxu0 0.0
    %11446 = vmatmul.mubr.f32.gmra.mrb[0].mxu0 %v11150
    %v11447 = vpop.f32.mrb[0].mxu0
    %v11448 = vadd.f32 0.0, %v11447
    %v11449 = vpop.f32.mrb[0].mxu0
    %11450 = vmatprep.mubr.f32.mxu0 0.0
    %11451 = vmatmul.mubr.f32.gmra.mrb[0].mxu0 %v11153
    %v11452 = vpop.f32.mrb[0].mxu0
    %v11453 = vadd.f32 0.0, %v11452
    %v11454 = vpop.f32.mrb[0].mxu0
    %11455 = vmatprep.mubr.f32.mxu0 0.0
    %11456 = vmatmul.mubr.f32.gmra.mrb[0].mxu0 %v11156
    %v11457 = vpop.f32.mrb[0].mxu0
    %v11458 = vadd.f32 0.0, %v11457
    %v11459 = vpop.f32.mrb[0].mxu0
    %11460 = vmatprep.mubr.f32.mxu0 0.0
    %11461 = vmatmul.mubr.f32.gmra.mrb[0].mxu0 %v11159
    %v11462 = vpop.f32.mrb[0].mxu0
    %v11463 = vadd.f32 0.0, %v11462
    %v11464 = vpop.f32.mrb[0].mxu0
    %11465 = vmatprep.mubr.f32.mxu0 0.0
    %11466 = vmatmul.mubr.f32.gmra.mrb[0].mxu0 %v11162
    %v11467 = vpop.f32.mrb[0].mxu0
    %v11468 = vadd.f32 0.0, %v11467
    %v11469 = vpop.f32.mrb[0].mxu0
    %11470 = vmatprep.mubr.f32.mxu0 0.0
    %11471 = vmatmul.mubr.f32.gmra.mrb[0].mxu0 %v11165
    %v11472 = vpop.f32.mrb[0].mxu0
    %v11473 = vadd.f32 0.0, %v11472
    %v11474 = vpop.f32.mrb[0].mxu0
    %11475 = vmatprep.mubr.f32.mxu0 0.0
    %11476 = vmatmul.mubr.f32.gmra.mrb[0].mxu0 %v11168
    %v11477 = vpop.f32.mrb[0].mxu0
    %v11478 = vadd.f32 0.0, %v11477
    %v11479 = vpop.f32.mrb[0].mxu0
    %11480 = vmatprep.mubr.f32.mxu0 0.0
    %11481 = vmatmul.mubr.f32.gmra.mrb[0].mxu0 %v11171
    %v11482 = vpop.f32.mrb[0].mxu0
    %v11483 = vadd.f32 0.0, %v11482
    %v11484 = vpop.f32.mrb[0].mxu0
    %11485 = vmatprep.mubr.f32.mxu0 0.0
    %11486 = vmatmul.mubr.f32.gmra.mrb[0].mxu0 %v11174
    %v11487 = vpop.f32.mrb[0].mxu0
    %v11488 = vadd.f32 0.0, %v11487
    %v11489 = vpop.f32.mrb[0].mxu0
    %11490 = vmatprep.mubr.f32.mxu0 0.0
    %11491 = vmatmul.mubr.f32.gmra.mrb[0].mxu0 %v11177
    %v11492 = vpop.f32.mrb[0].mxu0
    %v11493 = vadd.f32 0.0, %v11492
    %v11494 = vpop.f32.mrb[0].mxu0
    %11495 = vmatprep.mubr.f32.mxu0 0.0
    %11496 = vmatmul.mubr.f32.gmra.mrb[0].mxu0 %v11180
    %v11497 = vpop.f32.mrb[0].mxu0
    %v11498 = vadd.f32 0.0, %v11497
    %v11499 = vpop.f32.mrb[0].mxu0
    %11500 = vmatprep.mubr.f32.mxu0 0.0
    %11501 = vmatmul.mubr.f32.gmra.mrb[0].mxu0 %v11183
    %v11502 = vpop.f32.mrb[0].mxu0
    %v11503 = vadd.f32 0.0, %v11502
    %v11504 = vpop.f32.mrb[0].mxu0
    %11505 = vmatprep.mubr.f32.mxu0 0.0
    %11506 = vmatmul.mubr.f32.gmra.mrb[0].mxu0 %v11186
    %v11507 = vpop.f32.mrb[0].mxu0
    %v11508 = vadd.f32 0.0, %v11507
    %v11509 = vpop.f32.mrb[0].mxu0
    %11510 = vmatprep.mubr.f32.mxu0 0.0
    %11511 = vmatmul.mubr.f32.gmra.mrb[0].mxu0 %v11189
    %v11512 = vpop.f32.mrb[0].mxu0
    %v11513 = vadd.f32 0.0, %v11512
    %v11514 = vpop.f32.mrb[0].mxu0
    %11515 = vmatprep.mubr.f32.mxu0 0.0
    %11516 = vmatmul.mubr.f32.gmra.mrb[0].mxu0 %v11192
    %v11517 = vpop.f32.mrb[0].mxu0
    %v11518 = vadd.f32 0.0, %v11517
    %v11519 = vpop.f32.mrb[0].mxu0
    %11520 = vmatprep.mubr.f32.mxu0 0.0
    %11521 = vmatmul.mubr.f32.gmra.mrb[0].mxu0 %v11195
    %v11522 = vpop.f32.mrb[0].mxu0
    %v11523 = vadd.f32 0.0, %v11522
    %v11524 = vpop.f32.mrb[0].mxu0
    %11525 = vmatprep.mubr.f32.mxu0 0.0
    %11526 = vmatmul.mubr.f32.gmra.mrb[0].mxu0 %v11198
    %v11527 = vpop.f32.mrb[0].mxu0
    %v11528 = vadd.f32 0.0, %v11527
    %v11529 = vpop.f32.mrb[0].mxu0
    %11530 = vmatprep.mubr.f32.mxu0 0.0
    %11531 = vmatmul.mubr.f32.gmra.mrb[0].mxu0 %v11201
    %v11532 = vpop.f32.mrb[0].mxu0
    %v11533 = vadd.f32 0.0, %v11532
    %v11534 = vpop.f32.mrb[0].mxu0
    %11535 = vmatprep.mubr.f32.mxu0 0.0
    %11536 = vmatmul.mubr.f32.gmra.mrb[0].mxu0 %v11204
    %v11537 = vpop.f32.mrb[0].mxu0
    %v11538 = vadd.f32 0.0, %v11537
    %v11539 = vpop.f32.mrb[0].mxu0
    %11540 = vmatprep.mubr.f32.mxu0 0.0
    %11541 = vmatmul.mubr.f32.gmra.mrb[0].mxu0 %v11207
    %v11542 = vpop.f32.mrb[0].mxu0
    %v11543 = vadd.f32 0.0, %v11542
    %v11544 = vpop.f32.mrb[0].mxu0
    %11545 = vmatprep.mubr.f32.mxu0 0.0
    %11546 = vmatmul.mubr.f32.gmra.mrb[0].mxu0 %v11210
    %v11547 = vpop.f32.mrb[0].mxu0
    %v11548 = vadd.f32 0.0, %v11547
    %v11549 = vpop.f32.mrb[0].mxu0
    %11550 = vmatprep.mubr.f32.mxu0 0.0
    %11551 = vmatmul.mubr.f32.gmra.mrb[0].mxu0 %v11213
    %v11552 = vpop.f32.mrb[0].mxu0
    %v11553 = vadd.f32 0.0, %v11552
    %v11554 = vpop.f32.mrb[0].mxu0
    %11555 = vmatprep.mubr.f32.mxu0 0.0
    %11556 = vmatmul.mubr.f32.gmra.mrb[0].mxu0 %v11216
    %v11557 = vpop.f32.mrb[0].mxu0
    %v11558 = vadd.f32 0.0, %v11557
    %v11559 = vpop.f32.mrb[0].mxu0
    %11560 = vmatprep.mubr.f32.mxu0 0.0
    %11561 = vmatmul.mubr.f32.gmra.mrb[0].mxu0 %v11219
    %v11562 = vpop.f32.mrb[0].mxu0
    %v11563 = vadd.f32 0.0, %v11562
    %v11564 = vpop.f32.mrb[0].mxu0
    %11565 = vmatprep.mubr.f32.mxu0 0.0
    %11566 = vmatmul.mubr.f32.gmra.mrb[0].mxu0 %v11222
    %v11567 = vpop.f32.mrb[0].mxu0
    %v11568 = vadd.f32 0.0, %v11567
    %v11569 = vpop.f32.mrb[0].mxu0
    %11570 = vmatprep.mubr.f32.mxu0 0.0
    %11571 = vmatmul.mubr.f32.gmra.mrb[0].mxu0 %v11225
    %v11572 = vpop.f32.mrb[0].mxu0
    %v11573 = vadd.f32 0.0, %v11572
    %v11574 = vpop.f32.mrb[0].mxu0
    %11575 = vmatprep.mubr.f32.mxu0 0.0
    %11576 = vmatmul.mubr.f32.gmra.mrb[0].mxu0 %v11228
    %v11577 = vpop.f32.mrb[0].mxu0
    %v11578 = vadd.f32 0.0, %v11577
    %v11579 = vpop.f32.mrb[0].mxu0
    %11580 = vmatprep.mubr.f32.mxu0 0.0
    %11581 = vmatmul.mubr.f32.gmra.mrb[0].mxu0 %v11231
    %v11582 = vpop.f32.mrb[0].mxu0
    %v11583 = vadd.f32 0.0, %v11582
    %v11584 = vpop.f32.mrb[0].mxu0
    %11585 = vmatprep.mubr.f32.mxu0 0.0
    %11586 = vmatmul.mubr.f32.gmra.mrb[0].mxu0 %v11234
    %v11587 = vpop.f32.mrb[0].mxu0
    %v11588 = vadd.f32 0.0, %v11587
    %v11589 = vpop.f32.mrb[0].mxu0
    %11590 = vmatprep.mubr.f32.mxu0 0.0
    %11591 = vmatmul.mubr.f32.gmra.mrb[0].mxu0 %v11237
    %v11592 = vpop.f32.mrb[0].mxu0
    %v11593 = vadd.f32 0.0, %v11592
    %v11594 = vpop.f32.mrb[0].mxu0
    %11595 = vmatprep.mubr.f32.mxu0 0.0
    %11596 = vmatmul.mubr.f32.gmra.mrb[0].mxu0 %v11240
    %v11597 = vpop.f32.mrb[0].mxu0
    %v11598 = vadd.f32 0.0, %v11597
    %v11599 = vpop.f32.mrb[0].mxu0
    %11600 = vmatprep.mubr.f32.mxu0 0.0
    %11601 = vmatmul.mubr.f32.gmra.mrb[0].mxu0 %v11243
    %v11602 = vpop.f32.mrb[0].mxu0
    %v11603 = vadd.f32 0.0, %v11602
    %v11604 = vpop.f32.mrb[0].mxu0
    %11605 = vmatprep.mubr.f32.mxu0 0.0
    %11606 = vmatmul.mubr.f32.gmra.mrb[0].mxu0 %v11246
    %v11607 = vpop.f32.mrb[0].mxu0
    %v11608 = vadd.f32 0.0, %v11607
    %v11609 = vpop.f32.mrb[0].mxu0
    %11610 = vmatprep.mubr.f32.mxu0 0.0
    %11611 = vmatmul.mubr.f32.gmra.mrb[0].mxu0 %v11249
    %v11612 = vpop.f32.mrb[0].mxu0
    %v11613 = vadd.f32 0.0, %v11612
    %v11614 = vpop.f32.mrb[0].mxu0
    %11615 = vmatprep.mubr.f32.mxu0 0.0
    %11616 = vmatmul.mubr.f32.gmra.mrb[0].mxu0 %v11252
    %v11617 = vpop.f32.mrb[0].mxu0
    %v11618 = vadd.f32 0.0, %v11617
    %v11619 = vpop.f32.mrb[0].mxu0
    %11620 = vmatprep.mubr.f32.mxu0 0.0
    %11621 = vmatmul.mubr.f32.gmra.mrb[0].mxu0 %v11255
    %v11622 = vpop.f32.mrb[0].mxu0
    %v11623 = vadd.f32 0.0, %v11622
    %v11624 = vpop.f32.mrb[0].mxu0
    %11625 = vmatprep.mubr.f32.mxu0 0.0
    %11626 = vmatmul.mubr.f32.gmra.mrb[0].mxu0 %v11258
    %v11627 = vpop.f32.mrb[0].mxu0
    %v11628 = vadd.f32 0.0, %v11627
    %v11629 = vpop.f32.mrb[0].mxu0
    %11630 = vmatprep.mubr.f32.mxu0 0.0
    %11631 = vmatmul.mubr.f32.gmra.mrb[0].mxu0 %v11261
    %v11632 = vpop.f32.mrb[0].mxu0
    %v11633 = vadd.f32 0.0, %v11632
    %v11634 = vpop.f32.mrb[0].mxu0
    %11635 = vmatprep.mubr.f32.mxu0 0.0
    %11636 = vmatmul.mubr.f32.gmra.mrb[0].mxu0 %v11264
    %v11637 = vpop.f32.mrb[0].mxu0
    %v11638 = vadd.f32 0.0, %v11637
    %v11639 = vpop.f32.mrb[0].mxu0
    %11640 = vmatprep.mubr.f32.mxu0 0.0
    %11641 = vmatmul.mubr.f32.gmra.mrb[0].mxu0 %v11267
    %v11642 = vpop.f32.mrb[0].mxu0
    %v11643 = vadd.f32 0.0, %v11642
    %v11644 = vpop.f32.mrb[0].mxu0
    %11645 = vmatprep.mubr.f32.mxu0 0.0
    %11646 = vmatmul.mubr.f32.gmra.mrb[0].mxu0 %v11270
    %v11647 = vpop.f32.mrb[0].mxu0
    %v11648 = vadd.f32 0.0, %v11647
    %v11649 = vpop.f32.mrb[0].mxu0
    %11650 = vmatprep.mubr.f32.mxu0 0.0
    %11651 = vmatmul.mubr.f32.gmra.mrb[0].mxu0 %v11273
    %v11652 = vpop.f32.mrb[0].mxu0
    %v11653 = vadd.f32 0.0, %v11652
    %v11654 = vpop.f32.mrb[0].mxu0
    %11655 = vmatprep.mubr.f32.mxu0 0.0
    %11656 = vmatmul.mubr.f32.gmra.mrb[0].mxu0 %v11276
    %v11657 = vpop.f32.mrb[0].mxu0
    %v11658 = vadd.f32 0.0, %v11657
    %v11659 = vpop.f32.mrb[0].mxu0
    %11660 = vmatprep.mubr.f32.mxu0 0.0
    %11661 = vmatmul.mubr.f32.gmra.mrb[0].mxu0 %v11279
    %v11662 = vpop.f32.mrb[0].mxu0
    %v11663 = vadd.f32 0.0, %v11662
    %v11664 = vpop.f32.mrb[0].mxu0
    %11665 = vdwg.mxu0
    %v11666 = vadd.f32 %v10694, %v11348
    %v11667 = vadd.f32 %v10699, %v11353
    %v11668 = vadd.f32 %v10704, %v11358
    %v11669 = vadd.f32 %v10709, %v11363
    %v11670 = vadd.f32 %v10714, %v11368
    %v11671 = vadd.f32 %v10719, %v11373
    %v11672 = vadd.f32 %v10724, %v11378
    %v11673 = vadd.f32 %v10729, %v11383
    %v11674 = vadd.f32 %v10734, %v11388
    %v11675 = vadd.f32 %v10739, %v11393
    %v11676 = vadd.f32 %v10744, %v11398
    %v11677 = vadd.f32 %v10749, %v11403
    %v11678 = vadd.f32 %v10754, %v11408
    %v11679 = vadd.f32 %v10759, %v11413
    %v11680 = vadd.f32 %v10764, %v11418
    %v11681 = vadd.f32 %v10769, %v11423
    %v11682 = vadd.f32 %v10774, %v11428
    %v11683 = vadd.f32 %v10779, %v11433
    %v11684 = vadd.f32 %v10784, %v11438
    %v11685 = vadd.f32 %v10789, %v11443
    %v11686 = vadd.f32 %v10794, %v11448
    %v11687 = vadd.f32 %v10799, %v11453
    %v11688 = vadd.f32 %v10804, %v11458
    %v11689 = vadd.f32 %v10809, %v11463
    %v11690 = vadd.f32 %v10814, %v11468
    %v11691 = vadd.f32 %v10819, %v11473
    %v11692 = vadd.f32 %v10824, %v11478
    %v11693 = vadd.f32 %v10829, %v11483
    %v11694 = vadd.f32 %v10834, %v11488
    %v11695 = vadd.f32 %v10839, %v11493
    %v11696 = vadd.f32 %v10844, %v11498
    %v11697 = vadd.f32 %v10849, %v11503
    %v11698 = vadd.f32 %v10854, %v11508
    %v11699 = vadd.f32 %v10859, %v11513
    %v11700 = vadd.f32 %v10864, %v11518
    %v11701 = vadd.f32 %v10869, %v11523
    %v11702 = vadd.f32 %v10874, %v11528
    %v11703 = vadd.f32 %v10879, %v11533
    %v11704 = vadd.f32 %v10884, %v11538
    %v11705 = vadd.f32 %v10889, %v11543
    %v11706 = vadd.f32 %v10894, %v11548
    %v11707 = vadd.f32 %v10899, %v11553
    %v11708 = vadd.f32 %v10904, %v11558
    %v11709 = vadd.f32 %v10909, %v11563
    %v11710 = vadd.f32 %v10914, %v11568
    %v11711 = vadd.f32 %v10919, %v11573
    %v11712 = vadd.f32 %v10924, %v11578
    %v11713 = vadd.f32 %v10929, %v11583
    %v11714 = vadd.f32 %v10934, %v11588
    %v11715 = vadd.f32 %v10939, %v11593
    %v11716 = vadd.f32 %v10944, %v11598
    %v11717 = vadd.f32 %v10949, %v11603
    %v11718 = vadd.f32 %v10954, %v11608
    %v11719 = vadd.f32 %v10959, %v11613
    %v11720 = vadd.f32 %v10964, %v11618
    %v11721 = vadd.f32 %v10969, %v11623
    %v11722 = vadd.f32 %v10974, %v11628
    %v11723 = vadd.f32 %v10979, %v11633
    %v11724 = vadd.f32 %v10984, %v11638
    %v11725 = vadd.f32 %v10989, %v11643
    %v11726 = vadd.f32 %v10994, %v11648
    %v11727 = vadd.f32 %v10999, %v11653
    %v11728 = vadd.f32 %v11004, %v11658
    %v11729 = vadd.f32 %v11009, %v11663
    %v11730 = vld [vmem:[%s8] sm:$0x1]
    %v11732 = vlaneseq
    %v11733 = vshrl.u32 %v11732, 7
    %v11734 = vsub.s32 0, %v11733
    %v11735 = vrot.slane %v11730, %v11734
    %v11737 = vadd.f32 %v11666, %v11735
    %v11738 = vadd.f32 %v11667, %v11735
    %v11739 = vadd.f32 %v11668, %v11735
    %v11740 = vadd.f32 %v11669, %v11735
    %v11741 = vadd.f32 %v11670, %v11735
    %v11742 = vadd.f32 %v11671, %v11735
    %v11743 = vadd.f32 %v11672, %v11735
    %v11744 = vadd.f32 %v11673, %v11735
    %v11745 = vadd.f32 %v11674, %v11735
    %v11746 = vadd.f32 %v11675, %v11735
    %v11747 = vadd.f32 %v11676, %v11735
    %v11748 = vadd.f32 %v11677, %v11735
    %v11749 = vadd.f32 %v11678, %v11735
    %v11750 = vadd.f32 %v11679, %v11735
    %v11751 = vadd.f32 %v11680, %v11735
    %v11752 = vadd.f32 %v11681, %v11735
    %v11753 = vadd.f32 %v11682, %v11735
    %v11754 = vadd.f32 %v11683, %v11735
    %v11755 = vadd.f32 %v11684, %v11735
    %v11756 = vadd.f32 %v11685, %v11735
    %v11757 = vadd.f32 %v11686, %v11735
    %v11758 = vadd.f32 %v11687, %v11735
    %v11759 = vadd.f32 %v11688, %v11735
    %v11760 = vadd.f32 %v11689, %v11735
    %v11761 = vadd.f32 %v11690, %v11735
    %v11762 = vadd.f32 %v11691, %v11735
    %v11763 = vadd.f32 %v11692, %v11735
    %v11764 = vadd.f32 %v11693, %v11735
    %v11765 = vadd.f32 %v11694, %v11735
    %v11766 = vadd.f32 %v11695, %v11735
    %v11767 = vadd.f32 %v11696, %v11735
    %v11768 = vadd.f32 %v11697, %v11735
    %v11769 = vadd.f32 %v11698, %v11735
    %v11770 = vadd.f32 %v11699, %v11735
    %v11771 = vadd.f32 %v11700, %v11735
    %v11772 = vadd.f32 %v11701, %v11735
    %v11773 = vadd.f32 %v11702, %v11735
    %v11774 = vadd.f32 %v11703, %v11735
    %v11775 = vadd.f32 %v11704, %v11735
    %v11776 = vadd.f32 %v11705, %v11735
    %v11777 = vadd.f32 %v11706, %v11735
    %v11778 = vadd.f32 %v11707, %v11735
    %v11779 = vadd.f32 %v11708, %v11735
    %v11780 = vadd.f32 %v11709, %v11735
    %v11781 = vadd.f32 %v11710, %v11735
    %v11782 = vadd.f32 %v11711, %v11735
    %v11783 = vadd.f32 %v11712, %v11735
    %v11784 = vadd.f32 %v11713, %v11735
    %v11785 = vadd.f32 %v11714, %v11735
    %v11786 = vadd.f32 %v11715, %v11735
    %v11787 = vadd.f32 %v11716, %v11735
    %v11788 = vadd.f32 %v11717, %v11735
    %v11789 = vadd.f32 %v11718, %v11735
    %v11790 = vadd.f32 %v11719, %v11735
    %v11791 = vadd.f32 %v11720, %v11735
    %v11792 = vadd.f32 %v11721, %v11735
    %v11793 = vadd.f32 %v11722, %v11735
    %v11794 = vadd.f32 %v11723, %v11735
    %v11795 = vadd.f32 %v11724, %v11735
    %v11796 = vadd.f32 %v11725, %v11735
    %v11797 = vadd.f32 %v11726, %v11735
    %v11798 = vadd.f32 %v11727, %v11735
    %v11799 = vadd.f32 %v11728, %v11735
    %v11800 = vadd.f32 %v11729, %v11735
    %11801 = vst [vmem:[#allocation9] sm:$0xff] %v11737
    %11802 = vst [vmem:[#allocation9 + $0x8] sm:$0xff] %v11738
    %11803 = vst [vmem:[#allocation9 + $0x10] sm:$0xff] %v11739
    %11804 = vst [vmem:[#allocation9 + $0x18] sm:$0xff] %v11740
    %11805 = vst [vmem:[#allocation9 + $0x20] sm:$0xff] %v11741
    %11806 = vst [vmem:[#allocation9 + $0x28] sm:$0xff] %v11742
    %11807 = vst [vmem:[#allocation9 + $0x30] sm:$0xff] %v11743
    %11808 = vst [vmem:[#allocation9 + $0x38] sm:$0xff] %v11744
    %11809 = vst [vmem:[#allocation9 + $0x40] sm:$0xff] %v11745
    %11810 = vst [vmem:[#allocation9 + $0x48] sm:$0xff] %v11746
    %11811 = vst [vmem:[#allocation9 + $0x50] sm:$0xff] %v11747
    %11812 = vst [vmem:[#allocation9 + $0x58] sm:$0xff] %v11748
    %11813 = vst [vmem:[#allocation9 + $0x60] sm:$0xff] %v11749
    %11814 = vst [vmem:[#allocation9 + $0x68] sm:$0xff] %v11750
    %11815 = vst [vmem:[#allocation9 + $0x70] sm:$0xff] %v11751
    %11816 = vst [vmem:[#allocation9 + $0x78] sm:$0xff] %v11752
    %11817 = vst [vmem:[#allocation9 + $0x80] sm:$0xff] %v11753
    %11818 = vst [vmem:[#allocation9 + $0x88] sm:$0xff] %v11754
    %11819 = vst [vmem:[#allocation9 + $0x90] sm:$0xff] %v11755
    %11820 = vst [vmem:[#allocation9 + $0x98] sm:$0xff] %v11756
    %11821 = vst [vmem:[#allocation9 + $0xa0] sm:$0xff] %v11757
    %11822 = vst [vmem:[#allocation9 + $0xa8] sm:$0xff] %v11758
    %11823 = vst [vmem:[#allocation9 + $0xb0] sm:$0xff] %v11759
    %11824 = vst [vmem:[#allocation9 + $0xb8] sm:$0xff] %v11760
    %11825 = vst [vmem:[#allocation9 + $0xc0] sm:$0xff] %v11761
    %11826 = vst [vmem:[#allocation9 + $0xc8] sm:$0xff] %v11762
    %11827 = vst [vmem:[#allocation9 + $0xd0] sm:$0xff] %v11763
    %11828 = vst [vmem:[#allocation9 + $0xd8] sm:$0xff] %v11764
    %11829 = vst [vmem:[#allocation9 + $0xe0] sm:$0xff] %v11765
    %11830 = vst [vmem:[#allocation9 + $0xe8] sm:$0xff] %v11766
    %11831 = vst [vmem:[#allocation9 + $0xf0] sm:$0xff] %v11767
    %11832 = vst [vmem:[#allocation9 + $0xf8] sm:$0xff] %v11768
    %11833 = vst [vmem:[#allocation9 + $0x100] sm:$0xff] %v11769
    %11834 = vst [vmem:[#allocation9 + $0x108] sm:$0xff] %v11770
    %11835 = vst [vmem:[#allocation9 + $0x110] sm:$0xff] %v11771
    %11836 = vst [vmem:[#allocation9 + $0x118] sm:$0xff] %v11772
    %11837 = vst [vmem:[#allocation9 + $0x120] sm:$0xff] %v11773
    %11838 = vst [vmem:[#allocation9 + $0x128] sm:$0xff] %v11774
    %11839 = vst [vmem:[#allocation9 + $0x130] sm:$0xff] %v11775
    %11840 = vst [vmem:[#allocation9 + $0x138] sm:$0xff] %v11776
    %11841 = vst [vmem:[#allocation9 + $0x140] sm:$0xff] %v11777
    %11842 = vst [vmem:[#allocation9 + $0x148] sm:$0xff] %v11778
    %11843 = vst [vmem:[#allocation9 + $0x150] sm:$0xff] %v11779
    %11844 = vst [vmem:[#allocation9 + $0x158] sm:$0xff] %v11780
    %11845 = vst [vmem:[#allocation9 + $0x160] sm:$0xff] %v11781
    %11846 = vst [vmem:[#allocation9 + $0x168] sm:$0xff] %v11782
    %11847 = vst [vmem:[#allocation9 + $0x170] sm:$0xff] %v11783
    %11848 = vst [vmem:[#allocation9 + $0x178] sm:$0xff] %v11784
    %11849 = vst [vmem:[#allocation9 + $0x180] sm:$0xff] %v11785
    %11850 = vst [vmem:[#allocation9 + $0x188] sm:$0xff] %v11786
    %11851 = vst [vmem:[#allocation9 + $0x190] sm:$0xff] %v11787
    %11852 = vst [vmem:[#allocation9 + $0x198] sm:$0xff] %v11788
    %11853 = vst [vmem:[#allocation9 + $0x1a0] sm:$0xff] %v11789
    %11854 = vst [vmem:[#allocation9 + $0x1a8] sm:$0xff] %v11790
    %11855 = vst [vmem:[#allocation9 + $0x1b0] sm:$0xff] %v11791
    %11856 = vst [vmem:[#allocation9 + $0x1b8] sm:$0xff] %v11792
    %11857 = vst [vmem:[#allocation9 + $0x1c0] sm:$0xff] %v11793
    %11858 = vst [vmem:[#allocation9 + $0x1c8] sm:$0xff] %v11794
    %11859 = vst [vmem:[#allocation9 + $0x1d0] sm:$0xff] %v11795
    %11860 = vst [vmem:[#allocation9 + $0x1d8] sm:$0xff] %v11796
    %11861 = vst [vmem:[#allocation9 + $0x1e0] sm:$0xff] %v11797
    %11862 = vst [vmem:[#allocation9 + $0x1e8] sm:$0xff] %v11798
    %11863 = vst [vmem:[#allocation9 + $0x1f0] sm:$0xff] %v11799
    %11864 = vst [vmem:[#allocation9 + $0x1f8] sm:$0xff] %v11800
    // Predicated region
    $region46: #{tpu_custom_call.1} parent=1 // pred_check
      _
    $region47: #{tpu_custom_call.1} parent=1 // pred_check_branch
      %11866 = sbr.rel (0) target = $region49
    $region48: #{tpu_custom_call.1} parent=1 // pred_region
      %s11868 = ssub.s32 8192, 8192
      %11869 = vsyncadd [#allocation6], %s11868
      %s11870 = sshll.u32 [#allocation9], 4
      %s11871 = int_to_ptr.vmem [resolvable:$true] %s11870
      %11876 = dma.vmem_to_hbm [thread:$0]  %s11871, 8192, %s9, [#allocation6], 128, 128, 8
    $region49: #{tpu_custom_call.1} parent=1 // pred_fallthru
      _
    // Predicated region
    $region50: #{tpu_custom_call.1} parent=1 // pred_check
      _
    $region51: #{tpu_custom_call.1} parent=1 // pred_check_branch
      %11878 = sbr.rel (0) target = $region53
    $region52: #{tpu_custom_call.1} parent=1 // pred_region
      %11879 = dma.done [#allocation6], 8192
    $region53: #{tpu_custom_call.1} parent=1 // pred_fallthru
      _
    %11880 = vsyncpa [#allocation5], 1
    %11881 = vsyncpa [#allocation8], 1
    %11882 = vsyncpa [#allocation6], 1

</llo_original>
